<compile_context>
chip_gen: v6e
topology: v6e:2x2x1
jax: 0.10.0
libtpu: 0.0.40
codegen_flags: <defaults>
</compile_context>

<pallas_src>
import functools

import numpy as np
import jax
import jax.numpy as jnp
from jax.experimental import pallas as pl
from jax.experimental.pallas import tpu as pltpu


# ----------------------------------------------------------------------------
# Generation-aware VMEM budget and tile caps (feedback: v7x has 64 MiB/TC, v5e/v6e 128 MiB)
# ----------------------------------------------------------------------------
def _query_vmem_capacity():
    try:
        info = pltpu.get_tpu_info()
        cap = int(getattr(info, "vmem_capacity_bytes", 0) or 0)
        if cap > 0:
            return cap
    except Exception:
        pass
    return 64 * 1024 * 1024          # conservative fallback (v7x-sized)


_VMEM_CAP = _query_vmem_capacity()
# Leave ~25% headroom for compiler-internal scratch; never exceed ~100 MiB.
_VMEM_LIMIT = min((_VMEM_CAP * 3) // 4, 100 * 1024 * 1024)

if _VMEM_CAP >= 96 * 1024 * 1024:    # v5e / v6e (128 MiB): bigger tiles, fewer grid steps
    _ATTN_Q_CAP, _ATTN_KV_CAP, _ROW_CAP, _FFN_J_CAP = 256, 1024, 512, 512
else:                                # v7x (64 MiB): shrink caps so double buffers still fit
    _ATTN_Q_CAP, _ATTN_KV_CAP, _ROW_CAP, _FFN_J_CAP = 128, 256, 256, 256


def _pick_tile(n, cap, multiple=8, min_steps=1):
    """Largest divisor of n that is a multiple of `multiple`, <= cap, leaving >= min_steps grid
    steps (megacore likes >= 2 parallel steps on v7x). Falls back to n (untiled) if n is not a
    multiple of `multiple`."""
    if n % multiple != 0:
        return n
    limit = min(cap, n)
    if min_steps > 1:
        limit = min(limit, max(multiple, n // min_steps))
    best = multiple
    t = multiple
    while t <= limit:
        if n % t == 0:
            best = t
        t += multiple
    return best


# ----------------------------------------------------------------------------
# Fused per-head Q/K/V projections (one pallas_call, outputs already in [B, H, L, d])
# ----------------------------------------------------------------------------
def head_projections(x, weights):
    """x: [B, L, dm]; weights: tuple of per-head stacks [H, dm, d_i].
    Returns tuple of [B, H, L, d_i]; heads split by the out_spec -> no XLA transpose needed."""
    B, L, dm = x.shape
    H = weights[0].shape[0]
    n = len(weights)
    TR = _pick_tile(L, _ROW_CAP, multiple=8)
    nR = L // TR

    def kernel(x_ref, *refs):
        w_refs, o_refs = refs[:n], refs[n:]
        xv = x_ref[0]                                        # [TR, dm] — read once, used n times
        for w_ref, o_ref in zip(w_refs, o_refs):
            o_ref[0, 0] = jnp.dot(xv, w_ref[0],
                                  preferred_element_type=jnp.float32).astype(o_ref.dtype)

    in_specs = [pl.BlockSpec((1, TR, dm), lambda b, h, r: (b, r, 0))]
    for w in weights:
        in_specs.append(pl.BlockSpec((1, dm, w.shape[2]), lambda b, h, r: (h, 0, 0)))
    out_specs = tuple(pl.BlockSpec((1, 1, TR, w.shape[2]), lambda b, h, r: (b, h, r, 0))
                      for w in weights)
    out_shape = tuple(jax.ShapeDtypeStruct((B, H, L, w.shape[2]), x.dtype) for w in weights)

    outs = pl.pallas_call(
        kernel,
        out_shape=out_shape,
        grid_spec=pltpu.PrefetchScalarGridSpec(
            num_scalar_prefetch=0,
            grid=(B, H, nR),
            in_specs=in_specs,
            out_specs=out_specs,
        ),
        compiler_params=pltpu.CompilerParams(
            dimension_semantics=("parallel", "parallel", "parallel"),
            vmem_limit_bytes=_VMEM_LIMIT,
        ),
    )(x, *weights)
    if not isinstance(outs, (tuple, list)):
        outs = (outs,)
    return tuple(outs)


# ----------------------------------------------------------------------------
# Flash-style ScaledDotProductAttention (online softmax, additive mask bias)
# ----------------------------------------------------------------------------
def _flash_attn_kernel(q_ref, k_ref, v_ref, bias_ref, o_ref, m_sc, l_sc, acc_sc, *, scale):
    ki = pl.program_id(2)

    @pl.when(ki == 0)
    def _init():
        m_sc[...] = jnp.full(m_sc.shape, -jnp.inf, dtype=m_sc.dtype)
        l_sc[...] = jnp.zeros(l_sc.shape, dtype=l_sc.dtype)
        acc_sc[...] = jnp.zeros(acc_sc.shape, dtype=acc_sc.dtype)

    # Scale q (H*TQ*Dk elems) instead of the scores (H*TQ*TKV elems): ~TKV/Dk fewer VALU ops.
    q = q_ref[0] * jnp.asarray(scale, q_ref.dtype)           # [H, TQ,  Dk]
    k = k_ref[0]                                             # [H, TKV, Dk]
    v = v_ref[0]                                             # [H, TKV, Dv]

    # scores on the MXU with f32 accumulation; contract the head dim directly (no k.T).
    s = jnp.einsum("hqd,hkd->hqk", q, k, preferred_element_type=jnp.float32)
    # additive mask bias (0 / -1e9), broadcast over heads (and queries for padding masks).
    s = s + bias_ref[0][None, :, :]

    # online-softmax update (f32 running stats in VMEM scratch).
    m_prev = m_sc[...]
    m_new = jnp.maximum(m_prev, jnp.max(s, axis=-1, keepdims=True))
    alpha = jnp.exp(m_prev - m_new)
    p = jnp.exp(s - m_new)
    l_sc[...] = alpha * l_sc[...] + jnp.sum(p, axis=-1, keepdims=True)
    acc_sc[...] = alpha * acc_sc[...] + jnp.einsum(
        "hqk,hkd->hqd", p.astype(v.dtype), v, preferred_element_type=jnp.float32)
    m_sc[...] = m_new

    # attention-prob dropout: inference identity.
    @pl.when(ki == pl.num_programs(2) - 1)
    def _finalize():
        inv_l = pl.reciprocal(l_sc[...])                     # exact (review correctness note)
        o_ref[0] = (acc_sc[...] * inv_l).astype(o_ref.dtype)


def flash_attention(q, k, v, bias, *, temperature):
    """q,k,v: [B, H, L, D]; bias: f32 [B, 1, Lk] or [B, Lq, Lk] additive mask (0 / -1e9)."""
    B, H, Lq, Dk = q.shape
    Lk, Dv = k.shape[2], v.shape[3]
    mq = bias.shape[1]
    assert mq in (1, Lq), f"mask query dim must be 1 or Lq, got {mq}"

    TQ = _pick_tile(Lq, _ATTN_Q_CAP, multiple=8)
    TKV = _pick_tile(Lk, _ATTN_KV_CAP, multiple=128)
    nq, nkv = Lq // TQ, Lk // TKV

    if mq == 1:
        bias_spec = pl.BlockSpec((1, 1, TKV), lambda b, qi, ki: (b, 0, ki))
    else:
        bias_spec = pl.BlockSpec((1, TQ, TKV), lambda b, qi, ki: (b, qi, ki))

    kernel = functools.partial(_flash_attn_kernel, scale=1.0 / float(temperature))

    return pl.pallas_call(
        kernel,
        out_shape=jax.ShapeDtypeStruct((B, H, Lq, Dv), q.dtype),
        grid_spec=pltpu.PrefetchScalarGridSpec(
            num_scalar_prefetch=0,
            grid=(B, nq, nkv),               # reduction (kv) axis last
            in_specs=[
                pl.BlockSpec((1, H, TQ, Dk), lambda b, qi, ki: (b, 0, qi, 0)),
                pl.BlockSpec((1, H, TKV, Dk), lambda b, qi, ki: (b, 0, ki, 0)),
                pl.BlockSpec((1, H, TKV, Dv), lambda b, qi, ki: (b, 0, ki, 0)),
                bias_spec,
            ],
            out_specs=pl.BlockSpec((1, H, TQ, Dv), lambda b, qi, ki: (b, 0, qi, 0)),
            scratch_shapes=[
                pltpu.VMEM((H, TQ, 1), jnp.float32),    # running max
                pltpu.VMEM((H, TQ, 1), jnp.float32),    # running sum
                pltpu.VMEM((H, TQ, Dv), jnp.float32),   # output accumulator
            ],
        ),
        compiler_params=pltpu.CompilerParams(
            dimension_semantics=("parallel", "parallel", "arbitrary"),
            vmem_limit_bytes=_VMEM_LIMIT,
        ),
    )(q, k, v, bias)


# ----------------------------------------------------------------------------
# Fused output projection (fc) + residual add + LayerNorm; heads are the GEMM reduction axis
# ----------------------------------------------------------------------------
def _out_proj_ln_kernel(attn_ref, fcw_ref, res_ref, g_ref, b_ref, o_ref, acc_sc, *, eps):
    h = pl.program_id(2)

    @pl.when(h == 0)
    def _init():
        acc_sc[...] = res_ref[0].astype(jnp.float32)          # residual (fc dropout == identity)

    acc_sc[...] += jnp.dot(attn_ref[0, 0], fcw_ref[0],
                           preferred_element_type=jnp.float32)

    @pl.when(h == pl.num_programs(2) - 1)
    def _finalize():
        y = acc_sc[...]
        mu = jnp.mean(y, axis=-1, keepdims=True)
        yc = y - mu
        var = jnp.mean(yc * yc, axis=-1, keepdims=True)
        y = yc * jax.lax.rsqrt(var + eps)
        y = y * g_ref[...].astype(jnp.float32) + b_ref[...].astype(jnp.float32)
        o_ref[0] = y.astype(o_ref.dtype)


def out_proj_layer_norm(attn, fc_h, residual, gamma, beta, *, eps=1e-6):
    """attn: [B, H, Lq, Dv] (natural flash layout), fc_h: [H, Dv, dm], residual: [B, Lq, dm]."""
    B, H, Lq, Dv = attn.shape
    dm = fc_h.shape[2]
    TR = _pick_tile(Lq, _ROW_CAP, multiple=8)
    nR = Lq // TR
    return pl.pallas_call(
        functools.partial(_out_proj_ln_kernel, eps=eps),
        out_shape=jax.ShapeDtypeStruct((B, Lq, dm), residual.dtype),
        grid_spec=pltpu.PrefetchScalarGridSpec(
            num_scalar_prefetch=0,
            grid=(B, nR, H),                 # head reduction axis last
            in_specs=[
                pl.BlockSpec((1, 1, TR, Dv), lambda b, r, h: (b, h, r, 0)),
                pl.BlockSpec((1, Dv, dm), lambda b, r, h: (h, 0, 0)),
                pl.BlockSpec((1, TR, dm), lambda b, r, h: (b, r, 0)),
                pl.BlockSpec((1, dm), lambda b, r, h: (0, 0)),
                pl.BlockSpec((1, dm), lambda b, r, h: (0, 0)),
            ],
            out_specs=pl.BlockSpec((1, TR, dm), lambda b, r, h: (b, r, 0)),
            scratch_shapes=[pltpu.VMEM((TR, dm), jnp.float32)],
        ),
        compiler_params=pltpu.CompilerParams(
            dimension_semantics=("parallel", "parallel", "arbitrary"),
            vmem_limit_bytes=_VMEM_LIMIT,
        ),
    )(attn, fc_h, residual, gamma.reshape(1, dm), beta.reshape(1, dm))


# ----------------------------------------------------------------------------
# Fused residual-add + LayerNorm(eps=1e-6)  (positional encoding + first LN)
# ----------------------------------------------------------------------------
def _add_ln_kernel(x_ref, r_ref, g_ref, b_ref, o_ref, *, eps):
    x = x_ref[...].astype(jnp.float32) + r_ref[...].astype(jnp.float32)
    mu = jnp.mean(x, axis=-1, keepdims=True)
    xc = x - mu
    var = jnp.mean(xc * xc, axis=-1, keepdims=True)
    y = xc * jax.lax.rsqrt(var + eps)
    y = y * g_ref[...].astype(jnp.float32) + b_ref[...].astype(jnp.float32)
    o_ref[...] = y.astype(o_ref.dtype)


def add_layer_norm(x, residual, gamma, beta, *, eps=1e-6):
    B, L, D = x.shape
    R = B * L
    TR = _pick_tile(R, _ROW_CAP, multiple=8, min_steps=2)
    out = pl.pallas_call(
        functools.partial(_add_ln_kernel, eps=eps),
        out_shape=jax.ShapeDtypeStruct((R, D), x.dtype),
        grid_spec=pltpu.PrefetchScalarGridSpec(
            num_scalar_prefetch=0,
            grid=(R // TR,),
            in_specs=[pl.BlockSpec((TR, D), lambda i: (i, 0)),
                      pl.BlockSpec((TR, D), lambda i: (i, 0)),
                      pl.BlockSpec((1, D), lambda i: (0, 0)),
                      pl.BlockSpec((1, D), lambda i: (0, 0))],
            out_specs=pl.BlockSpec((TR, D), lambda i: (i, 0)),
        ),
        compiler_params=pltpu.CompilerParams(
            dimension_semantics=("parallel",),
            vmem_limit_bytes=_VMEM_LIMIT,
        ),
    )(x.reshape(R, D), residual.reshape(R, D), gamma.reshape(1, D), beta.reshape(1, D))
    return out.reshape(B, L, D)


# ----------------------------------------------------------------------------
# Fused PositionwiseFeedForward, d_inner tiled as a reduction axis with f32 accumulator
# ----------------------------------------------------------------------------
def _ffn_kernel(x_ref, w1_ref, b1_ref, w2_ref, b2_ref, g_ref, be_ref, o_ref, acc_sc, *, eps):
    j = pl.program_id(1)
    x = x_ref[...]                                            # [TR, dm]

    @pl.when(j == 0)
    def _init():                                              # residual + second-layer bias
        acc_sc[...] = x.astype(jnp.float32) + b2_ref[...].astype(jnp.float32)

    h = jnp.dot(x, w1_ref[...], preferred_element_type=jnp.float32)
    h = jnp.maximum(h + b1_ref[...].astype(jnp.float32), 0.0)
    acc_sc[...] += jnp.dot(h.astype(w2_ref.dtype), w2_ref[...],
                           preferred_element_type=jnp.float32)

    @pl.when(j == pl.num_programs(1) - 1)
    def _finalize():
        y = acc_sc[...]
        mu = jnp.mean(y, axis=-1, keepdims=True)
        yc = y - mu
        var = jnp.mean(yc * yc, axis=-1, keepdims=True)
        y = yc * jax.lax.rsqrt(var + eps)
        y = y * g_ref[...].astype(jnp.float32) + be_ref[...].astype(jnp.float32)
        o_ref[...] = y.astype(o_ref.dtype)


def pallas_ffn(x, p, *, eps=1e-6):
    B, L, dm = x.shape
    di = p["w1"].shape[1]
    R = B * L
    TR = _pick_tile(R, _ROW_CAP, multiple=8, min_steps=2)
    TJ = _pick_tile(di, _FFN_J_CAP, multiple=128)
    out = pl.pallas_call(
        functools.partial(_ffn_kernel, eps=eps),
        out_shape=jax.ShapeDtypeStruct((R, dm), x.dtype),
        grid_spec=pltpu.PrefetchScalarGridSpec(
            num_scalar_prefetch=0,
            grid=(R // TR, di // TJ),        # d_inner reduction axis last
            in_specs=[
                pl.BlockSpec((TR, dm), lambda r, j: (r, 0)),
                pl.BlockSpec((dm, TJ), lambda r, j: (0, j)),
                pl.BlockSpec((1, TJ), lambda r, j: (0, j)),
                pl.BlockSpec((TJ, dm), lambda r, j: (j, 0)),
                pl.BlockSpec((1, dm), lambda r, j: (0, 0)),
                pl.BlockSpec((1, dm), lambda r, j: (0, 0)),
                pl.BlockSpec((1, dm), lambda r, j: (0, 0)),
            ],
            out_specs=pl.BlockSpec((TR, dm), lambda r, j: (r, 0)),
            scratch_shapes=[pltpu.VMEM((TR, dm), jnp.float32)],
        ),
        compiler_params=pltpu.CompilerParams(
            dimension_semantics=("parallel", "arbitrary"),
            vmem_limit_bytes=_VMEM_LIMIT,
        ),
    )(x.reshape(R, dm), p["w1"], p["b1"].reshape(1, di), p["w2"], p["b2"].reshape(1, dm),
      p["ln_g"].reshape(1, dm), p["ln_b"].reshape(1, dm))
    return out.reshape(B, L, dm)


# ----------------------------------------------------------------------------
# MultiHeadAttention / TransformerDecoder wrappers
# ----------------------------------------------------------------------------
def _mask_to_bias(mask, batch, l_k, dtype=jnp.float32):
    """Convert 1/0 attend-mask to an additive f32 bias (0 / -1e9), shape [B, 1-or-Lq, Lk]."""
    if mask is None:
        return jnp.zeros((batch, 1, l_k), dtype)
    if mask.ndim == 4:                        # torch-style [B, 1, Lq_or_1, Lk]
        mask = mask[:, 0]
    return jnp.where(mask == 0, jnp.asarray(-1e9, dtype), jnp.asarray(0.0, dtype))


def pallas_mha(xq, xkv, p, mask_bias, *, d_k, self_attn):
    if self_attn:
        # one pallas_call: activation read once, q/k/v written directly as [B, H, L, d].
        q, k, v = head_projections(xq, (p["w_qs_h"], p["w_ks_h"], p["w_vs_h"]))
    else:
        (q,) = head_projections(xq, (p["w_qs_h"],))
        k, v = head_projections(xkv, (p["w_ks_h"], p["w_vs_h"]))
    o = flash_attention(q, k, v, mask_bias, temperature=float(d_k) ** 0.5)   # [B, H, Lq, Dv]
    # fc + dropout(identity) + residual + LayerNorm fused; head-merge is implicit in the reduction.
    return out_proj_layer_norm(o, p["fc_h"], xq, p["ln_g"], p["ln_b"])


def transformer_decoder_forward(trg_seq, trg_mask, enc_output, src_mask, params, pos_table,
                                *, n_head, d_k, d_v):
    B, L, dm = trg_seq.shape
    Lk = enc_output.shape[1]
    pos = jnp.broadcast_to(pos_table[None, :L, :], trg_seq.shape).astype(trg_seq.dtype)
    # dropout(position_enc(x)) -> LayerNorm : dropout is identity; pos add fused into the LN kernel.
    x = add_layer_norm(trg_seq, pos, params["ln_g"], params["ln_b"])
    trg_bias = _mask_to_bias(trg_mask, B, L)
    src_bias = _mask_to_bias(src_mask, B, Lk)
    for lp in params["layers"]:
        x = pallas_mha(x, x, lp["slf"], trg_bias, d_k=d_k, self_attn=True)
        x = pallas_mha(x, enc_output, lp["enc"], src_bias, d_k=d_k, self_attn=False)
        x = pallas_ffn(x, lp["ffn"])
    return x


def prepare_params(params, n_head, d_k, d_v):
    """Re-layout flat nn.Linear weights into per-head stacks (one-time, outside the jit)."""
    def conv_mha(p):
        dm = p["w_qs"].shape[0]
        return {
            "w_qs_h": p["w_qs"].reshape(dm, n_head, d_k).transpose(1, 0, 2),   # [H, dm, dk]
            "w_ks_h": p["w_ks"].reshape(dm, n_head, d_k).transpose(1, 0, 2),
            "w_vs_h": p["w_vs"].reshape(dm, n_head, d_v).transpose(1, 0, 2),
            "fc_h": p["fc"].reshape(n_head, d_v, dm),                          # [H, dv, dm]
            "ln_g": p["ln_g"], "ln_b": p["ln_b"],
        }
    return {
        "ln_g": params["ln_g"], "ln_b": params["ln_b"],
        "layers": [{"slf": conv_mha(lp["slf"]), "enc": conv_mha(lp["enc"]), "ffn": lp["ffn"]}
                   for lp in params["layers"]],
    }


# ----------------------------------------------------------------------------
# Pure-JAX reference (mirrors the PyTorch module, inference mode)
# ----------------------------------------------------------------------------
def _ref_layer_norm(x, g, b, eps=1e-6):
    mu = jnp.mean(x, axis=-1, keepdims=True)
    var = jnp.mean(jnp.square(x - mu), axis=-1, keepdims=True)
    return (x - mu) * jax.lax.rsqrt(var + eps) * g + b


def _ref_mha(xq, xkv, p, mask, n_head, d_k, d_v):
    B, Lq, dm = xq.shape
    Lk = xkv.shape[1]
    residual = xq
    q = (xq @ p["w_qs"]).reshape(B, Lq, n_head, d_k).transpose(0, 2, 1, 3)
    k = (xkv @ p["w_ks"]).reshape(B, Lk, n_head, d_k).transpose(0, 2, 1, 3)
    v = (xkv @ p["w_vs"]).reshape(B, Lk, n_head, d_v).transpose(0, 2, 1, 3)
    attn = jnp.einsum("bhqd,bhkd->bhqk", q / (float(d_k) ** 0.5), k)
    if mask is not None:
        attn = jnp.where(mask[:, None] == 0, -1e9, attn)
    attn = jax.nn.softmax(attn, axis=-1)
    o = jnp.einsum("bhqk,bhkd->bhqd", attn, v)
    o = o.transpose(0, 2, 1, 3).reshape(B, Lq, n_head * d_v) @ p["fc"]
    return _ref_layer_norm(o + residual, p["ln_g"], p["ln_b"])


def _ref_ffn(x, p):
    h = jnp.maximum(x @ p["w1"] + p["b1"], 0.0)
    y = h @ p["w2"] + p["b2"]
    return _ref_layer_norm(y + x, p["ln_g"], p["ln_b"])


def reference_decoder(trg_seq, trg_mask, enc_output, src_mask, params, pos_table,
                      *, n_head, d_k, d_v):
    L = trg_seq.shape[1]
    x = _ref_layer_norm(trg_seq + pos_table[None, :L, :], params["ln_g"], params["ln_b"])
    for lp in params["layers"]:
        x = _ref_mha(x, x, lp["slf"], trg_mask, n_head, d_k, d_v)
        x = _ref_mha(x, enc_output, lp["enc"], src_mask, n_head, d_k, d_v)
        x = _ref_ffn(x, lp["ffn"])
    return x


# ----------------------------------------------------------------------------
# Parameter / positional-table construction and demo
# ----------------------------------------------------------------------------
def sinusoid_pos_table(n_position, d_hid):
    pos = np.arange(n_position, dtype=np.float64)[:, None]
    i = np.arange(d_hid, dtype=np.float64)[None, :]
    angle = pos / np.power(10000.0, 2.0 * np.floor(i / 2.0) / d_hid)
    table = np.zeros((n_position, d_hid), dtype=np.float64)
    table[:, 0::2] = np.sin(angle[:, 0::2])
    table[:, 1::2] = np.cos(angle[:, 1::2])
    return jnp.asarray(table, dtype=jnp.float32)


def init_params(key, d_model, d_inner, n_layers, n_head, d_k, d_v):
    def dense(k, fan_in, shape):
        return jax.random.normal(k, shape, jnp.float32) * (1.0 / np.sqrt(fan_in))

    def ln(k, d):
        k1, k2 = jax.random.split(k)
        return (1.0 + 0.1 * jax.random.normal(k1, (d,), jnp.float32),
                0.1 * jax.random.normal(k2, (d,), jnp.float32))

    def mha(k):
        ks = jax.random.split(k, 5)
        g, b = ln(ks[4], d_model)
        return {"w_qs": dense(ks[0], d_model, (d_model, n_head * d_k)),
                "w_ks": dense(ks[1], d_model, (d_model, n_head * d_k)),
                "w_vs": dense(ks[2], d_model, (d_model, n_head * d_v)),
                "fc": dense(ks[3], n_head * d_v, (n_head * d_v, d_model)),
                "ln_g": g, "ln_b": b}

    def ffn(k):
        ks = jax.random.split(k, 5)
        g, b = ln(ks[4], d_model)
        return {"w1": dense(ks[0], d_model, (d_model, d_inner)),
                "b1": 0.1 * jax.random.normal(ks[1], (d_inner,), jnp.float32),
                "w2": dense(ks[2], d_inner, (d_inner, d_model)),
                "b2": 0.1 * jax.random.normal(ks[3], (d_model,), jnp.float32),
                "ln_g": g, "ln_b": b}

    keys = jax.random.split(key, n_layers + 1)
    g0, b0 = ln(keys[0], d_model)
    layers = []
    for i in range(n_layers):
        k_slf, k_enc, k_ffn = jax.random.split(keys[i + 1], 3)
        layers.append({"slf": mha(k_slf), "enc": mha(k_enc), "ffn": ffn(k_ffn)})
    return {"ln_g": g0, "ln_b": b0, "layers": layers}


if __name__ == "__main__":
    # Small, TPU-friendly config: per-head dim 128 (lane-dense), d_model/d_inner multiples of 128.
    D_MODEL, D_INNER, N_LAYERS, N_HEAD = 256, 512, 2, 2
    D_K = D_V = D_MODEL // N_HEAD            # 128
    B, L_TRG, L_SRC, N_POSITION = 2, 8, 16, 30

    root = jax.random.PRNGKey(0)
    k_par, k_trg, k_enc = jax.random.split(root, 3)
    params = init_params(k_par, D_MODEL, D_INNER, N_LAYERS, N_HEAD, D_K, D_V)
    pallas_params = prepare_params(params, N_HEAD, D_K, D_V)
    pos_table = sinusoid_pos_table(N_POSITION, D_MODEL)

    trg_seq = jax.random.normal(k_trg, (B, L_TRG, D_MODEL), jnp.float32)
    enc_output = jax.random.normal(k_enc, (B, L_SRC, D_MODEL), jnp.float32)

    # Decoder masks: causal + padding self-attn mask [B, Lq, Lq]; padding cross-attn mask [B, 1, Lsrc].
    trg_lens = jnp.array([L_TRG, L_TRG - 2])
    src_lens = jnp.array([L_SRC, L_SRC - 5])
    causal = jnp.arange(L_TRG)[None, :] <= jnp.arange(L_TRG)[:, None]
    trg_pad = jnp.arange(L_TRG)[None, :] < trg_lens[:, None]
    trg_mask = (causal[None, :, :] & trg_pad[:, None, :]).astype(jnp.int32)                     # [B, Lq, Lq]
    src_mask = (jnp.arange(L_SRC)[None, :] < src_lens[:, None])[:, None, :].astype(jnp.int32)   # [B, 1, Lsrc]

    fwd = jax.jit(functools.partial(transformer_decoder_forward,
                                    n_head=N_HEAD, d_k=D_K, d_v=D_V))
    out = jax.block_until_ready(fwd(trg_seq, trg_mask, enc_output, src_mask,
                                    pallas_params, pos_table))

    ref = reference_decoder(trg_seq, trg_mask, enc_output, src_mask, params, pos_table,
                            n_head=N_HEAD, d_k=D_K, d_v=D_V)
    ref = jax.block_until_ready(ref)

    assert out.shape == (B, L_TRG, D_MODEL)
    assert bool(jnp.allclose(out, ref, atol=2e-3, rtol=2e-3)), "Pallas decoder != reference"

    print("KERNEL_OK")
</pallas_src>

<mosaic_0001>
module attributes {stable_mosaic.version = 11 : i64} {
  func.func @_add_ln_kernel(%arg0: i32, %arg1: memref<8x256xf32, #tpu.memory_space<vmem>>, %arg2: memref<8x256xf32, #tpu.memory_space<vmem>>, %arg3: memref<1x256xf32, #tpu.memory_space<vmem>>, %arg4: memref<1x256xf32, #tpu.memory_space<vmem>>, %arg5: memref<8x256xf32, #tpu.memory_space<vmem>>) attributes {dimension_semantics = [#tpu.dimension_semantics<parallel>], iteration_bounds = array<i64: 2>, scalar_prefetch = 0 : i64, scratch_operands = 0 : i64, tpu.core_type = #tpu.core_type<tc>, window_params = [{transform_indices = @transform_0, window_bounds = array<i64: 8, 256>}, {transform_indices = @transform_1, window_bounds = array<i64: 8, 256>}, {pipeline_mode = #tpu.pipeline_mode<synchronous>, transform_indices = @transform_2, window_bounds = array<i64: 1, 256>}, {pipeline_mode = #tpu.pipeline_mode<synchronous>, transform_indices = @transform_3, window_bounds = array<i64: 1, 256>}, {transform_indices = @transform_4, window_bounds = array<i64: 8, 256>}]} {
    %c0 = arith.constant 0 : index
    %c0_0 = arith.constant 0 : index
    %0 = vector.load %arg1[%c0, %c0_0] : memref<8x256xf32, #tpu.memory_space<vmem>>, vector<8x256xf32>
    %c0_1 = arith.constant 0 : index
    %c0_2 = arith.constant 0 : index
    %1 = vector.load %arg2[%c0_1, %c0_2] : memref<8x256xf32, #tpu.memory_space<vmem>>, vector<8x256xf32>
    %2 = arith.addf %0, %1 : vector<8x256xf32>
    %cst = arith.constant dense<0.000000e+00> : vector<8xf32>
    %3 = vector.multi_reduction <add>, %2, %cst [1] : vector<8x256xf32> to vector<8xf32>
    %4 = vector.shape_cast %3 : vector<8xf32> to vector<8x1xf32>
    %cst_3 = arith.constant 2.560000e+02 : f32
    %5 = vector.broadcast %cst_3 : f32 to vector<8x1xf32>
    %6 = arith.divf %4, %5 : vector<8x1xf32>
    %7 = vector.broadcast %6 : vector<8x1xf32> to vector<8x256xf32>
    %8 = arith.subf %2, %7 : vector<8x256xf32>
    %9 = arith.mulf %8, %8 : vector<8x256xf32>
    %cst_4 = arith.constant dense<0.000000e+00> : vector<8xf32>
    %10 = vector.multi_reduction <add>, %9, %cst_4 [1] : vector<8x256xf32> to vector<8xf32>
    %11 = vector.shape_cast %10 : vector<8xf32> to vector<8x1xf32>
    %cst_5 = arith.constant 2.560000e+02 : f32
    %12 = vector.broadcast %cst_5 : f32 to vector<8x1xf32>
    %13 = arith.divf %11, %12 : vector<8x1xf32>
    %cst_6 = arith.constant 9.99999997E-7 : f32
    %14 = vector.broadcast %cst_6 : f32 to vector<8x1xf32>
    %15 = arith.addf %13, %14 : vector<8x1xf32>
    %16 = math.rsqrt %15 : vector<8x1xf32>
    %17 = vector.broadcast %16 : vector<8x1xf32> to vector<8x256xf32>
    %18 = arith.mulf %8, %17 : vector<8x256xf32>
    %c0_7 = arith.constant 0 : index
    %c0_8 = arith.constant 0 : index
    %19 = vector.load %arg3[%c0_7, %c0_8] : memref<1x256xf32, #tpu.memory_space<vmem>>, vector<1x256xf32>
    %20 = vector.broadcast %19 : vector<1x256xf32> to vector<8x256xf32>
    %21 = arith.mulf %18, %20 : vector<8x256xf32>
    %c0_9 = arith.constant 0 : index
    %c0_10 = arith.constant 0 : index
    %22 = vector.load %arg4[%c0_9, %c0_10] : memref<1x256xf32, #tpu.memory_space<vmem>>, vector<1x256xf32>
    %23 = vector.broadcast %22 : vector<1x256xf32> to vector<8x256xf32>
    %24 = arith.addf %21, %23 : vector<8x256xf32>
    %c0_11 = arith.constant 0 : index
    %c0_12 = arith.constant 0 : index
    %25 = vector.load %arg5[%c0_11, %c0_12] : memref<8x256xf32, #tpu.memory_space<vmem>>, vector<8x256xf32>
    tpu.vector_store %arg5[%c0_11, %c0_12], %24 {strides = array<i32>} : memref<8x256xf32, #tpu.memory_space<vmem>>, vector<8x256xf32>,
    return
  }
  func.func @transform_0(%arg0: i32) -> (i32, i32) {
    %c0_i32 = arith.constant 0 : i32
    %c0_i32_0 = arith.constant 0 : i32
    return %arg0, %c0_i32 : i32, i32
  }
  func.func @transform_1(%arg0: i32) -> (i32, i32) {
    %c0_i32 = arith.constant 0 : i32
    %c0_i32_0 = arith.constant 0 : i32
    return %arg0, %c0_i32 : i32, i32
  }
  func.func @transform_2(%arg0: i32) -> (i32, i32) {
    %c0_i32 = arith.constant 0 : i32
    %c0_i32_0 = arith.constant 0 : i32
    %c0_i32_1 = arith.constant 0 : i32
    return %c0_i32, %c0_i32_0 : i32, i32
  }
  func.func @transform_3(%arg0: i32) -> (i32, i32) {
    %c0_i32 = arith.constant 0 : i32
    %c0_i32_0 = arith.constant 0 : i32
    %c0_i32_1 = arith.constant 0 : i32
    return %c0_i32, %c0_i32_0 : i32, i32
  }
  func.func @transform_4(%arg0: i32) -> (i32, i32) {
    %c0_i32 = arith.constant 0 : i32
    %c0_i32_0 = arith.constant 0 : i32
    return %arg0, %c0_i32 : i32, i32
  }
}

module attributes {stable_mosaic.version = 11 : i64} {
  func.func @kernel(%arg0: i32, %arg1: i32, %arg2: i32, %arg3: memref<1x8x256xf32, #tpu.memory_space<vmem>>, %arg4: memref<1x256x128xf32, #tpu.memory_space<vmem>>, %arg5: memref<1x256x128xf32, #tpu.memory_space<vmem>>, %arg6: memref<1x256x128xf32, #tpu.memory_space<vmem>>, %arg7: memref<1x1x8x128xf32, #tpu.memory_space<vmem>>, %arg8: memref<1x1x8x128xf32, #tpu.memory_space<vmem>>, %arg9: memref<1x1x8x128xf32, #tpu.memory_space<vmem>>) attributes {dimension_semantics = [#tpu.dimension_semantics<parallel>, #tpu.dimension_semantics<parallel>, #tpu.dimension_semantics<parallel>], iteration_bounds = array<i64: 2, 2, 1>, scalar_prefetch = 0 : i64, scratch_operands = 0 : i64, tpu.core_type = #tpu.core_type<tc>, window_params = [{transform_indices = @transform_0, window_bounds = array<i64: 1, 8, 256>}, {transform_indices = @transform_1, window_bounds = array<i64: 1, 256, 128>}, {transform_indices = @transform_2, window_bounds = array<i64: 1, 256, 128>}, {transform_indices = @transform_3, window_bounds = array<i64: 1, 256, 128>}, {transform_indices = @transform_4, window_bounds = array<i64: 1, 1, 8, 128>}, {transform_indices = @transform_5, window_bounds = array<i64: 1, 1, 8, 128>}, {transform_indices = @transform_6, window_bounds = array<i64: 1, 1, 8, 128>}]} {
    %c0 = arith.constant 0 : index
    %c0_0 = arith.constant 0 : index
    %c0_1 = arith.constant 0 : index
    %0 = vector.load %arg3[%c0, %c0_0, %c0_1] : memref<1x8x256xf32, #tpu.memory_space<vmem>>, vector<1x8x256xf32>
    %1 = vector.shape_cast %0 : vector<1x8x256xf32> to vector<8x256xf32>
    %c0_2 = arith.constant 0 : index
    %c0_3 = arith.constant 0 : index
    %c0_4 = arith.constant 0 : index
    %2 = vector.load %arg4[%c0_2, %c0_3, %c0_4] : memref<1x256x128xf32, #tpu.memory_space<vmem>>, vector<1x256x128xf32>
    %3 = vector.shape_cast %2 : vector<1x256x128xf32> to vector<256x128xf32>
    %cst = arith.constant dense<0.000000e+00> : vector<8x128xf32>
    %4 = tpu.matmul %1, %3, %cst {dimension_numbers = #tpu.dot_dimension_numbers<[1], [0], [0], [1], [0, 0, 1, 1], [], []>} : vector<8x256xf32>, vector<256x128xf32>, vector<8x128xf32> -> vector<8x128xf32>
    %c0_5 = arith.constant 0 : index
    %c0_6 = arith.constant 0 : index
    %c0_7 = arith.constant 0 : index
    %c0_8 = arith.constant 0 : index
    %5 = vector.load %arg7[%c0_5, %c0_6, %c0_7, %c0_8] : memref<1x1x8x128xf32, #tpu.memory_space<vmem>>, vector<1x1x8x128xf32>
    %6 = vector.shape_cast %5 : vector<1x1x8x128xf32> to vector<8x128xf32>
    %7 = vector.shape_cast %4 : vector<8x128xf32> to vector<1x1x8x128xf32>
    tpu.vector_store %arg7[%c0_5, %c0_6, %c0_7, %c0_8], %7 {strides = array<i32>} : memref<1x1x8x128xf32, #tpu.memory_space<vmem>>, vector<1x1x8x128xf32>,
    %c0_9 = arith.constant 0 : index
    %c0_10 = arith.constant 0 : index
    %c0_11 = arith.constant 0 : index
    %8 = vector.load %arg5[%c0_9, %c0_10, %c0_11] : memref<1x256x128xf32, #tpu.memory_space<vmem>>, vector<1x256x128xf32>
    %9 = vector.shape_cast %8 : vector<1x256x128xf32> to vector<256x128xf32>
    %cst_12 = arith.constant dense<0.000000e+00> : vector<8x128xf32>
    %10 = tpu.matmul %1, %9, %cst_12 {dimension_numbers = #tpu.dot_dimension_numbers<[1], [0], [0], [1], [0, 0, 1, 1], [], []>} : vector<8x256xf32>, vector<256x128xf32>, vector<8x128xf32> -> vector<8x128xf32>
    %c0_13 = arith.constant 0 : index
    %c0_14 = arith.constant 0 : index
    %c0_15 = arith.constant 0 : index
    %c0_16 = arith.constant 0 : index
    %11 = vector.load %arg8[%c0_13, %c0_14, %c0_15, %c0_16] : memref<1x1x8x128xf32, #tpu.memory_space<vmem>>, vector<1x1x8x128xf32>
    %12 = vector.shape_cast %11 : vector<1x1x8x128xf32> to vector<8x128xf32>
    %13 = vector.shape_cast %10 : vector<8x128xf32> to vector<1x1x8x128xf32>
    tpu.vector_store %arg8[%c0_13, %c0_14, %c0_15, %c0_16], %13 {strides = array<i32>} : memref<1x1x8x128xf32, #tpu.memory_space<vmem>>, vector<1x1x8x128xf32>,
    %c0_17 = arith.constant 0 : index
    %c0_18 = arith.constant 0 : index
    %c0_19 = arith.constant 0 : index
    %14 = vector.load %arg6[%c0_17, %c0_18, %c0_19] : memref<1x256x128xf32, #tpu.memory_space<vmem>>, vector<1x256x128xf32>
    %15 = vector.shape_cast %14 : vector<1x256x128xf32> to vector<256x128xf32>
    %cst_20 = arith.constant dense<0.000000e+00> : vector<8x128xf32>
    %16 = tpu.matmul %1, %15, %cst_20 {dimension_numbers = #tpu.dot_dimension_numbers<[1], [0], [0], [1], [0, 0, 1, 1], [], []>} : vector<8x256xf32>, vector<256x128xf32>, vector<8x128xf32> -> vector<8x128xf32>
    %c0_21 = arith.constant 0 : index
    %c0_22 = arith.constant 0 : index
    %c0_23 = arith.constant 0 : index
    %c0_24 = arith.constant 0 : index
    %17 = vector.load %arg9[%c0_21, %c0_22, %c0_23, %c0_24] : memref<1x1x8x128xf32, #tpu.memory_space<vmem>>, vector<1x1x8x128xf32>
    %18 = vector.shape_cast %17 : vector<1x1x8x128xf32> to vector<8x128xf32>
    %19 = vector.shape_cast %16 : vector<8x128xf32> to vector<1x1x8x128xf32>
    tpu.vector_store %arg9[%c0_21, %c0_22, %c0_23, %c0_24], %19 {strides = array<i32>} : memref<1x1x8x128xf32, #tpu.memory_space<vmem>>, vector<1x1x8x128xf32>,
    return
  }
  func.func @transform_0(%arg0: i32, %arg1: i32, %arg2: i32) -> (i32, i32, i32) {
    %c0_i32 = arith.constant 0 : i32
    %c0_i32_0 = arith.constant 0 : i32
    return %arg0, %arg2, %c0_i32 : i32, i32, i32
  }
  func.func @transform_1(%arg0: i32, %arg1: i32, %arg2: i32) -> (i32, i32, i32) {
    %c0_i32 = arith.constant 0 : i32
    %c0_i32_0 = arith.constant 0 : i32
    %c0_i32_1 = arith.constant 0 : i32
    return %arg1, %c0_i32, %c0_i32_0 : i32, i32, i32
  }
  func.func @transform_2(%arg0: i32, %arg1: i32, %arg2: i32) -> (i32, i32, i32) {
    %c0_i32 = arith.constant 0 : i32
    %c0_i32_0 = arith.constant 0 : i32
    %c0_i32_1 = arith.constant 0 : i32
    return %arg1, %c0_i32, %c0_i32_0 : i32, i32, i32
  }
  func.func @transform_3(%arg0: i32, %arg1: i32, %arg2: i32) -> (i32, i32, i32) {
    %c0_i32 = arith.constant 0 : i32
    %c0_i32_0 = arith.constant 0 : i32
    %c0_i32_1 = arith.constant 0 : i32
    return %arg1, %c0_i32, %c0_i32_0 : i32, i32, i32
  }
  func.func @transform_4(%arg0: i32, %arg1: i32, %arg2: i32) -> (i32, i32, i32, i32) {
    %c0_i32 = arith.constant 0 : i32
    %c0_i32_0 = arith.constant 0 : i32
    return %arg0, %arg1, %arg2, %c0_i32 : i32, i32, i32, i32
  }
  func.func @transform_5(%arg0: i32, %arg1: i32, %arg2: i32) -> (i32, i32, i32, i32) {
    %c0_i32 = arith.constant 0 : i32
    %c0_i32_0 = arith.constant 0 : i32
    return %arg0, %arg1, %arg2, %c0_i32 : i32, i32, i32, i32
  }
  func.func @transform_6(%arg0: i32, %arg1: i32, %arg2: i32) -> (i32, i32, i32, i32) {
    %c0_i32 = arith.constant 0 : i32
    %c0_i32_0 = arith.constant 0 : i32
    return %arg0, %arg1, %arg2, %c0_i32 : i32, i32, i32, i32
  }
}

module attributes {stable_mosaic.version = 11 : i64} {
  func.func @_out_proj_ln_kernel(%arg0: i32, %arg1: i32, %arg2: i32, %arg3: memref<1x1x8x128xf32, #tpu.memory_space<vmem>>, %arg4: memref<1x128x256xf32, #tpu.memory_space<vmem>>, %arg5: memref<1x8x256xf32, #tpu.memory_space<vmem>>, %arg6: memref<1x256xf32, #tpu.memory_space<vmem>>, %arg7: memref<1x256xf32, #tpu.memory_space<vmem>>, %arg8: memref<1x8x256xf32, #tpu.memory_space<vmem>>, %arg9: memref<8x256xf32, #tpu.memory_space<vmem>>) attributes {dimension_semantics = [#tpu.dimension_semantics<parallel>, #tpu.dimension_semantics<parallel>, #tpu.dimension_semantics<arbitrary>], iteration_bounds = array<i64: 2, 1, 2>, scalar_prefetch = 0 : i64, scratch_operands = 1 : i64, tpu.core_type = #tpu.core_type<tc>, window_params = [{transform_indices = @transform_0, window_bounds = array<i64: 1, 1, 8, 128>}, {transform_indices = @transform_1, window_bounds = array<i64: 1, 128, 256>}, {transform_indices = @transform_2, window_bounds = array<i64: 1, 8, 256>}, {pipeline_mode = #tpu.pipeline_mode<synchronous>, transform_indices = @transform_3, window_bounds = array<i64: 1, 256>}, {pipeline_mode = #tpu.pipeline_mode<synchronous>, transform_indices = @transform_4, window_bounds = array<i64: 1, 256>}, {transform_indices = @transform_5, window_bounds = array<i64: 1, 8, 256>}]} {
    %c0_i32 = arith.constant 0 : i32
    %0 = arith.cmpi eq, %arg2, %c0_i32 : i32
    %1 = arith.extui %0 : i1 to i32
    %c0_i32_0 = arith.constant 0 : i32
    %2 = arith.cmpi ne, %1, %c0_i32_0 : i32
    scf.if %2 {
      %c0_12 = arith.constant 0 : index
      %c0_13 = arith.constant 0 : index
      %c0_14 = arith.constant 0 : index
      %14 = vector.load %arg5[%c0_12, %c0_13, %c0_14] : memref<1x8x256xf32, #tpu.memory_space<vmem>>, vector<1x8x256xf32>
      %15 = vector.shape_cast %14 : vector<1x8x256xf32> to vector<8x256xf32>
      %c0_15 = arith.constant 0 : index
      %c0_16 = arith.constant 0 : index
      %16 = vector.load %arg9[%c0_15, %c0_16] : memref<8x256xf32, #tpu.memory_space<vmem>>, vector<8x256xf32>
      tpu.vector_store %arg9[%c0_15, %c0_16], %15 {strides = array<i32>} : memref<8x256xf32, #tpu.memory_space<vmem>>, vector<8x256xf32>,
    } else {
    }
    %c0 = arith.constant 0 : index
    %c0_1 = arith.constant 0 : index
    %3 = vector.load %arg9[%c0, %c0_1] : memref<8x256xf32, #tpu.memory_space<vmem>>, vector<8x256xf32>
    %c0_2 = arith.constant 0 : index
    %c0_3 = arith.constant 0 : index
    %c0_4 = arith.constant 0 : index
    %c0_5 = arith.constant 0 : index
    %4 = vector.load %arg3[%c0_2, %c0_3, %c0_4, %c0_5] : memref<1x1x8x128xf32, #tpu.memory_space<vmem>>, vector<1x1x8x128xf32>
    %5 = vector.shape_cast %4 : vector<1x1x8x128xf32> to vector<8x128xf32>
    %c0_6 = arith.constant 0 : index
    %c0_7 = arith.constant 0 : index
    %c0_8 = arith.constant 0 : index
    %6 = vector.load %arg4[%c0_6, %c0_7, %c0_8] : memref<1x128x256xf32, #tpu.memory_space<vmem>>, vector<1x128x256xf32>
    %7 = vector.shape_cast %6 : vector<1x128x256xf32> to vector<128x256xf32>
    %cst = arith.constant dense<0.000000e+00> : vector<8x256xf32>
    %8 = tpu.matmul %5, %7, %cst {dimension_numbers = #tpu.dot_dimension_numbers<[1], [0], [0], [1], [0, 0, 1, 1], [], []>} : vector<8x128xf32>, vector<128x256xf32>, vector<8x256xf32> -> vector<8x256xf32>
    %9 = arith.addf %3, %8 : vector<8x256xf32>
    %c0_9 = arith.constant 0 : index
    %c0_10 = arith.constant 0 : index
    %10 = vector.load %arg9[%c0_9, %c0_10] : memref<8x256xf32, #tpu.memory_space<vmem>>, vector<8x256xf32>
    tpu.vector_store %arg9[%c0_9, %c0_10], %9 {strides = array<i32>} : memref<8x256xf32, #tpu.memory_space<vmem>>, vector<8x256xf32>,
    %c1_i32 = arith.constant 1 : i32
    %11 = arith.cmpi eq, %arg2, %c1_i32 : i32
    %12 = arith.extui %11 : i1 to i32
    %c0_i32_11 = arith.constant 0 : i32
    %13 = arith.cmpi ne, %12, %c0_i32_11 : i32
    scf.if %13 {
      %c0_12 = arith.constant 0 : index
      %c0_13 = arith.constant 0 : index
      %14 = vector.load %arg9[%c0_12, %c0_13] : memref<8x256xf32, #tpu.memory_space<vmem>>, vector<8x256xf32>
      %cst_14 = arith.constant dense<0.000000e+00> : vector<8xf32>
      %15 = vector.multi_reduction <add>, %14, %cst_14 [1] : vector<8x256xf32> to vector<8xf32>
      %16 = vector.shape_cast %15 : vector<8xf32> to vector<8x1xf32>
      %cst_15 = arith.constant 2.560000e+02 : f32
      %17 = vector.broadcast %cst_15 : f32 to vector<8x1xf32>
      %18 = arith.divf %16, %17 : vector<8x1xf32>
      %19 = vector.broadcast %18 : vector<8x1xf32> to vector<8x256xf32>
      %20 = arith.subf %14, %19 : vector<8x256xf32>
      %21 = arith.mulf %20, %20 : vector<8x256xf32>
      %cst_16 = arith.constant dense<0.000000e+00> : vector<8xf32>
      %22 = vector.multi_reduction <add>, %21, %cst_16 [1] : vector<8x256xf32> to vector<8xf32>
      %23 = vector.shape_cast %22 : vector<8xf32> to vector<8x1xf32>
      %cst_17 = arith.constant 2.560000e+02 : f32
      %24 = vector.broadcast %cst_17 : f32 to vector<8x1xf32>
      %25 = arith.divf %23, %24 : vector<8x1xf32>
      %cst_18 = arith.constant 9.99999997E-7 : f32
      %26 = vector.broadcast %cst_18 : f32 to vector<8x1xf32>
      %27 = arith.addf %25, %26 : vector<8x1xf32>
      %28 = math.rsqrt %27 : vector<8x1xf32>
      %29 = vector.broadcast %28 : vector<8x1xf32> to vector<8x256xf32>
      %30 = arith.mulf %20, %29 : vector<8x256xf32>
      %c0_19 = arith.constant 0 : index
      %c0_20 = arith.constant 0 : index
      %31 = vector.load %arg6[%c0_19, %c0_20] : memref<1x256xf32, #tpu.memory_space<vmem>>, vector<1x256xf32>
      %32 = vector.broadcast %31 : vector<1x256xf32> to vector<8x256xf32>
      %33 = arith.mulf %30, %32 : vector<8x256xf32>
      %c0_21 = arith.constant 0 : index
      %c0_22 = arith.constant 0 : index
      %34 = vector.load %arg7[%c0_21, %c0_22] : memref<1x256xf32, #tpu.memory_space<vmem>>, vector<1x256xf32>
      %35 = vector.broadcast %34 : vector<1x256xf32> to vector<8x256xf32>
      %36 = arith.addf %33, %35 : vector<8x256xf32>
      %c0_23 = arith.constant 0 : index
      %c0_24 = arith.constant 0 : index
      %c0_25 = arith.constant 0 : index
      %37 = vector.load %arg8[%c0_23, %c0_24, %c0_25] : memref<1x8x256xf32, #tpu.memory_space<vmem>>, vector<1x8x256xf32>
      %38 = vector.shape_cast %37 : vector<1x8x256xf32> to vector<8x256xf32>
      %39 = vector.shape_cast %36 : vector<8x256xf32> to vector<1x8x256xf32>
      tpu.vector_store %arg8[%c0_23, %c0_24, %c0_25], %39 {strides = array<i32>} : memref<1x8x256xf32, #tpu.memory_space<vmem>>, vector<1x8x256xf32>,
    } else {
    }
    return
  }
  func.func @transform_0(%arg0: i32, %arg1: i32, %arg2: i32) -> (i32, i32, i32, i32) {
    %c0_i32 = arith.constant 0 : i32
    %c0_i32_0 = arith.constant 0 : i32
    return %arg0, %arg2, %arg1, %c0_i32 : i32, i32, i32, i32
  }
  func.func @transform_1(%arg0: i32, %arg1: i32, %arg2: i32) -> (i32, i32, i32) {
    %c0_i32 = arith.constant 0 : i32
    %c0_i32_0 = arith.constant 0 : i32
    %c0_i32_1 = arith.constant 0 : i32
    return %arg2, %c0_i32, %c0_i32_0 : i32, i32, i32
  }
  func.func @transform_2(%arg0: i32, %arg1: i32, %arg2: i32) -> (i32, i32, i32) {
    %c0_i32 = arith.constant 0 : i32
    %c0_i32_0 = arith.constant 0 : i32
    return %arg0, %arg1, %c0_i32 : i32, i32, i32
  }
  func.func @transform_3(%arg0: i32, %arg1: i32, %arg2: i32) -> (i32, i32) {
    %c0_i32 = arith.constant 0 : i32
    %c0_i32_0 = arith.constant 0 : i32
    %c0_i32_1 = arith.constant 0 : i32
    return %c0_i32, %c0_i32_0 : i32, i32
  }
  func.func @transform_4(%arg0: i32, %arg1: i32, %arg2: i32) -> (i32, i32) {
    %c0_i32 = arith.constant 0 : i32
    %c0_i32_0 = arith.constant 0 : i32
    %c0_i32_1 = arith.constant 0 : i32
    return %c0_i32, %c0_i32_0 : i32, i32
  }
  func.func @transform_5(%arg0: i32, %arg1: i32, %arg2: i32) -> (i32, i32, i32) {
    %c0_i32 = arith.constant 0 : i32
    %c0_i32_0 = arith.constant 0 : i32
    return %arg0, %arg1, %c0_i32 : i32, i32, i32
  }
}

module attributes {stable_mosaic.version = 11 : i64} {
  func.func @_flash_attn_kernel(%arg0: i32, %arg1: i32, %arg2: i32, %arg3: memref<1x2x8x128xf32, #tpu.memory_space<vmem>>, %arg4: memref<1x2x8x128xf32, #tpu.memory_space<vmem>>, %arg5: memref<1x2x8x128xf32, #tpu.memory_space<vmem>>, %arg6: memref<1x8x8xf32, #tpu.memory_space<vmem>>, %arg7: memref<1x2x8x128xf32, #tpu.memory_space<vmem>>, %arg8: memref<2x8x1xf32, #tpu.memory_space<vmem>>, %arg9: memref<2x8x1xf32, #tpu.memory_space<vmem>>, %arg10: memref<2x8x128xf32, #tpu.memory_space<vmem>>) attributes {dimension_semantics = [#tpu.dimension_semantics<parallel>, #tpu.dimension_semantics<parallel>, #tpu.dimension_semantics<arbitrary>], iteration_bounds = array<i64: 2, 1, 1>, scalar_prefetch = 0 : i64, scratch_operands = 3 : i64, tpu.core_type = #tpu.core_type<tc>, window_params = [{transform_indices = @transform_0, window_bounds = array<i64: 1, 2, 8, 128>}, {transform_indices = @transform_1, window_bounds = array<i64: 1, 2, 8, 128>}, {transform_indices = @transform_2, window_bounds = array<i64: 1, 2, 8, 128>}, {transform_indices = @transform_3, window_bounds = array<i64: 1, 8, 8>}, {transform_indices = @transform_4, window_bounds = array<i64: 1, 2, 8, 128>}]} {
    %c0_i32 = arith.constant 0 : i32
    %0 = arith.cmpi eq, %arg2, %c0_i32 : i32
    %1 = arith.extui %0 : i1 to i32
    %c0_i32_0 = arith.constant 0 : i32
    %2 = arith.cmpi ne, %1, %c0_i32_0 : i32
    scf.if %2 {
      %cst_39 = arith.constant 0xFF800000 : f32
      %42 = vector.broadcast %cst_39 : f32 to vector<2x8x1xf32>
      %c0_40 = arith.constant 0 : index
      %c0_41 = arith.constant 0 : index
      %c0_42 = arith.constant 0 : index
      %43 = vector.load %arg8[%c0_40, %c0_41, %c0_42] : memref<2x8x1xf32, #tpu.memory_space<vmem>>, vector<2x8x1xf32>
      tpu.vector_store %arg8[%c0_40, %c0_41, %c0_42], %42 {strides = array<i32>} : memref<2x8x1xf32, #tpu.memory_space<vmem>>, vector<2x8x1xf32>,
      %cst_43 = arith.constant 0.000000e+00 : f32
      %44 = vector.broadcast %cst_43 : f32 to vector<2x8x1xf32>
      %c0_44 = arith.constant 0 : index
      %c0_45 = arith.constant 0 : index
      %c0_46 = arith.constant 0 : index
      %45 = vector.load %arg9[%c0_44, %c0_45, %c0_46] : memref<2x8x1xf32, #tpu.memory_space<vmem>>, vector<2x8x1xf32>
      tpu.vector_store %arg9[%c0_44, %c0_45, %c0_46], %44 {strides = array<i32>} : memref<2x8x1xf32, #tpu.memory_space<vmem>>, vector<2x8x1xf32>,
      %cst_47 = arith.constant 0.000000e+00 : f32
      %46 = vector.broadcast %cst_47 : f32 to vector<2x8x128xf32>
      %c0_48 = arith.constant 0 : index
      %c0_49 = arith.constant 0 : index
      %c0_50 = arith.constant 0 : index
      %47 = vector.load %arg10[%c0_48, %c0_49, %c0_50] : memref<2x8x128xf32, #tpu.memory_space<vmem>>, vector<2x8x128xf32>
      tpu.vector_store %arg10[%c0_48, %c0_49, %c0_50], %46 {strides = array<i32>} : memref<2x8x128xf32, #tpu.memory_space<vmem>>, vector<2x8x128xf32>,
    } else {
    }
    %c0 = arith.constant 0 : index
    %c0_1 = arith.constant 0 : index
    %c0_2 = arith.constant 0 : index
    %c0_3 = arith.constant 0 : index
    %3 = vector.load %arg3[%c0, %c0_1, %c0_2, %c0_3] : memref<1x2x8x128xf32, #tpu.memory_space<vmem>>, vector<1x2x8x128xf32>
    %4 = vector.shape_cast %3 : vector<1x2x8x128xf32> to vector<2x8x128xf32>
    %cst = arith.constant 0.0883883461 : f32
    %5 = vector.broadcast %cst : f32 to vector<2x8x128xf32>
    %6 = arith.mulf %4, %5 : vector<2x8x128xf32>
    %c0_4 = arith.constant 0 : index
    %c0_5 = arith.constant 0 : index
    %c0_6 = arith.constant 0 : index
    %c0_7 = arith.constant 0 : index
    %7 = vector.load %arg4[%c0_4, %c0_5, %c0_6, %c0_7] : memref<1x2x8x128xf32, #tpu.memory_space<vmem>>, vector<1x2x8x128xf32>
    %8 = vector.shape_cast %7 : vector<1x2x8x128xf32> to vector<2x8x128xf32>
    %c0_8 = arith.constant 0 : index
    %c0_9 = arith.constant 0 : index
    %c0_10 = arith.constant 0 : index
    %c0_11 = arith.constant 0 : index
    %9 = vector.load %arg5[%c0_8, %c0_9, %c0_10, %c0_11] : memref<1x2x8x128xf32, #tpu.memory_space<vmem>>, vector<1x2x8x128xf32>
    %10 = vector.shape_cast %9 : vector<1x2x8x128xf32> to vector<2x8x128xf32>
    "tpu.trace_start"() <{level = 10 : i32, message = "hqd,hkd->hqk"}> : () -> ()
    %cst_12 = arith.constant dense<0.000000e+00> : vector<2x8x8xf32>
    %11 = tpu.matmul %6, %8, %cst_12 {dimension_numbers = #tpu.dot_dimension_numbers<[2], [2], [1], [1], [0, 0, 0, 1, 1, 1], [0], [0]>} : vector<2x8x128xf32>, vector<2x8x128xf32>, vector<2x8x8xf32> -> vector<2x8x8xf32>
    "tpu.trace_stop"() : () -> ()
    %c0_13 = arith.constant 0 : index
    %c0_14 = arith.constant 0 : index
    %c0_15 = arith.constant 0 : index
    %12 = vector.load %arg6[%c0_13, %c0_14, %c0_15] : memref<1x8x8xf32, #tpu.memory_space<vmem>>, vector<1x8x8xf32>
    %13 = vector.shape_cast %12 : vector<1x8x8xf32> to vector<8x8xf32>
    %14 = vector.shape_cast %13 : vector<8x8xf32> to vector<1x8x8xf32>
    %15 = vector.broadcast %14 : vector<1x8x8xf32> to vector<2x8x8xf32>
    %16 = arith.addf %11, %15 : vector<2x8x8xf32>
    %c0_16 = arith.constant 0 : index
    %c0_17 = arith.constant 0 : index
    %c0_18 = arith.constant 0 : index
    %17 = vector.load %arg8[%c0_16, %c0_17, %c0_18] : memref<2x8x1xf32, #tpu.memory_space<vmem>>, vector<2x8x1xf32>
    %cst_19 = arith.constant dense<0xFF800000> : vector<2x8xf32>
    %18 = vector.multi_reduction <maximumf>, %16, %cst_19 [2] : vector<2x8x8xf32> to vector<2x8xf32>
    %19 = vector.shape_cast %18 : vector<2x8xf32> to vector<2x8x1xf32>
    %20 = arith.maximumf %17, %19 : vector<2x8x1xf32>
    %21 = arith.subf %17, %20 : vector<2x8x1xf32>
    %22 = math.exp %21 : vector<2x8x1xf32>
    %23 = vector.broadcast %20 : vector<2x8x1xf32> to vector<2x8x8xf32>
    %24 = arith.subf %16, %23 : vector<2x8x8xf32>
    %25 = math.exp %24 : vector<2x8x8xf32>
    %c0_20 = arith.constant 0 : index
    %c0_21 = arith.constant 0 : index
    %c0_22 = arith.constant 0 : index
    %26 = vector.load %arg9[%c0_20, %c0_21, %c0_22] : memref<2x8x1xf32, #tpu.memory_space<vmem>>, vector<2x8x1xf32>
    %27 = arith.mulf %22, %26 : vector<2x8x1xf32>
    %cst_23 = arith.constant dense<0.000000e+00> : vector<2x8xf32>
    %28 = vector.multi_reduction <add>, %25, %cst_23 [2] : vector<2x8x8xf32> to vector<2x8xf32>
    %29 = vector.shape_cast %28 : vector<2x8xf32> to vector<2x8x1xf32>
    %30 = arith.addf %27, %29 : vector<2x8x1xf32>
    %c0_24 = arith.constant 0 : index
    %c0_25 = arith.constant 0 : index
    %c0_26 = arith.constant 0 : index
    %31 = vector.load %arg9[%c0_24, %c0_25, %c0_26] : memref<2x8x1xf32, #tpu.memory_space<vmem>>, vector<2x8x1xf32>
    tpu.vector_store %arg9[%c0_24, %c0_25, %c0_26], %30 {strides = array<i32>} : memref<2x8x1xf32, #tpu.memory_space<vmem>>, vector<2x8x1xf32>,
    %c0_27 = arith.constant 0 : index
    %c0_28 = arith.constant 0 : index
    %c0_29 = arith.constant 0 : index
    %32 = vector.load %arg10[%c0_27, %c0_28, %c0_29] : memref<2x8x128xf32, #tpu.memory_space<vmem>>, vector<2x8x128xf32>
    %33 = vector.broadcast %22 : vector<2x8x1xf32> to vector<2x8x128xf32>
    %34 = arith.mulf %33, %32 : vector<2x8x128xf32>
    "tpu.trace_start"() <{level = 10 : i32, message = "hqk,hkd->hqd"}> : () -> ()
    %cst_30 = arith.constant dense<0.000000e+00> : vector<2x8x128xf32>
    %35 = tpu.matmul %25, %10, %cst_30 {dimension_numbers = #tpu.dot_dimension_numbers<[2], [1], [1], [2], [0, 0, 0, 1, 1, 2], [0], [0]>} : vector<2x8x8xf32>, vector<2x8x128xf32>, vector<2x8x128xf32> -> vector<2x8x128xf32>
    "tpu.trace_stop"() : () -> ()
    %36 = arith.addf %34, %35 : vector<2x8x128xf32>
    %c0_31 = arith.constant 0 : index
    %c0_32 = arith.constant 0 : index
    %c0_33 = arith.constant 0 : index
    %37 = vector.load %arg10[%c0_31, %c0_32, %c0_33] : memref<2x8x128xf32, #tpu.memory_space<vmem>>, vector<2x8x128xf32>
    tpu.vector_store %arg10[%c0_31, %c0_32, %c0_33], %36 {strides = array<i32>} : memref<2x8x128xf32, #tpu.memory_space<vmem>>, vector<2x8x128xf32>,
    %c0_34 = arith.constant 0 : index
    %c0_35 = arith.constant 0 : index
    %c0_36 = arith.constant 0 : index
    %38 = vector.load %arg8[%c0_34, %c0_35, %c0_36] : memref<2x8x1xf32, #tpu.memory_space<vmem>>, vector<2x8x1xf32>
    tpu.vector_store %arg8[%c0_34, %c0_35, %c0_36], %20 {strides = array<i32>} : memref<2x8x1xf32, #tpu.memory_space<vmem>>, vector<2x8x1xf32>,
    %c0_i32_37 = arith.constant 0 : i32
    %39 = arith.cmpi eq, %arg2, %c0_i32_37 : i32
    %40 = arith.extui %39 : i1 to i32
    %c0_i32_38 = arith.constant 0 : i32
    %41 = arith.cmpi ne, %40, %c0_i32_38 : i32
    scf.if %41 {
      %c0_39 = arith.constant 0 : index
      %c0_40 = arith.constant 0 : index
      %c0_41 = arith.constant 0 : index
      %42 = vector.load %arg9[%c0_39, %c0_40, %c0_41] : memref<2x8x1xf32, #tpu.memory_space<vmem>>, vector<2x8x1xf32>
      %43 = tpu.reciprocal %42 : vector<2x8x1xf32> -> vector<2x8x1xf32>
      %c0_42 = arith.constant 0 : index
      %c0_43 = arith.constant 0 : index
      %c0_44 = arith.constant 0 : index
      %44 = vector.load %arg10[%c0_42, %c0_43, %c0_44] : memref<2x8x128xf32, #tpu.memory_space<vmem>>, vector<2x8x128xf32>
      %45 = vector.broadcast %43 : vector<2x8x1xf32> to vector<2x8x128xf32>
      %46 = arith.mulf %44, %45 : vector<2x8x128xf32>
      %c0_45 = arith.constant 0 : index
      %c0_46 = arith.constant 0 : index
      %c0_47 = arith.constant 0 : index
      %c0_48 = arith.constant 0 : index
      %47 = vector.load %arg7[%c0_45, %c0_46, %c0_47, %c0_48] : memref<1x2x8x128xf32, #tpu.memory_space<vmem>>, vector<1x2x8x128xf32>
      %48 = vector.shape_cast %47 : vector<1x2x8x128xf32> to vector<2x8x128xf32>
      %49 = vector.shape_cast %46 : vector<2x8x128xf32> to vector<1x2x8x128xf32>
      tpu.vector_store %arg7[%c0_45, %c0_46, %c0_47, %c0_48], %49 {strides = array<i32>} : memref<1x2x8x128xf32, #tpu.memory_space<vmem>>, vector<1x2x8x128xf32>,
    } else {
    }
    return
  }
  func.func @transform_0(%arg0: i32, %arg1: i32, %arg2: i32) -> (i32, i32, i32, i32) {
    %c0_i32 = arith.constant 0 : i32
    %c0_i32_0 = arith.constant 0 : i32
    %c0_i32_1 = arith.constant 0 : i32
    return %arg0, %c0_i32, %arg1, %c0_i32_0 : i32, i32, i32, i32
  }
  func.func @transform_1(%arg0: i32, %arg1: i32, %arg2: i32) -> (i32, i32, i32, i32) {
    %c0_i32 = arith.constant 0 : i32
    %c0_i32_0 = arith.constant 0 : i32
    %c0_i32_1 = arith.constant 0 : i32
    return %arg0, %c0_i32, %arg2, %c0_i32_0 : i32, i32, i32, i32
  }
  func.func @transform_2(%arg0: i32, %arg1: i32, %arg2: i32) -> (i32, i32, i32, i32) {
    %c0_i32 = arith.constant 0 : i32
    %c0_i32_0 = arith.constant 0 : i32
    %c0_i32_1 = arith.constant 0 : i32
    return %arg0, %c0_i32, %arg2, %c0_i32_0 : i32, i32, i32, i32
  }
  func.func @transform_3(%arg0: i32, %arg1: i32, %arg2: i32) -> (i32, i32, i32) {
    %c0_i32 = arith.constant 0 : i32
    return %arg0, %arg1, %arg2 : i32, i32, i32
  }
  func.func @transform_4(%arg0: i32, %arg1: i32, %arg2: i32) -> (i32, i32, i32, i32) {
    %c0_i32 = arith.constant 0 : i32
    %c0_i32_0 = arith.constant 0 : i32
    %c0_i32_1 = arith.constant 0 : i32
    return %arg0, %c0_i32, %arg1, %c0_i32_0 : i32, i32, i32, i32
  }
}

module attributes {stable_mosaic.version = 11 : i64} {
  func.func @kernel(%arg0: i32, %arg1: i32, %arg2: i32, %arg3: memref<1x8x256xf32, #tpu.memory_space<vmem>>, %arg4: memref<1x256x128xf32, #tpu.memory_space<vmem>>, %arg5: memref<1x1x8x128xf32, #tpu.memory_space<vmem>>) attributes {dimension_semantics = [#tpu.dimension_semantics<parallel>, #tpu.dimension_semantics<parallel>, #tpu.dimension_semantics<parallel>], iteration_bounds = array<i64: 2, 2, 1>, scalar_prefetch = 0 : i64, scratch_operands = 0 : i64, tpu.core_type = #tpu.core_type<tc>, window_params = [{transform_indices = @transform_0, window_bounds = array<i64: 1, 8, 256>}, {transform_indices = @transform_1, window_bounds = array<i64: 1, 256, 128>}, {transform_indices = @transform_2, window_bounds = array<i64: 1, 1, 8, 128>}]} {
    %c0 = arith.constant 0 : index
    %c0_0 = arith.constant 0 : index
    %c0_1 = arith.constant 0 : index
    %0 = vector.load %arg3[%c0, %c0_0, %c0_1] : memref<1x8x256xf32, #tpu.memory_space<vmem>>, vector<1x8x256xf32>
    %1 = vector.shape_cast %0 : vector<1x8x256xf32> to vector<8x256xf32>
    %c0_2 = arith.constant 0 : index
    %c0_3 = arith.constant 0 : index
    %c0_4 = arith.constant 0 : index
    %2 = vector.load %arg4[%c0_2, %c0_3, %c0_4] : memref<1x256x128xf32, #tpu.memory_space<vmem>>, vector<1x256x128xf32>
    %3 = vector.shape_cast %2 : vector<1x256x128xf32> to vector<256x128xf32>
    %cst = arith.constant dense<0.000000e+00> : vector<8x128xf32>
    %4 = tpu.matmul %1, %3, %cst {dimension_numbers = #tpu.dot_dimension_numbers<[1], [0], [0], [1], [0, 0, 1, 1], [], []>} : vector<8x256xf32>, vector<256x128xf32>, vector<8x128xf32> -> vector<8x128xf32>
    %c0_5 = arith.constant 0 : index
    %c0_6 = arith.constant 0 : index
    %c0_7 = arith.constant 0 : index
    %c0_8 = arith.constant 0 : index
    %5 = vector.load %arg5[%c0_5, %c0_6, %c0_7, %c0_8] : memref<1x1x8x128xf32, #tpu.memory_space<vmem>>, vector<1x1x8x128xf32>
    %6 = vector.shape_cast %5 : vector<1x1x8x128xf32> to vector<8x128xf32>
    %7 = vector.shape_cast %4 : vector<8x128xf32> to vector<1x1x8x128xf32>
    tpu.vector_store %arg5[%c0_5, %c0_6, %c0_7, %c0_8], %7 {strides = array<i32>} : memref<1x1x8x128xf32, #tpu.memory_space<vmem>>, vector<1x1x8x128xf32>,
    return
  }
  func.func @transform_0(%arg0: i32, %arg1: i32, %arg2: i32) -> (i32, i32, i32) {
    %c0_i32 = arith.constant 0 : i32
    %c0_i32_0 = arith.constant 0 : i32
    return %arg0, %arg2, %c0_i32 : i32, i32, i32
  }
  func.func @transform_1(%arg0: i32, %arg1: i32, %arg2: i32) -> (i32, i32, i32) {
    %c0_i32 = arith.constant 0 : i32
    %c0_i32_0 = arith.constant 0 : i32
    %c0_i32_1 = arith.constant 0 : i32
    return %arg1, %c0_i32, %c0_i32_0 : i32, i32, i32
  }
  func.func @transform_2(%arg0: i32, %arg1: i32, %arg2: i32) -> (i32, i32, i32, i32) {
    %c0_i32 = arith.constant 0 : i32
    %c0_i32_0 = arith.constant 0 : i32
    return %arg0, %arg1, %arg2, %c0_i32 : i32, i32, i32, i32
  }
}

module attributes {stable_mosaic.version = 11 : i64} {
  func.func @kernel(%arg0: i32, %arg1: i32, %arg2: i32, %arg3: memref<1x16x256xf32, #tpu.memory_space<vmem>>, %arg4: memref<1x256x128xf32, #tpu.memory_space<vmem>>, %arg5: memref<1x256x128xf32, #tpu.memory_space<vmem>>, %arg6: memref<1x1x16x128xf32, #tpu.memory_space<vmem>>, %arg7: memref<1x1x16x128xf32, #tpu.memory_space<vmem>>) attributes {dimension_semantics = [#tpu.dimension_semantics<parallel>, #tpu.dimension_semantics<parallel>, #tpu.dimension_semantics<parallel>], iteration_bounds = array<i64: 2, 2, 1>, scalar_prefetch = 0 : i64, scratch_operands = 0 : i64, tpu.core_type = #tpu.core_type<tc>, window_params = [{transform_indices = @transform_0, window_bounds = array<i64: 1, 16, 256>}, {transform_indices = @transform_1, window_bounds = array<i64: 1, 256, 128>}, {transform_indices = @transform_2, window_bounds = array<i64: 1, 256, 128>}, {transform_indices = @transform_3, window_bounds = array<i64: 1, 1, 16, 128>}, {transform_indices = @transform_4, window_bounds = array<i64: 1, 1, 16, 128>}]} {
    %c0 = arith.constant 0 : index
    %c0_0 = arith.constant 0 : index
    %c0_1 = arith.constant 0 : index
    %0 = vector.load %arg3[%c0, %c0_0, %c0_1] : memref<1x16x256xf32, #tpu.memory_space<vmem>>, vector<1x16x256xf32>
    %1 = vector.shape_cast %0 : vector<1x16x256xf32> to vector<16x256xf32>
    %c0_2 = arith.constant 0 : index
    %c0_3 = arith.constant 0 : index
    %c0_4 = arith.constant 0 : index
    %2 = vector.load %arg4[%c0_2, %c0_3, %c0_4] : memref<1x256x128xf32, #tpu.memory_space<vmem>>, vector<1x256x128xf32>
    %3 = vector.shape_cast %2 : vector<1x256x128xf32> to vector<256x128xf32>
    %cst = arith.constant dense<0.000000e+00> : vector<16x128xf32>
    %4 = tpu.matmul %1, %3, %cst {dimension_numbers = #tpu.dot_dimension_numbers<[1], [0], [0], [1], [0, 0, 1, 1], [], []>} : vector<16x256xf32>, vector<256x128xf32>, vector<16x128xf32> -> vector<16x128xf32>
    %c0_5 = arith.constant 0 : index
    %c0_6 = arith.constant 0 : index
    %c0_7 = arith.constant 0 : index
    %c0_8 = arith.constant 0 : index
    %5 = vector.load %arg6[%c0_5, %c0_6, %c0_7, %c0_8] : memref<1x1x16x128xf32, #tpu.memory_space<vmem>>, vector<1x1x16x128xf32>
    %6 = vector.shape_cast %5 : vector<1x1x16x128xf32> to vector<16x128xf32>
    %7 = vector.shape_cast %4 : vector<16x128xf32> to vector<1x1x16x128xf32>
    tpu.vector_store %arg6[%c0_5, %c0_6, %c0_7, %c0_8], %7 {strides = array<i32>} : memref<1x1x16x128xf32, #tpu.memory_space<vmem>>, vector<1x1x16x128xf32>,
    %c0_9 = arith.constant 0 : index
    %c0_10 = arith.constant 0 : index
    %c0_11 = arith.constant 0 : index
    %8 = vector.load %arg5[%c0_9, %c0_10, %c0_11] : memref<1x256x128xf32, #tpu.memory_space<vmem>>, vector<1x256x128xf32>
    %9 = vector.shape_cast %8 : vector<1x256x128xf32> to vector<256x128xf32>
    %cst_12 = arith.constant dense<0.000000e+00> : vector<16x128xf32>
    %10 = tpu.matmul %1, %9, %cst_12 {dimension_numbers = #tpu.dot_dimension_numbers<[1], [0], [0], [1], [0, 0, 1, 1], [], []>} : vector<16x256xf32>, vector<256x128xf32>, vector<16x128xf32> -> vector<16x128xf32>
    %c0_13 = arith.constant 0 : index
    %c0_14 = arith.constant 0 : index
    %c0_15 = arith.constant 0 : index
    %c0_16 = arith.constant 0 : index
    %11 = vector.load %arg7[%c0_13, %c0_14, %c0_15, %c0_16] : memref<1x1x16x128xf32, #tpu.memory_space<vmem>>, vector<1x1x16x128xf32>
    %12 = vector.shape_cast %11 : vector<1x1x16x128xf32> to vector<16x128xf32>
    %13 = vector.shape_cast %10 : vector<16x128xf32> to vector<1x1x16x128xf32>
    tpu.vector_store %arg7[%c0_13, %c0_14, %c0_15, %c0_16], %13 {strides = array<i32>} : memref<1x1x16x128xf32, #tpu.memory_space<vmem>>, vector<1x1x16x128xf32>,
    return
  }
  func.func @transform_0(%arg0: i32, %arg1: i32, %arg2: i32) -> (i32, i32, i32) {
    %c0_i32 = arith.constant 0 : i32
    %c0_i32_0 = arith.constant 0 : i32
    return %arg0, %arg2, %c0_i32 : i32, i32, i32
  }
  func.func @transform_1(%arg0: i32, %arg1: i32, %arg2: i32) -> (i32, i32, i32) {
    %c0_i32 = arith.constant 0 : i32
    %c0_i32_0 = arith.constant 0 : i32
    %c0_i32_1 = arith.constant 0 : i32
    return %arg1, %c0_i32, %c0_i32_0 : i32, i32, i32
  }
  func.func @transform_2(%arg0: i32, %arg1: i32, %arg2: i32) -> (i32, i32, i32) {
    %c0_i32 = arith.constant 0 : i32
    %c0_i32_0 = arith.constant 0 : i32
    %c0_i32_1 = arith.constant 0 : i32
    return %arg1, %c0_i32, %c0_i32_0 : i32, i32, i32
  }
  func.func @transform_3(%arg0: i32, %arg1: i32, %arg2: i32) -> (i32, i32, i32, i32) {
    %c0_i32 = arith.constant 0 : i32
    %c0_i32_0 = arith.constant 0 : i32
    return %arg0, %arg1, %arg2, %c0_i32 : i32, i32, i32, i32
  }
  func.func @transform_4(%arg0: i32, %arg1: i32, %arg2: i32) -> (i32, i32, i32, i32) {
    %c0_i32 = arith.constant 0 : i32
    %c0_i32_0 = arith.constant 0 : i32
    return %arg0, %arg1, %arg2, %c0_i32 : i32, i32, i32, i32
  }
}

module attributes {stable_mosaic.version = 11 : i64} {
  func.func @_flash_attn_kernel(%arg0: i32, %arg1: i32, %arg2: i32, %arg3: memref<1x2x8x128xf32, #tpu.memory_space<vmem>>, %arg4: memref<1x2x16x128xf32, #tpu.memory_space<vmem>>, %arg5: memref<1x2x16x128xf32, #tpu.memory_space<vmem>>, %arg6: memref<1x1x16xf32, #tpu.memory_space<vmem>>, %arg7: memref<1x2x8x128xf32, #tpu.memory_space<vmem>>, %arg8: memref<2x8x1xf32, #tpu.memory_space<vmem>>, %arg9: memref<2x8x1xf32, #tpu.memory_space<vmem>>, %arg10: memref<2x8x128xf32, #tpu.memory_space<vmem>>) attributes {dimension_semantics = [#tpu.dimension_semantics<parallel>, #tpu.dimension_semantics<parallel>, #tpu.dimension_semantics<arbitrary>], iteration_bounds = array<i64: 2, 1, 1>, scalar_prefetch = 0 : i64, scratch_operands = 3 : i64, tpu.core_type = #tpu.core_type<tc>, window_params = [{transform_indices = @transform_0, window_bounds = array<i64: 1, 2, 8, 128>}, {transform_indices = @transform_1, window_bounds = array<i64: 1, 2, 16, 128>}, {transform_indices = @transform_2, window_bounds = array<i64: 1, 2, 16, 128>}, {transform_indices = @transform_3, window_bounds = array<i64: 1, 1, 16>}, {transform_indices = @transform_4, window_bounds = array<i64: 1, 2, 8, 128>}]} {
    %c0_i32 = arith.constant 0 : i32
    %0 = arith.cmpi eq, %arg2, %c0_i32 : i32
    %1 = arith.extui %0 : i1 to i32
    %c0_i32_0 = arith.constant 0 : i32
    %2 = arith.cmpi ne, %1, %c0_i32_0 : i32
    scf.if %2 {
      %cst_39 = arith.constant 0xFF800000 : f32
      %42 = vector.broadcast %cst_39 : f32 to vector<2x8x1xf32>
      %c0_40 = arith.constant 0 : index
      %c0_41 = arith.constant 0 : index
      %c0_42 = arith.constant 0 : index
      %43 = vector.load %arg8[%c0_40, %c0_41, %c0_42] : memref<2x8x1xf32, #tpu.memory_space<vmem>>, vector<2x8x1xf32>
      tpu.vector_store %arg8[%c0_40, %c0_41, %c0_42], %42 {strides = array<i32>} : memref<2x8x1xf32, #tpu.memory_space<vmem>>, vector<2x8x1xf32>,
      %cst_43 = arith.constant 0.000000e+00 : f32
      %44 = vector.broadcast %cst_43 : f32 to vector<2x8x1xf32>
      %c0_44 = arith.constant 0 : index
      %c0_45 = arith.constant 0 : index
      %c0_46 = arith.constant 0 : index
      %45 = vector.load %arg9[%c0_44, %c0_45, %c0_46] : memref<2x8x1xf32, #tpu.memory_space<vmem>>, vector<2x8x1xf32>
      tpu.vector_store %arg9[%c0_44, %c0_45, %c0_46], %44 {strides = array<i32>} : memref<2x8x1xf32, #tpu.memory_space<vmem>>, vector<2x8x1xf32>,
      %cst_47 = arith.constant 0.000000e+00 : f32
      %46 = vector.broadcast %cst_47 : f32 to vector<2x8x128xf32>
      %c0_48 = arith.constant 0 : index
      %c0_49 = arith.constant 0 : index
      %c0_50 = arith.constant 0 : index
      %47 = vector.load %arg10[%c0_48, %c0_49, %c0_50] : memref<2x8x128xf32, #tpu.memory_space<vmem>>, vector<2x8x128xf32>
      tpu.vector_store %arg10[%c0_48, %c0_49, %c0_50], %46 {strides = array<i32>} : memref<2x8x128xf32, #tpu.memory_space<vmem>>, vector<2x8x128xf32>,
    } else {
    }
    %c0 = arith.constant 0 : index
    %c0_1 = arith.constant 0 : index
    %c0_2 = arith.constant 0 : index
    %c0_3 = arith.constant 0 : index
    %3 = vector.load %arg3[%c0, %c0_1, %c0_2, %c0_3] : memref<1x2x8x128xf32, #tpu.memory_space<vmem>>, vector<1x2x8x128xf32>
    %4 = vector.shape_cast %3 : vector<1x2x8x128xf32> to vector<2x8x128xf32>
    %cst = arith.constant 0.0883883461 : f32
    %5 = vector.broadcast %cst : f32 to vector<2x8x128xf32>
    %6 = arith.mulf %4, %5 : vector<2x8x128xf32>
    %c0_4 = arith.constant 0 : index
    %c0_5 = arith.constant 0 : index
    %c0_6 = arith.constant 0 : index
    %c0_7 = arith.constant 0 : index
    %7 = vector.load %arg4[%c0_4, %c0_5, %c0_6, %c0_7] : memref<1x2x16x128xf32, #tpu.memory_space<vmem>>, vector<1x2x16x128xf32>
    %8 = vector.shape_cast %7 : vector<1x2x16x128xf32> to vector<2x16x128xf32>
    %c0_8 = arith.constant 0 : index
    %c0_9 = arith.constant 0 : index
    %c0_10 = arith.constant 0 : index
    %c0_11 = arith.constant 0 : index
    %9 = vector.load %arg5[%c0_8, %c0_9, %c0_10, %c0_11] : memref<1x2x16x128xf32, #tpu.memory_space<vmem>>, vector<1x2x16x128xf32>
    %10 = vector.shape_cast %9 : vector<1x2x16x128xf32> to vector<2x16x128xf32>
    "tpu.trace_start"() <{level = 10 : i32, message = "hqd,hkd->hqk"}> : () -> ()
    %cst_12 = arith.constant dense<0.000000e+00> : vector<2x8x16xf32>
    %11 = tpu.matmul %6, %8, %cst_12 {dimension_numbers = #tpu.dot_dimension_numbers<[2], [2], [1], [1], [0, 0, 0, 1, 1, 1], [0], [0]>} : vector<2x8x128xf32>, vector<2x16x128xf32>, vector<2x8x16xf32> -> vector<2x8x16xf32>
    "tpu.trace_stop"() : () -> ()
    %c0_13 = arith.constant 0 : index
    %c0_14 = arith.constant 0 : index
    %c0_15 = arith.constant 0 : index
    %12 = vector.load %arg6[%c0_13, %c0_14, %c0_15] : memref<1x1x16xf32, #tpu.memory_space<vmem>>, vector<1x1x16xf32>
    %13 = vector.shape_cast %12 : vector<1x1x16xf32> to vector<1x16xf32>
    %14 = vector.shape_cast %13 : vector<1x16xf32> to vector<1x1x16xf32>
    %15 = vector.broadcast %14 : vector<1x1x16xf32> to vector<2x8x16xf32>
    %16 = arith.addf %11, %15 : vector<2x8x16xf32>
    %c0_16 = arith.constant 0 : index
    %c0_17 = arith.constant 0 : index
    %c0_18 = arith.constant 0 : index
    %17 = vector.load %arg8[%c0_16, %c0_17, %c0_18] : memref<2x8x1xf32, #tpu.memory_space<vmem>>, vector<2x8x1xf32>
    %cst_19 = arith.constant dense<0xFF800000> : vector<2x8xf32>
    %18 = vector.multi_reduction <maximumf>, %16, %cst_19 [2] : vector<2x8x16xf32> to vector<2x8xf32>
    %19 = vector.shape_cast %18 : vector<2x8xf32> to vector<2x8x1xf32>
    %20 = arith.maximumf %17, %19 : vector<2x8x1xf32>
    %21 = arith.subf %17, %20 : vector<2x8x1xf32>
    %22 = math.exp %21 : vector<2x8x1xf32>
    %23 = vector.broadcast %20 : vector<2x8x1xf32> to vector<2x8x16xf32>
    %24 = arith.subf %16, %23 : vector<2x8x16xf32>
    %25 = math.exp %24 : vector<2x8x16xf32>
    %c0_20 = arith.constant 0 : index
    %c0_21 = arith.constant 0 : index
    %c0_22 = arith.constant 0 : index
    %26 = vector.load %arg9[%c0_20, %c0_21, %c0_22] : memref<2x8x1xf32, #tpu.memory_space<vmem>>, vector<2x8x1xf32>
    %27 = arith.mulf %22, %26 : vector<2x8x1xf32>
    %cst_23 = arith.constant dense<0.000000e+00> : vector<2x8xf32>
    %28 = vector.multi_reduction <add>, %25, %cst_23 [2] : vector<2x8x16xf32> to vector<2x8xf32>
    %29 = vector.shape_cast %28 : vector<2x8xf32> to vector<2x8x1xf32>
    %30 = arith.addf %27, %29 : vector<2x8x1xf32>
    %c0_24 = arith.constant 0 : index
    %c0_25 = arith.constant 0 : index
    %c0_26 = arith.constant 0 : index
    %31 = vector.load %arg9[%c0_24, %c0_25, %c0_26] : memref<2x8x1xf32, #tpu.memory_space<vmem>>, vector<2x8x1xf32>
    tpu.vector_store %arg9[%c0_24, %c0_25, %c0_26], %30 {strides = array<i32>} : memref<2x8x1xf32, #tpu.memory_space<vmem>>, vector<2x8x1xf32>,
    %c0_27 = arith.constant 0 : index
    %c0_28 = arith.constant 0 : index
    %c0_29 = arith.constant 0 : index
    %32 = vector.load %arg10[%c0_27, %c0_28, %c0_29] : memref<2x8x128xf32, #tpu.memory_space<vmem>>, vector<2x8x128xf32>
    %33 = vector.broadcast %22 : vector<2x8x1xf32> to vector<2x8x128xf32>
    %34 = arith.mulf %33, %32 : vector<2x8x128xf32>
    "tpu.trace_start"() <{level = 10 : i32, message = "hqk,hkd->hqd"}> : () -> ()
    %cst_30 = arith.constant dense<0.000000e+00> : vector<2x8x128xf32>
    %35 = tpu.matmul %25, %10, %cst_30 {dimension_numbers = #tpu.dot_dimension_numbers<[2], [1], [1], [2], [0, 0, 0, 1, 1, 2], [0], [0]>} : vector<2x8x16xf32>, vector<2x16x128xf32>, vector<2x8x128xf32> -> vector<2x8x128xf32>
    "tpu.trace_stop"() : () -> ()
    %36 = arith.addf %34, %35 : vector<2x8x128xf32>
    %c0_31 = arith.constant 0 : index
    %c0_32 = arith.constant 0 : index
    %c0_33 = arith.constant 0 : index
    %37 = vector.load %arg10[%c0_31, %c0_32, %c0_33] : memref<2x8x128xf32, #tpu.memory_space<vmem>>, vector<2x8x128xf32>
    tpu.vector_store %arg10[%c0_31, %c0_32, %c0_33], %36 {strides = array<i32>} : memref<2x8x128xf32, #tpu.memory_space<vmem>>, vector<2x8x128xf32>,
    %c0_34 = arith.constant 0 : index
    %c0_35 = arith.constant 0 : index
    %c0_36 = arith.constant 0 : index
    %38 = vector.load %arg8[%c0_34, %c0_35, %c0_36] : memref<2x8x1xf32, #tpu.memory_space<vmem>>, vector<2x8x1xf32>
    tpu.vector_store %arg8[%c0_34, %c0_35, %c0_36], %20 {strides = array<i32>} : memref<2x8x1xf32, #tpu.memory_space<vmem>>, vector<2x8x1xf32>,
    %c0_i32_37 = arith.constant 0 : i32
    %39 = arith.cmpi eq, %arg2, %c0_i32_37 : i32
    %40 = arith.extui %39 : i1 to i32
    %c0_i32_38 = arith.constant 0 : i32
    %41 = arith.cmpi ne, %40, %c0_i32_38 : i32
    scf.if %41 {
      %c0_39 = arith.constant 0 : index
      %c0_40 = arith.constant 0 : index
      %c0_41 = arith.constant 0 : index
      %42 = vector.load %arg9[%c0_39, %c0_40, %c0_41] : memref<2x8x1xf32, #tpu.memory_space<vmem>>, vector<2x8x1xf32>
      %43 = tpu.reciprocal %42 : vector<2x8x1xf32> -> vector<2x8x1xf32>
      %c0_42 = arith.constant 0 : index
      %c0_43 = arith.constant 0 : index
      %c0_44 = arith.constant 0 : index
      %44 = vector.load %arg10[%c0_42, %c0_43, %c0_44] : memref<2x8x128xf32, #tpu.memory_space<vmem>>, vector<2x8x128xf32>
      %45 = vector.broadcast %43 : vector<2x8x1xf32> to vector<2x8x128xf32>
      %46 = arith.mulf %44, %45 : vector<2x8x128xf32>
      %c0_45 = arith.constant 0 : index
      %c0_46 = arith.constant 0 : index
      %c0_47 = arith.constant 0 : index
      %c0_48 = arith.constant 0 : index
      %47 = vector.load %arg7[%c0_45, %c0_46, %c0_47, %c0_48] : memref<1x2x8x128xf32, #tpu.memory_space<vmem>>, vector<1x2x8x128xf32>
      %48 = vector.shape_cast %47 : vector<1x2x8x128xf32> to vector<2x8x128xf32>
      %49 = vector.shape_cast %46 : vector<2x8x128xf32> to vector<1x2x8x128xf32>
      tpu.vector_store %arg7[%c0_45, %c0_46, %c0_47, %c0_48], %49 {strides = array<i32>} : memref<1x2x8x128xf32, #tpu.memory_space<vmem>>, vector<1x2x8x128xf32>,
    } else {
    }
    return
  }
  func.func @transform_0(%arg0: i32, %arg1: i32, %arg2: i32) -> (i32, i32, i32, i32) {
    %c0_i32 = arith.constant 0 : i32
    %c0_i32_0 = arith.constant 0 : i32
    %c0_i32_1 = arith.constant 0 : i32
    return %arg0, %c0_i32, %arg1, %c0_i32_0 : i32, i32, i32, i32
  }
  func.func @transform_1(%arg0: i32, %arg1: i32, %arg2: i32) -> (i32, i32, i32, i32) {
    %c0_i32 = arith.constant 0 : i32
    %c0_i32_0 = arith.constant 0 : i32
    %c0_i32_1 = arith.constant 0 : i32
    return %arg0, %c0_i32, %arg2, %c0_i32_0 : i32, i32, i32, i32
  }
  func.func @transform_2(%arg0: i32, %arg1: i32, %arg2: i32) -> (i32, i32, i32, i32) {
    %c0_i32 = arith.constant 0 : i32
    %c0_i32_0 = arith.constant 0 : i32
    %c0_i32_1 = arith.constant 0 : i32
    return %arg0, %c0_i32, %arg2, %c0_i32_0 : i32, i32, i32, i32
  }
  func.func @transform_3(%arg0: i32, %arg1: i32, %arg2: i32) -> (i32, i32, i32) {
    %c0_i32 = arith.constant 0 : i32
    %c0_i32_0 = arith.constant 0 : i32
    return %arg0, %c0_i32, %arg2 : i32, i32, i32
  }
  func.func @transform_4(%arg0: i32, %arg1: i32, %arg2: i32) -> (i32, i32, i32, i32) {
    %c0_i32 = arith.constant 0 : i32
    %c0_i32_0 = arith.constant 0 : i32
    %c0_i32_1 = arith.constant 0 : i32
    return %arg0, %c0_i32, %arg1, %c0_i32_0 : i32, i32, i32, i32
  }
}

module attributes {stable_mosaic.version = 11 : i64} {
  func.func @_ffn_kernel(%arg0: i32, %arg1: i32, %arg2: memref<8x256xf32, #tpu.memory_space<vmem>>, %arg3: memref<256x256xf32, #tpu.memory_space<vmem>>, %arg4: memref<1x256xf32, #tpu.memory_space<vmem>>, %arg5: memref<256x256xf32, #tpu.memory_space<vmem>>, %arg6: memref<1x256xf32, #tpu.memory_space<vmem>>, %arg7: memref<1x256xf32, #tpu.memory_space<vmem>>, %arg8: memref<1x256xf32, #tpu.memory_space<vmem>>, %arg9: memref<8x256xf32, #tpu.memory_space<vmem>>, %arg10: memref<8x256xf32, #tpu.memory_space<vmem>>) attributes {dimension_semantics = [#tpu.dimension_semantics<parallel>, #tpu.dimension_semantics<arbitrary>], iteration_bounds = array<i64: 2, 2>, scalar_prefetch = 0 : i64, scratch_operands = 1 : i64, tpu.core_type = #tpu.core_type<tc>, window_params = [{transform_indices = @transform_0, window_bounds = array<i64: 8, 256>}, {transform_indices = @transform_1, window_bounds = array<i64: 256, 256>}, {transform_indices = @transform_2, window_bounds = array<i64: 1, 256>}, {transform_indices = @transform_3, window_bounds = array<i64: 256, 256>}, {pipeline_mode = #tpu.pipeline_mode<synchronous>, transform_indices = @transform_4, window_bounds = array<i64: 1, 256>}, {pipeline_mode = #tpu.pipeline_mode<synchronous>, transform_indices = @transform_5, window_bounds = array<i64: 1, 256>}, {pipeline_mode = #tpu.pipeline_mode<synchronous>, transform_indices = @transform_6, window_bounds = array<i64: 1, 256>}, {transform_indices = @transform_7, window_bounds = array<i64: 8, 256>}]} {
    %c0 = arith.constant 0 : index
    %c0_0 = arith.constant 0 : index
    %0 = vector.load %arg2[%c0, %c0_0] : memref<8x256xf32, #tpu.memory_space<vmem>>, vector<8x256xf32>
    %c0_i32 = arith.constant 0 : i32
    %1 = arith.cmpi eq, %arg1, %c0_i32 : i32
    %2 = arith.extui %1 : i1 to i32
    %c0_i32_1 = arith.constant 0 : i32
    %3 = arith.cmpi ne, %2, %c0_i32_1 : i32
    scf.if %3 {
      %c0_15 = arith.constant 0 : index
      %c0_16 = arith.constant 0 : index
      %19 = vector.load %arg6[%c0_15, %c0_16] : memref<1x256xf32, #tpu.memory_space<vmem>>, vector<1x256xf32>
      %20 = vector.broadcast %19 : vector<1x256xf32> to vector<8x256xf32>
      %21 = arith.addf %0, %20 : vector<8x256xf32>
      %c0_17 = arith.constant 0 : index
      %c0_18 = arith.constant 0 : index
      %22 = vector.load %arg10[%c0_17, %c0_18] : memref<8x256xf32, #tpu.memory_space<vmem>>, vector<8x256xf32>
      tpu.vector_store %arg10[%c0_17, %c0_18], %21 {strides = array<i32>} : memref<8x256xf32, #tpu.memory_space<vmem>>, vector<8x256xf32>,
    } else {
    }
    %c0_2 = arith.constant 0 : index
    %c0_3 = arith.constant 0 : index
    %4 = vector.load %arg3[%c0_2, %c0_3] : memref<256x256xf32, #tpu.memory_space<vmem>>, vector<256x256xf32>
    %cst = arith.constant dense<0.000000e+00> : vector<8x256xf32>
    %5 = tpu.matmul %0, %4, %cst {dimension_numbers = #tpu.dot_dimension_numbers<[1], [0], [0], [1], [0, 0, 1, 1], [], []>} : vector<8x256xf32>, vector<256x256xf32>, vector<8x256xf32> -> vector<8x256xf32>
    %c0_4 = arith.constant 0 : index
    %c0_5 = arith.constant 0 : index
    %6 = vector.load %arg4[%c0_4, %c0_5] : memref<1x256xf32, #tpu.memory_space<vmem>>, vector<1x256xf32>
    %7 = vector.broadcast %6 : vector<1x256xf32> to vector<8x256xf32>
    %8 = arith.addf %5, %7 : vector<8x256xf32>
    %cst_6 = arith.constant 0.000000e+00 : f32
    %9 = vector.broadcast %cst_6 : f32 to vector<8x256xf32>
    %10 = arith.maximumf %8, %9 : vector<8x256xf32>
    %c0_7 = arith.constant 0 : index
    %c0_8 = arith.constant 0 : index
    %11 = vector.load %arg10[%c0_7, %c0_8] : memref<8x256xf32, #tpu.memory_space<vmem>>, vector<8x256xf32>
    %c0_9 = arith.constant 0 : index
    %c0_10 = arith.constant 0 : index
    %12 = vector.load %arg5[%c0_9, %c0_10] : memref<256x256xf32, #tpu.memory_space<vmem>>, vector<256x256xf32>
    %cst_11 = arith.constant dense<0.000000e+00> : vector<8x256xf32>
    %13 = tpu.matmul %10, %12, %cst_11 {dimension_numbers = #tpu.dot_dimension_numbers<[1], [0], [0], [1], [0, 0, 1, 1], [], []>} : vector<8x256xf32>, vector<256x256xf32>, vector<8x256xf32> -> vector<8x256xf32>
    %14 = arith.addf %11, %13 : vector<8x256xf32>
    %c0_12 = arith.constant 0 : index
    %c0_13 = arith.constant 0 : index
    %15 = vector.load %arg10[%c0_12, %c0_13] : memref<8x256xf32, #tpu.memory_space<vmem>>, vector<8x256xf32>
    tpu.vector_store %arg10[%c0_12, %c0_13], %14 {strides = array<i32>} : memref<8x256xf32, #tpu.memory_space<vmem>>, vector<8x256xf32>,
    %c1_i32 = arith.constant 1 : i32
    %16 = arith.cmpi eq, %arg1, %c1_i32 : i32
    %17 = arith.extui %16 : i1 to i32
    %c0_i32_14 = arith.constant 0 : i32
    %18 = arith.cmpi ne, %17, %c0_i32_14 : i32
    scf.if %18 {
      %c0_15 = arith.constant 0 : index
      %c0_16 = arith.constant 0 : index
      %19 = vector.load %arg10[%c0_15, %c0_16] : memref<8x256xf32, #tpu.memory_space<vmem>>, vector<8x256xf32>
      %cst_17 = arith.constant dense<0.000000e+00> : vector<8xf32>
      %20 = vector.multi_reduction <add>, %19, %cst_17 [1] : vector<8x256xf32> to vector<8xf32>
      %21 = vector.shape_cast %20 : vector<8xf32> to vector<8x1xf32>
      %cst_18 = arith.constant 2.560000e+02 : f32
      %22 = vector.broadcast %cst_18 : f32 to vector<8x1xf32>
      %23 = arith.divf %21, %22 : vector<8x1xf32>
      %24 = vector.broadcast %23 : vector<8x1xf32> to vector<8x256xf32>
      %25 = arith.subf %19, %24 : vector<8x256xf32>
      %26 = arith.mulf %25, %25 : vector<8x256xf32>
      %cst_19 = arith.constant dense<0.000000e+00> : vector<8xf32>
      %27 = vector.multi_reduction <add>, %26, %cst_19 [1] : vector<8x256xf32> to vector<8xf32>
      %28 = vector.shape_cast %27 : vector<8xf32> to vector<8x1xf32>
      %cst_20 = arith.constant 2.560000e+02 : f32
      %29 = vector.broadcast %cst_20 : f32 to vector<8x1xf32>
      %30 = arith.divf %28, %29 : vector<8x1xf32>
      %cst_21 = arith.constant 9.99999997E-7 : f32
      %31 = vector.broadcast %cst_21 : f32 to vector<8x1xf32>
      %32 = arith.addf %30, %31 : vector<8x1xf32>
      %33 = math.rsqrt %32 : vector<8x1xf32>
      %34 = vector.broadcast %33 : vector<8x1xf32> to vector<8x256xf32>
      %35 = arith.mulf %25, %34 : vector<8x256xf32>
      %c0_22 = arith.constant 0 : index
      %c0_23 = arith.constant 0 : index
      %36 = vector.load %arg7[%c0_22, %c0_23] : memref<1x256xf32, #tpu.memory_space<vmem>>, vector<1x256xf32>
      %37 = vector.broadcast %36 : vector<1x256xf32> to vector<8x256xf32>
      %38 = arith.mulf %35, %37 : vector<8x256xf32>
      %c0_24 = arith.constant 0 : index
      %c0_25 = arith.constant 0 : index
      %39 = vector.load %arg8[%c0_24, %c0_25] : memref<1x256xf32, #tpu.memory_space<vmem>>, vector<1x256xf32>
      %40 = vector.broadcast %39 : vector<1x256xf32> to vector<8x256xf32>
      %41 = arith.addf %38, %40 : vector<8x256xf32>
      %c0_26 = arith.constant 0 : index
      %c0_27 = arith.constant 0 : index
      %42 = vector.load %arg9[%c0_26, %c0_27] : memref<8x256xf32, #tpu.memory_space<vmem>>, vector<8x256xf32>
      tpu.vector_store %arg9[%c0_26, %c0_27], %41 {strides = array<i32>} : memref<8x256xf32, #tpu.memory_space<vmem>>, vector<8x256xf32>,
    } else {
    }
    return
  }
  func.func @transform_0(%arg0: i32, %arg1: i32) -> (i32, i32) {
    %c0_i32 = arith.constant 0 : i32
    %c0_i32_0 = arith.constant 0 : i32
    return %arg0, %c0_i32 : i32, i32
  }
  func.func @transform_1(%arg0: i32, %arg1: i32) -> (i32, i32) {
    %c0_i32 = arith.constant 0 : i32
    %c0_i32_0 = arith.constant 0 : i32
    return %c0_i32, %arg1 : i32, i32
  }
  func.func @transform_2(%arg0: i32, %arg1: i32) -> (i32, i32) {
    %c0_i32 = arith.constant 0 : i32
    %c0_i32_0 = arith.constant 0 : i32
    return %c0_i32, %arg1 : i32, i32
  }
  func.func @transform_3(%arg0: i32, %arg1: i32) -> (i32, i32) {
    %c0_i32 = arith.constant 0 : i32
    %c0_i32_0 = arith.constant 0 : i32
    return %arg1, %c0_i32 : i32, i32
  }
  func.func @transform_4(%arg0: i32, %arg1: i32) -> (i32, i32) {
    %c0_i32 = arith.constant 0 : i32
    %c0_i32_0 = arith.constant 0 : i32
    %c0_i32_1 = arith.constant 0 : i32
    return %c0_i32, %c0_i32_0 : i32, i32
  }
  func.func @transform_5(%arg0: i32, %arg1: i32) -> (i32, i32) {
    %c0_i32 = arith.constant 0 : i32
    %c0_i32_0 = arith.constant 0 : i32
    %c0_i32_1 = arith.constant 0 : i32
    return %c0_i32, %c0_i32_0 : i32, i32
  }
  func.func @transform_6(%arg0: i32, %arg1: i32) -> (i32, i32) {
    %c0_i32 = arith.constant 0 : i32
    %c0_i32_0 = arith.constant 0 : i32
    %c0_i32_1 = arith.constant 0 : i32
    return %c0_i32, %c0_i32_0 : i32, i32
  }
  func.func @transform_7(%arg0: i32, %arg1: i32) -> (i32, i32) {
    %c0_i32 = arith.constant 0 : i32
    %c0_i32_0 = arith.constant 0 : i32
    return %arg0, %c0_i32 : i32, i32
  }
}

module attributes {stable_mosaic.version = 11 : i64} {
  func.func @kernel(%arg0: i32, %arg1: i32, %arg2: i32, %arg3: memref<1x8x256xf32, #tpu.memory_space<vmem>>, %arg4: memref<1x256x128xf32, #tpu.memory_space<vmem>>, %arg5: memref<1x256x128xf32, #tpu.memory_space<vmem>>, %arg6: memref<1x256x128xf32, #tpu.memory_space<vmem>>, %arg7: memref<1x1x8x128xf32, #tpu.memory_space<vmem>>, %arg8: memref<1x1x8x128xf32, #tpu.memory_space<vmem>>, %arg9: memref<1x1x8x128xf32, #tpu.memory_space<vmem>>) attributes {dimension_semantics = [#tpu.dimension_semantics<parallel>, #tpu.dimension_semantics<parallel>, #tpu.dimension_semantics<parallel>], iteration_bounds = array<i64: 2, 2, 1>, scalar_prefetch = 0 : i64, scratch_operands = 0 : i64, tpu.core_type = #tpu.core_type<tc>, window_params = [{transform_indices = @transform_0, window_bounds = array<i64: 1, 8, 256>}, {transform_indices = @transform_1, window_bounds = array<i64: 1, 256, 128>}, {transform_indices = @transform_2, window_bounds = array<i64: 1, 256, 128>}, {transform_indices = @transform_3, window_bounds = array<i64: 1, 256, 128>}, {transform_indices = @transform_4, window_bounds = array<i64: 1, 1, 8, 128>}, {transform_indices = @transform_5, window_bounds = array<i64: 1, 1, 8, 128>}, {transform_indices = @transform_6, window_bounds = array<i64: 1, 1, 8, 128>}]} {
    %c0 = arith.constant 0 : index
    %c0_0 = arith.constant 0 : index
    %c0_1 = arith.constant 0 : index
    %0 = vector.load %arg3[%c0, %c0_0, %c0_1] : memref<1x8x256xf32, #tpu.memory_space<vmem>>, vector<1x8x256xf32>
    %1 = vector.shape_cast %0 : vector<1x8x256xf32> to vector<8x256xf32>
    %c0_2 = arith.constant 0 : index
    %c0_3 = arith.constant 0 : index
    %c0_4 = arith.constant 0 : index
    %2 = vector.load %arg4[%c0_2, %c0_3, %c0_4] : memref<1x256x128xf32, #tpu.memory_space<vmem>>, vector<1x256x128xf32>
    %3 = vector.shape_cast %2 : vector<1x256x128xf32> to vector<256x128xf32>
    %cst = arith.constant dense<0.000000e+00> : vector<8x128xf32>
    %4 = tpu.matmul %1, %3, %cst {dimension_numbers = #tpu.dot_dimension_numbers<[1], [0], [0], [1], [0, 0, 1, 1], [], []>} : vector<8x256xf32>, vector<256x128xf32>, vector<8x128xf32> -> vector<8x128xf32>
    %c0_5 = arith.constant 0 : index
    %c0_6 = arith.constant 0 : index
    %c0_7 = arith.constant 0 : index
    %c0_8 = arith.constant 0 : index
    %5 = vector.load %arg7[%c0_5, %c0_6, %c0_7, %c0_8] : memref<1x1x8x128xf32, #tpu.memory_space<vmem>>, vector<1x1x8x128xf32>
    %6 = vector.shape_cast %5 : vector<1x1x8x128xf32> to vector<8x128xf32>
    %7 = vector.shape_cast %4 : vector<8x128xf32> to vector<1x1x8x128xf32>
    tpu.vector_store %arg7[%c0_5, %c0_6, %c0_7, %c0_8], %7 {strides = array<i32>} : memref<1x1x8x128xf32, #tpu.memory_space<vmem>>, vector<1x1x8x128xf32>,
    %c0_9 = arith.constant 0 : index
    %c0_10 = arith.constant 0 : index
    %c0_11 = arith.constant 0 : index
    %8 = vector.load %arg5[%c0_9, %c0_10, %c0_11] : memref<1x256x128xf32, #tpu.memory_space<vmem>>, vector<1x256x128xf32>
    %9 = vector.shape_cast %8 : vector<1x256x128xf32> to vector<256x128xf32>
    %cst_12 = arith.constant dense<0.000000e+00> : vector<8x128xf32>
    %10 = tpu.matmul %1, %9, %cst_12 {dimension_numbers = #tpu.dot_dimension_numbers<[1], [0], [0], [1], [0, 0, 1, 1], [], []>} : vector<8x256xf32>, vector<256x128xf32>, vector<8x128xf32> -> vector<8x128xf32>
    %c0_13 = arith.constant 0 : index
    %c0_14 = arith.constant 0 : index
    %c0_15 = arith.constant 0 : index
    %c0_16 = arith.constant 0 : index
    %11 = vector.load %arg8[%c0_13, %c0_14, %c0_15, %c0_16] : memref<1x1x8x128xf32, #tpu.memory_space<vmem>>, vector<1x1x8x128xf32>
    %12 = vector.shape_cast %11 : vector<1x1x8x128xf32> to vector<8x128xf32>
    %13 = vector.shape_cast %10 : vector<8x128xf32> to vector<1x1x8x128xf32>
    tpu.vector_store %arg8[%c0_13, %c0_14, %c0_15, %c0_16], %13 {strides = array<i32>} : memref<1x1x8x128xf32, #tpu.memory_space<vmem>>, vector<1x1x8x128xf32>,
    %c0_17 = arith.constant 0 : index
    %c0_18 = arith.constant 0 : index
    %c0_19 = arith.constant 0 : index
    %14 = vector.load %arg6[%c0_17, %c0_18, %c0_19] : memref<1x256x128xf32, #tpu.memory_space<vmem>>, vector<1x256x128xf32>
    %15 = vector.shape_cast %14 : vector<1x256x128xf32> to vector<256x128xf32>
    %cst_20 = arith.constant dense<0.000000e+00> : vector<8x128xf32>
    %16 = tpu.matmul %1, %15, %cst_20 {dimension_numbers = #tpu.dot_dimension_numbers<[1], [0], [0], [1], [0, 0, 1, 1], [], []>} : vector<8x256xf32>, vector<256x128xf32>, vector<8x128xf32> -> vector<8x128xf32>
    %c0_21 = arith.constant 0 : index
    %c0_22 = arith.constant 0 : index
    %c0_23 = arith.constant 0 : index
    %c0_24 = arith.constant 0 : index
    %17 = vector.load %arg9[%c0_21, %c0_22, %c0_23, %c0_24] : memref<1x1x8x128xf32, #tpu.memory_space<vmem>>, vector<1x1x8x128xf32>
    %18 = vector.shape_cast %17 : vector<1x1x8x128xf32> to vector<8x128xf32>
    %19 = vector.shape_cast %16 : vector<8x128xf32> to vector<1x1x8x128xf32>
    tpu.vector_store %arg9[%c0_21, %c0_22, %c0_23, %c0_24], %19 {strides = array<i32>} : memref<1x1x8x128xf32, #tpu.memory_space<vmem>>, vector<1x1x8x128xf32>,
    return
  }
  func.func @transform_0(%arg0: i32, %arg1: i32, %arg2: i32) -> (i32, i32, i32) {
    %c0_i32 = arith.constant 0 : i32
    %c0_i32_0 = arith.constant 0 : i32
    return %arg0, %arg2, %c0_i32 : i32, i32, i32
  }
  func.func @transform_1(%arg0: i32, %arg1: i32, %arg2: i32) -> (i32, i32, i32) {
    %c0_i32 = arith.constant 0 : i32
    %c0_i32_0 = arith.constant 0 : i32
    %c0_i32_1 = arith.constant 0 : i32
    return %arg1, %c0_i32, %c0_i32_0 : i32, i32, i32
  }
  func.func @transform_2(%arg0: i32, %arg1: i32, %arg2: i32) -> (i32, i32, i32) {
    %c0_i32 = arith.constant 0 : i32
    %c0_i32_0 = arith.constant 0 : i32
    %c0_i32_1 = arith.constant 0 : i32
    return %arg1, %c0_i32, %c0_i32_0 : i32, i32, i32
  }
  func.func @transform_3(%arg0: i32, %arg1: i32, %arg2: i32) -> (i32, i32, i32) {
    %c0_i32 = arith.constant 0 : i32
    %c0_i32_0 = arith.constant 0 : i32
    %c0_i32_1 = arith.constant 0 : i32
    return %arg1, %c0_i32, %c0_i32_0 : i32, i32, i32
  }
  func.func @transform_4(%arg0: i32, %arg1: i32, %arg2: i32) -> (i32, i32, i32, i32) {
    %c0_i32 = arith.constant 0 : i32
    %c0_i32_0 = arith.constant 0 : i32
    return %arg0, %arg1, %arg2, %c0_i32 : i32, i32, i32, i32
  }
  func.func @transform_5(%arg0: i32, %arg1: i32, %arg2: i32) -> (i32, i32, i32, i32) {
    %c0_i32 = arith.constant 0 : i32
    %c0_i32_0 = arith.constant 0 : i32
    return %arg0, %arg1, %arg2, %c0_i32 : i32, i32, i32, i32
  }
  func.func @transform_6(%arg0: i32, %arg1: i32, %arg2: i32) -> (i32, i32, i32, i32) {
    %c0_i32 = arith.constant 0 : i32
    %c0_i32_0 = arith.constant 0 : i32
    return %arg0, %arg1, %arg2, %c0_i32 : i32, i32, i32, i32
  }
}

module attributes {stable_mosaic.version = 11 : i64} {
  func.func @_ffn_kernel(%arg0: i32, %arg1: i32, %arg2: memref<8x256xf32, #tpu.memory_space<vmem>>, %arg3: memref<256x256xf32, #tpu.memory_space<vmem>>, %arg4: memref<1x256xf32, #tpu.memory_space<vmem>>, %arg5: memref<256x256xf32, #tpu.memory_space<vmem>>, %arg6: memref<1x256xf32, #tpu.memory_space<vmem>>, %arg7: memref<1x256xf32, #tpu.memory_space<vmem>>, %arg8: memref<1x256xf32, #tpu.memory_space<vmem>>, %arg9: memref<8x256xf32, #tpu.memory_space<vmem>>, %arg10: memref<8x256xf32, #tpu.memory_space<vmem>>) attributes {dimension_semantics = [#tpu.dimension_semantics<parallel>, #tpu.dimension_semantics<arbitrary>], iteration_bounds = array<i64: 2, 2>, scalar_prefetch = 0 : i64, scratch_operands = 1 : i64, tpu.core_type = #tpu.core_type<tc>, window_params = [{transform_indices = @transform_0, window_bounds = array<i64: 8, 256>}, {transform_indices = @transform_1, window_bounds = array<i64: 256, 256>}, {transform_indices = @transform_2, window_bounds = array<i64: 1, 256>}, {transform_indices = @transform_3, window_bounds = array<i64: 256, 256>}, {pipeline_mode = #tpu.pipeline_mode<synchronous>, transform_indices = @transform_4, window_bounds = array<i64: 1, 256>}, {pipeline_mode = #tpu.pipeline_mode<synchronous>, transform_indices = @transform_5, window_bounds = array<i64: 1, 256>}, {pipeline_mode = #tpu.pipeline_mode<synchronous>, transform_indices = @transform_6, window_bounds = array<i64: 1, 256>}, {transform_indices = @transform_7, window_bounds = array<i64: 8, 256>}]} {
    %c0 = arith.constant 0 : index
    %c0_0 = arith.constant 0 : index
    %0 = vector.load %arg2[%c0, %c0_0] : memref<8x256xf32, #tpu.memory_space<vmem>>, vector<8x256xf32>
    %c0_i32 = arith.constant 0 : i32
    %1 = arith.cmpi eq, %arg1, %c0_i32 : i32
    %2 = arith.extui %1 : i1 to i32
    %c0_i32_1 = arith.constant 0 : i32
    %3 = arith.cmpi ne, %2, %c0_i32_1 : i32
    scf.if %3 {
      %c0_15 = arith.constant 0 : index
      %c0_16 = arith.constant 0 : index
      %19 = vector.load %arg6[%c0_15, %c0_16] : memref<1x256xf32, #tpu.memory_space<vmem>>, vector<1x256xf32>
      %20 = vector.broadcast %19 : vector<1x256xf32> to vector<8x256xf32>
      %21 = arith.addf %0, %20 : vector<8x256xf32>
      %c0_17 = arith.constant 0 : index
      %c0_18 = arith.constant 0 : index
      %22 = vector.load %arg10[%c0_17, %c0_18] : memref<8x256xf32, #tpu.memory_space<vmem>>, vector<8x256xf32>
      tpu.vector_store %arg10[%c0_17, %c0_18], %21 {strides = array<i32>} : memref<8x256xf32, #tpu.memory_space<vmem>>, vector<8x256xf32>,
    } else {
    }
    %c0_2 = arith.constant 0 : index
    %c0_3 = arith.constant 0 : index
    %4 = vector.load %arg3[%c0_2, %c0_3] : memref<256x256xf32, #tpu.memory_space<vmem>>, vector<256x256xf32>
    %cst = arith.constant dense<0.000000e+00> : vector<8x256xf32>
    %5 = tpu.matmul %0, %4, %cst {dimension_numbers = #tpu.dot_dimension_numbers<[1], [0], [0], [1], [0, 0, 1, 1], [], []>} : vector<8x256xf32>, vector<256x256xf32>, vector<8x256xf32> -> vector<8x256xf32>
    %c0_4 = arith.constant 0 : index
    %c0_5 = arith.constant 0 : index
    %6 = vector.load %arg4[%c0_4, %c0_5] : memref<1x256xf32, #tpu.memory_space<vmem>>, vector<1x256xf32>
    %7 = vector.broadcast %6 : vector<1x256xf32> to vector<8x256xf32>
    %8 = arith.addf %5, %7 : vector<8x256xf32>
    %cst_6 = arith.constant 0.000000e+00 : f32
    %9 = vector.broadcast %cst_6 : f32 to vector<8x256xf32>
    %10 = arith.maximumf %8, %9 : vector<8x256xf32>
    %c0_7 = arith.constant 0 : index
    %c0_8 = arith.constant 0 : index
    %11 = vector.load %arg10[%c0_7, %c0_8] : memref<8x256xf32, #tpu.memory_space<vmem>>, vector<8x256xf32>
    %c0_9 = arith.constant 0 : index
    %c0_10 = arith.constant 0 : index
    %12 = vector.load %arg5[%c0_9, %c0_10] : memref<256x256xf32, #tpu.memory_space<vmem>>, vector<256x256xf32>
    %cst_11 = arith.constant dense<0.000000e+00> : vector<8x256xf32>
    %13 = tpu.matmul %10, %12, %cst_11 {dimension_numbers = #tpu.dot_dimension_numbers<[1], [0], [0], [1], [0, 0, 1, 1], [], []>} : vector<8x256xf32>, vector<256x256xf32>, vector<8x256xf32> -> vector<8x256xf32>
    %14 = arith.addf %11, %13 : vector<8x256xf32>
    %c0_12 = arith.constant 0 : index
    %c0_13 = arith.constant 0 : index
    %15 = vector.load %arg10[%c0_12, %c0_13] : memref<8x256xf32, #tpu.memory_space<vmem>>, vector<8x256xf32>
    tpu.vector_store %arg10[%c0_12, %c0_13], %14 {strides = array<i32>} : memref<8x256xf32, #tpu.memory_space<vmem>>, vector<8x256xf32>,
    %c1_i32 = arith.constant 1 : i32
    %16 = arith.cmpi eq, %arg1, %c1_i32 : i32
    %17 = arith.extui %16 : i1 to i32
    %c0_i32_14 = arith.constant 0 : i32
    %18 = arith.cmpi ne, %17, %c0_i32_14 : i32
    scf.if %18 {
      %c0_15 = arith.constant 0 : index
      %c0_16 = arith.constant 0 : index
      %19 = vector.load %arg10[%c0_15, %c0_16] : memref<8x256xf32, #tpu.memory_space<vmem>>, vector<8x256xf32>
      %cst_17 = arith.constant dense<0.000000e+00> : vector<8xf32>
      %20 = vector.multi_reduction <add>, %19, %cst_17 [1] : vector<8x256xf32> to vector<8xf32>
      %21 = vector.shape_cast %20 : vector<8xf32> to vector<8x1xf32>
      %cst_18 = arith.constant 2.560000e+02 : f32
      %22 = vector.broadcast %cst_18 : f32 to vector<8x1xf32>
      %23 = arith.divf %21, %22 : vector<8x1xf32>
      %24 = vector.broadcast %23 : vector<8x1xf32> to vector<8x256xf32>
      %25 = arith.subf %19, %24 : vector<8x256xf32>
      %26 = arith.mulf %25, %25 : vector<8x256xf32>
      %cst_19 = arith.constant dense<0.000000e+00> : vector<8xf32>
      %27 = vector.multi_reduction <add>, %26, %cst_19 [1] : vector<8x256xf32> to vector<8xf32>
      %28 = vector.shape_cast %27 : vector<8xf32> to vector<8x1xf32>
      %cst_20 = arith.constant 2.560000e+02 : f32
      %29 = vector.broadcast %cst_20 : f32 to vector<8x1xf32>
      %30 = arith.divf %28, %29 : vector<8x1xf32>
      %cst_21 = arith.constant 9.99999997E-7 : f32
      %31 = vector.broadcast %cst_21 : f32 to vector<8x1xf32>
      %32 = arith.addf %30, %31 : vector<8x1xf32>
      %33 = math.rsqrt %32 : vector<8x1xf32>
      %34 = vector.broadcast %33 : vector<8x1xf32> to vector<8x256xf32>
      %35 = arith.mulf %25, %34 : vector<8x256xf32>
      %c0_22 = arith.constant 0 : index
      %c0_23 = arith.constant 0 : index
      %36 = vector.load %arg7[%c0_22, %c0_23] : memref<1x256xf32, #tpu.memory_space<vmem>>, vector<1x256xf32>
      %37 = vector.broadcast %36 : vector<1x256xf32> to vector<8x256xf32>
      %38 = arith.mulf %35, %37 : vector<8x256xf32>
      %c0_24 = arith.constant 0 : index
      %c0_25 = arith.constant 0 : index
      %39 = vector.load %arg8[%c0_24, %c0_25] : memref<1x256xf32, #tpu.memory_space<vmem>>, vector<1x256xf32>
      %40 = vector.broadcast %39 : vector<1x256xf32> to vector<8x256xf32>
      %41 = arith.addf %38, %40 : vector<8x256xf32>
      %c0_26 = arith.constant 0 : index
      %c0_27 = arith.constant 0 : index
      %42 = vector.load %arg9[%c0_26, %c0_27] : memref<8x256xf32, #tpu.memory_space<vmem>>, vector<8x256xf32>
      tpu.vector_store %arg9[%c0_26, %c0_27], %41 {strides = array<i32>} : memref<8x256xf32, #tpu.memory_space<vmem>>, vector<8x256xf32>,
    } else {
    }
    return
  }
  func.func @transform_0(%arg0: i32, %arg1: i32) -> (i32, i32) {
    %c0_i32 = arith.constant 0 : i32
    %c0_i32_0 = arith.constant 0 : i32
    return %arg0, %c0_i32 : i32, i32
  }
  func.func @transform_1(%arg0: i32, %arg1: i32) -> (i32, i32) {
    %c0_i32 = arith.constant 0 : i32
    %c0_i32_0 = arith.constant 0 : i32
    return %c0_i32, %arg1 : i32, i32
  }
  func.func @transform_2(%arg0: i32, %arg1: i32) -> (i32, i32) {
    %c0_i32 = arith.constant 0 : i32
    %c0_i32_0 = arith.constant 0 : i32
    return %c0_i32, %arg1 : i32, i32
  }
  func.func @transform_3(%arg0: i32, %arg1: i32) -> (i32, i32) {
    %c0_i32 = arith.constant 0 : i32
    %c0_i32_0 = arith.constant 0 : i32
    return %arg1, %c0_i32 : i32, i32
  }
  func.func @transform_4(%arg0: i32, %arg1: i32) -> (i32, i32) {
    %c0_i32 = arith.constant 0 : i32
    %c0_i32_0 = arith.constant 0 : i32
    %c0_i32_1 = arith.constant 0 : i32
    return %c0_i32, %c0_i32_0 : i32, i32
  }
  func.func @transform_5(%arg0: i32, %arg1: i32) -> (i32, i32) {
    %c0_i32 = arith.constant 0 : i32
    %c0_i32_0 = arith.constant 0 : i32
    %c0_i32_1 = arith.constant 0 : i32
    return %c0_i32, %c0_i32_0 : i32, i32
  }
  func.func @transform_6(%arg0: i32, %arg1: i32) -> (i32, i32) {
    %c0_i32 = arith.constant 0 : i32
    %c0_i32_0 = arith.constant 0 : i32
    %c0_i32_1 = arith.constant 0 : i32
    return %c0_i32, %c0_i32_0 : i32, i32
  }
  func.func @transform_7(%arg0: i32, %arg1: i32) -> (i32, i32) {
    %c0_i32 = arith.constant 0 : i32
    %c0_i32_0 = arith.constant 0 : i32
    return %arg0, %c0_i32 : i32, i32
  }
}

</mosaic_0001>

<llo_original>
// kernel: transformer_decoder_forward.17
$region0: #{transformer_decoder_forward.17}
  #allocation0 [shape = 'u32[]', space=smem, size = 0x4, offset = 0x4, fixed_abs, tag = 'smem constant byte address 0x4 - core index']
  #allocation1 [shape = 'u32[144,128]{1,0:T(1,128)}', space=vmem, size = 0x12000, scoped, tag = 'internal scratch']
  %s0 = inlined_call_operand.vmem [shape: f32[16,256], index: 0, kind: input, shape index: {}]
  %s1 = inlined_call_operand.vmem [shape: f32[16,256], index: 1, kind: input, shape index: {}]
  %s2 = inlined_call_operand.vmem [shape: f32[1,256], index: 2, kind: input, shape index: {}]
  %s3 = inlined_call_operand.vmem [shape: f32[1,256], index: 3, kind: input, shape index: {}]
  %s4 = inlined_call_operand.vmem [shape: f32[16,256], index: 4, kind: output, shape index: {}]
  %s5 = sld [smem:[#allocation0]]
  $region49: #{transformer_decoder_forward.17} parent=0
    _
  %s7 = ssub.s32 1, %s5
  %s8 = scalar_select 0, %s7, %s5
  loop: start=0, step=1, limit=4
  $region2: #{transformer_decoder_forward.17} parent=0 // loop_pre_header
    _
  $region3: #{transformer_decoder_forward.17} parent=0 // loop_header
    %s10 = sphi 0, %s14
    %p11 = scmp.ge.s32.totalorder %s10, 4
    %s20 = sphi 0, %s22
    %s23 = sphi 0, %s20
    %s24 = sphi 0, %s23
    %s40 = sphi 0, %s24
    %s46 = sphi 0, %s48
    %s49 = sphi 0, %s46
    %s50 = sphi 0, %s49
    %s66 = sphi 0, %s50
    %s70 = sphi 0, %s70
    %s72 = sphi 0, %s70
    %s73 = sphi 0, %s72
    %s87 = sphi 0, %s73
    %s91 = sphi 0, %s91
    %s93 = sphi 0, %s91
    %s94 = sphi 0, %s93
    %s108 = sphi 0, %s94
    %s114 = sphi 0, %s116
    %s117 = sphi 0, %s114
    %s118 = sphi 0, %s117
    %s134 = sphi 0, %s118
  $region4: #{transformer_decoder_forward.17} parent=0 // loop_header_branch
    %13 = sbr.rel (%p11) target = $region8
  $region5: #{transformer_decoder_forward.17} parent=0 // loop_body
    %s15 = ssub.s32 %s10, 1
    %s16 = ssub.s32 %s10, 2
    %s17 = sadd.s32 %s10, 1
    %s18 = ssub.s32 %s10, %s17
    %p19 = scmp.eq.s32.totalorder %s18, 0
    %s21 = sadd.s32 %s20, 1
    %s22 = scalar_select %p19, %s20, %s21
    %p25 = pneg %p19
    %p26 = scmp.eq.s32.totalorder %s10, 1
    %p27 = por %p25, %p26
    %p28 = scmp.ne.s32.totalorder %s20, %s23
    %p29 = scmp.eq.s32.totalorder %s10, 0
    %p30 = por %p28, %p29
    %p31 = scmp.ne.s32.totalorder %s20, %s23
    %p32 = scmp.eq.s32.totalorder %s15, 1
    %p33 = por %p31, %p32
    %p34 = scmp.ne.s32.totalorder %s23, %s24
    %p35 = scmp.eq.s32.totalorder %s15, 0
    %p36 = por %p34, %p35
    %p37 = scmp.ne.s32.totalorder %s23, %s24
    %p38 = scmp.eq.s32.totalorder %s16, 1
    %p39 = por %p37, %p38
    %p41 = scmp.ne.s32.totalorder %s24, %s40
    %p42 = scmp.eq.s32.totalorder %s16, 0
    %p43 = por %p41, %p42
    %s44 = ssub.s32 %s10, %s17
    %p45 = scmp.eq.s32.totalorder %s44, 0
    %s47 = sadd.s32 %s46, 1
    %s48 = scalar_select %p45, %s46, %s47
    %p51 = pneg %p45
    %p52 = scmp.eq.s32.totalorder %s10, 1
    %p53 = por %p51, %p52
    %p54 = scmp.ne.s32.totalorder %s46, %s49
    %p55 = scmp.eq.s32.totalorder %s10, 0
    %p56 = por %p54, %p55
    %p57 = scmp.ne.s32.totalorder %s46, %s49
    %p58 = scmp.eq.s32.totalorder %s15, 1
    %p59 = por %p57, %p58
    %p60 = scmp.ne.s32.totalorder %s49, %s50
    %p61 = scmp.eq.s32.totalorder %s15, 0
    %p62 = por %p60, %p61
    %p63 = scmp.ne.s32.totalorder %s49, %s50
    %p64 = scmp.eq.s32.totalorder %s16, 1
    %p65 = por %p63, %p64
    %p67 = scmp.ne.s32.totalorder %s50, %s66
    %p68 = scmp.eq.s32.totalorder %s16, 0
    %p69 = por %p67, %p68
    %s71 = sadd.s32 %s70, 1
    %p74 = scmp.eq.s32.totalorder %s10, 1
    %p75 = scmp.ne.s32.totalorder %s70, %s72
    %p76 = scmp.eq.s32.totalorder %s10, 0
    %p77 = por %p75, %p76
    %p78 = scmp.ne.s32.totalorder %s70, %s72
    %p79 = scmp.eq.s32.totalorder %s15, 1
    %p80 = por %p78, %p79
    %p81 = scmp.ne.s32.totalorder %s72, %s73
    %p82 = scmp.eq.s32.totalorder %s15, 0
    %p83 = por %p81, %p82
    %p84 = scmp.ne.s32.totalorder %s72, %s73
    %p85 = scmp.eq.s32.totalorder %s16, 1
    %p86 = por %p84, %p85
    %p88 = scmp.ne.s32.totalorder %s73, %s87
    %p89 = scmp.eq.s32.totalorder %s16, 0
    %p90 = por %p88, %p89
    %s92 = sadd.s32 %s91, 1
    %p95 = scmp.eq.s32.totalorder %s10, 1
    %p96 = scmp.ne.s32.totalorder %s91, %s93
    %p97 = scmp.eq.s32.totalorder %s10, 0
    %p98 = por %p96, %p97
    %p99 = scmp.ne.s32.totalorder %s91, %s93
    %p100 = scmp.eq.s32.totalorder %s15, 1
    %p101 = por %p99, %p100
    %p102 = scmp.ne.s32.totalorder %s93, %s94
    %p103 = scmp.eq.s32.totalorder %s15, 0
    %p104 = por %p102, %p103
    %p105 = scmp.ne.s32.totalorder %s93, %s94
    %p106 = scmp.eq.s32.totalorder %s16, 1
    %p107 = por %p105, %p106
    %p109 = scmp.ne.s32.totalorder %s94, %s108
    %p110 = scmp.eq.s32.totalorder %s16, 0
    %p111 = por %p109, %p110
    %s112 = ssub.s32 %s10, %s17
    %p113 = scmp.eq.s32.totalorder %s112, 0
    %s115 = sadd.s32 %s114, 1
    %s116 = scalar_select %p113, %s114, %s115
    %p119 = pneg %p113
    %p120 = scmp.eq.s32.totalorder %s10, 1
    %p121 = por %p119, %p120
    %p122 = scmp.ne.s32.totalorder %s114, %s117
    %p123 = scmp.eq.s32.totalorder %s10, 0
    %p124 = por %p122, %p123
    %p125 = scmp.ne.s32.totalorder %s114, %s117
    %p126 = scmp.eq.s32.totalorder %s15, 1
    %p127 = por %p125, %p126
    %p128 = scmp.ne.s32.totalorder %s117, %s118
    %p129 = scmp.eq.s32.totalorder %s15, 0
    %p130 = por %p128, %p129
    %p131 = scmp.ne.s32.totalorder %s117, %s118
    %p132 = scmp.eq.s32.totalorder %s16, 1
    %p133 = por %p131, %p132
    %p135 = scmp.ne.s32.totalorder %s118, %s134
    %p136 = scmp.eq.s32.totalorder %s16, 0
    %p137 = por %p135, %p136
    %p138 = scmp.le.s32.totalorder 1, %s10
    %p139 = scmp.lt.s32.totalorder %s10, 3
    %p140 = pnand %p138, %p139
    %p141 = pneg %p140
    // Predicated region
    $region9: #{transformer_decoder_forward.17} parent=5 // pred_check
      _
    $region10: #{transformer_decoder_forward.17} parent=5 // pred_check_branch
      %143 = sbr.rel (%p140) target = $region12
    $region11: #{transformer_decoder_forward.17} parent=5 // pred_region
      %s144 = ssub.s32 %s10, 1
      // Predicated region
      $region13: #{transformer_decoder_forward.17} parent=11 // pred_check
        %p145 = pneg %p83
      $region14: #{transformer_decoder_forward.17} parent=11 // pred_check_branch
        %147 = sbr.rel (%p145) target = $region16
      $region15: #{transformer_decoder_forward.17} parent=11 // pred_region
        _
      $region16: #{transformer_decoder_forward.17} parent=11 // pred_fallthru
        _
      // Predicated region
      $region17: #{transformer_decoder_forward.17} parent=11 // pred_check
        %p148 = pneg %p104
      $region18: #{transformer_decoder_forward.17} parent=11 // pred_check_branch
        %150 = sbr.rel (%p148) target = $region20
      $region19: #{transformer_decoder_forward.17} parent=11 // pred_region
        _
      $region20: #{transformer_decoder_forward.17} parent=11 // pred_fallthru
        _
    $region12: #{transformer_decoder_forward.17} parent=5 // pred_fallthru
      _
    %p151 = scmp.lt.s32.totalorder %s10, 2
    // Predicated region
    $region21: #{transformer_decoder_forward.17} parent=5 // pred_check
      %p152 = pneg %p151
    $region22: #{transformer_decoder_forward.17} parent=5 // pred_check_branch
      %154 = sbr.rel (%p152) target = $region24
    $region23: #{transformer_decoder_forward.17} parent=5 // pred_region
      // Predicated region
      $region25: #{transformer_decoder_forward.17} parent=23 // pred_check
        %p155 = pneg %p30
      $region26: #{transformer_decoder_forward.17} parent=23 // pred_check_branch
        %157 = sbr.rel (%p155) target = $region28
      $region27: #{transformer_decoder_forward.17} parent=23 // pred_region
        %p158 = scmp.lt.s32.totalorder %s10, 1
        %s159 = scalar_select %p158, %s10, 1
        %s160 = smul.addr %s159, 2
        %s161 = smul.addr %s160, 8
        %s162 = scalar_lea.vmem %s0, %s161
      $region28: #{transformer_decoder_forward.17} parent=23 // pred_fallthru
        _
      // Predicated region
      $region29: #{transformer_decoder_forward.17} parent=23 // pred_check
        %p163 = pneg %p56
      $region30: #{transformer_decoder_forward.17} parent=23 // pred_check_branch
        %165 = sbr.rel (%p163) target = $region32
      $region31: #{transformer_decoder_forward.17} parent=23 // pred_region
        %p166 = scmp.lt.s32.totalorder %s10, 1
        %s167 = scalar_select %p166, %s10, 1
        %s168 = smul.addr %s167, 2
        %s169 = smul.addr %s168, 8
        %s170 = scalar_lea.vmem %s1, %s169
      $region32: #{transformer_decoder_forward.17} parent=23 // pred_fallthru
        _
    $region24: #{transformer_decoder_forward.17} parent=5 // pred_fallthru
      _
    %p171 = scmp.le.s32.totalorder 1, %s10
    %p172 = scmp.lt.s32.totalorder %s10, 3
    %p173 = pnand %p171, %p172
    %p174 = pneg %p173
    // Predicated region
    $region33: #{transformer_decoder_forward.17} parent=5 // pred_check
      _
    $region34: #{transformer_decoder_forward.17} parent=5 // pred_check_branch
      %176 = sbr.rel (%p173) target = $region36
    $region35: #{transformer_decoder_forward.17} parent=5 // pred_region
      %s177 = ssub.s32 %s10, 1
      %p178 = scmp.lt.s32.totalorder %s15, 1
      %s179 = scalar_select %p178, %s15, 1
      %s180 = smul.addr %s179, 2
      %s181 = smul.addr %s180, 8
      %s182 = scalar_lea.vmem %s0, %s181
      %p183 = pneg %p36
      %p184 = pneg %p33
      %p185 = scmp.lt.s32.totalorder %s15, 1
      %s186 = scalar_select %p185, %s15, 1
      %s187 = smul.addr %s186, 2
      %s188 = smul.addr %s187, 8
      %s189 = scalar_lea.vmem %s1, %s188
      %p190 = pneg %p62
      %p191 = pneg %p59
      %p192 = pneg %p83
      %p193 = pneg %p80
      %p194 = pneg %p104
      %p195 = pneg %p101
      %p196 = pneg %p130
      %p197 = pneg %p127
      %p198 = scmp.lt.s32.totalorder %s15, 1
      %s199 = scalar_select %p198, %s15, 1
      %s200 = smul.addr %s199, 2
      %s201 = smul.addr %s200, 8
      %s202 = scalar_lea.vmem %s4, %s201
      %p203 = scmp.lt.s32.totalorder %s15, 1
      %s204 = scalar_select %p203, %s15, 1
      %s205 = smul.addr %s204, 2
      %s206 = smul.addr %s205, 8
      %s207 = scalar_lea.vmem %s0, %s206
      %p208 = scmp.lt.s32.totalorder %s15, 1
      %s209 = scalar_select %p208, %s15, 1
      %s210 = smul.addr %s209, 2
      %s211 = smul.addr %s210, 8
      %s212 = scalar_lea.vmem %s1, %s211
      %p213 = scmp.lt.s32.totalorder %s15, 1
      %s214 = scalar_select %p213, %s15, 1
      %s215 = smul.addr %s214, 2
      %s216 = smul.addr %s215, 8
      %s217 = scalar_lea.vmem %s4, %s216
      %v218 = vld [vmem:[%s207] sm:$0xff]
      %v219 = vld [vmem:[%s207 + $0x8] sm:$0xff]
      %v220 = vld [vmem:[%s212] sm:$0xff]
      %v221 = vld [vmem:[%s212 + $0x8] sm:$0xff]
      %v222 = vadd.f32 %v218, %v220
      %v223 = vadd.f32 %v219, %v221
      %v224 = vadd.f32 %v222, %v223
      %225 = vadd.xlane.f32.xlu0 %v224
      %v226 = vpop.xlane.xlu0 %225
      %v227 = vrcp.pop 256.0
      %v228 = vmul.f32 %v226, %v227
      %v229 = vsub.f32 %v222, %v228
      %v230 = vsub.f32 %v223, %v228
      %v231 = vmul.f32 %v229, %v229
      %v232 = vmul.f32 %v230, %v230
      %v233 = vadd.f32 %v231, %v232
      %234 = vadd.xlane.f32.xlu0 %v233
      %v235 = vpop.xlane.xlu0 %234
      %v236 = vmul.f32 %v235, %v227
      %v237 = vadd.f32 %v236, 1e-06
      %v238 = vrsqrt.pop %v237
      %v239 = vmul.f32 %v229, %v238
      %v240 = vmul.f32 %v230, %v238
      %v241 = vld [vmem:[%s2] sm:$0x3]
      %v243 = vlaneseq
      %v244 = vshrl.u32 %v243, 7
      %v245 = vsub.s32 0, %v244
      %v246 = vrot.slane %v241, %v245
      %v247 = vlaneseq
      %v248 = vshrl.u32 %v247, 7
      %v249 = vsub.s32 1, %v248
      %v250 = vrot.slane %v241, %v249
      %v253 = vmul.f32 %v239, %v246
      %v254 = vmul.f32 %v240, %v250
      %v255 = vld [vmem:[%s3] sm:$0x3]
      %v257 = vlaneseq
      %v258 = vshrl.u32 %v257, 7
      %v259 = vsub.s32 0, %v258
      %v260 = vrot.slane %v255, %v259
      %v261 = vlaneseq
      %v262 = vshrl.u32 %v261, 7
      %v263 = vsub.s32 1, %v262
      %v264 = vrot.slane %v255, %v263
      %v267 = vadd.f32 %v253, %v260
      %v268 = vadd.f32 %v254, %v264
      %269 = vst [vmem:[%s217] sm:$0xff] %v267
      %270 = vst [vmem:[%s217 + $0x8] sm:$0xff] %v268
      %p271 = scmp.lt.s32.totalorder %s15, 1
      %s272 = scalar_select %p271, %s15, 1
      %s273 = smul.addr %s272, 2
      %s274 = smul.addr %s273, 8
      %s275 = scalar_lea.vmem %s4, %s274
      // Predicated region
      $region37: #{transformer_decoder_forward.17} parent=35 // pred_check
        %p276 = pneg %p127
      $region38: #{transformer_decoder_forward.17} parent=35 // pred_check_branch
        %278 = sbr.rel (%p276) target = $region40
      $region39: #{transformer_decoder_forward.17} parent=35 // pred_region
        _
      $region40: #{transformer_decoder_forward.17} parent=35 // pred_fallthru
        _
    $region36: #{transformer_decoder_forward.17} parent=5 // pred_fallthru
      _
    %p279 = scmp.le.s32.totalorder 2, %s10
    // Predicated region
    $region41: #{transformer_decoder_forward.17} parent=5 // pred_check
      %p280 = pneg %p279
    $region42: #{transformer_decoder_forward.17} parent=5 // pred_check_branch
      %282 = sbr.rel (%p280) target = $region44
    $region43: #{transformer_decoder_forward.17} parent=5 // pred_region
      %s283 = ssub.s32 %s10, 2
      // Predicated region
      $region45: #{transformer_decoder_forward.17} parent=43 // pred_check
        %p284 = pneg %p133
      $region46: #{transformer_decoder_forward.17} parent=43 // pred_check_branch
        %286 = sbr.rel (%p284) target = $region48
      $region47: #{transformer_decoder_forward.17} parent=43 // pred_region
        %p287 = scmp.lt.s32.totalorder %s16, 1
        %s288 = scalar_select %p287, %s16, 1
        %s289 = smul.addr %s288, 2
        %s290 = smul.addr %s289, 8
        %s291 = scalar_lea.vmem %s4, %s290
      $region48: #{transformer_decoder_forward.17} parent=43 // pred_fallthru
        _
    $region44: #{transformer_decoder_forward.17} parent=5 // pred_fallthru
      _
  $region6: #{transformer_decoder_forward.17} parent=0 // loop_footer
    %s14 = sadd.s32 1, %s10
  $region7: #{transformer_decoder_forward.17} parent=0 // loop_footer_branch
    %9 = sbr.rel target = $region3
  $region8: #{transformer_decoder_forward.17} parent=0 // loop_exit
    _

// kernel: transformer_decoder_forward.18
$region0: #{transformer_decoder_forward.18}
  #allocation0 [shape = 'u32[]', space=smem, size = 0x4, offset = 0x4, fixed_abs, tag = 'smem constant byte address 0x4 - core index']
  #allocation1 [shape = 'u32[144,128]{1,0:T(1,128)}', space=vmem, size = 0x12000, scoped, tag = 'internal scratch']
  %s0 = inlined_call_operand.vmem [shape: f32[2,8,256], index: 0, kind: input, shape index: {}]
  %s1 = inlined_call_operand.hbm [shape: f32[2,256,128], index: 1, kind: input, shape index: {}]
  %s2 = inlined_call_operand.hbm [shape: f32[2,256,128], index: 2, kind: input, shape index: {}]
  %s3 = inlined_call_operand.hbm [shape: f32[2,256,128], index: 3, kind: input, shape index: {}]
  %s4 = inlined_call_operand.vmem [shape: f32[2,2,8,128], index: 4, kind: output, shape index: {0}]
  %s5 = inlined_call_operand.vmem [shape: f32[2,2,8,128], index: 5, kind: output, shape index: {1}]
  %s6 = inlined_call_operand.vmem [shape: f32[2,2,8,128], index: 6, kind: output, shape index: {2}]
  %7 = xla_tuple %s4, %s5, %s6
  %s8 = sld [smem:[#allocation0]]
  $region77: #{transformer_decoder_forward.18} parent=0
    _
  %s10 = ssub.s32 1, %s8
  %s11 = scalar_select 0, %s10, %s8
  $region1: #{transformer_decoder_forward.18} parent=0
    #allocation2 [shape = 'u8[262144]{0}', space=vmem, size = 0x40000, scoped, tag = 'input window, operand 1']
    #allocation3 [shape = 's32[2]{0}', space=sflag, size = 0x8, scoped, tag = 'scoped memory for transformer_decoder_forward.18']
    #allocation4 [shape = 'u8[262144]{0}', space=vmem, size = 0x40000, scoped, tag = 'input window, operand 2']
    #allocation5 [shape = 's32[2]{0}', space=sflag, size = 0x8, scoped, tag = 'scoped memory for transformer_decoder_forward.18']
    #allocation6 [shape = 'u8[262144]{0}', space=vmem, size = 0x40000, scoped, tag = 'input window, operand 3']
    %12 = vsyncpa [#allocation3], 0
    %s13 = scalar_lea.sflag [#allocation3], 1
    %14 = vsyncpa %s13, 0
    %15 = vsyncpa [#allocation5], 0
    %s16 = scalar_lea.sflag [#allocation5], 1
    %17 = vsyncpa %s16, 0
    loop: start=0, step=1, limit=6
    $region2: #{transformer_decoder_forward.18} parent=1 // loop_pre_header
      _
    $region3: #{transformer_decoder_forward.18} parent=1 // loop_header
      %s19 = sphi 0, %s23
      %p20 = scmp.ge.s32.totalorder %s19, 6
      %s26 = sphi 0, %s45
      %s27 = sphi 0, %s41
      %s28 = sphi 0, %s37
      %s29 = sphi 0, %s26
      %s30 = sphi 0, %s27
      %s31 = sphi 0, %s28
      %s32 = sphi 0, %s29
      %s33 = sphi 0, %s30
      %s34 = sphi 0, %s31
      %s50 = sphi 0, %s52
      %s53 = sphi 0, %s50
      %s54 = sphi 0, %s53
      %s70 = sphi 0, %s54
      %s76 = sphi 0, %s78
      %s79 = sphi 0, %s76
      %s80 = sphi 0, %s79
      %s96 = sphi 0, %s80
      %s102 = sphi 0, %s104
      %s105 = sphi 0, %s102
      %s106 = sphi 0, %s105
      %s122 = sphi 0, %s106
      %s128 = sphi 0, %s130
      %s131 = sphi 0, %s128
      %s132 = sphi 0, %s131
      %s148 = sphi 0, %s132
      %s158 = sphi 0, %s160
      %s161 = sphi 0, %s158
      %s162 = sphi 0, %s161
      %s178 = sphi 0, %s162
      %s188 = sphi 0, %s190
      %s191 = sphi 0, %s188
      %s192 = sphi 0, %s191
      %s208 = sphi 0, %s192
      %s218 = sphi 0, %s220
      %s221 = sphi 0, %s218
      %s222 = sphi 0, %s221
      %s238 = sphi 0, %s222
    $region4: #{transformer_decoder_forward.18} parent=1 // loop_header_branch
      %22 = sbr.rel (%p20) target = $region8
    $region5: #{transformer_decoder_forward.18} parent=1 // loop_body
      %s24 = ssub.s32 %s19, 1
      %s25 = ssub.s32 %s19, 2
      %s35 = sadd.s32 1, %s28
      %p36 = scmp.ge.s32.totalorder %s35, 1
      %s37 = scalar_select %p36, 0, %s35
      %s38 = sadd.s32 1, %s27
      %s39 = scalar_select %p36, %s38, %s27
      %p40 = scmp.ge.s32.totalorder %s39, 2
      %s41 = scalar_select %p40, 0, %s39
      %s42 = sadd.s32 1, %s26
      %s43 = scalar_select %p40, %s42, %s26
      %p44 = scmp.ge.s32.totalorder %s43, 2
      %s45 = scalar_select %p44, 0, %s43
      %s46 = ssub.s32 %s26, %s45
      %s47 = ssub.s32 %s28, %s37
      %s48 = sor.u32 %s46, %s47
      %p49 = scmp.eq.s32.totalorder %s48, 0
      %s51 = sadd.s32 %s50, 1
      %s52 = scalar_select %p49, %s50, %s51
      %p55 = pneg %p49
      %p56 = scmp.eq.s32.totalorder %s19, 3
      %p57 = por %p55, %p56
      %p58 = scmp.ne.s32.totalorder %s50, %s53
      %p59 = scmp.eq.s32.totalorder %s19, 0
      %p60 = por %p58, %p59
      %p61 = scmp.ne.s32.totalorder %s50, %s53
      %p62 = scmp.eq.s32.totalorder %s24, 3
      %p63 = por %p61, %p62
      %p64 = scmp.ne.s32.totalorder %s53, %s54
      %p65 = scmp.eq.s32.totalorder %s24, 0
      %p66 = por %p64, %p65
      %p67 = scmp.ne.s32.totalorder %s53, %s54
      %p68 = scmp.eq.s32.totalorder %s25, 3
      %p69 = por %p67, %p68
      %p71 = scmp.ne.s32.totalorder %s54, %s70
      %p72 = scmp.eq.s32.totalorder %s25, 0
      %p73 = por %p71, %p72
      %s74 = ssub.s32 %s27, %s41
      %p75 = scmp.eq.s32.totalorder %s74, 0
      %s77 = sadd.s32 %s76, 1
      %s78 = scalar_select %p75, %s76, %s77
      %p81 = pneg %p75
      %p82 = scmp.eq.s32.totalorder %s19, 3
      %p83 = por %p81, %p82
      %p84 = scmp.ne.s32.totalorder %s76, %s79
      %p85 = scmp.eq.s32.totalorder %s19, 0
      %p86 = por %p84, %p85
      %p87 = scmp.ne.s32.totalorder %s76, %s79
      %p88 = scmp.eq.s32.totalorder %s24, 3
      %p89 = por %p87, %p88
      %p90 = scmp.ne.s32.totalorder %s79, %s80
      %p91 = scmp.eq.s32.totalorder %s24, 0
      %p92 = por %p90, %p91
      %p93 = scmp.ne.s32.totalorder %s79, %s80
      %p94 = scmp.eq.s32.totalorder %s25, 3
      %p95 = por %p93, %p94
      %p97 = scmp.ne.s32.totalorder %s80, %s96
      %p98 = scmp.eq.s32.totalorder %s25, 0
      %p99 = por %p97, %p98
      %s100 = ssub.s32 %s27, %s41
      %p101 = scmp.eq.s32.totalorder %s100, 0
      %s103 = sadd.s32 %s102, 1
      %s104 = scalar_select %p101, %s102, %s103
      %p107 = pneg %p101
      %p108 = scmp.eq.s32.totalorder %s19, 3
      %p109 = por %p107, %p108
      %p110 = scmp.ne.s32.totalorder %s102, %s105
      %p111 = scmp.eq.s32.totalorder %s19, 0
      %p112 = por %p110, %p111
      %p113 = scmp.ne.s32.totalorder %s102, %s105
      %p114 = scmp.eq.s32.totalorder %s24, 3
      %p115 = por %p113, %p114
      %p116 = scmp.ne.s32.totalorder %s105, %s106
      %p117 = scmp.eq.s32.totalorder %s24, 0
      %p118 = por %p116, %p117
      %p119 = scmp.ne.s32.totalorder %s105, %s106
      %p120 = scmp.eq.s32.totalorder %s25, 3
      %p121 = por %p119, %p120
      %p123 = scmp.ne.s32.totalorder %s106, %s122
      %p124 = scmp.eq.s32.totalorder %s25, 0
      %p125 = por %p123, %p124
      %s126 = ssub.s32 %s27, %s41
      %p127 = scmp.eq.s32.totalorder %s126, 0
      %s129 = sadd.s32 %s128, 1
      %s130 = scalar_select %p127, %s128, %s129
      %p133 = pneg %p127
      %p134 = scmp.eq.s32.totalorder %s19, 3
      %p135 = por %p133, %p134
      %p136 = scmp.ne.s32.totalorder %s128, %s131
      %p137 = scmp.eq.s32.totalorder %s19, 0
      %p138 = por %p136, %p137
      %p139 = scmp.ne.s32.totalorder %s128, %s131
      %p140 = scmp.eq.s32.totalorder %s24, 3
      %p141 = por %p139, %p140
      %p142 = scmp.ne.s32.totalorder %s131, %s132
      %p143 = scmp.eq.s32.totalorder %s24, 0
      %p144 = por %p142, %p143
      %p145 = scmp.ne.s32.totalorder %s131, %s132
      %p146 = scmp.eq.s32.totalorder %s25, 3
      %p147 = por %p145, %p146
      %p149 = scmp.ne.s32.totalorder %s132, %s148
      %p150 = scmp.eq.s32.totalorder %s25, 0
      %p151 = por %p149, %p150
      %s152 = ssub.s32 %s26, %s45
      %s153 = ssub.s32 %s27, %s41
      %s154 = sor.u32 %s152, %s153
      %s155 = ssub.s32 %s28, %s37
      %s156 = sor.u32 %s154, %s155
      %p157 = scmp.eq.s32.totalorder %s156, 0
      %s159 = sadd.s32 %s158, 1
      %s160 = scalar_select %p157, %s158, %s159
      %p163 = pneg %p157
      %p164 = scmp.eq.s32.totalorder %s19, 3
      %p165 = por %p163, %p164
      %p166 = scmp.ne.s32.totalorder %s158, %s161
      %p167 = scmp.eq.s32.totalorder %s19, 0
      %p168 = por %p166, %p167
      %p169 = scmp.ne.s32.totalorder %s158, %s161
      %p170 = scmp.eq.s32.totalorder %s24, 3
      %p171 = por %p169, %p170
      %p172 = scmp.ne.s32.totalorder %s161, %s162
      %p173 = scmp.eq.s32.totalorder %s24, 0
      %p174 = por %p172, %p173
      %p175 = scmp.ne.s32.totalorder %s161, %s162
      %p176 = scmp.eq.s32.totalorder %s25, 3
      %p177 = por %p175, %p176
      %p179 = scmp.ne.s32.totalorder %s162, %s178
      %p180 = scmp.eq.s32.totalorder %s25, 0
      %p181 = por %p179, %p180
      %s182 = ssub.s32 %s26, %s45
      %s183 = ssub.s32 %s27, %s41
      %s184 = sor.u32 %s182, %s183
      %s185 = ssub.s32 %s28, %s37
      %s186 = sor.u32 %s184, %s185
      %p187 = scmp.eq.s32.totalorder %s186, 0
      %s189 = sadd.s32 %s188, 1
      %s190 = scalar_select %p187, %s188, %s189
      %p193 = pneg %p187
      %p194 = scmp.eq.s32.totalorder %s19, 3
      %p195 = por %p193, %p194
      %p196 = scmp.ne.s32.totalorder %s188, %s191
      %p197 = scmp.eq.s32.totalorder %s19, 0
      %p198 = por %p196, %p197
      %p199 = scmp.ne.s32.totalorder %s188, %s191
      %p200 = scmp.eq.s32.totalorder %s24, 3
      %p201 = por %p199, %p200
      %p202 = scmp.ne.s32.totalorder %s191, %s192
      %p203 = scmp.eq.s32.totalorder %s24, 0
      %p204 = por %p202, %p203
      %p205 = scmp.ne.s32.totalorder %s191, %s192
      %p206 = scmp.eq.s32.totalorder %s25, 3
      %p207 = por %p205, %p206
      %p209 = scmp.ne.s32.totalorder %s192, %s208
      %p210 = scmp.eq.s32.totalorder %s25, 0
      %p211 = por %p209, %p210
      %s212 = ssub.s32 %s26, %s45
      %s213 = ssub.s32 %s27, %s41
      %s214 = sor.u32 %s212, %s213
      %s215 = ssub.s32 %s28, %s37
      %s216 = sor.u32 %s214, %s215
      %p217 = scmp.eq.s32.totalorder %s216, 0
      %s219 = sadd.s32 %s218, 1
      %s220 = scalar_select %p217, %s218, %s219
      %p223 = pneg %p217
      %p224 = scmp.eq.s32.totalorder %s19, 3
      %p225 = por %p223, %p224
      %p226 = scmp.ne.s32.totalorder %s218, %s221
      %p227 = scmp.eq.s32.totalorder %s19, 0
      %p228 = por %p226, %p227
      %p229 = scmp.ne.s32.totalorder %s218, %s221
      %p230 = scmp.eq.s32.totalorder %s24, 3
      %p231 = por %p229, %p230
      %p232 = scmp.ne.s32.totalorder %s221, %s222
      %p233 = scmp.eq.s32.totalorder %s24, 0
      %p234 = por %p232, %p233
      %p235 = scmp.ne.s32.totalorder %s221, %s222
      %p236 = scmp.eq.s32.totalorder %s25, 3
      %p237 = por %p235, %p236
      %p239 = scmp.ne.s32.totalorder %s222, %s238
      %p240 = scmp.eq.s32.totalorder %s25, 0
      %p241 = por %p239, %p240
      %p242 = scmp.le.s32.totalorder 1, %s19
      %p243 = scmp.lt.s32.totalorder %s19, 5
      %p244 = pnand %p242, %p243
      %p245 = pneg %p244
      // Predicated region
      $region9: #{transformer_decoder_forward.18} parent=5 // pred_check
        _
      $region10: #{transformer_decoder_forward.18} parent=5 // pred_check_branch
        %247 = sbr.rel (%p244) target = $region12
      $region11: #{transformer_decoder_forward.18} parent=5 // pred_region
        %s248 = ssub.s32 %s19, 1
      $region12: #{transformer_decoder_forward.18} parent=5 // pred_fallthru
        _
      %p249 = scmp.lt.s32.totalorder %s19, 4
      // Predicated region
      $region13: #{transformer_decoder_forward.18} parent=5 // pred_check
        %p250 = pneg %p249
      $region14: #{transformer_decoder_forward.18} parent=5 // pred_check_branch
        %252 = sbr.rel (%p250) target = $region16
      $region15: #{transformer_decoder_forward.18} parent=5 // pred_region
        // Predicated region
        $region17: #{transformer_decoder_forward.18} parent=15 // pred_check
          %p253 = pneg %p60
        $region18: #{transformer_decoder_forward.18} parent=15 // pred_check_branch
          %255 = sbr.rel (%p253) target = $region20
        $region19: #{transformer_decoder_forward.18} parent=15 // pred_region
          %p256 = scmp.lt.s32.totalorder %s26, 1
          %s257 = scalar_select %p256, %s26, 1
          %p258 = scmp.lt.s32.totalorder %s28, 0
          %s259 = scalar_select %p258, %s28, 0
          %s260 = smul.addr %s259, 2
          %s261 = smul.addr %s257, 2
          %s262 = sadd.s32 %s260, %s261
          %s263 = smul.addr %s262, 8
          %s264 = scalar_lea.vmem %s0, %s263
        $region20: #{transformer_decoder_forward.18} parent=15 // pred_fallthru
          _
        // Predicated region
        $region21: #{transformer_decoder_forward.18} parent=15 // pred_check
          %p265 = pneg %p86
        $region22: #{transformer_decoder_forward.18} parent=15 // pred_check_branch
          %267 = sbr.rel (%p265) target = $region24
        $region23: #{transformer_decoder_forward.18} parent=15 // pred_region
          %s268 = sand.u32 %s76, 1
          %s269 = scalar_lea.sflag [#allocation3], %s268
          %s270 = sand.u32 %s76, 1
          %s271 = smul.addr %s270, 256
          %s272 = scalar_lea.vmem [#allocation2], %s271
          %s274 = ssub.s32 4096, 4096
          %275 = vsyncadd %s269, %s274
          %s276 = smul.addr %s27, 32
          %s277 = smul.addr %s276, 128
          %s278 = scalar_lea.hbm %s1, %s277
          %s279 = sshll.u32 %s272, 4
          %s280 = int_to_ptr.vmem [resolvable:$true] %s279
          %285 = dma.hbm_to_vmem [thread:$0]  %s278, 4096, %s280, %s269, 128, 128, 8
        $region24: #{transformer_decoder_forward.18} parent=15 // pred_fallthru
          _
        // Predicated region
        $region25: #{transformer_decoder_forward.18} parent=15 // pred_check
          %p286 = pneg %p112
        $region26: #{transformer_decoder_forward.18} parent=15 // pred_check_branch
          %288 = sbr.rel (%p286) target = $region28
        $region27: #{transformer_decoder_forward.18} parent=15 // pred_region
          %s289 = sand.u32 %s19, 1
          %s290 = scalar_lea.sflag [#allocation5], %s289
          %s291 = sand.u32 %s102, 1
          %s292 = smul.addr %s291, 256
          %s293 = scalar_lea.vmem [#allocation4], %s292
          %s295 = ssub.s32 4096, 4096
          %296 = vsyncadd %s290, %s295
          %s297 = smul.addr %s27, 32
          %s298 = smul.addr %s297, 128
          %s299 = scalar_lea.hbm %s2, %s298
          %s300 = sshll.u32 %s293, 4
          %s301 = int_to_ptr.vmem [resolvable:$true] %s300
          %306 = dma.hbm_to_vmem [thread:$0]  %s299, 4096, %s301, %s290, 128, 128, 8
        $region28: #{transformer_decoder_forward.18} parent=15 // pred_fallthru
          _
        // Predicated region
        $region29: #{transformer_decoder_forward.18} parent=15 // pred_check
          %p307 = pneg %p138
        $region30: #{transformer_decoder_forward.18} parent=15 // pred_check_branch
          %309 = sbr.rel (%p307) target = $region32
        $region31: #{transformer_decoder_forward.18} parent=15 // pred_region
          %s310 = sand.u32 %s19, 1
          %s311 = scalar_lea.sflag [#allocation5], %s310
          %s312 = sand.u32 %s128, 1
          %s313 = smul.addr %s312, 256
          %s314 = scalar_lea.vmem [#allocation6], %s313
          %s316 = ssub.s32 4096, 4096
          %317 = vsyncadd %s311, %s316
          %s318 = smul.addr %s27, 32
          %s319 = smul.addr %s318, 128
          %s320 = scalar_lea.hbm %s3, %s319
          %s321 = sshll.u32 %s314, 4
          %s322 = int_to_ptr.vmem [resolvable:$true] %s321
          %327 = dma.hbm_to_vmem [thread:$0]  %s320, 4096, %s322, %s311, 128, 128, 8
        $region32: #{transformer_decoder_forward.18} parent=15 // pred_fallthru
          _
      $region16: #{transformer_decoder_forward.18} parent=5 // pred_fallthru
        _
      %p328 = scmp.le.s32.totalorder 1, %s19
      %p329 = scmp.lt.s32.totalorder %s19, 5
      %p330 = pnand %p328, %p329
      %p331 = pneg %p330
      // Predicated region
      $region33: #{transformer_decoder_forward.18} parent=5 // pred_check
        _
      $region34: #{transformer_decoder_forward.18} parent=5 // pred_check_branch
        %333 = sbr.rel (%p330) target = $region36
      $region35: #{transformer_decoder_forward.18} parent=5 // pred_region
        %s334 = ssub.s32 %s19, 1
        %s335 = sand.u32 %s79, 1
        %s336 = scalar_lea.sflag [#allocation3], %s335
        %s337 = sand.u32 %s79, 1
        %s338 = smul.addr %s337, 256
        %s339 = scalar_lea.vmem [#allocation2], %s338
        // Predicated region
        $region37: #{transformer_decoder_forward.18} parent=35 // pred_check
          %p340 = pneg %p92
        $region38: #{transformer_decoder_forward.18} parent=35 // pred_check_branch
          %342 = sbr.rel (%p340) target = $region40
        $region39: #{transformer_decoder_forward.18} parent=35 // pred_region
          %343 = dma.done %s336, 4096
        $region40: #{transformer_decoder_forward.18} parent=35 // pred_fallthru
          _
        %s344 = sand.u32 %s24, 1
        %s345 = scalar_lea.sflag [#allocation5], %s344
        %s346 = sand.u32 %s105, 1
        %s347 = smul.addr %s346, 256
        %s348 = scalar_lea.vmem [#allocation4], %s347
        // Predicated region
        $region41: #{transformer_decoder_forward.18} parent=35 // pred_check
          %p349 = pneg %p118
        $region42: #{transformer_decoder_forward.18} parent=35 // pred_check_branch
          %351 = sbr.rel (%p349) target = $region44
        $region43: #{transformer_decoder_forward.18} parent=35 // pred_region
          %352 = dma.done %s345, 4096
        $region44: #{transformer_decoder_forward.18} parent=35 // pred_fallthru
          _
        %s353 = sand.u32 %s24, 1
        %s354 = scalar_lea.sflag [#allocation5], %s353
        %s355 = sand.u32 %s131, 1
        %s356 = smul.addr %s355, 256
        %s357 = scalar_lea.vmem [#allocation6], %s356
        // Predicated region
        $region45: #{transformer_decoder_forward.18} parent=35 // pred_check
          %p358 = pneg %p144
        $region46: #{transformer_decoder_forward.18} parent=35 // pred_check_branch
          %360 = sbr.rel (%p358) target = $region48
        $region47: #{transformer_decoder_forward.18} parent=35 // pred_region
          %361 = dma.done %s354, 4096
        $region48: #{transformer_decoder_forward.18} parent=35 // pred_fallthru
          _
        %p362 = scmp.lt.s32.totalorder %s29, 1
        %s363 = scalar_select %p362, %s29, 1
        %p364 = scmp.lt.s32.totalorder %s31, 0
        %s365 = scalar_select %p364, %s31, 0
        %s366 = smul.addr %s365, 2
        %s367 = smul.addr %s363, 2
        %s368 = sadd.s32 %s366, %s367
        %s369 = smul.addr %s368, 8
        %s370 = scalar_lea.vmem %s0, %s369
        %p371 = pneg %p66
        %p372 = pneg %p63
        %s373 = sand.u32 %s79, 1
        %s374 = scalar_lea.sflag [#allocation3], %s373
        %s375 = sand.u32 %s79, 1
        %s376 = smul.addr %s375, 256
        %s377 = scalar_lea.vmem [#allocation2], %s376
        %p378 = pneg %p92
        %p379 = pneg %p89
        %s380 = sand.u32 %s24, 1
        %s381 = scalar_lea.sflag [#allocation5], %s380
        %s382 = sand.u32 %s105, 1
        %s383 = smul.addr %s382, 256
        %s384 = scalar_lea.vmem [#allocation4], %s383
        %p385 = pneg %p118
        %p386 = pneg %p115
        %s387 = sand.u32 %s24, 1
        %s388 = scalar_lea.sflag [#allocation5], %s387
        %s389 = sand.u32 %s131, 1
        %s390 = smul.addr %s389, 256
        %s391 = scalar_lea.vmem [#allocation6], %s390
        %p392 = pneg %p144
        %p393 = pneg %p141
        %p394 = pneg %p174
        %p395 = pneg %p171
        %p396 = scmp.lt.s32.totalorder %s29, 1
        %s397 = scalar_select %p396, %s29, 1
        %p398 = scmp.lt.s32.totalorder %s30, 1
        %s399 = scalar_select %p398, %s30, 1
        %p400 = scmp.lt.s32.totalorder %s31, 0
        %s401 = scalar_select %p400, %s31, 0
        %s402 = sadd.s32 %s401, %s399
        %s403 = smul.addr %s397, 2
        %s404 = sadd.s32 %s402, %s403
        %s405 = smul.addr %s404, 8
        %s406 = scalar_lea.vmem %s4, %s405
        %p407 = pneg %p204
        %p408 = pneg %p201
        %p409 = scmp.lt.s32.totalorder %s29, 1
        %s410 = scalar_select %p409, %s29, 1
        %p411 = scmp.lt.s32.totalorder %s30, 1
        %s412 = scalar_select %p411, %s30, 1
        %p413 = scmp.lt.s32.totalorder %s31, 0
        %s414 = scalar_select %p413, %s31, 0
        %s415 = sadd.s32 %s414, %s412
        %s416 = smul.addr %s410, 2
        %s417 = sadd.s32 %s415, %s416
        %s418 = smul.addr %s417, 8
        %s419 = scalar_lea.vmem %s5, %s418
        %p420 = pneg %p234
        %p421 = pneg %p231
        %p422 = scmp.lt.s32.totalorder %s29, 1
        %s423 = scalar_select %p422, %s29, 1
        %p424 = scmp.lt.s32.totalorder %s30, 1
        %s425 = scalar_select %p424, %s30, 1
        %p426 = scmp.lt.s32.totalorder %s31, 0
        %s427 = scalar_select %p426, %s31, 0
        %s428 = sadd.s32 %s427, %s425
        %s429 = smul.addr %s423, 2
        %s430 = sadd.s32 %s428, %s429
        %s431 = smul.addr %s430, 8
        %s432 = scalar_lea.vmem %s6, %s431
        %p433 = scmp.lt.s32.totalorder %s29, 1
        %s434 = scalar_select %p433, %s29, 1
        %p435 = scmp.lt.s32.totalorder %s31, 0
        %s436 = scalar_select %p435, %s31, 0
        %s437 = smul.addr %s436, 2
        %s438 = smul.addr %s434, 2
        %s439 = sadd.s32 %s437, %s438
        %s440 = smul.addr %s439, 8
        %s441 = scalar_lea.vmem %s0, %s440
        %p442 = scmp.lt.s32.totalorder %s29, 1
        %s443 = scalar_select %p442, %s29, 1
        %p444 = scmp.lt.s32.totalorder %s30, 1
        %s445 = scalar_select %p444, %s30, 1
        %p446 = scmp.lt.s32.totalorder %s31, 0
        %s447 = scalar_select %p446, %s31, 0
        %s448 = sadd.s32 %s447, %s445
        %s449 = smul.addr %s443, 2
        %s450 = sadd.s32 %s448, %s449
        %s451 = smul.addr %s450, 8
        %s452 = scalar_lea.vmem %s4, %s451
        %p453 = scmp.lt.s32.totalorder %s29, 1
        %s454 = scalar_select %p453, %s29, 1
        %p455 = scmp.lt.s32.totalorder %s30, 1
        %s456 = scalar_select %p455, %s30, 1
        %p457 = scmp.lt.s32.totalorder %s31, 0
        %s458 = scalar_select %p457, %s31, 0
        %s459 = sadd.s32 %s458, %s456
        %s460 = smul.addr %s454, 2
        %s461 = sadd.s32 %s459, %s460
        %s462 = smul.addr %s461, 8
        %s463 = scalar_lea.vmem %s5, %s462
        %p464 = scmp.lt.s32.totalorder %s29, 1
        %s465 = scalar_select %p464, %s29, 1
        %p466 = scmp.lt.s32.totalorder %s30, 1
        %s467 = scalar_select %p466, %s30, 1
        %p468 = scmp.lt.s32.totalorder %s31, 0
        %s469 = scalar_select %p468, %s31, 0
        %s470 = sadd.s32 %s469, %s467
        %s471 = smul.addr %s465, 2
        %s472 = sadd.s32 %s470, %s471
        %s473 = smul.addr %s472, 8
        %s474 = scalar_lea.vmem %s6, %s473
        %v475 = vld [vmem:[%s441] sm:$0xff]
        %v476 = vld [vmem:[%s441 + $0x8] sm:$0xff]
        %v477 = vld [vmem:[%s339] sm:$0xff]
        %v478 = vld [vmem:[%s339 + $0x8] sm:$0xff]
        %v479 = vld [vmem:[%s339 + $0x10] sm:$0xff]
        %v480 = vld [vmem:[%s339 + $0x18] sm:$0xff]
        %v481 = vld [vmem:[%s339 + $0x20] sm:$0xff]
        %v482 = vld [vmem:[%s339 + $0x28] sm:$0xff]
        %v483 = vld [vmem:[%s339 + $0x30] sm:$0xff]
        %v484 = vld [vmem:[%s339 + $0x38] sm:$0xff]
        %v485 = vld [vmem:[%s339 + $0x40] sm:$0xff]
        %v486 = vld [vmem:[%s339 + $0x48] sm:$0xff]
        %v487 = vld [vmem:[%s339 + $0x50] sm:$0xff]
        %v488 = vld [vmem:[%s339 + $0x58] sm:$0xff]
        %v489 = vld [vmem:[%s339 + $0x60] sm:$0xff]
        %v490 = vld [vmem:[%s339 + $0x68] sm:$0xff]
        %v491 = vld [vmem:[%s339 + $0x70] sm:$0xff]
        %v492 = vld [vmem:[%s339 + $0x78] sm:$0xff]
        %v493 = vld [vmem:[%s339 + $0x80] sm:$0xff]
        %v494 = vld [vmem:[%s339 + $0x88] sm:$0xff]
        %v495 = vld [vmem:[%s339 + $0x90] sm:$0xff]
        %v496 = vld [vmem:[%s339 + $0x98] sm:$0xff]
        %v497 = vld [vmem:[%s339 + $0xa0] sm:$0xff]
        %v498 = vld [vmem:[%s339 + $0xa8] sm:$0xff]
        %v499 = vld [vmem:[%s339 + $0xb0] sm:$0xff]
        %v500 = vld [vmem:[%s339 + $0xb8] sm:$0xff]
        %v501 = vld [vmem:[%s339 + $0xc0] sm:$0xff]
        %v502 = vld [vmem:[%s339 + $0xc8] sm:$0xff]
        %v503 = vld [vmem:[%s339 + $0xd0] sm:$0xff]
        %v504 = vld [vmem:[%s339 + $0xd8] sm:$0xff]
        %v505 = vld [vmem:[%s339 + $0xe0] sm:$0xff]
        %v506 = vld [vmem:[%s339 + $0xe8] sm:$0xff]
        %v507 = vld [vmem:[%s339 + $0xf0] sm:$0xff]
        %v508 = vld [vmem:[%s339 + $0xf8] sm:$0xff]
        %509 = vmatprep.subr.mxu0 0.0
        %510 = vmatpush1.msra.mxu0 %v492
        %511 = vmatprep.subr.mxu0 0.0
        %512 = vmatpush1.msra.mxu0 %v491
        %513 = vmatprep.subr.mxu0 0.0
        %514 = vmatpush1.msra.mxu0 %v490
        %515 = vmatprep.subr.mxu0 0.0
        %516 = vmatpush1.msra.mxu0 %v489
        %517 = vmatprep.subr.mxu0 0.0
        %518 = vmatpush1.msra.mxu0 %v488
        %519 = vmatprep.subr.mxu0 0.0
        %520 = vmatpush1.msra.mxu0 %v487
        %521 = vmatprep.subr.mxu0 0.0
        %522 = vmatpush1.msra.mxu0 %v486
        %523 = vmatprep.subr.mxu0 0.0
        %524 = vmatpush1.msra.mxu0 %v485
        %525 = vmatprep.subr.mxu0 0.0
        %526 = vmatpush1.msra.mxu0 %v484
        %527 = vmatprep.subr.mxu0 0.0
        %528 = vmatpush1.msra.mxu0 %v483
        %529 = vmatprep.subr.mxu0 0.0
        %530 = vmatpush1.msra.mxu0 %v482
        %531 = vmatprep.subr.mxu0 0.0
        %532 = vmatpush1.msra.mxu0 %v481
        %533 = vmatprep.subr.mxu0 0.0
        %534 = vmatpush1.msra.mxu0 %v480
        %535 = vmatprep.subr.mxu0 0.0
        %536 = vmatpush1.msra.mxu0 %v479
        %537 = vmatprep.subr.mxu0 0.0
        %538 = vmatpush1.msra.mxu0 %v478
        %539 = vmatprep.subr.mxu0 0.0
        %540 = vmatpush1.msra.mxu0 %v477
        %541 = vmatprep.subr.mxu0 0.0
        %542 = vmatpush2.msra.mxu0 %v508
        %543 = vmatprep.subr.mxu0 0.0
        %544 = vmatpush2.msra.mxu0 %v507
        %545 = vmatprep.subr.mxu0 0.0
        %546 = vmatpush2.msra.mxu0 %v506
        %547 = vmatprep.subr.mxu0 0.0
        %548 = vmatpush2.msra.mxu0 %v505
        %549 = vmatprep.subr.mxu0 0.0
        %550 = vmatpush2.msra.mxu0 %v504
        %551 = vmatprep.subr.mxu0 0.0
        %552 = vmatpush2.msra.mxu0 %v503
        %553 = vmatprep.subr.mxu0 0.0
        %554 = vmatpush2.msra.mxu0 %v502
        %555 = vmatprep.subr.mxu0 0.0
        %556 = vmatpush2.msra.mxu0 %v501
        %557 = vmatprep.subr.mxu0 0.0
        %558 = vmatpush2.msra.mxu0 %v500
        %559 = vmatprep.subr.mxu0 0.0
        %560 = vmatpush2.msra.mxu0 %v499
        %561 = vmatprep.subr.mxu0 0.0
        %562 = vmatpush2.msra.mxu0 %v498
        %563 = vmatprep.subr.mxu0 0.0
        %564 = vmatpush2.msra.mxu0 %v497
        %565 = vmatprep.subr.mxu0 0.0
        %566 = vmatpush2.msra.mxu0 %v496
        %567 = vmatprep.subr.mxu0 0.0
        %568 = vmatpush2.msra.mxu0 %v495
        %569 = vmatprep.subr.mxu0 0.0
        %570 = vmatpush2.msra.mxu0 %v494
        %571 = vmatprep.subr.mxu0 0.0
        %572 = vmatpush2.msra.mxu0 %v493
        %573 = vmatprep.mubr.f32.mxu0 %v476
        %574 = vmatmul.mubr.f32.gmra.mxu0 %v475
        %v575 = vpop.f32.mrf.mxu0
        %v576 = vadd.f32 0.0, %v575
        %v577 = vpop.f32.mrf.mxu0
        %578 = vdwg.mxu0
        %579 = vst [vmem:[%s452] sm:$0xff] %v576
        %v580 = vld [vmem:[%s348] sm:$0xff]
        %v581 = vld [vmem:[%s348 + $0x8] sm:$0xff]
        %v582 = vld [vmem:[%s348 + $0x10] sm:$0xff]
        %v583 = vld [vmem:[%s348 + $0x18] sm:$0xff]
        %v584 = vld [vmem:[%s348 + $0x20] sm:$0xff]
        %v585 = vld [vmem:[%s348 + $0x28] sm:$0xff]
        %v586 = vld [vmem:[%s348 + $0x30] sm:$0xff]
        %v587 = vld [vmem:[%s348 + $0x38] sm:$0xff]
        %v588 = vld [vmem:[%s348 + $0x40] sm:$0xff]
        %v589 = vld [vmem:[%s348 + $0x48] sm:$0xff]
        %v590 = vld [vmem:[%s348 + $0x50] sm:$0xff]
        %v591 = vld [vmem:[%s348 + $0x58] sm:$0xff]
        %v592 = vld [vmem:[%s348 + $0x60] sm:$0xff]
        %v593 = vld [vmem:[%s348 + $0x68] sm:$0xff]
        %v594 = vld [vmem:[%s348 + $0x70] sm:$0xff]
        %v595 = vld [vmem:[%s348 + $0x78] sm:$0xff]
        %v596 = vld [vmem:[%s348 + $0x80] sm:$0xff]
        %v597 = vld [vmem:[%s348 + $0x88] sm:$0xff]
        %v598 = vld [vmem:[%s348 + $0x90] sm:$0xff]
        %v599 = vld [vmem:[%s348 + $0x98] sm:$0xff]
        %v600 = vld [vmem:[%s348 + $0xa0] sm:$0xff]
        %v601 = vld [vmem:[%s348 + $0xa8] sm:$0xff]
        %v602 = vld [vmem:[%s348 + $0xb0] sm:$0xff]
        %v603 = vld [vmem:[%s348 + $0xb8] sm:$0xff]
        %v604 = vld [vmem:[%s348 + $0xc0] sm:$0xff]
        %v605 = vld [vmem:[%s348 + $0xc8] sm:$0xff]
        %v606 = vld [vmem:[%s348 + $0xd0] sm:$0xff]
        %v607 = vld [vmem:[%s348 + $0xd8] sm:$0xff]
        %v608 = vld [vmem:[%s348 + $0xe0] sm:$0xff]
        %v609 = vld [vmem:[%s348 + $0xe8] sm:$0xff]
        %v610 = vld [vmem:[%s348 + $0xf0] sm:$0xff]
        %v611 = vld [vmem:[%s348 + $0xf8] sm:$0xff]
        %612 = vmatprep.subr.mxu0 0.0
        %613 = vmatpush1.msra.mxu0 %v595
        %614 = vmatprep.subr.mxu0 0.0
        %615 = vmatpush1.msra.mxu0 %v594
        %616 = vmatprep.subr.mxu0 0.0
        %617 = vmatpush1.msra.mxu0 %v593
        %618 = vmatprep.subr.mxu0 0.0
        %619 = vmatpush1.msra.mxu0 %v592
        %620 = vmatprep.subr.mxu0 0.0
        %621 = vmatpush1.msra.mxu0 %v591
        %622 = vmatprep.subr.mxu0 0.0
        %623 = vmatpush1.msra.mxu0 %v590
        %624 = vmatprep.subr.mxu0 0.0
        %625 = vmatpush1.msra.mxu0 %v589
        %626 = vmatprep.subr.mxu0 0.0
        %627 = vmatpush1.msra.mxu0 %v588
        %628 = vmatprep.subr.mxu0 0.0
        %629 = vmatpush1.msra.mxu0 %v587
        %630 = vmatprep.subr.mxu0 0.0
        %631 = vmatpush1.msra.mxu0 %v586
        %632 = vmatprep.subr.mxu0 0.0
        %633 = vmatpush1.msra.mxu0 %v585
        %634 = vmatprep.subr.mxu0 0.0
        %635 = vmatpush1.msra.mxu0 %v584
        %636 = vmatprep.subr.mxu0 0.0
        %637 = vmatpush1.msra.mxu0 %v583
        %638 = vmatprep.subr.mxu0 0.0
        %639 = vmatpush1.msra.mxu0 %v582
        %640 = vmatprep.subr.mxu0 0.0
        %641 = vmatpush1.msra.mxu0 %v581
        %642 = vmatprep.subr.mxu0 0.0
        %643 = vmatpush1.msra.mxu0 %v580
        %644 = vmatprep.subr.mxu0 0.0
        %645 = vmatpush2.msra.mxu0 %v611
        %646 = vmatprep.subr.mxu0 0.0
        %647 = vmatpush2.msra.mxu0 %v610
        %648 = vmatprep.subr.mxu0 0.0
        %649 = vmatpush2.msra.mxu0 %v609
        %650 = vmatprep.subr.mxu0 0.0
        %651 = vmatpush2.msra.mxu0 %v608
        %652 = vmatprep.subr.mxu0 0.0
        %653 = vmatpush2.msra.mxu0 %v607
        %654 = vmatprep.subr.mxu0 0.0
        %655 = vmatpush2.msra.mxu0 %v606
        %656 = vmatprep.subr.mxu0 0.0
        %657 = vmatpush2.msra.mxu0 %v605
        %658 = vmatprep.subr.mxu0 0.0
        %659 = vmatpush2.msra.mxu0 %v604
        %660 = vmatprep.subr.mxu0 0.0
        %661 = vmatpush2.msra.mxu0 %v603
        %662 = vmatprep.subr.mxu0 0.0
        %663 = vmatpush2.msra.mxu0 %v602
        %664 = vmatprep.subr.mxu0 0.0
        %665 = vmatpush2.msra.mxu0 %v601
        %666 = vmatprep.subr.mxu0 0.0
        %667 = vmatpush2.msra.mxu0 %v600
        %668 = vmatprep.subr.mxu0 0.0
        %669 = vmatpush2.msra.mxu0 %v599
        %670 = vmatprep.subr.mxu0 0.0
        %671 = vmatpush2.msra.mxu0 %v598
        %672 = vmatprep.subr.mxu0 0.0
        %673 = vmatpush2.msra.mxu0 %v597
        %674 = vmatprep.subr.mxu0 0.0
        %675 = vmatpush2.msra.mxu0 %v596
        %676 = vmatprep.mubr.f32.mxu0 %v476
        %677 = vmatmul.mubr.f32.gmra.mxu0 %v475
        %v678 = vpop.f32.mrf.mxu0
        %v679 = vadd.f32 0.0, %v678
        %v680 = vpop.f32.mrf.mxu0
        %681 = vdwg.mxu0
        %682 = vst [vmem:[%s463] sm:$0xff] %v679
        %v683 = vld [vmem:[%s357] sm:$0xff]
        %v684 = vld [vmem:[%s357 + $0x8] sm:$0xff]
        %v685 = vld [vmem:[%s357 + $0x10] sm:$0xff]
        %v686 = vld [vmem:[%s357 + $0x18] sm:$0xff]
        %v687 = vld [vmem:[%s357 + $0x20] sm:$0xff]
        %v688 = vld [vmem:[%s357 + $0x28] sm:$0xff]
        %v689 = vld [vmem:[%s357 + $0x30] sm:$0xff]
        %v690 = vld [vmem:[%s357 + $0x38] sm:$0xff]
        %v691 = vld [vmem:[%s357 + $0x40] sm:$0xff]
        %v692 = vld [vmem:[%s357 + $0x48] sm:$0xff]
        %v693 = vld [vmem:[%s357 + $0x50] sm:$0xff]
        %v694 = vld [vmem:[%s357 + $0x58] sm:$0xff]
        %v695 = vld [vmem:[%s357 + $0x60] sm:$0xff]
        %v696 = vld [vmem:[%s357 + $0x68] sm:$0xff]
        %v697 = vld [vmem:[%s357 + $0x70] sm:$0xff]
        %v698 = vld [vmem:[%s357 + $0x78] sm:$0xff]
        %v699 = vld [vmem:[%s357 + $0x80] sm:$0xff]
        %v700 = vld [vmem:[%s357 + $0x88] sm:$0xff]
        %v701 = vld [vmem:[%s357 + $0x90] sm:$0xff]
        %v702 = vld [vmem:[%s357 + $0x98] sm:$0xff]
        %v703 = vld [vmem:[%s357 + $0xa0] sm:$0xff]
        %v704 = vld [vmem:[%s357 + $0xa8] sm:$0xff]
        %v705 = vld [vmem:[%s357 + $0xb0] sm:$0xff]
        %v706 = vld [vmem:[%s357 + $0xb8] sm:$0xff]
        %v707 = vld [vmem:[%s357 + $0xc0] sm:$0xff]
        %v708 = vld [vmem:[%s357 + $0xc8] sm:$0xff]
        %v709 = vld [vmem:[%s357 + $0xd0] sm:$0xff]
        %v710 = vld [vmem:[%s357 + $0xd8] sm:$0xff]
        %v711 = vld [vmem:[%s357 + $0xe0] sm:$0xff]
        %v712 = vld [vmem:[%s357 + $0xe8] sm:$0xff]
        %v713 = vld [vmem:[%s357 + $0xf0] sm:$0xff]
        %v714 = vld [vmem:[%s357 + $0xf8] sm:$0xff]
        %715 = vmatprep.subr.mxu0 0.0
        %716 = vmatpush1.msra.mxu0 %v698
        %717 = vmatprep.subr.mxu0 0.0
        %718 = vmatpush1.msra.mxu0 %v697
        %719 = vmatprep.subr.mxu0 0.0
        %720 = vmatpush1.msra.mxu0 %v696
        %721 = vmatprep.subr.mxu0 0.0
        %722 = vmatpush1.msra.mxu0 %v695
        %723 = vmatprep.subr.mxu0 0.0
        %724 = vmatpush1.msra.mxu0 %v694
        %725 = vmatprep.subr.mxu0 0.0
        %726 = vmatpush1.msra.mxu0 %v693
        %727 = vmatprep.subr.mxu0 0.0
        %728 = vmatpush1.msra.mxu0 %v692
        %729 = vmatprep.subr.mxu0 0.0
        %730 = vmatpush1.msra.mxu0 %v691
        %731 = vmatprep.subr.mxu0 0.0
        %732 = vmatpush1.msra.mxu0 %v690
        %733 = vmatprep.subr.mxu0 0.0
        %734 = vmatpush1.msra.mxu0 %v689
        %735 = vmatprep.subr.mxu0 0.0
        %736 = vmatpush1.msra.mxu0 %v688
        %737 = vmatprep.subr.mxu0 0.0
        %738 = vmatpush1.msra.mxu0 %v687
        %739 = vmatprep.subr.mxu0 0.0
        %740 = vmatpush1.msra.mxu0 %v686
        %741 = vmatprep.subr.mxu0 0.0
        %742 = vmatpush1.msra.mxu0 %v685
        %743 = vmatprep.subr.mxu0 0.0
        %744 = vmatpush1.msra.mxu0 %v684
        %745 = vmatprep.subr.mxu0 0.0
        %746 = vmatpush1.msra.mxu0 %v683
        %747 = vmatprep.subr.mxu0 0.0
        %748 = vmatpush2.msra.mxu0 %v714
        %749 = vmatprep.subr.mxu0 0.0
        %750 = vmatpush2.msra.mxu0 %v713
        %751 = vmatprep.subr.mxu0 0.0
        %752 = vmatpush2.msra.mxu0 %v712
        %753 = vmatprep.subr.mxu0 0.0
        %754 = vmatpush2.msra.mxu0 %v711
        %755 = vmatprep.subr.mxu0 0.0
        %756 = vmatpush2.msra.mxu0 %v710
        %757 = vmatprep.subr.mxu0 0.0
        %758 = vmatpush2.msra.mxu0 %v709
        %759 = vmatprep.subr.mxu0 0.0
        %760 = vmatpush2.msra.mxu0 %v708
        %761 = vmatprep.subr.mxu0 0.0
        %762 = vmatpush2.msra.mxu0 %v707
        %763 = vmatprep.subr.mxu0 0.0
        %764 = vmatpush2.msra.mxu0 %v706
        %765 = vmatprep.subr.mxu0 0.0
        %766 = vmatpush2.msra.mxu0 %v705
        %767 = vmatprep.subr.mxu0 0.0
        %768 = vmatpush2.msra.mxu0 %v704
        %769 = vmatprep.subr.mxu0 0.0
        %770 = vmatpush2.msra.mxu0 %v703
        %771 = vmatprep.subr.mxu0 0.0
        %772 = vmatpush2.msra.mxu0 %v702
        %773 = vmatprep.subr.mxu0 0.0
        %774 = vmatpush2.msra.mxu0 %v701
        %775 = vmatprep.subr.mxu0 0.0
        %776 = vmatpush2.msra.mxu0 %v700
        %777 = vmatprep.subr.mxu0 0.0
        %778 = vmatpush2.msra.mxu0 %v699
        %779 = vmatprep.mubr.f32.mxu0 %v476
        %780 = vmatmul.mubr.f32.gmra.mxu0 %v475
        %v781 = vpop.f32.mrf.mxu0
        %v782 = vadd.f32 0.0, %v781
        %v783 = vpop.f32.mrf.mxu0
        %784 = vdwg.mxu0
        %785 = vst [vmem:[%s474] sm:$0xff] %v782
        %p786 = scmp.lt.s32.totalorder %s29, 1
        %s787 = scalar_select %p786, %s29, 1
        %p788 = scmp.lt.s32.totalorder %s30, 1
        %s789 = scalar_select %p788, %s30, 1
        %p790 = scmp.lt.s32.totalorder %s31, 0
        %s791 = scalar_select %p790, %s31, 0
        %s792 = sadd.s32 %s791, %s789
        %s793 = smul.addr %s787, 2
        %s794 = sadd.s32 %s792, %s793
        %s795 = smul.addr %s794, 8
        %s796 = scalar_lea.vmem %s4, %s795
        %p797 = scmp.lt.s32.totalorder %s29, 1
        %s798 = scalar_select %p797, %s29, 1
        %p799 = scmp.lt.s32.totalorder %s30, 1
        %s800 = scalar_select %p799, %s30, 1
        %p801 = scmp.lt.s32.totalorder %s31, 0
        %s802 = scalar_select %p801, %s31, 0
        %s803 = sadd.s32 %s802, %s800
        %s804 = smul.addr %s798, 2
        %s805 = sadd.s32 %s803, %s804
        %s806 = smul.addr %s805, 8
        %s807 = scalar_lea.vmem %s5, %s806
        %p808 = scmp.lt.s32.totalorder %s29, 1
        %s809 = scalar_select %p808, %s29, 1
        %p810 = scmp.lt.s32.totalorder %s30, 1
        %s811 = scalar_select %p810, %s30, 1
        %p812 = scmp.lt.s32.totalorder %s31, 0
        %s813 = scalar_select %p812, %s31, 0
        %s814 = sadd.s32 %s813, %s811
        %s815 = smul.addr %s809, 2
        %s816 = sadd.s32 %s814, %s815
        %s817 = smul.addr %s816, 8
        %s818 = scalar_lea.vmem %s6, %s817
        // Predicated region
        $region49: #{transformer_decoder_forward.18} parent=35 // pred_check
          %p819 = pneg %p171
        $region50: #{transformer_decoder_forward.18} parent=35 // pred_check_branch
          %821 = sbr.rel (%p819) target = $region52
        $region51: #{transformer_decoder_forward.18} parent=35 // pred_region
          _
        $region52: #{transformer_decoder_forward.18} parent=35 // pred_fallthru
          _
        // Predicated region
        $region53: #{transformer_decoder_forward.18} parent=35 // pred_check
          %p822 = pneg %p201
        $region54: #{transformer_decoder_forward.18} parent=35 // pred_check_branch
          %824 = sbr.rel (%p822) target = $region56
        $region55: #{transformer_decoder_forward.18} parent=35 // pred_region
          _
        $region56: #{transformer_decoder_forward.18} parent=35 // pred_fallthru
          _
        // Predicated region
        $region57: #{transformer_decoder_forward.18} parent=35 // pred_check
          %p825 = pneg %p231
        $region58: #{transformer_decoder_forward.18} parent=35 // pred_check_branch
          %827 = sbr.rel (%p825) target = $region60
        $region59: #{transformer_decoder_forward.18} parent=35 // pred_region
          _
        $region60: #{transformer_decoder_forward.18} parent=35 // pred_fallthru
          _
      $region36: #{transformer_decoder_forward.18} parent=5 // pred_fallthru
        _
      %p828 = scmp.le.s32.totalorder 2, %s19
      // Predicated region
      $region61: #{transformer_decoder_forward.18} parent=5 // pred_check
        %p829 = pneg %p828
      $region62: #{transformer_decoder_forward.18} parent=5 // pred_check_branch
        %831 = sbr.rel (%p829) target = $region64
      $region63: #{transformer_decoder_forward.18} parent=5 // pred_region
        %s832 = ssub.s32 %s19, 2
        // Predicated region
        $region65: #{transformer_decoder_forward.18} parent=63 // pred_check
          %p833 = pneg %p177
        $region66: #{transformer_decoder_forward.18} parent=63 // pred_check_branch
          %835 = sbr.rel (%p833) target = $region68
        $region67: #{transformer_decoder_forward.18} parent=63 // pred_region
          %p836 = scmp.lt.s32.totalorder %s32, 1
          %s837 = scalar_select %p836, %s32, 1
          %p838 = scmp.lt.s32.totalorder %s33, 1
          %s839 = scalar_select %p838, %s33, 1
          %p840 = scmp.lt.s32.totalorder %s34, 0
          %s841 = scalar_select %p840, %s34, 0
          %s842 = sadd.s32 %s841, %s839
          %s843 = smul.addr %s837, 2
          %s844 = sadd.s32 %s842, %s843
          %s845 = smul.addr %s844, 8
          %s846 = scalar_lea.vmem %s4, %s845
        $region68: #{transformer_decoder_forward.18} parent=63 // pred_fallthru
          _
        // Predicated region
        $region69: #{transformer_decoder_forward.18} parent=63 // pred_check
          %p847 = pneg %p207
        $region70: #{transformer_decoder_forward.18} parent=63 // pred_check_branch
          %849 = sbr.rel (%p847) target = $region72
        $region71: #{transformer_decoder_forward.18} parent=63 // pred_region
          %p850 = scmp.lt.s32.totalorder %s32, 1
          %s851 = scalar_select %p850, %s32, 1
          %p852 = scmp.lt.s32.totalorder %s33, 1
          %s853 = scalar_select %p852, %s33, 1
          %p854 = scmp.lt.s32.totalorder %s34, 0
          %s855 = scalar_select %p854, %s34, 0
          %s856 = sadd.s32 %s855, %s853
          %s857 = smul.addr %s851, 2
          %s858 = sadd.s32 %s856, %s857
          %s859 = smul.addr %s858, 8
          %s860 = scalar_lea.vmem %s5, %s859
        $region72: #{transformer_decoder_forward.18} parent=63 // pred_fallthru
          _
        // Predicated region
        $region73: #{transformer_decoder_forward.18} parent=63 // pred_check
          %p861 = pneg %p237
        $region74: #{transformer_decoder_forward.18} parent=63 // pred_check_branch
          %863 = sbr.rel (%p861) target = $region76
        $region75: #{transformer_decoder_forward.18} parent=63 // pred_region
          %p864 = scmp.lt.s32.totalorder %s32, 1
          %s865 = scalar_select %p864, %s32, 1
          %p866 = scmp.lt.s32.totalorder %s33, 1
          %s867 = scalar_select %p866, %s33, 1
          %p868 = scmp.lt.s32.totalorder %s34, 0
          %s869 = scalar_select %p868, %s34, 0
          %s870 = sadd.s32 %s869, %s867
          %s871 = smul.addr %s865, 2
          %s872 = sadd.s32 %s870, %s871
          %s873 = smul.addr %s872, 8
          %s874 = scalar_lea.vmem %s6, %s873
        $region76: #{transformer_decoder_forward.18} parent=63 // pred_fallthru
          _
      $region64: #{transformer_decoder_forward.18} parent=5 // pred_fallthru
        _
    $region6: #{transformer_decoder_forward.18} parent=1 // loop_footer
      %s23 = sadd.s32 1, %s19
    $region7: #{transformer_decoder_forward.18} parent=1 // loop_footer_branch
      %18 = sbr.rel target = $region3
    $region8: #{transformer_decoder_forward.18} parent=1 // loop_exit
      _
    %875 = vsyncpa [#allocation3], 1
    %s876 = scalar_lea.sflag [#allocation3], 1
    %877 = vsyncpa %s876, 1
    %878 = vsyncpa [#allocation5], 1
    %s879 = scalar_lea.sflag [#allocation5], 1
    %880 = vsyncpa %s879, 1

// kernel: transformer_decoder_forward.20
$region0: #{transformer_decoder_forward.20}
  #allocation0 [shape = 'u32[]', space=smem, size = 0x4, offset = 0x4, fixed_abs, tag = 'smem constant byte address 0x4 - core index']
  #allocation1 [shape = 'u32[144,128]{1,0:T(1,128)}', space=vmem, size = 0x12000, scoped, tag = 'internal scratch']
  #allocation2 [shape = 'f32[8,256]{1,0:T(8,128)}', space=vmem, size = 0x2000, scoped, tag = 'scratch operand']
  %s0 = inlined_call_operand.vmem [shape: f32[2,2,8,128], index: 0, kind: input, shape index: {}]
  %s1 = inlined_call_operand.vmem [shape: f32[2,128,256], index: 1, kind: input, shape index: {}]
  %s2 = inlined_call_operand.vmem [shape: f32[2,8,256], index: 2, kind: input, shape index: {}]
  %s3 = inlined_call_operand.vmem [shape: f32[1,256], index: 3, kind: input, shape index: {}]
  %s4 = inlined_call_operand.vmem [shape: f32[1,256], index: 4, kind: input, shape index: {}]
  %s5 = inlined_call_operand.vmem [shape: f32[2,8,256], index: 5, kind: output, shape index: {}]
  %s6 = sld [smem:[#allocation0]]
  $region61: #{transformer_decoder_forward.20} parent=0
    _
  %s8 = ssub.s32 1, %s6
  %s9 = scalar_select 0, %s8, %s6
  loop: start=0, step=1, limit=6
  $region2: #{transformer_decoder_forward.20} parent=0 // loop_pre_header
    _
  $region3: #{transformer_decoder_forward.20} parent=0 // loop_header
    %s11 = sphi 0, %s15
    %p12 = scmp.ge.s32.totalorder %s11, 6
    %s18 = sphi 0, %s37
    %s19 = sphi 0, %s33
    %s20 = sphi 0, %s29
    %s21 = sphi 0, %s18
    %s22 = sphi 0, %s19
    %s23 = sphi 0, %s20
    %s24 = sphi 0, %s21
    %s25 = sphi 0, %s22
    %s26 = sphi 0, %s23
    %s44 = sphi 0, %s46
    %s47 = sphi 0, %s44
    %s48 = sphi 0, %s47
    %s64 = sphi 0, %s48
    %s70 = sphi 0, %s72
    %s73 = sphi 0, %s70
    %s74 = sphi 0, %s73
    %s90 = sphi 0, %s74
    %s98 = sphi 0, %s100
    %s101 = sphi 0, %s98
    %s102 = sphi 0, %s101
    %s118 = sphi 0, %s102
    %s122 = sphi 0, %s122
    %s124 = sphi 0, %s122
    %s125 = sphi 0, %s124
    %s139 = sphi 0, %s125
    %s143 = sphi 0, %s143
    %s145 = sphi 0, %s143
    %s146 = sphi 0, %s145
    %s160 = sphi 0, %s146
    %s168 = sphi 0, %s170
    %s171 = sphi 0, %s168
    %s172 = sphi 0, %s171
    %s188 = sphi 0, %s172
  $region4: #{transformer_decoder_forward.20} parent=0 // loop_header_branch
    %14 = sbr.rel (%p12) target = $region8
  $region5: #{transformer_decoder_forward.20} parent=0 // loop_body
    %s16 = ssub.s32 %s11, 1
    %s17 = ssub.s32 %s11, 2
    %s27 = sadd.s32 1, %s20
    %p28 = scmp.ge.s32.totalorder %s27, 2
    %s29 = scalar_select %p28, 0, %s27
    %s30 = sadd.s32 1, %s19
    %s31 = scalar_select %p28, %s30, %s19
    %p32 = scmp.ge.s32.totalorder %s31, 1
    %s33 = scalar_select %p32, 0, %s31
    %s34 = sadd.s32 1, %s18
    %s35 = scalar_select %p32, %s34, %s18
    %p36 = scmp.ge.s32.totalorder %s35, 2
    %s37 = scalar_select %p36, 0, %s35
    %s38 = ssub.s32 %s18, %s37
    %s39 = ssub.s32 %s20, %s29
    %s40 = sor.u32 %s38, %s39
    %s41 = ssub.s32 %s19, %s33
    %s42 = sor.u32 %s40, %s41
    %p43 = scmp.eq.s32.totalorder %s42, 0
    %s45 = sadd.s32 %s44, 1
    %s46 = scalar_select %p43, %s44, %s45
    %p49 = pneg %p43
    %p50 = scmp.eq.s32.totalorder %s11, 3
    %p51 = por %p49, %p50
    %p52 = scmp.ne.s32.totalorder %s44, %s47
    %p53 = scmp.eq.s32.totalorder %s11, 0
    %p54 = por %p52, %p53
    %p55 = scmp.ne.s32.totalorder %s44, %s47
    %p56 = scmp.eq.s32.totalorder %s16, 3
    %p57 = por %p55, %p56
    %p58 = scmp.ne.s32.totalorder %s47, %s48
    %p59 = scmp.eq.s32.totalorder %s16, 0
    %p60 = por %p58, %p59
    %p61 = scmp.ne.s32.totalorder %s47, %s48
    %p62 = scmp.eq.s32.totalorder %s17, 3
    %p63 = por %p61, %p62
    %p65 = scmp.ne.s32.totalorder %s48, %s64
    %p66 = scmp.eq.s32.totalorder %s17, 0
    %p67 = por %p65, %p66
    %s68 = ssub.s32 %s20, %s29
    %p69 = scmp.eq.s32.totalorder %s68, 0
    %s71 = sadd.s32 %s70, 1
    %s72 = scalar_select %p69, %s70, %s71
    %p75 = pneg %p69
    %p76 = scmp.eq.s32.totalorder %s11, 3
    %p77 = por %p75, %p76
    %p78 = scmp.ne.s32.totalorder %s70, %s73
    %p79 = scmp.eq.s32.totalorder %s11, 0
    %p80 = por %p78, %p79
    %p81 = scmp.ne.s32.totalorder %s70, %s73
    %p82 = scmp.eq.s32.totalorder %s16, 3
    %p83 = por %p81, %p82
    %p84 = scmp.ne.s32.totalorder %s73, %s74
    %p85 = scmp.eq.s32.totalorder %s16, 0
    %p86 = por %p84, %p85
    %p87 = scmp.ne.s32.totalorder %s73, %s74
    %p88 = scmp.eq.s32.totalorder %s17, 3
    %p89 = por %p87, %p88
    %p91 = scmp.ne.s32.totalorder %s74, %s90
    %p92 = scmp.eq.s32.totalorder %s17, 0
    %p93 = por %p91, %p92
    %s94 = ssub.s32 %s18, %s37
    %s95 = ssub.s32 %s19, %s33
    %s96 = sor.u32 %s94, %s95
    %p97 = scmp.eq.s32.totalorder %s96, 0
    %s99 = sadd.s32 %s98, 1
    %s100 = scalar_select %p97, %s98, %s99
    %p103 = pneg %p97
    %p104 = scmp.eq.s32.totalorder %s11, 3
    %p105 = por %p103, %p104
    %p106 = scmp.ne.s32.totalorder %s98, %s101
    %p107 = scmp.eq.s32.totalorder %s11, 0
    %p108 = por %p106, %p107
    %p109 = scmp.ne.s32.totalorder %s98, %s101
    %p110 = scmp.eq.s32.totalorder %s16, 3
    %p111 = por %p109, %p110
    %p112 = scmp.ne.s32.totalorder %s101, %s102
    %p113 = scmp.eq.s32.totalorder %s16, 0
    %p114 = por %p112, %p113
    %p115 = scmp.ne.s32.totalorder %s101, %s102
    %p116 = scmp.eq.s32.totalorder %s17, 3
    %p117 = por %p115, %p116
    %p119 = scmp.ne.s32.totalorder %s102, %s118
    %p120 = scmp.eq.s32.totalorder %s17, 0
    %p121 = por %p119, %p120
    %s123 = sadd.s32 %s122, 1
    %p126 = scmp.eq.s32.totalorder %s11, 3
    %p127 = scmp.ne.s32.totalorder %s122, %s124
    %p128 = scmp.eq.s32.totalorder %s11, 0
    %p129 = por %p127, %p128
    %p130 = scmp.ne.s32.totalorder %s122, %s124
    %p131 = scmp.eq.s32.totalorder %s16, 3
    %p132 = por %p130, %p131
    %p133 = scmp.ne.s32.totalorder %s124, %s125
    %p134 = scmp.eq.s32.totalorder %s16, 0
    %p135 = por %p133, %p134
    %p136 = scmp.ne.s32.totalorder %s124, %s125
    %p137 = scmp.eq.s32.totalorder %s17, 3
    %p138 = por %p136, %p137
    %p140 = scmp.ne.s32.totalorder %s125, %s139
    %p141 = scmp.eq.s32.totalorder %s17, 0
    %p142 = por %p140, %p141
    %s144 = sadd.s32 %s143, 1
    %p147 = scmp.eq.s32.totalorder %s11, 3
    %p148 = scmp.ne.s32.totalorder %s143, %s145
    %p149 = scmp.eq.s32.totalorder %s11, 0
    %p150 = por %p148, %p149
    %p151 = scmp.ne.s32.totalorder %s143, %s145
    %p152 = scmp.eq.s32.totalorder %s16, 3
    %p153 = por %p151, %p152
    %p154 = scmp.ne.s32.totalorder %s145, %s146
    %p155 = scmp.eq.s32.totalorder %s16, 0
    %p156 = por %p154, %p155
    %p157 = scmp.ne.s32.totalorder %s145, %s146
    %p158 = scmp.eq.s32.totalorder %s17, 3
    %p159 = por %p157, %p158
    %p161 = scmp.ne.s32.totalorder %s146, %s160
    %p162 = scmp.eq.s32.totalorder %s17, 0
    %p163 = por %p161, %p162
    %s164 = ssub.s32 %s18, %s37
    %s165 = ssub.s32 %s19, %s33
    %s166 = sor.u32 %s164, %s165
    %p167 = scmp.eq.s32.totalorder %s166, 0
    %s169 = sadd.s32 %s168, 1
    %s170 = scalar_select %p167, %s168, %s169
    %p173 = pneg %p167
    %p174 = scmp.eq.s32.totalorder %s11, 3
    %p175 = por %p173, %p174
    %p176 = scmp.ne.s32.totalorder %s168, %s171
    %p177 = scmp.eq.s32.totalorder %s11, 0
    %p178 = por %p176, %p177
    %p179 = scmp.ne.s32.totalorder %s168, %s171
    %p180 = scmp.eq.s32.totalorder %s16, 3
    %p181 = por %p179, %p180
    %p182 = scmp.ne.s32.totalorder %s171, %s172
    %p183 = scmp.eq.s32.totalorder %s16, 0
    %p184 = por %p182, %p183
    %p185 = scmp.ne.s32.totalorder %s171, %s172
    %p186 = scmp.eq.s32.totalorder %s17, 3
    %p187 = por %p185, %p186
    %p189 = scmp.ne.s32.totalorder %s172, %s188
    %p190 = scmp.eq.s32.totalorder %s17, 0
    %p191 = por %p189, %p190
    %p192 = scmp.le.s32.totalorder 1, %s11
    %p193 = scmp.lt.s32.totalorder %s11, 5
    %p194 = pnand %p192, %p193
    %p195 = pneg %p194
    // Predicated region
    $region9: #{transformer_decoder_forward.20} parent=5 // pred_check
      _
    $region10: #{transformer_decoder_forward.20} parent=5 // pred_check_branch
      %197 = sbr.rel (%p194) target = $region12
    $region11: #{transformer_decoder_forward.20} parent=5 // pred_region
      %s198 = ssub.s32 %s11, 1
      // Predicated region
      $region13: #{transformer_decoder_forward.20} parent=11 // pred_check
        %p199 = pneg %p135
      $region14: #{transformer_decoder_forward.20} parent=11 // pred_check_branch
        %201 = sbr.rel (%p199) target = $region16
      $region15: #{transformer_decoder_forward.20} parent=11 // pred_region
        _
      $region16: #{transformer_decoder_forward.20} parent=11 // pred_fallthru
        _
      // Predicated region
      $region17: #{transformer_decoder_forward.20} parent=11 // pred_check
        %p202 = pneg %p156
      $region18: #{transformer_decoder_forward.20} parent=11 // pred_check_branch
        %204 = sbr.rel (%p202) target = $region20
      $region19: #{transformer_decoder_forward.20} parent=11 // pred_region
        _
      $region20: #{transformer_decoder_forward.20} parent=11 // pred_fallthru
        _
    $region12: #{transformer_decoder_forward.20} parent=5 // pred_fallthru
      _
    %p205 = scmp.lt.s32.totalorder %s11, 4
    // Predicated region
    $region21: #{transformer_decoder_forward.20} parent=5 // pred_check
      %p206 = pneg %p205
    $region22: #{transformer_decoder_forward.20} parent=5 // pred_check_branch
      %208 = sbr.rel (%p206) target = $region24
    $region23: #{transformer_decoder_forward.20} parent=5 // pred_region
      // Predicated region
      $region25: #{transformer_decoder_forward.20} parent=23 // pred_check
        %p209 = pneg %p54
      $region26: #{transformer_decoder_forward.20} parent=23 // pred_check_branch
        %211 = sbr.rel (%p209) target = $region28
      $region27: #{transformer_decoder_forward.20} parent=23 // pred_region
        %p212 = scmp.lt.s32.totalorder %s18, 1
        %s213 = scalar_select %p212, %s18, 1
        %p214 = scmp.lt.s32.totalorder %s20, 1
        %s215 = scalar_select %p214, %s20, 1
        %p216 = scmp.lt.s32.totalorder %s19, 0
        %s217 = scalar_select %p216, %s19, 0
        %s218 = sadd.s32 %s217, %s215
        %s219 = smul.addr %s213, 2
        %s220 = sadd.s32 %s218, %s219
        %s221 = smul.addr %s220, 8
        %s222 = scalar_lea.vmem %s0, %s221
      $region28: #{transformer_decoder_forward.20} parent=23 // pred_fallthru
        _
      // Predicated region
      $region29: #{transformer_decoder_forward.20} parent=23 // pred_check
        %p223 = pneg %p80
      $region30: #{transformer_decoder_forward.20} parent=23 // pred_check_branch
        %225 = sbr.rel (%p223) target = $region32
      $region31: #{transformer_decoder_forward.20} parent=23 // pred_region
        %p226 = scmp.lt.s32.totalorder %s20, 1
        %s227 = scalar_select %p226, %s20, 1
        %s228 = smul.addr %s227, 32
        %s229 = smul.addr %s228, 8
        %s230 = scalar_lea.vmem %s1, %s229
      $region32: #{transformer_decoder_forward.20} parent=23 // pred_fallthru
        _
      // Predicated region
      $region33: #{transformer_decoder_forward.20} parent=23 // pred_check
        %p231 = pneg %p108
      $region34: #{transformer_decoder_forward.20} parent=23 // pred_check_branch
        %233 = sbr.rel (%p231) target = $region36
      $region35: #{transformer_decoder_forward.20} parent=23 // pred_region
        %p234 = scmp.lt.s32.totalorder %s18, 1
        %s235 = scalar_select %p234, %s18, 1
        %p236 = scmp.lt.s32.totalorder %s19, 0
        %s237 = scalar_select %p236, %s19, 0
        %s238 = smul.addr %s237, 2
        %s239 = smul.addr %s235, 2
        %s240 = sadd.s32 %s238, %s239
        %s241 = smul.addr %s240, 8
        %s242 = scalar_lea.vmem %s2, %s241
      $region36: #{transformer_decoder_forward.20} parent=23 // pred_fallthru
        _
    $region24: #{transformer_decoder_forward.20} parent=5 // pred_fallthru
      _
    %p243 = scmp.le.s32.totalorder 1, %s11
    %p244 = scmp.lt.s32.totalorder %s11, 5
    %p245 = pnand %p243, %p244
    %p246 = pneg %p245
    // Predicated region
    $region37: #{transformer_decoder_forward.20} parent=5 // pred_check
      _
    $region38: #{transformer_decoder_forward.20} parent=5 // pred_check_branch
      %248 = sbr.rel (%p245) target = $region40
    $region39: #{transformer_decoder_forward.20} parent=5 // pred_region
      %s249 = ssub.s32 %s11, 1
      %p250 = scmp.lt.s32.totalorder %s21, 1
      %s251 = scalar_select %p250, %s21, 1
      %p252 = scmp.lt.s32.totalorder %s23, 1
      %s253 = scalar_select %p252, %s23, 1
      %p254 = scmp.lt.s32.totalorder %s22, 0
      %s255 = scalar_select %p254, %s22, 0
      %s256 = sadd.s32 %s255, %s253
      %s257 = smul.addr %s251, 2
      %s258 = sadd.s32 %s256, %s257
      %s259 = smul.addr %s258, 8
      %s260 = scalar_lea.vmem %s0, %s259
      %p261 = pneg %p60
      %p262 = pneg %p57
      %p263 = scmp.lt.s32.totalorder %s23, 1
      %s264 = scalar_select %p263, %s23, 1
      %s265 = smul.addr %s264, 32
      %s266 = smul.addr %s265, 8
      %s267 = scalar_lea.vmem %s1, %s266
      %p268 = pneg %p86
      %p269 = pneg %p83
      %p270 = scmp.lt.s32.totalorder %s21, 1
      %s271 = scalar_select %p270, %s21, 1
      %p272 = scmp.lt.s32.totalorder %s22, 0
      %s273 = scalar_select %p272, %s22, 0
      %s274 = smul.addr %s273, 2
      %s275 = smul.addr %s271, 2
      %s276 = sadd.s32 %s274, %s275
      %s277 = smul.addr %s276, 8
      %s278 = scalar_lea.vmem %s2, %s277
      %p279 = pneg %p114
      %p280 = pneg %p111
      %p281 = pneg %p135
      %p282 = pneg %p132
      %p283 = pneg %p156
      %p284 = pneg %p153
      %p285 = pneg %p184
      %p286 = pneg %p181
      %p287 = scmp.lt.s32.totalorder %s21, 1
      %s288 = scalar_select %p287, %s21, 1
      %p289 = scmp.lt.s32.totalorder %s22, 0
      %s290 = scalar_select %p289, %s22, 0
      %s291 = smul.addr %s290, 2
      %s292 = smul.addr %s288, 2
      %s293 = sadd.s32 %s291, %s292
      %s294 = smul.addr %s293, 8
      %s295 = scalar_lea.vmem %s5, %s294
      %p296 = scmp.lt.s32.totalorder %s21, 1
      %s297 = scalar_select %p296, %s21, 1
      %p298 = scmp.lt.s32.totalorder %s23, 1
      %s299 = scalar_select %p298, %s23, 1
      %p300 = scmp.lt.s32.totalorder %s22, 0
      %s301 = scalar_select %p300, %s22, 0
      %s302 = sadd.s32 %s301, %s299
      %s303 = smul.addr %s297, 2
      %s304 = sadd.s32 %s302, %s303
      %s305 = smul.addr %s304, 8
      %s306 = scalar_lea.vmem %s0, %s305
      %p307 = scmp.lt.s32.totalorder %s23, 1
      %s308 = scalar_select %p307, %s23, 1
      %s309 = smul.addr %s308, 32
      %s310 = smul.addr %s309, 8
      %s311 = scalar_lea.vmem %s1, %s310
      %p312 = scmp.lt.s32.totalorder %s21, 1
      %s313 = scalar_select %p312, %s21, 1
      %p314 = scmp.lt.s32.totalorder %s22, 0
      %s315 = scalar_select %p314, %s22, 0
      %s316 = smul.addr %s315, 2
      %s317 = smul.addr %s313, 2
      %s318 = sadd.s32 %s316, %s317
      %s319 = smul.addr %s318, 8
      %s320 = scalar_lea.vmem %s2, %s319
      %p321 = scmp.lt.s32.totalorder %s21, 1
      %s322 = scalar_select %p321, %s21, 1
      %p323 = scmp.lt.s32.totalorder %s22, 0
      %s324 = scalar_select %p323, %s22, 0
      %s325 = smul.addr %s324, 2
      %s326 = smul.addr %s322, 2
      %s327 = sadd.s32 %s325, %s326
      %s328 = smul.addr %s327, 8
      %s329 = scalar_lea.vmem %s5, %s328
      %p330 = scmp.eq.s32.totalorder %s23, 0
      // Predicated region
      $region41: #{transformer_decoder_forward.20} parent=39 // pred_check
        %p331 = pneg %p330
      $region42: #{transformer_decoder_forward.20} parent=39 // pred_check_branch
        %333 = sbr.rel (%p331) target = $region44
      $region43: #{transformer_decoder_forward.20} parent=39 // pred_region
        %v334 = vld [vmem:[%s320] sm:$0xff]
        %v335 = vld [vmem:[%s320 + $0x8] sm:$0xff]
        %336 = vst [vmem:[#allocation2] sm:$0xff] %v334
        %337 = vst [vmem:[#allocation2 + $0x8] sm:$0xff] %v335
      $region44: #{transformer_decoder_forward.20} parent=39 // pred_fallthru
        _
      %v338 = vld [vmem:[#allocation2] sm:$0xff]
      %v339 = vld [vmem:[#allocation2 + $0x8] sm:$0xff]
      %v340 = vld [vmem:[%s306] sm:$0xff]
      %v341 = vld [vmem:[%s311] sm:$0xff]
      %v342 = vld [vmem:[%s311 + $0x8] sm:$0xff]
      %v343 = vld [vmem:[%s311 + $0x10] sm:$0xff]
      %v344 = vld [vmem:[%s311 + $0x18] sm:$0xff]
      %v345 = vld [vmem:[%s311 + $0x20] sm:$0xff]
      %v346 = vld [vmem:[%s311 + $0x28] sm:$0xff]
      %v347 = vld [vmem:[%s311 + $0x30] sm:$0xff]
      %v348 = vld [vmem:[%s311 + $0x38] sm:$0xff]
      %v349 = vld [vmem:[%s311 + $0x40] sm:$0xff]
      %v350 = vld [vmem:[%s311 + $0x48] sm:$0xff]
      %v351 = vld [vmem:[%s311 + $0x50] sm:$0xff]
      %v352 = vld [vmem:[%s311 + $0x58] sm:$0xff]
      %v353 = vld [vmem:[%s311 + $0x60] sm:$0xff]
      %v354 = vld [vmem:[%s311 + $0x68] sm:$0xff]
      %v355 = vld [vmem:[%s311 + $0x70] sm:$0xff]
      %v356 = vld [vmem:[%s311 + $0x78] sm:$0xff]
      %v357 = vld [vmem:[%s311 + $0x80] sm:$0xff]
      %v358 = vld [vmem:[%s311 + $0x88] sm:$0xff]
      %v359 = vld [vmem:[%s311 + $0x90] sm:$0xff]
      %v360 = vld [vmem:[%s311 + $0x98] sm:$0xff]
      %v361 = vld [vmem:[%s311 + $0xa0] sm:$0xff]
      %v362 = vld [vmem:[%s311 + $0xa8] sm:$0xff]
      %v363 = vld [vmem:[%s311 + $0xb0] sm:$0xff]
      %v364 = vld [vmem:[%s311 + $0xb8] sm:$0xff]
      %v365 = vld [vmem:[%s311 + $0xc0] sm:$0xff]
      %v366 = vld [vmem:[%s311 + $0xc8] sm:$0xff]
      %v367 = vld [vmem:[%s311 + $0xd0] sm:$0xff]
      %v368 = vld [vmem:[%s311 + $0xd8] sm:$0xff]
      %v369 = vld [vmem:[%s311 + $0xe0] sm:$0xff]
      %v370 = vld [vmem:[%s311 + $0xe8] sm:$0xff]
      %v371 = vld [vmem:[%s311 + $0xf0] sm:$0xff]
      %v372 = vld [vmem:[%s311 + $0xf8] sm:$0xff]
      %373 = vmatprep.subr.mxu0 %v372
      %374 = vmatpush1.msra.mxu0 %v371
      %375 = vmatprep.subr.mxu0 %v370
      %376 = vmatpush1.msra.mxu0 %v369
      %377 = vmatprep.subr.mxu0 %v368
      %378 = vmatpush1.msra.mxu0 %v367
      %379 = vmatprep.subr.mxu0 %v366
      %380 = vmatpush1.msra.mxu0 %v365
      %381 = vmatprep.subr.mxu0 %v364
      %382 = vmatpush1.msra.mxu0 %v363
      %383 = vmatprep.subr.mxu0 %v362
      %384 = vmatpush1.msra.mxu0 %v361
      %385 = vmatprep.subr.mxu0 %v360
      %386 = vmatpush1.msra.mxu0 %v359
      %387 = vmatprep.subr.mxu0 %v358
      %388 = vmatpush1.msra.mxu0 %v357
      %389 = vmatprep.subr.mxu0 %v356
      %390 = vmatpush1.msra.mxu0 %v355
      %391 = vmatprep.subr.mxu0 %v354
      %392 = vmatpush1.msra.mxu0 %v353
      %393 = vmatprep.subr.mxu0 %v352
      %394 = vmatpush1.msra.mxu0 %v351
      %395 = vmatprep.subr.mxu0 %v350
      %396 = vmatpush1.msra.mxu0 %v349
      %397 = vmatprep.subr.mxu0 %v348
      %398 = vmatpush1.msra.mxu0 %v347
      %399 = vmatprep.subr.mxu0 %v346
      %400 = vmatpush1.msra.mxu0 %v345
      %401 = vmatprep.subr.mxu0 %v344
      %402 = vmatpush1.msra.mxu0 %v343
      %403 = vmatprep.subr.mxu0 %v342
      %404 = vmatpush1.msra.mxu0 %v341
      %405 = vmatprep.subr.mxu0 0.0
      %406 = vmatpush2.msra.mxu0 0.0
      %407 = vmatprep.subr.mxu0 0.0
      %408 = vmatpush2.msra.mxu0 0.0
      %409 = vmatprep.subr.mxu0 0.0
      %410 = vmatpush2.msra.mxu0 0.0
      %411 = vmatprep.subr.mxu0 0.0
      %412 = vmatpush2.msra.mxu0 0.0
      %413 = vmatprep.subr.mxu0 0.0
      %414 = vmatpush2.msra.mxu0 0.0
      %415 = vmatprep.subr.mxu0 0.0
      %416 = vmatpush2.msra.mxu0 0.0
      %417 = vmatprep.subr.mxu0 0.0
      %418 = vmatpush2.msra.mxu0 0.0
      %419 = vmatprep.subr.mxu0 0.0
      %420 = vmatpush2.msra.mxu0 0.0
      %421 = vmatprep.subr.mxu0 0.0
      %422 = vmatpush2.msra.mxu0 0.0
      %423 = vmatprep.subr.mxu0 0.0
      %424 = vmatpush2.msra.mxu0 0.0
      %425 = vmatprep.subr.mxu0 0.0
      %426 = vmatpush2.msra.mxu0 0.0
      %427 = vmatprep.subr.mxu0 0.0
      %428 = vmatpush2.msra.mxu0 0.0
      %429 = vmatprep.subr.mxu0 0.0
      %430 = vmatpush2.msra.mxu0 0.0
      %431 = vmatprep.subr.mxu0 0.0
      %432 = vmatpush2.msra.mxu0 0.0
      %433 = vmatprep.subr.mxu0 0.0
      %434 = vmatpush2.msra.mxu0 0.0
      %435 = vmatprep.subr.mxu0 0.0
      %436 = vmatpush2.msra.mxu0 0.0
      %437 = vmatprep.mubr.f32.mxu0 0.0
      %438 = vmatmul.mubr.f32.gmra.mxu0 %v340
      %v439 = vpop.f32.mrf.mxu0
      %v440 = vadd.f32 0.0, %v439
      %v441 = vpop.f32.mrf.mxu0
      %v442 = vadd.f32 0.0, %v441
      %443 = vdwg.mxu0
      %v444 = vadd.f32 %v338, %v440
      %v445 = vadd.f32 %v339, %v442
      %446 = vst [vmem:[#allocation2] sm:$0xff] %v444
      %447 = vst [vmem:[#allocation2 + $0x8] sm:$0xff] %v445
      %p448 = scmp.eq.s32.totalorder %s23, 1
      // Predicated region
      $region45: #{transformer_decoder_forward.20} parent=39 // pred_check
        %p449 = pneg %p448
      $region46: #{transformer_decoder_forward.20} parent=39 // pred_check_branch
        %451 = sbr.rel (%p449) target = $region48
      $region47: #{transformer_decoder_forward.20} parent=39 // pred_region
        %v452 = vld [vmem:[#allocation2] sm:$0xff]
        %v453 = vld [vmem:[#allocation2 + $0x8] sm:$0xff]
        %v454 = vadd.f32 %v452, %v453
        %455 = vadd.xlane.f32.xlu0 %v454
        %v456 = vpop.xlane.xlu0 %455
        %v457 = vrcp.pop 256.0
        %v458 = vmul.f32 %v456, %v457
        %v459 = vsub.f32 %v452, %v458
        %v460 = vsub.f32 %v453, %v458
        %v461 = vmul.f32 %v459, %v459
        %v462 = vmul.f32 %v460, %v460
        %v463 = vadd.f32 %v461, %v462
        %464 = vadd.xlane.f32.xlu0 %v463
        %v465 = vpop.xlane.xlu0 %464
        %v466 = vmul.f32 %v465, %v457
        %v467 = vadd.f32 %v466, 1e-06
        %v468 = vrsqrt.pop %v467
        %v469 = vmul.f32 %v459, %v468
        %v470 = vmul.f32 %v460, %v468
        %v471 = vld [vmem:[%s3] sm:$0x3]
        %v473 = vlaneseq
        %v474 = vshrl.u32 %v473, 7
        %v475 = vsub.s32 0, %v474
        %v476 = vrot.slane %v471, %v475
        %v477 = vlaneseq
        %v478 = vshrl.u32 %v477, 7
        %v479 = vsub.s32 1, %v478
        %v480 = vrot.slane %v471, %v479
        %v483 = vmul.f32 %v469, %v476
        %v484 = vmul.f32 %v470, %v480
        %v485 = vld [vmem:[%s4] sm:$0x3]
        %v487 = vlaneseq
        %v488 = vshrl.u32 %v487, 7
        %v489 = vsub.s32 0, %v488
        %v490 = vrot.slane %v485, %v489
        %v491 = vlaneseq
        %v492 = vshrl.u32 %v491, 7
        %v493 = vsub.s32 1, %v492
        %v494 = vrot.slane %v485, %v493
        %v497 = vadd.f32 %v483, %v490
        %v498 = vadd.f32 %v484, %v494
        %499 = vst [vmem:[%s329] sm:$0xff] %v497
        %500 = vst [vmem:[%s329 + $0x8] sm:$0xff] %v498
      $region48: #{transformer_decoder_forward.20} parent=39 // pred_fallthru
        _
      %p501 = scmp.lt.s32.totalorder %s21, 1
      %s502 = scalar_select %p501, %s21, 1
      %p503 = scmp.lt.s32.totalorder %s22, 0
      %s504 = scalar_select %p503, %s22, 0
      %s505 = smul.addr %s504, 2
      %s506 = smul.addr %s502, 2
      %s507 = sadd.s32 %s505, %s506
      %s508 = smul.addr %s507, 8
      %s509 = scalar_lea.vmem %s5, %s508
      // Predicated region
      $region49: #{transformer_decoder_forward.20} parent=39 // pred_check
        %p510 = pneg %p181
      $region50: #{transformer_decoder_forward.20} parent=39 // pred_check_branch
        %512 = sbr.rel (%p510) target = $region52
      $region51: #{transformer_decoder_forward.20} parent=39 // pred_region
        _
      $region52: #{transformer_decoder_forward.20} parent=39 // pred_fallthru
        _
    $region40: #{transformer_decoder_forward.20} parent=5 // pred_fallthru
      _
    %p513 = scmp.le.s32.totalorder 2, %s11
    // Predicated region
    $region53: #{transformer_decoder_forward.20} parent=5 // pred_check
      %p514 = pneg %p513
    $region54: #{transformer_decoder_forward.20} parent=5 // pred_check_branch
      %516 = sbr.rel (%p514) target = $region56
    $region55: #{transformer_decoder_forward.20} parent=5 // pred_region
      %s517 = ssub.s32 %s11, 2
      // Predicated region
      $region57: #{transformer_decoder_forward.20} parent=55 // pred_check
        %p518 = pneg %p187
      $region58: #{transformer_decoder_forward.20} parent=55 // pred_check_branch
        %520 = sbr.rel (%p518) target = $region60
      $region59: #{transformer_decoder_forward.20} parent=55 // pred_region
        %p521 = scmp.lt.s32.totalorder %s24, 1
        %s522 = scalar_select %p521, %s24, 1
        %p523 = scmp.lt.s32.totalorder %s25, 0
        %s524 = scalar_select %p523, %s25, 0
        %s525 = smul.addr %s524, 2
        %s526 = smul.addr %s522, 2
        %s527 = sadd.s32 %s525, %s526
        %s528 = smul.addr %s527, 8
        %s529 = scalar_lea.vmem %s5, %s528
      $region60: #{transformer_decoder_forward.20} parent=55 // pred_fallthru
        _
    $region56: #{transformer_decoder_forward.20} parent=5 // pred_fallthru
      _
  $region6: #{transformer_decoder_forward.20} parent=0 // loop_footer
    %s15 = sadd.s32 1, %s11
  $region7: #{transformer_decoder_forward.20} parent=0 // loop_footer_branch
    %10 = sbr.rel target = $region3
  $region8: #{transformer_decoder_forward.20} parent=0 // loop_exit
    _

// kernel: transformer_decoder_forward.19
$region0: #{transformer_decoder_forward.19}
  #allocation0 [shape = 'u32[]', space=smem, size = 0x4, offset = 0x4, fixed_abs, tag = 'smem constant byte address 0x4 - core index']
  #allocation1 [shape = 'u32[144,128]{1,0:T(1,128)}', space=vmem, size = 0x12000, scoped, tag = 'internal scratch']
  #allocation2 [shape = 'f32[2,8,1]{2,1,0:T(8,128)}', space=vmem, size = 0x2000, scoped, tag = 'scratch operand']
  #allocation3 [shape = 'f32[2,8,1]{2,1,0:T(8,128)}', space=vmem, size = 0x2000, scoped, tag = 'scratch operand']
  #allocation4 [shape = 'f32[2,8,128]{2,1,0:T(8,128)}', space=vmem, size = 0x2000, scoped, tag = 'scratch operand']
  %s0 = inlined_call_operand.vmem [shape: f32[2,2,8,128], index: 0, kind: input, shape index: {}]
  %s1 = inlined_call_operand.vmem [shape: f32[2,2,8,128], index: 1, kind: input, shape index: {}]
  %s2 = inlined_call_operand.vmem [shape: f32[2,2,8,128], index: 2, kind: input, shape index: {}]
  %s3 = inlined_call_operand.vmem [shape: f32[2,8,8], index: 3, kind: input, shape index: {}]
  %s4 = inlined_call_operand.vmem [shape: f32[2,2,8,128], index: 4, kind: output, shape index: {}]
  %s5 = sld [smem:[#allocation0]]
  $region57: #{transformer_decoder_forward.19} parent=0
    _
  %s7 = ssub.s32 1, %s5
  %s8 = scalar_select 0, %s7, %s5
  loop: start=0, step=1, limit=4
  $region2: #{transformer_decoder_forward.19} parent=0 // loop_pre_header
    _
  $region3: #{transformer_decoder_forward.19} parent=0 // loop_header
    %s10 = sphi 0, %s14
    %p11 = scmp.ge.s32.totalorder %s10, 4
    %s17 = sphi 0, %s36
    %s18 = sphi 0, %s32
    %s19 = sphi 0, %s28
    %s20 = sphi 0, %s17
    %s21 = sphi 0, %s18
    %s22 = sphi 0, %s19
    %s23 = sphi 0, %s20
    %s24 = sphi 0, %s21
    %s25 = sphi 0, %s22
    %s41 = sphi 0, %s43
    %s44 = sphi 0, %s41
    %s45 = sphi 0, %s44
    %s61 = sphi 0, %s45
    %s69 = sphi 0, %s71
    %s72 = sphi 0, %s69
    %s73 = sphi 0, %s72
    %s89 = sphi 0, %s73
    %s97 = sphi 0, %s99
    %s100 = sphi 0, %s97
    %s101 = sphi 0, %s100
    %s117 = sphi 0, %s101
    %s127 = sphi 0, %s129
    %s130 = sphi 0, %s127
    %s131 = sphi 0, %s130
    %s147 = sphi 0, %s131
    %s155 = sphi 0, %s157
    %s158 = sphi 0, %s155
    %s159 = sphi 0, %s158
    %s175 = sphi 0, %s159
  $region4: #{transformer_decoder_forward.19} parent=0 // loop_header_branch
    %13 = sbr.rel (%p11) target = $region8
  $region5: #{transformer_decoder_forward.19} parent=0 // loop_body
    %s15 = ssub.s32 %s10, 1
    %s16 = ssub.s32 %s10, 2
    %s26 = sadd.s32 1, %s19
    %p27 = scmp.ge.s32.totalorder %s26, 1
    %s28 = scalar_select %p27, 0, %s26
    %s29 = sadd.s32 1, %s18
    %s30 = scalar_select %p27, %s29, %s18
    %p31 = scmp.ge.s32.totalorder %s30, 1
    %s32 = scalar_select %p31, 0, %s30
    %s33 = sadd.s32 1, %s17
    %s34 = scalar_select %p31, %s33, %s17
    %p35 = scmp.ge.s32.totalorder %s34, 2
    %s36 = scalar_select %p35, 0, %s34
    %s37 = ssub.s32 %s17, %s36
    %s38 = ssub.s32 %s18, %s32
    %s39 = sor.u32 %s37, %s38
    %p40 = scmp.eq.s32.totalorder %s39, 0
    %s42 = sadd.s32 %s41, 1
    %s43 = scalar_select %p40, %s41, %s42
    %p46 = pneg %p40
    %p47 = scmp.eq.s32.totalorder %s10, 1
    %p48 = por %p46, %p47
    %p49 = scmp.ne.s32.totalorder %s41, %s44
    %p50 = scmp.eq.s32.totalorder %s10, 0
    %p51 = por %p49, %p50
    %p52 = scmp.ne.s32.totalorder %s41, %s44
    %p53 = scmp.eq.s32.totalorder %s15, 1
    %p54 = por %p52, %p53
    %p55 = scmp.ne.s32.totalorder %s44, %s45
    %p56 = scmp.eq.s32.totalorder %s15, 0
    %p57 = por %p55, %p56
    %p58 = scmp.ne.s32.totalorder %s44, %s45
    %p59 = scmp.eq.s32.totalorder %s16, 1
    %p60 = por %p58, %p59
    %p62 = scmp.ne.s32.totalorder %s45, %s61
    %p63 = scmp.eq.s32.totalorder %s16, 0
    %p64 = por %p62, %p63
    %s65 = ssub.s32 %s17, %s36
    %s66 = ssub.s32 %s19, %s28
    %s67 = sor.u32 %s65, %s66
    %p68 = scmp.eq.s32.totalorder %s67, 0
    %s70 = sadd.s32 %s69, 1
    %s71 = scalar_select %p68, %s69, %s70
    %p74 = pneg %p68
    %p75 = scmp.eq.s32.totalorder %s10, 1
    %p76 = por %p74, %p75
    %p77 = scmp.ne.s32.totalorder %s69, %s72
    %p78 = scmp.eq.s32.totalorder %s10, 0
    %p79 = por %p77, %p78
    %p80 = scmp.ne.s32.totalorder %s69, %s72
    %p81 = scmp.eq.s32.totalorder %s15, 1
    %p82 = por %p80, %p81
    %p83 = scmp.ne.s32.totalorder %s72, %s73
    %p84 = scmp.eq.s32.totalorder %s15, 0
    %p85 = por %p83, %p84
    %p86 = scmp.ne.s32.totalorder %s72, %s73
    %p87 = scmp.eq.s32.totalorder %s16, 1
    %p88 = por %p86, %p87
    %p90 = scmp.ne.s32.totalorder %s73, %s89
    %p91 = scmp.eq.s32.totalorder %s16, 0
    %p92 = por %p90, %p91
    %s93 = ssub.s32 %s17, %s36
    %s94 = ssub.s32 %s19, %s28
    %s95 = sor.u32 %s93, %s94
    %p96 = scmp.eq.s32.totalorder %s95, 0
    %s98 = sadd.s32 %s97, 1
    %s99 = scalar_select %p96, %s97, %s98
    %p102 = pneg %p96
    %p103 = scmp.eq.s32.totalorder %s10, 1
    %p104 = por %p102, %p103
    %p105 = scmp.ne.s32.totalorder %s97, %s100
    %p106 = scmp.eq.s32.totalorder %s10, 0
    %p107 = por %p105, %p106
    %p108 = scmp.ne.s32.totalorder %s97, %s100
    %p109 = scmp.eq.s32.totalorder %s15, 1
    %p110 = por %p108, %p109
    %p111 = scmp.ne.s32.totalorder %s100, %s101
    %p112 = scmp.eq.s32.totalorder %s15, 0
    %p113 = por %p111, %p112
    %p114 = scmp.ne.s32.totalorder %s100, %s101
    %p115 = scmp.eq.s32.totalorder %s16, 1
    %p116 = por %p114, %p115
    %p118 = scmp.ne.s32.totalorder %s101, %s117
    %p119 = scmp.eq.s32.totalorder %s16, 0
    %p120 = por %p118, %p119
    %s121 = ssub.s32 %s17, %s36
    %s122 = ssub.s32 %s18, %s32
    %s123 = sor.u32 %s121, %s122
    %s124 = ssub.s32 %s19, %s28
    %s125 = sor.u32 %s123, %s124
    %p126 = scmp.eq.s32.totalorder %s125, 0
    %s128 = sadd.s32 %s127, 1
    %s129 = scalar_select %p126, %s127, %s128
    %p132 = pneg %p126
    %p133 = scmp.eq.s32.totalorder %s10, 1
    %p134 = por %p132, %p133
    %p135 = scmp.ne.s32.totalorder %s127, %s130
    %p136 = scmp.eq.s32.totalorder %s10, 0
    %p137 = por %p135, %p136
    %p138 = scmp.ne.s32.totalorder %s127, %s130
    %p139 = scmp.eq.s32.totalorder %s15, 1
    %p140 = por %p138, %p139
    %p141 = scmp.ne.s32.totalorder %s130, %s131
    %p142 = scmp.eq.s32.totalorder %s15, 0
    %p143 = por %p141, %p142
    %p144 = scmp.ne.s32.totalorder %s130, %s131
    %p145 = scmp.eq.s32.totalorder %s16, 1
    %p146 = por %p144, %p145
    %p148 = scmp.ne.s32.totalorder %s131, %s147
    %p149 = scmp.eq.s32.totalorder %s16, 0
    %p150 = por %p148, %p149
    %s151 = ssub.s32 %s17, %s36
    %s152 = ssub.s32 %s18, %s32
    %s153 = sor.u32 %s151, %s152
    %p154 = scmp.eq.s32.totalorder %s153, 0
    %s156 = sadd.s32 %s155, 1
    %s157 = scalar_select %p154, %s155, %s156
    %p160 = pneg %p154
    %p161 = scmp.eq.s32.totalorder %s10, 1
    %p162 = por %p160, %p161
    %p163 = scmp.ne.s32.totalorder %s155, %s158
    %p164 = scmp.eq.s32.totalorder %s10, 0
    %p165 = por %p163, %p164
    %p166 = scmp.ne.s32.totalorder %s155, %s158
    %p167 = scmp.eq.s32.totalorder %s15, 1
    %p168 = por %p166, %p167
    %p169 = scmp.ne.s32.totalorder %s158, %s159
    %p170 = scmp.eq.s32.totalorder %s15, 0
    %p171 = por %p169, %p170
    %p172 = scmp.ne.s32.totalorder %s158, %s159
    %p173 = scmp.eq.s32.totalorder %s16, 1
    %p174 = por %p172, %p173
    %p176 = scmp.ne.s32.totalorder %s159, %s175
    %p177 = scmp.eq.s32.totalorder %s16, 0
    %p178 = por %p176, %p177
    %p179 = scmp.le.s32.totalorder 1, %s10
    %p180 = scmp.lt.s32.totalorder %s10, 3
    %p181 = pnand %p179, %p180
    %p182 = pneg %p181
    // Predicated region
    $region9: #{transformer_decoder_forward.19} parent=5 // pred_check
      _
    $region10: #{transformer_decoder_forward.19} parent=5 // pred_check_branch
      %184 = sbr.rel (%p181) target = $region12
    $region11: #{transformer_decoder_forward.19} parent=5 // pred_region
      %s185 = ssub.s32 %s10, 1
    $region12: #{transformer_decoder_forward.19} parent=5 // pred_fallthru
      _
    %p186 = scmp.lt.s32.totalorder %s10, 2
    // Predicated region
    $region13: #{transformer_decoder_forward.19} parent=5 // pred_check
      %p187 = pneg %p186
    $region14: #{transformer_decoder_forward.19} parent=5 // pred_check_branch
      %189 = sbr.rel (%p187) target = $region16
    $region15: #{transformer_decoder_forward.19} parent=5 // pred_region
      // Predicated region
      $region17: #{transformer_decoder_forward.19} parent=15 // pred_check
        %p190 = pneg %p51
      $region18: #{transformer_decoder_forward.19} parent=15 // pred_check_branch
        %192 = sbr.rel (%p190) target = $region20
      $region19: #{transformer_decoder_forward.19} parent=15 // pred_region
        %p193 = scmp.lt.s32.totalorder %s17, 1
        %s194 = scalar_select %p193, %s17, 1
        %p195 = scmp.lt.s32.totalorder %s18, 0
        %s196 = scalar_select %p195, %s18, 0
        %s197 = smul.addr %s194, 2
        %s198 = sadd.s32 %s196, %s197
        %s199 = smul.addr %s198, 8
        %s200 = scalar_lea.vmem %s0, %s199
      $region20: #{transformer_decoder_forward.19} parent=15 // pred_fallthru
        _
      // Predicated region
      $region21: #{transformer_decoder_forward.19} parent=15 // pred_check
        %p201 = pneg %p79
      $region22: #{transformer_decoder_forward.19} parent=15 // pred_check_branch
        %203 = sbr.rel (%p201) target = $region24
      $region23: #{transformer_decoder_forward.19} parent=15 // pred_region
        %p204 = scmp.lt.s32.totalorder %s17, 1
        %s205 = scalar_select %p204, %s17, 1
        %p206 = scmp.lt.s32.totalorder %s19, 0
        %s207 = scalar_select %p206, %s19, 0
        %s208 = smul.addr %s205, 2
        %s209 = sadd.s32 %s207, %s208
        %s210 = smul.addr %s209, 8
        %s211 = scalar_lea.vmem %s1, %s210
      $region24: #{transformer_decoder_forward.19} parent=15 // pred_fallthru
        _
      // Predicated region
      $region25: #{transformer_decoder_forward.19} parent=15 // pred_check
        %p212 = pneg %p107
      $region26: #{transformer_decoder_forward.19} parent=15 // pred_check_branch
        %214 = sbr.rel (%p212) target = $region28
      $region27: #{transformer_decoder_forward.19} parent=15 // pred_region
        %p215 = scmp.lt.s32.totalorder %s17, 1
        %s216 = scalar_select %p215, %s17, 1
        %p217 = scmp.lt.s32.totalorder %s19, 0
        %s218 = scalar_select %p217, %s19, 0
        %s219 = smul.addr %s216, 2
        %s220 = sadd.s32 %s218, %s219
        %s221 = smul.addr %s220, 8
        %s222 = scalar_lea.vmem %s2, %s221
      $region28: #{transformer_decoder_forward.19} parent=15 // pred_fallthru
        _
      // Predicated region
      $region29: #{transformer_decoder_forward.19} parent=15 // pred_check
        %p223 = pneg %p137
      $region30: #{transformer_decoder_forward.19} parent=15 // pred_check_branch
        %225 = sbr.rel (%p223) target = $region32
      $region31: #{transformer_decoder_forward.19} parent=15 // pred_region
        %p226 = scmp.lt.s32.totalorder %s17, 1
        %s227 = scalar_select %p226, %s17, 1
        %p228 = scmp.lt.s32.totalorder %s18, 0
        %s229 = scalar_select %p228, %s18, 0
        %p230 = scmp.lt.s32.totalorder %s19, 0
        %s231 = scalar_select %p230, %s19, 0
        %s232 = sadd.s32 %s231, %s229
        %s233 = sadd.s32 %s232, %s227
        %s234 = smul.addr %s233, 8
        %s235 = scalar_lea.vmem %s3, %s234
      $region32: #{transformer_decoder_forward.19} parent=15 // pred_fallthru
        _
    $region16: #{transformer_decoder_forward.19} parent=5 // pred_fallthru
      _
    %p236 = scmp.le.s32.totalorder 1, %s10
    %p237 = scmp.lt.s32.totalorder %s10, 3
    %p238 = pnand %p236, %p237
    %p239 = pneg %p238
    // Predicated region
    $region33: #{transformer_decoder_forward.19} parent=5 // pred_check
      _
    $region34: #{transformer_decoder_forward.19} parent=5 // pred_check_branch
      %241 = sbr.rel (%p238) target = $region36
    $region35: #{transformer_decoder_forward.19} parent=5 // pred_region
      %s242 = ssub.s32 %s10, 1
      %p243 = scmp.lt.s32.totalorder %s20, 1
      %s244 = scalar_select %p243, %s20, 1
      %p245 = scmp.lt.s32.totalorder %s21, 0
      %s246 = scalar_select %p245, %s21, 0
      %s247 = smul.addr %s244, 2
      %s248 = sadd.s32 %s246, %s247
      %s249 = smul.addr %s248, 8
      %s250 = scalar_lea.vmem %s0, %s249
      %p251 = pneg %p57
      %p252 = pneg %p54
      %p253 = scmp.lt.s32.totalorder %s20, 1
      %s254 = scalar_select %p253, %s20, 1
      %p255 = scmp.lt.s32.totalorder %s22, 0
      %s256 = scalar_select %p255, %s22, 0
      %s257 = smul.addr %s254, 2
      %s258 = sadd.s32 %s256, %s257
      %s259 = smul.addr %s258, 8
      %s260 = scalar_lea.vmem %s1, %s259
      %p261 = pneg %p85
      %p262 = pneg %p82
      %p263 = scmp.lt.s32.totalorder %s20, 1
      %s264 = scalar_select %p263, %s20, 1
      %p265 = scmp.lt.s32.totalorder %s22, 0
      %s266 = scalar_select %p265, %s22, 0
      %s267 = smul.addr %s264, 2
      %s268 = sadd.s32 %s266, %s267
      %s269 = smul.addr %s268, 8
      %s270 = scalar_lea.vmem %s2, %s269
      %p271 = pneg %p113
      %p272 = pneg %p110
      %p273 = scmp.lt.s32.totalorder %s20, 1
      %s274 = scalar_select %p273, %s20, 1
      %p275 = scmp.lt.s32.totalorder %s21, 0
      %s276 = scalar_select %p275, %s21, 0
      %p277 = scmp.lt.s32.totalorder %s22, 0
      %s278 = scalar_select %p277, %s22, 0
      %s279 = sadd.s32 %s278, %s276
      %s280 = sadd.s32 %s279, %s274
      %s281 = smul.addr %s280, 8
      %s282 = scalar_lea.vmem %s3, %s281
      %p283 = pneg %p143
      %p284 = pneg %p140
      %p285 = pneg %p171
      %p286 = pneg %p168
      %p287 = scmp.lt.s32.totalorder %s20, 1
      %s288 = scalar_select %p287, %s20, 1
      %p289 = scmp.lt.s32.totalorder %s21, 0
      %s290 = scalar_select %p289, %s21, 0
      %s291 = smul.addr %s288, 2
      %s292 = sadd.s32 %s290, %s291
      %s293 = smul.addr %s292, 8
      %s294 = scalar_lea.vmem %s4, %s293
      %p295 = scmp.lt.s32.totalorder %s20, 1
      %s296 = scalar_select %p295, %s20, 1
      %p297 = scmp.lt.s32.totalorder %s21, 0
      %s298 = scalar_select %p297, %s21, 0
      %s299 = smul.addr %s296, 2
      %s300 = sadd.s32 %s298, %s299
      %s301 = smul.addr %s300, 8
      %s302 = scalar_lea.vmem %s0, %s301
      %p303 = scmp.lt.s32.totalorder %s20, 1
      %s304 = scalar_select %p303, %s20, 1
      %p305 = scmp.lt.s32.totalorder %s22, 0
      %s306 = scalar_select %p305, %s22, 0
      %s307 = smul.addr %s304, 2
      %s308 = sadd.s32 %s306, %s307
      %s309 = smul.addr %s308, 8
      %s310 = scalar_lea.vmem %s1, %s309
      %p311 = scmp.lt.s32.totalorder %s20, 1
      %s312 = scalar_select %p311, %s20, 1
      %p313 = scmp.lt.s32.totalorder %s22, 0
      %s314 = scalar_select %p313, %s22, 0
      %s315 = smul.addr %s312, 2
      %s316 = sadd.s32 %s314, %s315
      %s317 = smul.addr %s316, 8
      %s318 = scalar_lea.vmem %s2, %s317
      %p319 = scmp.lt.s32.totalorder %s20, 1
      %s320 = scalar_select %p319, %s20, 1
      %p321 = scmp.lt.s32.totalorder %s21, 0
      %s322 = scalar_select %p321, %s21, 0
      %p323 = scmp.lt.s32.totalorder %s22, 0
      %s324 = scalar_select %p323, %s22, 0
      %s325 = sadd.s32 %s324, %s322
      %s326 = sadd.s32 %s325, %s320
      %s327 = smul.addr %s326, 8
      %s328 = scalar_lea.vmem %s3, %s327
      %p329 = scmp.lt.s32.totalorder %s20, 1
      %s330 = scalar_select %p329, %s20, 1
      %p331 = scmp.lt.s32.totalorder %s21, 0
      %s332 = scalar_select %p331, %s21, 0
      %s333 = smul.addr %s330, 2
      %s334 = sadd.s32 %s332, %s333
      %s335 = smul.addr %s334, 8
      %s336 = scalar_lea.vmem %s4, %s335
      %p337 = scmp.eq.s32.totalorder %s22, 0
      // Predicated region
      $region37: #{transformer_decoder_forward.19} parent=35 // pred_check
        %p338 = pneg %p337
      $region38: #{transformer_decoder_forward.19} parent=35 // pred_check_branch
        %340 = sbr.rel (%p338) target = $region40
      $region39: #{transformer_decoder_forward.19} parent=35 // pred_region
        %vm341 = vcmask 7168
        %342 = vst.msk [vmem:[#allocation2] sm:$0xff] %vm341, -inf
        %343 = vst.msk [vmem:[#allocation2 + $0x8] sm:$0xff] %vm341, -inf
        %344 = vst.msk [vmem:[#allocation3] sm:$0xff] %vm341, 0.0
        %345 = vst.msk [vmem:[#allocation3 + $0x8] sm:$0xff] %vm341, 0.0
        %346 = vst [vmem:[#allocation4] sm:$0xff] 0.0
        %347 = vst [vmem:[#allocation4 + $0x8] sm:$0xff] 0.0
      $region40: #{transformer_decoder_forward.19} parent=35 // pred_fallthru
        _
      %v348 = vld [vmem:[%s302] sm:$0xff]
      %v349 = vld [vmem:[%s302 + $0x8] sm:$0xff]
      %v350 = vmul.f32 %v348, 0.088388346
      %v351 = vmul.f32 %v349, 0.088388346
      %v352 = vld [vmem:[%s310] sm:$0xff]
      %v353 = vld [vmem:[%s310 + $0x8] sm:$0xff]
      %v354 = vld [vmem:[%s318] sm:$0xff]
      %v355 = vld [vmem:[%s318 + $0x8] sm:$0xff]
      %v356 = vld [vmem:[%s328] sm:$0xff]
      %357 = vmatprep.subr.mxu0 0.0
      %358 = vmatpush1.xpose.msra.mxu0 0.0
      %359 = vmatprep.subr.mxu0 0.0
      %360 = vmatpush1.xpose.msra.mxu0 0.0
      %361 = vmatprep.subr.mxu0 0.0
      %362 = vmatpush1.xpose.msra.mxu0 0.0
      %363 = vmatprep.subr.mxu0 0.0
      %364 = vmatpush1.xpose.msra.mxu0 0.0
      %365 = vmatprep.subr.mxu0 0.0
      %366 = vmatpush1.xpose.msra.mxu0 0.0
      %367 = vmatprep.subr.mxu0 0.0
      %368 = vmatpush1.xpose.msra.mxu0 0.0
      %369 = vmatprep.subr.mxu0 0.0
      %370 = vmatpush1.xpose.msra.mxu0 0.0
      %371 = vmatprep.subr.mxu0 0.0
      %372 = vmatpush1.xpose.msra.mxu0 0.0
      %373 = vmatprep.subr.mxu0 0.0
      %374 = vmatpush1.xpose.msra.mxu0 0.0
      %375 = vmatprep.subr.mxu0 0.0
      %376 = vmatpush1.xpose.msra.mxu0 0.0
      %377 = vmatprep.subr.mxu0 0.0
      %378 = vmatpush1.xpose.msra.mxu0 0.0
      %379 = vmatprep.subr.mxu0 0.0
      %380 = vmatpush1.xpose.msra.mxu0 0.0
      %381 = vmatprep.subr.mxu0 0.0
      %382 = vmatpush1.xpose.msra.mxu0 0.0
      %383 = vmatprep.subr.mxu0 0.0
      %384 = vmatpush1.xpose.msra.mxu0 0.0
      %385 = vmatprep.subr.mxu0 0.0
      %386 = vmatpush1.xpose.msra.mxu0 0.0
      %387 = vmatprep.subr.mxu0 0.0
      %388 = vmatpush1.xpose.msra.mxu0 %v352
      %389 = vmatprep.subr.mxu0 0.0
      %390 = vmatpush2.xpose.msra.mxu0 0.0
      %391 = vmatprep.subr.mxu0 0.0
      %392 = vmatpush2.xpose.msra.mxu0 0.0
      %393 = vmatprep.subr.mxu0 0.0
      %394 = vmatpush2.xpose.msra.mxu0 0.0
      %395 = vmatprep.subr.mxu0 0.0
      %396 = vmatpush2.xpose.msra.mxu0 0.0
      %397 = vmatprep.subr.mxu0 0.0
      %398 = vmatpush2.xpose.msra.mxu0 0.0
      %399 = vmatprep.subr.mxu0 0.0
      %400 = vmatpush2.xpose.msra.mxu0 0.0
      %401 = vmatprep.subr.mxu0 0.0
      %402 = vmatpush2.xpose.msra.mxu0 0.0
      %403 = vmatprep.subr.mxu0 0.0
      %404 = vmatpush2.xpose.msra.mxu0 0.0
      %405 = vmatprep.subr.mxu0 0.0
      %406 = vmatpush2.xpose.msra.mxu0 0.0
      %407 = vmatprep.subr.mxu0 0.0
      %408 = vmatpush2.xpose.msra.mxu0 0.0
      %409 = vmatprep.subr.mxu0 0.0
      %410 = vmatpush2.xpose.msra.mxu0 0.0
      %411 = vmatprep.subr.mxu0 0.0
      %412 = vmatpush2.xpose.msra.mxu0 0.0
      %413 = vmatprep.subr.mxu0 0.0
      %414 = vmatpush2.xpose.msra.mxu0 0.0
      %415 = vmatprep.subr.mxu0 0.0
      %416 = vmatpush2.xpose.msra.mxu0 0.0
      %417 = vmatprep.subr.mxu0 0.0
      %418 = vmatpush2.xpose.msra.mxu0 0.0
      %419 = vmatprep.subr.mxu0 0.0
      %420 = vmatpush2.xpose.msra.mxu0 0.0
      %421 = vmatprep.mubr.f32.mxu0 0.0
      %422 = vmatmul.mubr.f32.gmra.mxu0 %v350
      %v423 = vpop.f32.mrf.mxu0
      %v424 = vadd.f32 %v356, %v423
      %v425 = vpop.f32.mrf.mxu0
      %426 = vdwg.mxu0
      %427 = vmatprep.subr.mxu0 0.0
      %428 = vmatpush1.xpose.msra.mxu0 0.0
      %429 = vmatprep.subr.mxu0 0.0
      %430 = vmatpush1.xpose.msra.mxu0 0.0
      %431 = vmatprep.subr.mxu0 0.0
      %432 = vmatpush1.xpose.msra.mxu0 0.0
      %433 = vmatprep.subr.mxu0 0.0
      %434 = vmatpush1.xpose.msra.mxu0 0.0
      %435 = vmatprep.subr.mxu0 0.0
      %436 = vmatpush1.xpose.msra.mxu0 0.0
      %437 = vmatprep.subr.mxu0 0.0
      %438 = vmatpush1.xpose.msra.mxu0 0.0
      %439 = vmatprep.subr.mxu0 0.0
      %440 = vmatpush1.xpose.msra.mxu0 0.0
      %441 = vmatprep.subr.mxu0 0.0
      %442 = vmatpush1.xpose.msra.mxu0 0.0
      %443 = vmatprep.subr.mxu0 0.0
      %444 = vmatpush1.xpose.msra.mxu0 0.0
      %445 = vmatprep.subr.mxu0 0.0
      %446 = vmatpush1.xpose.msra.mxu0 0.0
      %447 = vmatprep.subr.mxu0 0.0
      %448 = vmatpush1.xpose.msra.mxu0 0.0
      %449 = vmatprep.subr.mxu0 0.0
      %450 = vmatpush1.xpose.msra.mxu0 0.0
      %451 = vmatprep.subr.mxu0 0.0
      %452 = vmatpush1.xpose.msra.mxu0 0.0
      %453 = vmatprep.subr.mxu0 0.0
      %454 = vmatpush1.xpose.msra.mxu0 0.0
      %455 = vmatprep.subr.mxu0 0.0
      %456 = vmatpush1.xpose.msra.mxu0 0.0
      %457 = vmatprep.subr.mxu0 0.0
      %458 = vmatpush1.xpose.msra.mxu0 %v353
      %459 = vmatprep.subr.mxu0 0.0
      %460 = vmatpush2.xpose.msra.mxu0 0.0
      %461 = vmatprep.subr.mxu0 0.0
      %462 = vmatpush2.xpose.msra.mxu0 0.0
      %463 = vmatprep.subr.mxu0 0.0
      %464 = vmatpush2.xpose.msra.mxu0 0.0
      %465 = vmatprep.subr.mxu0 0.0
      %466 = vmatpush2.xpose.msra.mxu0 0.0
      %467 = vmatprep.subr.mxu0 0.0
      %468 = vmatpush2.xpose.msra.mxu0 0.0
      %469 = vmatprep.subr.mxu0 0.0
      %470 = vmatpush2.xpose.msra.mxu0 0.0
      %471 = vmatprep.subr.mxu0 0.0
      %472 = vmatpush2.xpose.msra.mxu0 0.0
      %473 = vmatprep.subr.mxu0 0.0
      %474 = vmatpush2.xpose.msra.mxu0 0.0
      %475 = vmatprep.subr.mxu0 0.0
      %476 = vmatpush2.xpose.msra.mxu0 0.0
      %477 = vmatprep.subr.mxu0 0.0
      %478 = vmatpush2.xpose.msra.mxu0 0.0
      %479 = vmatprep.subr.mxu0 0.0
      %480 = vmatpush2.xpose.msra.mxu0 0.0
      %481 = vmatprep.subr.mxu0 0.0
      %482 = vmatpush2.xpose.msra.mxu0 0.0
      %483 = vmatprep.subr.mxu0 0.0
      %484 = vmatpush2.xpose.msra.mxu0 0.0
      %485 = vmatprep.subr.mxu0 0.0
      %486 = vmatpush2.xpose.msra.mxu0 0.0
      %487 = vmatprep.subr.mxu0 0.0
      %488 = vmatpush2.xpose.msra.mxu0 0.0
      %489 = vmatprep.subr.mxu0 0.0
      %490 = vmatpush2.xpose.msra.mxu0 0.0
      %491 = vmatprep.mubr.f32.mxu0 0.0
      %492 = vmatmul.mubr.f32.gmra.mxu0 %v351
      %v493 = vpop.f32.mrf.mxu0
      %v494 = vadd.f32 %v356, %v493
      %v495 = vpop.f32.mrf.mxu0
      %496 = vdwg.mxu0
      %v497 = vld [vmem:[#allocation2] sm:$0xff]
      %v498 = vld [vmem:[#allocation2 + $0x8] sm:$0xff]
      %vm499 = vcmask 64512
      %v500 = vsel %vm499, %v424, -inf
      %501 = vmax.xlane.f32.xlu0 %v500
      %v502 = vpop.xlane.xlu0 %501
      %v503 = vsel %vm499, %v494, -inf
      %504 = vmax.xlane.f32.xlu0 %v503
      %v505 = vpop.xlane.xlu0 %504
      %v506 = vmax.f32 %v497, %v502
      %v507 = vmax.f32 %v498, %v505
      %v508 = vsub.f32 %v497, %v506
      %v509 = vsub.f32 %v498, %v507
      %v510 = vmul.f32 %v508, 1.442695
      %v511 = vpow.pop %v510
      %v512 = vmul.f32 %v509, 1.442695
      %v513 = vpow.pop %v512
      %515 = vset.pattern.permute.xlu0 0
      %516 = vperm.xlu0 %515, %v506
      %v517 = vpop.permute.xlu0 %516
      %520 = vset.pattern.permute.xlu0 0
      %521 = vperm.xlu0 %520, %v507
      %v522 = vpop.permute.xlu0 %521
      %v524 = vsub.f32 %v424, %v517
      %v525 = vsub.f32 %v494, %v522
      %v526 = vmul.f32 %v524, 1.442695
      %v527 = vpow.pop %v526
      %v528 = vmul.f32 %v525, 1.442695
      %v529 = vpow.pop %v528
      %v530 = vld [vmem:[#allocation3] sm:$0xff]
      %v531 = vld [vmem:[#allocation3 + $0x8] sm:$0xff]
      %v532 = vmul.f32 %v511, %v530
      %v533 = vmul.f32 %v513, %v531
      %v534 = vsel %vm499, %v527, 0.0
      %535 = vadd.xlane.f32.xlu0 %v534
      %v536 = vpop.xlane.xlu0 %535
      %v537 = vsel %vm499, %v529, 0.0
      %538 = vadd.xlane.f32.xlu0 %v537
      %v539 = vpop.xlane.xlu0 %538
      %v540 = vadd.f32 %v532, %v536
      %v541 = vadd.f32 %v533, %v539
      %vm542 = vcmask 7168
      %543 = vst.msk [vmem:[#allocation3] sm:$0xff] %vm542, %v540
      %544 = vst.msk [vmem:[#allocation3 + $0x8] sm:$0xff] %vm542, %v541
      %v545 = vld [vmem:[#allocation4] sm:$0xff]
      %v546 = vld [vmem:[#allocation4 + $0x8] sm:$0xff]
      %548 = vset.pattern.permute.xlu0 0
      %549 = vperm.xlu0 %548, %v511
      %v550 = vpop.permute.xlu0 %549
      %553 = vset.pattern.permute.xlu0 0
      %554 = vperm.xlu0 %553, %v513
      %v555 = vpop.permute.xlu0 %554
      %v557 = vmul.f32 %v550, %v545
      %v558 = vmul.f32 %v555, %v546
      %v560 = vsel %vm499, %v527, 0
      %562 = vmatprep.subr.mxu0 0.0
      %563 = vmatpush1.msra.mxu0 0.0
      %564 = vmatprep.subr.mxu0 0.0
      %565 = vmatpush1.msra.mxu0 0.0
      %566 = vmatprep.subr.mxu0 0.0
      %567 = vmatpush1.msra.mxu0 0.0
      %568 = vmatprep.subr.mxu0 0.0
      %569 = vmatpush1.msra.mxu0 0.0
      %570 = vmatprep.subr.mxu0 0.0
      %571 = vmatpush1.msra.mxu0 0.0
      %572 = vmatprep.subr.mxu0 0.0
      %573 = vmatpush1.msra.mxu0 0.0
      %574 = vmatprep.subr.mxu0 0.0
      %575 = vmatpush1.msra.mxu0 0.0
      %576 = vmatprep.subr.mxu0 0.0
      %577 = vmatpush1.msra.mxu0 0.0
      %578 = vmatprep.subr.mxu0 0.0
      %579 = vmatpush1.msra.mxu0 0.0
      %580 = vmatprep.subr.mxu0 0.0
      %581 = vmatpush1.msra.mxu0 0.0
      %582 = vmatprep.subr.mxu0 0.0
      %583 = vmatpush1.msra.mxu0 0.0
      %584 = vmatprep.subr.mxu0 0.0
      %585 = vmatpush1.msra.mxu0 0.0
      %586 = vmatprep.subr.mxu0 0.0
      %587 = vmatpush1.msra.mxu0 0.0
      %588 = vmatprep.subr.mxu0 0.0
      %589 = vmatpush1.msra.mxu0 0.0
      %590 = vmatprep.subr.mxu0 0.0
      %591 = vmatpush1.msra.mxu0 0.0
      %592 = vmatprep.subr.mxu0 0.0
      %593 = vmatpush1.msra.mxu0 %v354
      %594 = vmatprep.subr.mxu0 0.0
      %595 = vmatpush2.msra.mxu0 0.0
      %596 = vmatprep.subr.mxu0 0.0
      %597 = vmatpush2.msra.mxu0 0.0
      %598 = vmatprep.subr.mxu0 0.0
      %599 = vmatpush2.msra.mxu0 0.0
      %600 = vmatprep.subr.mxu0 0.0
      %601 = vmatpush2.msra.mxu0 0.0
      %602 = vmatprep.subr.mxu0 0.0
      %603 = vmatpush2.msra.mxu0 0.0
      %604 = vmatprep.subr.mxu0 0.0
      %605 = vmatpush2.msra.mxu0 0.0
      %606 = vmatprep.subr.mxu0 0.0
      %607 = vmatpush2.msra.mxu0 0.0
      %608 = vmatprep.subr.mxu0 0.0
      %609 = vmatpush2.msra.mxu0 0.0
      %610 = vmatprep.subr.mxu0 0.0
      %611 = vmatpush2.msra.mxu0 0.0
      %612 = vmatprep.subr.mxu0 0.0
      %613 = vmatpush2.msra.mxu0 0.0
      %614 = vmatprep.subr.mxu0 0.0
      %615 = vmatpush2.msra.mxu0 0.0
      %616 = vmatprep.subr.mxu0 0.0
      %617 = vmatpush2.msra.mxu0 0.0
      %618 = vmatprep.subr.mxu0 0.0
      %619 = vmatpush2.msra.mxu0 0.0
      %620 = vmatprep.subr.mxu0 0.0
      %621 = vmatpush2.msra.mxu0 0.0
      %622 = vmatprep.subr.mxu0 0.0
      %623 = vmatpush2.msra.mxu0 0.0
      %624 = vmatprep.subr.mxu0 0.0
      %625 = vmatpush2.msra.mxu0 0.0
      %626 = vmatprep.mubr.f32.mxu0 0.0
      %627 = vmatmul.mubr.f32.gmra.mxu0 %v560
      %v628 = vpop.f32.mrf.mxu0
      %v629 = vadd.f32 0.0, %v628
      %v630 = vpop.f32.mrf.mxu0
      %631 = vdwg.mxu0
      %v633 = vsel %vm499, %v529, 0
      %635 = vmatprep.subr.mxu0 0.0
      %636 = vmatpush1.msra.mxu0 0.0
      %637 = vmatprep.subr.mxu0 0.0
      %638 = vmatpush1.msra.mxu0 0.0
      %639 = vmatprep.subr.mxu0 0.0
      %640 = vmatpush1.msra.mxu0 0.0
      %641 = vmatprep.subr.mxu0 0.0
      %642 = vmatpush1.msra.mxu0 0.0
      %643 = vmatprep.subr.mxu0 0.0
      %644 = vmatpush1.msra.mxu0 0.0
      %645 = vmatprep.subr.mxu0 0.0
      %646 = vmatpush1.msra.mxu0 0.0
      %647 = vmatprep.subr.mxu0 0.0
      %648 = vmatpush1.msra.mxu0 0.0
      %649 = vmatprep.subr.mxu0 0.0
      %650 = vmatpush1.msra.mxu0 0.0
      %651 = vmatprep.subr.mxu0 0.0
      %652 = vmatpush1.msra.mxu0 0.0
      %653 = vmatprep.subr.mxu0 0.0
      %654 = vmatpush1.msra.mxu0 0.0
      %655 = vmatprep.subr.mxu0 0.0
      %656 = vmatpush1.msra.mxu0 0.0
      %657 = vmatprep.subr.mxu0 0.0
      %658 = vmatpush1.msra.mxu0 0.0
      %659 = vmatprep.subr.mxu0 0.0
      %660 = vmatpush1.msra.mxu0 0.0
      %661 = vmatprep.subr.mxu0 0.0
      %662 = vmatpush1.msra.mxu0 0.0
      %663 = vmatprep.subr.mxu0 0.0
      %664 = vmatpush1.msra.mxu0 0.0
      %665 = vmatprep.subr.mxu0 0.0
      %666 = vmatpush1.msra.mxu0 %v355
      %667 = vmatprep.subr.mxu0 0.0
      %668 = vmatpush2.msra.mxu0 0.0
      %669 = vmatprep.subr.mxu0 0.0
      %670 = vmatpush2.msra.mxu0 0.0
      %671 = vmatprep.subr.mxu0 0.0
      %672 = vmatpush2.msra.mxu0 0.0
      %673 = vmatprep.subr.mxu0 0.0
      %674 = vmatpush2.msra.mxu0 0.0
      %675 = vmatprep.subr.mxu0 0.0
      %676 = vmatpush2.msra.mxu0 0.0
      %677 = vmatprep.subr.mxu0 0.0
      %678 = vmatpush2.msra.mxu0 0.0
      %679 = vmatprep.subr.mxu0 0.0
      %680 = vmatpush2.msra.mxu0 0.0
      %681 = vmatprep.subr.mxu0 0.0
      %682 = vmatpush2.msra.mxu0 0.0
      %683 = vmatprep.subr.mxu0 0.0
      %684 = vmatpush2.msra.mxu0 0.0
      %685 = vmatprep.subr.mxu0 0.0
      %686 = vmatpush2.msra.mxu0 0.0
      %687 = vmatprep.subr.mxu0 0.0
      %688 = vmatpush2.msra.mxu0 0.0
      %689 = vmatprep.subr.mxu0 0.0
      %690 = vmatpush2.msra.mxu0 0.0
      %691 = vmatprep.subr.mxu0 0.0
      %692 = vmatpush2.msra.mxu0 0.0
      %693 = vmatprep.subr.mxu0 0.0
      %694 = vmatpush2.msra.mxu0 0.0
      %695 = vmatprep.subr.mxu0 0.0
      %696 = vmatpush2.msra.mxu0 0.0
      %697 = vmatprep.subr.mxu0 0.0
      %698 = vmatpush2.msra.mxu0 0.0
      %699 = vmatprep.mubr.f32.mxu0 0.0
      %700 = vmatmul.mubr.f32.gmra.mxu0 %v633
      %v701 = vpop.f32.mrf.mxu0
      %v702 = vadd.f32 0.0, %v701
      %v703 = vpop.f32.mrf.mxu0
      %704 = vdwg.mxu0
      %v705 = vadd.f32 %v557, %v629
      %v706 = vadd.f32 %v558, %v702
      %707 = vst [vmem:[#allocation4] sm:$0xff] %v705
      %708 = vst [vmem:[#allocation4 + $0x8] sm:$0xff] %v706
      %709 = vst.msk [vmem:[#allocation2] sm:$0xff] %vm542, %v506
      %710 = vst.msk [vmem:[#allocation2 + $0x8] sm:$0xff] %vm542, %v507
      // Predicated region
      $region41: #{transformer_decoder_forward.19} parent=35 // pred_check
        %p711 = pneg %p337
      $region42: #{transformer_decoder_forward.19} parent=35 // pred_check_branch
        %713 = sbr.rel (%p711) target = $region44
      $region43: #{transformer_decoder_forward.19} parent=35 // pred_region
        %v714 = vld [vmem:[#allocation3] sm:$0xff]
        %v715 = vld [vmem:[#allocation3 + $0x8] sm:$0xff]
        %v716 = vrcp.pop %v714
        %v717 = vrcp.pop %v715
        %v718 = vld [vmem:[#allocation4] sm:$0xff]
        %v719 = vld [vmem:[#allocation4 + $0x8] sm:$0xff]
        %721 = vset.pattern.permute.xlu0 0
        %722 = vperm.xlu0 %721, %v716
        %v723 = vpop.permute.xlu0 %722
        %726 = vset.pattern.permute.xlu0 0
        %727 = vperm.xlu0 %726, %v717
        %v728 = vpop.permute.xlu0 %727
        %v730 = vmul.f32 %v718, %v723
        %v731 = vmul.f32 %v719, %v728
        %732 = vst [vmem:[%s336] sm:$0xff] %v730
        %733 = vst [vmem:[%s336 + $0x8] sm:$0xff] %v731
      $region44: #{transformer_decoder_forward.19} parent=35 // pred_fallthru
        _
      %p734 = scmp.lt.s32.totalorder %s20, 1
      %s735 = scalar_select %p734, %s20, 1
      %p736 = scmp.lt.s32.totalorder %s21, 0
      %s737 = scalar_select %p736, %s21, 0
      %s738 = smul.addr %s735, 2
      %s739 = sadd.s32 %s737, %s738
      %s740 = smul.addr %s739, 8
      %s741 = scalar_lea.vmem %s4, %s740
      // Predicated region
      $region45: #{transformer_decoder_forward.19} parent=35 // pred_check
        %p742 = pneg %p168
      $region46: #{transformer_decoder_forward.19} parent=35 // pred_check_branch
        %744 = sbr.rel (%p742) target = $region48
      $region47: #{transformer_decoder_forward.19} parent=35 // pred_region
        _
      $region48: #{transformer_decoder_forward.19} parent=35 // pred_fallthru
        _
    $region36: #{transformer_decoder_forward.19} parent=5 // pred_fallthru
      _
    %p745 = scmp.le.s32.totalorder 2, %s10
    // Predicated region
    $region49: #{transformer_decoder_forward.19} parent=5 // pred_check
      %p746 = pneg %p745
    $region50: #{transformer_decoder_forward.19} parent=5 // pred_check_branch
      %748 = sbr.rel (%p746) target = $region52
    $region51: #{transformer_decoder_forward.19} parent=5 // pred_region
      %s749 = ssub.s32 %s10, 2
      // Predicated region
      $region53: #{transformer_decoder_forward.19} parent=51 // pred_check
        %p750 = pneg %p174
      $region54: #{transformer_decoder_forward.19} parent=51 // pred_check_branch
        %752 = sbr.rel (%p750) target = $region56
      $region55: #{transformer_decoder_forward.19} parent=51 // pred_region
        %p753 = scmp.lt.s32.totalorder %s23, 1
        %s754 = scalar_select %p753, %s23, 1
        %p755 = scmp.lt.s32.totalorder %s24, 0
        %s756 = scalar_select %p755, %s24, 0
        %s757 = smul.addr %s754, 2
        %s758 = sadd.s32 %s756, %s757
        %s759 = smul.addr %s758, 8
        %s760 = scalar_lea.vmem %s4, %s759
      $region56: #{transformer_decoder_forward.19} parent=51 // pred_fallthru
        _
    $region52: #{transformer_decoder_forward.19} parent=5 // pred_fallthru
      _
  $region6: #{transformer_decoder_forward.19} parent=0 // loop_footer
    %s14 = sadd.s32 1, %s10
  $region7: #{transformer_decoder_forward.19} parent=0 // loop_footer_branch
    %9 = sbr.rel target = $region3
  $region8: #{transformer_decoder_forward.19} parent=0 // loop_exit
    _

// kernel: transformer_decoder_forward.21
$region0: #{transformer_decoder_forward.21}
  #allocation0 [shape = 'u32[]', space=smem, size = 0x4, offset = 0x4, fixed_abs, tag = 'smem constant byte address 0x4 - core index']
  #allocation1 [shape = 'u32[144,128]{1,0:T(1,128)}', space=vmem, size = 0x12000, scoped, tag = 'internal scratch']
  %s0 = inlined_call_operand.vmem [shape: f32[2,8,256], index: 0, kind: input, shape index: {}]
  %s1 = inlined_call_operand.vmem [shape: f32[2,256,128], index: 1, kind: input, shape index: {}]
  %s2 = inlined_call_operand.vmem [shape: f32[2,2,8,128], index: 2, kind: output, shape index: {}]
  %s3 = sld [smem:[#allocation0]]
  $region41: #{transformer_decoder_forward.21} parent=0
    _
  %s5 = ssub.s32 1, %s3
  %s6 = scalar_select 0, %s5, %s3
  loop: start=0, step=1, limit=6
  $region2: #{transformer_decoder_forward.21} parent=0 // loop_pre_header
    _
  $region3: #{transformer_decoder_forward.21} parent=0 // loop_header
    %s8 = sphi 0, %s12
    %p9 = scmp.ge.s32.totalorder %s8, 6
    %s15 = sphi 0, %s34
    %s16 = sphi 0, %s30
    %s17 = sphi 0, %s26
    %s18 = sphi 0, %s15
    %s19 = sphi 0, %s16
    %s20 = sphi 0, %s17
    %s21 = sphi 0, %s18
    %s22 = sphi 0, %s19
    %s23 = sphi 0, %s20
    %s39 = sphi 0, %s41
    %s42 = sphi 0, %s39
    %s43 = sphi 0, %s42
    %s59 = sphi 0, %s43
    %s65 = sphi 0, %s67
    %s68 = sphi 0, %s65
    %s69 = sphi 0, %s68
    %s85 = sphi 0, %s69
    %s95 = sphi 0, %s97
    %s98 = sphi 0, %s95
    %s99 = sphi 0, %s98
    %s115 = sphi 0, %s99
  $region4: #{transformer_decoder_forward.21} parent=0 // loop_header_branch
    %11 = sbr.rel (%p9) target = $region8
  $region5: #{transformer_decoder_forward.21} parent=0 // loop_body
    %s13 = ssub.s32 %s8, 1
    %s14 = ssub.s32 %s8, 2
    %s24 = sadd.s32 1, %s17
    %p25 = scmp.ge.s32.totalorder %s24, 1
    %s26 = scalar_select %p25, 0, %s24
    %s27 = sadd.s32 1, %s16
    %s28 = scalar_select %p25, %s27, %s16
    %p29 = scmp.ge.s32.totalorder %s28, 2
    %s30 = scalar_select %p29, 0, %s28
    %s31 = sadd.s32 1, %s15
    %s32 = scalar_select %p29, %s31, %s15
    %p33 = scmp.ge.s32.totalorder %s32, 2
    %s34 = scalar_select %p33, 0, %s32
    %s35 = ssub.s32 %s15, %s34
    %s36 = ssub.s32 %s17, %s26
    %s37 = sor.u32 %s35, %s36
    %p38 = scmp.eq.s32.totalorder %s37, 0
    %s40 = sadd.s32 %s39, 1
    %s41 = scalar_select %p38, %s39, %s40
    %p44 = pneg %p38
    %p45 = scmp.eq.s32.totalorder %s8, 3
    %p46 = por %p44, %p45
    %p47 = scmp.ne.s32.totalorder %s39, %s42
    %p48 = scmp.eq.s32.totalorder %s8, 0
    %p49 = por %p47, %p48
    %p50 = scmp.ne.s32.totalorder %s39, %s42
    %p51 = scmp.eq.s32.totalorder %s13, 3
    %p52 = por %p50, %p51
    %p53 = scmp.ne.s32.totalorder %s42, %s43
    %p54 = scmp.eq.s32.totalorder %s13, 0
    %p55 = por %p53, %p54
    %p56 = scmp.ne.s32.totalorder %s42, %s43
    %p57 = scmp.eq.s32.totalorder %s14, 3
    %p58 = por %p56, %p57
    %p60 = scmp.ne.s32.totalorder %s43, %s59
    %p61 = scmp.eq.s32.totalorder %s14, 0
    %p62 = por %p60, %p61
    %s63 = ssub.s32 %s16, %s30
    %p64 = scmp.eq.s32.totalorder %s63, 0
    %s66 = sadd.s32 %s65, 1
    %s67 = scalar_select %p64, %s65, %s66
    %p70 = pneg %p64
    %p71 = scmp.eq.s32.totalorder %s8, 3
    %p72 = por %p70, %p71
    %p73 = scmp.ne.s32.totalorder %s65, %s68
    %p74 = scmp.eq.s32.totalorder %s8, 0
    %p75 = por %p73, %p74
    %p76 = scmp.ne.s32.totalorder %s65, %s68
    %p77 = scmp.eq.s32.totalorder %s13, 3
    %p78 = por %p76, %p77
    %p79 = scmp.ne.s32.totalorder %s68, %s69
    %p80 = scmp.eq.s32.totalorder %s13, 0
    %p81 = por %p79, %p80
    %p82 = scmp.ne.s32.totalorder %s68, %s69
    %p83 = scmp.eq.s32.totalorder %s14, 3
    %p84 = por %p82, %p83
    %p86 = scmp.ne.s32.totalorder %s69, %s85
    %p87 = scmp.eq.s32.totalorder %s14, 0
    %p88 = por %p86, %p87
    %s89 = ssub.s32 %s15, %s34
    %s90 = ssub.s32 %s16, %s30
    %s91 = sor.u32 %s89, %s90
    %s92 = ssub.s32 %s17, %s26
    %s93 = sor.u32 %s91, %s92
    %p94 = scmp.eq.s32.totalorder %s93, 0
    %s96 = sadd.s32 %s95, 1
    %s97 = scalar_select %p94, %s95, %s96
    %p100 = pneg %p94
    %p101 = scmp.eq.s32.totalorder %s8, 3
    %p102 = por %p100, %p101
    %p103 = scmp.ne.s32.totalorder %s95, %s98
    %p104 = scmp.eq.s32.totalorder %s8, 0
    %p105 = por %p103, %p104
    %p106 = scmp.ne.s32.totalorder %s95, %s98
    %p107 = scmp.eq.s32.totalorder %s13, 3
    %p108 = por %p106, %p107
    %p109 = scmp.ne.s32.totalorder %s98, %s99
    %p110 = scmp.eq.s32.totalorder %s13, 0
    %p111 = por %p109, %p110
    %p112 = scmp.ne.s32.totalorder %s98, %s99
    %p113 = scmp.eq.s32.totalorder %s14, 3
    %p114 = por %p112, %p113
    %p116 = scmp.ne.s32.totalorder %s99, %s115
    %p117 = scmp.eq.s32.totalorder %s14, 0
    %p118 = por %p116, %p117
    %p119 = scmp.le.s32.totalorder 1, %s8
    %p120 = scmp.lt.s32.totalorder %s8, 5
    %p121 = pnand %p119, %p120
    %p122 = pneg %p121
    // Predicated region
    $region9: #{transformer_decoder_forward.21} parent=5 // pred_check
      _
    $region10: #{transformer_decoder_forward.21} parent=5 // pred_check_branch
      %124 = sbr.rel (%p121) target = $region12
    $region11: #{transformer_decoder_forward.21} parent=5 // pred_region
      %s125 = ssub.s32 %s8, 1
    $region12: #{transformer_decoder_forward.21} parent=5 // pred_fallthru
      _
    %p126 = scmp.lt.s32.totalorder %s8, 4
    // Predicated region
    $region13: #{transformer_decoder_forward.21} parent=5 // pred_check
      %p127 = pneg %p126
    $region14: #{transformer_decoder_forward.21} parent=5 // pred_check_branch
      %129 = sbr.rel (%p127) target = $region16
    $region15: #{transformer_decoder_forward.21} parent=5 // pred_region
      // Predicated region
      $region17: #{transformer_decoder_forward.21} parent=15 // pred_check
        %p130 = pneg %p49
      $region18: #{transformer_decoder_forward.21} parent=15 // pred_check_branch
        %132 = sbr.rel (%p130) target = $region20
      $region19: #{transformer_decoder_forward.21} parent=15 // pred_region
        %p133 = scmp.lt.s32.totalorder %s15, 1
        %s134 = scalar_select %p133, %s15, 1
        %p135 = scmp.lt.s32.totalorder %s17, 0
        %s136 = scalar_select %p135, %s17, 0
        %s137 = smul.addr %s136, 2
        %s138 = smul.addr %s134, 2
        %s139 = sadd.s32 %s137, %s138
        %s140 = smul.addr %s139, 8
        %s141 = scalar_lea.vmem %s0, %s140
      $region20: #{transformer_decoder_forward.21} parent=15 // pred_fallthru
        _
      // Predicated region
      $region21: #{transformer_decoder_forward.21} parent=15 // pred_check
        %p142 = pneg %p75
      $region22: #{transformer_decoder_forward.21} parent=15 // pred_check_branch
        %144 = sbr.rel (%p142) target = $region24
      $region23: #{transformer_decoder_forward.21} parent=15 // pred_region
        %p145 = scmp.lt.s32.totalorder %s16, 1
        %s146 = scalar_select %p145, %s16, 1
        %s147 = smul.addr %s146, 32
        %s148 = smul.addr %s147, 8
        %s149 = scalar_lea.vmem %s1, %s148
      $region24: #{transformer_decoder_forward.21} parent=15 // pred_fallthru
        _
    $region16: #{transformer_decoder_forward.21} parent=5 // pred_fallthru
      _
    %p150 = scmp.le.s32.totalorder 1, %s8
    %p151 = scmp.lt.s32.totalorder %s8, 5
    %p152 = pnand %p150, %p151
    %p153 = pneg %p152
    // Predicated region
    $region25: #{transformer_decoder_forward.21} parent=5 // pred_check
      _
    $region26: #{transformer_decoder_forward.21} parent=5 // pred_check_branch
      %155 = sbr.rel (%p152) target = $region28
    $region27: #{transformer_decoder_forward.21} parent=5 // pred_region
      %s156 = ssub.s32 %s8, 1
      %p157 = scmp.lt.s32.totalorder %s18, 1
      %s158 = scalar_select %p157, %s18, 1
      %p159 = scmp.lt.s32.totalorder %s20, 0
      %s160 = scalar_select %p159, %s20, 0
      %s161 = smul.addr %s160, 2
      %s162 = smul.addr %s158, 2
      %s163 = sadd.s32 %s161, %s162
      %s164 = smul.addr %s163, 8
      %s165 = scalar_lea.vmem %s0, %s164
      %p166 = pneg %p55
      %p167 = pneg %p52
      %p168 = scmp.lt.s32.totalorder %s19, 1
      %s169 = scalar_select %p168, %s19, 1
      %s170 = smul.addr %s169, 32
      %s171 = smul.addr %s170, 8
      %s172 = scalar_lea.vmem %s1, %s171
      %p173 = pneg %p81
      %p174 = pneg %p78
      %p175 = pneg %p111
      %p176 = pneg %p108
      %p177 = scmp.lt.s32.totalorder %s18, 1
      %s178 = scalar_select %p177, %s18, 1
      %p179 = scmp.lt.s32.totalorder %s19, 1
      %s180 = scalar_select %p179, %s19, 1
      %p181 = scmp.lt.s32.totalorder %s20, 0
      %s182 = scalar_select %p181, %s20, 0
      %s183 = sadd.s32 %s182, %s180
      %s184 = smul.addr %s178, 2
      %s185 = sadd.s32 %s183, %s184
      %s186 = smul.addr %s185, 8
      %s187 = scalar_lea.vmem %s2, %s186
      %p188 = scmp.lt.s32.totalorder %s18, 1
      %s189 = scalar_select %p188, %s18, 1
      %p190 = scmp.lt.s32.totalorder %s20, 0
      %s191 = scalar_select %p190, %s20, 0
      %s192 = smul.addr %s191, 2
      %s193 = smul.addr %s189, 2
      %s194 = sadd.s32 %s192, %s193
      %s195 = smul.addr %s194, 8
      %s196 = scalar_lea.vmem %s0, %s195
      %p197 = scmp.lt.s32.totalorder %s19, 1
      %s198 = scalar_select %p197, %s19, 1
      %s199 = smul.addr %s198, 32
      %s200 = smul.addr %s199, 8
      %s201 = scalar_lea.vmem %s1, %s200
      %p202 = scmp.lt.s32.totalorder %s18, 1
      %s203 = scalar_select %p202, %s18, 1
      %p204 = scmp.lt.s32.totalorder %s19, 1
      %s205 = scalar_select %p204, %s19, 1
      %p206 = scmp.lt.s32.totalorder %s20, 0
      %s207 = scalar_select %p206, %s20, 0
      %s208 = sadd.s32 %s207, %s205
      %s209 = smul.addr %s203, 2
      %s210 = sadd.s32 %s208, %s209
      %s211 = smul.addr %s210, 8
      %s212 = scalar_lea.vmem %s2, %s211
      %v213 = vld [vmem:[%s196] sm:$0xff]
      %v214 = vld [vmem:[%s196 + $0x8] sm:$0xff]
      %v215 = vld [vmem:[%s201] sm:$0xff]
      %v216 = vld [vmem:[%s201 + $0x8] sm:$0xff]
      %v217 = vld [vmem:[%s201 + $0x10] sm:$0xff]
      %v218 = vld [vmem:[%s201 + $0x18] sm:$0xff]
      %v219 = vld [vmem:[%s201 + $0x20] sm:$0xff]
      %v220 = vld [vmem:[%s201 + $0x28] sm:$0xff]
      %v221 = vld [vmem:[%s201 + $0x30] sm:$0xff]
      %v222 = vld [vmem:[%s201 + $0x38] sm:$0xff]
      %v223 = vld [vmem:[%s201 + $0x40] sm:$0xff]
      %v224 = vld [vmem:[%s201 + $0x48] sm:$0xff]
      %v225 = vld [vmem:[%s201 + $0x50] sm:$0xff]
      %v226 = vld [vmem:[%s201 + $0x58] sm:$0xff]
      %v227 = vld [vmem:[%s201 + $0x60] sm:$0xff]
      %v228 = vld [vmem:[%s201 + $0x68] sm:$0xff]
      %v229 = vld [vmem:[%s201 + $0x70] sm:$0xff]
      %v230 = vld [vmem:[%s201 + $0x78] sm:$0xff]
      %v231 = vld [vmem:[%s201 + $0x80] sm:$0xff]
      %v232 = vld [vmem:[%s201 + $0x88] sm:$0xff]
      %v233 = vld [vmem:[%s201 + $0x90] sm:$0xff]
      %v234 = vld [vmem:[%s201 + $0x98] sm:$0xff]
      %v235 = vld [vmem:[%s201 + $0xa0] sm:$0xff]
      %v236 = vld [vmem:[%s201 + $0xa8] sm:$0xff]
      %v237 = vld [vmem:[%s201 + $0xb0] sm:$0xff]
      %v238 = vld [vmem:[%s201 + $0xb8] sm:$0xff]
      %v239 = vld [vmem:[%s201 + $0xc0] sm:$0xff]
      %v240 = vld [vmem:[%s201 + $0xc8] sm:$0xff]
      %v241 = vld [vmem:[%s201 + $0xd0] sm:$0xff]
      %v242 = vld [vmem:[%s201 + $0xd8] sm:$0xff]
      %v243 = vld [vmem:[%s201 + $0xe0] sm:$0xff]
      %v244 = vld [vmem:[%s201 + $0xe8] sm:$0xff]
      %v245 = vld [vmem:[%s201 + $0xf0] sm:$0xff]
      %v246 = vld [vmem:[%s201 + $0xf8] sm:$0xff]
      %247 = vmatprep.subr.mxu0 0.0
      %248 = vmatpush1.msra.mxu0 %v230
      %249 = vmatprep.subr.mxu0 0.0
      %250 = vmatpush1.msra.mxu0 %v229
      %251 = vmatprep.subr.mxu0 0.0
      %252 = vmatpush1.msra.mxu0 %v228
      %253 = vmatprep.subr.mxu0 0.0
      %254 = vmatpush1.msra.mxu0 %v227
      %255 = vmatprep.subr.mxu0 0.0
      %256 = vmatpush1.msra.mxu0 %v226
      %257 = vmatprep.subr.mxu0 0.0
      %258 = vmatpush1.msra.mxu0 %v225
      %259 = vmatprep.subr.mxu0 0.0
      %260 = vmatpush1.msra.mxu0 %v224
      %261 = vmatprep.subr.mxu0 0.0
      %262 = vmatpush1.msra.mxu0 %v223
      %263 = vmatprep.subr.mxu0 0.0
      %264 = vmatpush1.msra.mxu0 %v222
      %265 = vmatprep.subr.mxu0 0.0
      %266 = vmatpush1.msra.mxu0 %v221
      %267 = vmatprep.subr.mxu0 0.0
      %268 = vmatpush1.msra.mxu0 %v220
      %269 = vmatprep.subr.mxu0 0.0
      %270 = vmatpush1.msra.mxu0 %v219
      %271 = vmatprep.subr.mxu0 0.0
      %272 = vmatpush1.msra.mxu0 %v218
      %273 = vmatprep.subr.mxu0 0.0
      %274 = vmatpush1.msra.mxu0 %v217
      %275 = vmatprep.subr.mxu0 0.0
      %276 = vmatpush1.msra.mxu0 %v216
      %277 = vmatprep.subr.mxu0 0.0
      %278 = vmatpush1.msra.mxu0 %v215
      %279 = vmatprep.subr.mxu0 0.0
      %280 = vmatpush2.msra.mxu0 %v246
      %281 = vmatprep.subr.mxu0 0.0
      %282 = vmatpush2.msra.mxu0 %v245
      %283 = vmatprep.subr.mxu0 0.0
      %284 = vmatpush2.msra.mxu0 %v244
      %285 = vmatprep.subr.mxu0 0.0
      %286 = vmatpush2.msra.mxu0 %v243
      %287 = vmatprep.subr.mxu0 0.0
      %288 = vmatpush2.msra.mxu0 %v242
      %289 = vmatprep.subr.mxu0 0.0
      %290 = vmatpush2.msra.mxu0 %v241
      %291 = vmatprep.subr.mxu0 0.0
      %292 = vmatpush2.msra.mxu0 %v240
      %293 = vmatprep.subr.mxu0 0.0
      %294 = vmatpush2.msra.mxu0 %v239
      %295 = vmatprep.subr.mxu0 0.0
      %296 = vmatpush2.msra.mxu0 %v238
      %297 = vmatprep.subr.mxu0 0.0
      %298 = vmatpush2.msra.mxu0 %v237
      %299 = vmatprep.subr.mxu0 0.0
      %300 = vmatpush2.msra.mxu0 %v236
      %301 = vmatprep.subr.mxu0 0.0
      %302 = vmatpush2.msra.mxu0 %v235
      %303 = vmatprep.subr.mxu0 0.0
      %304 = vmatpush2.msra.mxu0 %v234
      %305 = vmatprep.subr.mxu0 0.0
      %306 = vmatpush2.msra.mxu0 %v233
      %307 = vmatprep.subr.mxu0 0.0
      %308 = vmatpush2.msra.mxu0 %v232
      %309 = vmatprep.subr.mxu0 0.0
      %310 = vmatpush2.msra.mxu0 %v231
      %311 = vmatprep.mubr.f32.mxu0 %v214
      %312 = vmatmul.mubr.f32.gmra.mxu0 %v213
      %v313 = vpop.f32.mrf.mxu0
      %v314 = vadd.f32 0.0, %v313
      %v315 = vpop.f32.mrf.mxu0
      %316 = vdwg.mxu0
      %317 = vst [vmem:[%s212] sm:$0xff] %v314
      %p318 = scmp.lt.s32.totalorder %s18, 1
      %s319 = scalar_select %p318, %s18, 1
      %p320 = scmp.lt.s32.totalorder %s19, 1
      %s321 = scalar_select %p320, %s19, 1
      %p322 = scmp.lt.s32.totalorder %s20, 0
      %s323 = scalar_select %p322, %s20, 0
      %s324 = sadd.s32 %s323, %s321
      %s325 = smul.addr %s319, 2
      %s326 = sadd.s32 %s324, %s325
      %s327 = smul.addr %s326, 8
      %s328 = scalar_lea.vmem %s2, %s327
      // Predicated region
      $region29: #{transformer_decoder_forward.21} parent=27 // pred_check
        %p329 = pneg %p108
      $region30: #{transformer_decoder_forward.21} parent=27 // pred_check_branch
        %331 = sbr.rel (%p329) target = $region32
      $region31: #{transformer_decoder_forward.21} parent=27 // pred_region
        _
      $region32: #{transformer_decoder_forward.21} parent=27 // pred_fallthru
        _
    $region28: #{transformer_decoder_forward.21} parent=5 // pred_fallthru
      _
    %p332 = scmp.le.s32.totalorder 2, %s8
    // Predicated region
    $region33: #{transformer_decoder_forward.21} parent=5 // pred_check
      %p333 = pneg %p332
    $region34: #{transformer_decoder_forward.21} parent=5 // pred_check_branch
      %335 = sbr.rel (%p333) target = $region36
    $region35: #{transformer_decoder_forward.21} parent=5 // pred_region
      %s336 = ssub.s32 %s8, 2
      // Predicated region
      $region37: #{transformer_decoder_forward.21} parent=35 // pred_check
        %p337 = pneg %p114
      $region38: #{transformer_decoder_forward.21} parent=35 // pred_check_branch
        %339 = sbr.rel (%p337) target = $region40
      $region39: #{transformer_decoder_forward.21} parent=35 // pred_region
        %p340 = scmp.lt.s32.totalorder %s21, 1
        %s341 = scalar_select %p340, %s21, 1
        %p342 = scmp.lt.s32.totalorder %s22, 1
        %s343 = scalar_select %p342, %s22, 1
        %p344 = scmp.lt.s32.totalorder %s23, 0
        %s345 = scalar_select %p344, %s23, 0
        %s346 = sadd.s32 %s345, %s343
        %s347 = smul.addr %s341, 2
        %s348 = sadd.s32 %s346, %s347
        %s349 = smul.addr %s348, 8
        %s350 = scalar_lea.vmem %s2, %s349
      $region40: #{transformer_decoder_forward.21} parent=35 // pred_fallthru
        _
    $region36: #{transformer_decoder_forward.21} parent=5 // pred_fallthru
      _
  $region6: #{transformer_decoder_forward.21} parent=0 // loop_footer
    %s12 = sadd.s32 1, %s8
  $region7: #{transformer_decoder_forward.21} parent=0 // loop_footer_branch
    %7 = sbr.rel target = $region3
  $region8: #{transformer_decoder_forward.21} parent=0 // loop_exit
    _

// kernel: transformer_decoder_forward.22
$region0: #{transformer_decoder_forward.22}
  #allocation0 [shape = 'u32[]', space=smem, size = 0x4, offset = 0x4, fixed_abs, tag = 'smem constant byte address 0x4 - core index']
  #allocation1 [shape = 'u32[144,128]{1,0:T(1,128)}', space=vmem, size = 0x12000, scoped, tag = 'internal scratch']
  %s0 = inlined_call_operand.vmem [shape: f32[2,16,256], index: 0, kind: input, shape index: {}]
  %s1 = inlined_call_operand.vmem [shape: f32[2,256,128], index: 1, kind: input, shape index: {}]
  %s2 = inlined_call_operand.vmem [shape: f32[2,256,128], index: 2, kind: input, shape index: {}]
  %s3 = inlined_call_operand.vmem [shape: f32[2,2,16,128], index: 3, kind: output, shape index: {0}]
  %s4 = inlined_call_operand.vmem [shape: f32[2,2,16,128], index: 4, kind: output, shape index: {1}]
  %5 = xla_tuple %s3, %s4
  %s6 = sld [smem:[#allocation0]]
  $region53: #{transformer_decoder_forward.22} parent=0
    _
  %s8 = ssub.s32 1, %s6
  %s9 = scalar_select 0, %s8, %s6
  loop: start=0, step=1, limit=6
  $region2: #{transformer_decoder_forward.22} parent=0 // loop_pre_header
    _
  $region3: #{transformer_decoder_forward.22} parent=0 // loop_header
    %s11 = sphi 0, %s15
    %p12 = scmp.ge.s32.totalorder %s11, 6
    %s18 = sphi 0, %s37
    %s19 = sphi 0, %s33
    %s20 = sphi 0, %s29
    %s21 = sphi 0, %s18
    %s22 = sphi 0, %s19
    %s23 = sphi 0, %s20
    %s24 = sphi 0, %s21
    %s25 = sphi 0, %s22
    %s26 = sphi 0, %s23
    %s42 = sphi 0, %s44
    %s45 = sphi 0, %s42
    %s46 = sphi 0, %s45
    %s62 = sphi 0, %s46
    %s68 = sphi 0, %s70
    %s71 = sphi 0, %s68
    %s72 = sphi 0, %s71
    %s88 = sphi 0, %s72
    %s94 = sphi 0, %s96
    %s97 = sphi 0, %s94
    %s98 = sphi 0, %s97
    %s114 = sphi 0, %s98
    %s124 = sphi 0, %s126
    %s127 = sphi 0, %s124
    %s128 = sphi 0, %s127
    %s144 = sphi 0, %s128
    %s154 = sphi 0, %s156
    %s157 = sphi 0, %s154
    %s158 = sphi 0, %s157
    %s174 = sphi 0, %s158
  $region4: #{transformer_decoder_forward.22} parent=0 // loop_header_branch
    %14 = sbr.rel (%p12) target = $region8
  $region5: #{transformer_decoder_forward.22} parent=0 // loop_body
    %s16 = ssub.s32 %s11, 1
    %s17 = ssub.s32 %s11, 2
    %s27 = sadd.s32 1, %s20
    %p28 = scmp.ge.s32.totalorder %s27, 1
    %s29 = scalar_select %p28, 0, %s27
    %s30 = sadd.s32 1, %s19
    %s31 = scalar_select %p28, %s30, %s19
    %p32 = scmp.ge.s32.totalorder %s31, 2
    %s33 = scalar_select %p32, 0, %s31
    %s34 = sadd.s32 1, %s18
    %s35 = scalar_select %p32, %s34, %s18
    %p36 = scmp.ge.s32.totalorder %s35, 2
    %s37 = scalar_select %p36, 0, %s35
    %s38 = ssub.s32 %s18, %s37
    %s39 = ssub.s32 %s20, %s29
    %s40 = sor.u32 %s38, %s39
    %p41 = scmp.eq.s32.totalorder %s40, 0
    %s43 = sadd.s32 %s42, 1
    %s44 = scalar_select %p41, %s42, %s43
    %p47 = pneg %p41
    %p48 = scmp.eq.s32.totalorder %s11, 3
    %p49 = por %p47, %p48
    %p50 = scmp.ne.s32.totalorder %s42, %s45
    %p51 = scmp.eq.s32.totalorder %s11, 0
    %p52 = por %p50, %p51
    %p53 = scmp.ne.s32.totalorder %s42, %s45
    %p54 = scmp.eq.s32.totalorder %s16, 3
    %p55 = por %p53, %p54
    %p56 = scmp.ne.s32.totalorder %s45, %s46
    %p57 = scmp.eq.s32.totalorder %s16, 0
    %p58 = por %p56, %p57
    %p59 = scmp.ne.s32.totalorder %s45, %s46
    %p60 = scmp.eq.s32.totalorder %s17, 3
    %p61 = por %p59, %p60
    %p63 = scmp.ne.s32.totalorder %s46, %s62
    %p64 = scmp.eq.s32.totalorder %s17, 0
    %p65 = por %p63, %p64
    %s66 = ssub.s32 %s19, %s33
    %p67 = scmp.eq.s32.totalorder %s66, 0
    %s69 = sadd.s32 %s68, 1
    %s70 = scalar_select %p67, %s68, %s69
    %p73 = pneg %p67
    %p74 = scmp.eq.s32.totalorder %s11, 3
    %p75 = por %p73, %p74
    %p76 = scmp.ne.s32.totalorder %s68, %s71
    %p77 = scmp.eq.s32.totalorder %s11, 0
    %p78 = por %p76, %p77
    %p79 = scmp.ne.s32.totalorder %s68, %s71
    %p80 = scmp.eq.s32.totalorder %s16, 3
    %p81 = por %p79, %p80
    %p82 = scmp.ne.s32.totalorder %s71, %s72
    %p83 = scmp.eq.s32.totalorder %s16, 0
    %p84 = por %p82, %p83
    %p85 = scmp.ne.s32.totalorder %s71, %s72
    %p86 = scmp.eq.s32.totalorder %s17, 3
    %p87 = por %p85, %p86
    %p89 = scmp.ne.s32.totalorder %s72, %s88
    %p90 = scmp.eq.s32.totalorder %s17, 0
    %p91 = por %p89, %p90
    %s92 = ssub.s32 %s19, %s33
    %p93 = scmp.eq.s32.totalorder %s92, 0
    %s95 = sadd.s32 %s94, 1
    %s96 = scalar_select %p93, %s94, %s95
    %p99 = pneg %p93
    %p100 = scmp.eq.s32.totalorder %s11, 3
    %p101 = por %p99, %p100
    %p102 = scmp.ne.s32.totalorder %s94, %s97
    %p103 = scmp.eq.s32.totalorder %s11, 0
    %p104 = por %p102, %p103
    %p105 = scmp.ne.s32.totalorder %s94, %s97
    %p106 = scmp.eq.s32.totalorder %s16, 3
    %p107 = por %p105, %p106
    %p108 = scmp.ne.s32.totalorder %s97, %s98
    %p109 = scmp.eq.s32.totalorder %s16, 0
    %p110 = por %p108, %p109
    %p111 = scmp.ne.s32.totalorder %s97, %s98
    %p112 = scmp.eq.s32.totalorder %s17, 3
    %p113 = por %p111, %p112
    %p115 = scmp.ne.s32.totalorder %s98, %s114
    %p116 = scmp.eq.s32.totalorder %s17, 0
    %p117 = por %p115, %p116
    %s118 = ssub.s32 %s18, %s37
    %s119 = ssub.s32 %s19, %s33
    %s120 = sor.u32 %s118, %s119
    %s121 = ssub.s32 %s20, %s29
    %s122 = sor.u32 %s120, %s121
    %p123 = scmp.eq.s32.totalorder %s122, 0
    %s125 = sadd.s32 %s124, 1
    %s126 = scalar_select %p123, %s124, %s125
    %p129 = pneg %p123
    %p130 = scmp.eq.s32.totalorder %s11, 3
    %p131 = por %p129, %p130
    %p132 = scmp.ne.s32.totalorder %s124, %s127
    %p133 = scmp.eq.s32.totalorder %s11, 0
    %p134 = por %p132, %p133
    %p135 = scmp.ne.s32.totalorder %s124, %s127
    %p136 = scmp.eq.s32.totalorder %s16, 3
    %p137 = por %p135, %p136
    %p138 = scmp.ne.s32.totalorder %s127, %s128
    %p139 = scmp.eq.s32.totalorder %s16, 0
    %p140 = por %p138, %p139
    %p141 = scmp.ne.s32.totalorder %s127, %s128
    %p142 = scmp.eq.s32.totalorder %s17, 3
    %p143 = por %p141, %p142
    %p145 = scmp.ne.s32.totalorder %s128, %s144
    %p146 = scmp.eq.s32.totalorder %s17, 0
    %p147 = por %p145, %p146
    %s148 = ssub.s32 %s18, %s37
    %s149 = ssub.s32 %s19, %s33
    %s150 = sor.u32 %s148, %s149
    %s151 = ssub.s32 %s20, %s29
    %s152 = sor.u32 %s150, %s151
    %p153 = scmp.eq.s32.totalorder %s152, 0
    %s155 = sadd.s32 %s154, 1
    %s156 = scalar_select %p153, %s154, %s155
    %p159 = pneg %p153
    %p160 = scmp.eq.s32.totalorder %s11, 3
    %p161 = por %p159, %p160
    %p162 = scmp.ne.s32.totalorder %s154, %s157
    %p163 = scmp.eq.s32.totalorder %s11, 0
    %p164 = por %p162, %p163
    %p165 = scmp.ne.s32.totalorder %s154, %s157
    %p166 = scmp.eq.s32.totalorder %s16, 3
    %p167 = por %p165, %p166
    %p168 = scmp.ne.s32.totalorder %s157, %s158
    %p169 = scmp.eq.s32.totalorder %s16, 0
    %p170 = por %p168, %p169
    %p171 = scmp.ne.s32.totalorder %s157, %s158
    %p172 = scmp.eq.s32.totalorder %s17, 3
    %p173 = por %p171, %p172
    %p175 = scmp.ne.s32.totalorder %s158, %s174
    %p176 = scmp.eq.s32.totalorder %s17, 0
    %p177 = por %p175, %p176
    %p178 = scmp.le.s32.totalorder 1, %s11
    %p179 = scmp.lt.s32.totalorder %s11, 5
    %p180 = pnand %p178, %p179
    %p181 = pneg %p180
    // Predicated region
    $region9: #{transformer_decoder_forward.22} parent=5 // pred_check
      _
    $region10: #{transformer_decoder_forward.22} parent=5 // pred_check_branch
      %183 = sbr.rel (%p180) target = $region12
    $region11: #{transformer_decoder_forward.22} parent=5 // pred_region
      %s184 = ssub.s32 %s11, 1
    $region12: #{transformer_decoder_forward.22} parent=5 // pred_fallthru
      _
    %p185 = scmp.lt.s32.totalorder %s11, 4
    // Predicated region
    $region13: #{transformer_decoder_forward.22} parent=5 // pred_check
      %p186 = pneg %p185
    $region14: #{transformer_decoder_forward.22} parent=5 // pred_check_branch
      %188 = sbr.rel (%p186) target = $region16
    $region15: #{transformer_decoder_forward.22} parent=5 // pred_region
      // Predicated region
      $region17: #{transformer_decoder_forward.22} parent=15 // pred_check
        %p189 = pneg %p52
      $region18: #{transformer_decoder_forward.22} parent=15 // pred_check_branch
        %191 = sbr.rel (%p189) target = $region20
      $region19: #{transformer_decoder_forward.22} parent=15 // pred_region
        %s192 = smul.u32 2, %s20
        %p193 = scmp.lt.s32.totalorder %s18, 1
        %s194 = scalar_select %p193, %s18, 1
        %p195 = scmp.lt.s32.totalorder %s192, 1
        %s196 = scalar_select %p195, %s192, 1
        %s197 = smul.addr %s196, 2
        %s198 = smul.addr %s194, 4
        %s199 = sadd.s32 %s197, %s198
        %s200 = smul.addr %s199, 8
        %s201 = scalar_lea.vmem %s0, %s200
        %s202 = smul.u32 2, %s20
      $region20: #{transformer_decoder_forward.22} parent=15 // pred_fallthru
        _
      // Predicated region
      $region21: #{transformer_decoder_forward.22} parent=15 // pred_check
        %p203 = pneg %p78
      $region22: #{transformer_decoder_forward.22} parent=15 // pred_check_branch
        %205 = sbr.rel (%p203) target = $region24
      $region23: #{transformer_decoder_forward.22} parent=15 // pred_region
        %p206 = scmp.lt.s32.totalorder %s19, 1
        %s207 = scalar_select %p206, %s19, 1
        %s208 = smul.addr %s207, 32
        %s209 = smul.addr %s208, 8
        %s210 = scalar_lea.vmem %s1, %s209
      $region24: #{transformer_decoder_forward.22} parent=15 // pred_fallthru
        _
      // Predicated region
      $region25: #{transformer_decoder_forward.22} parent=15 // pred_check
        %p211 = pneg %p104
      $region26: #{transformer_decoder_forward.22} parent=15 // pred_check_branch
        %213 = sbr.rel (%p211) target = $region28
      $region27: #{transformer_decoder_forward.22} parent=15 // pred_region
        %p214 = scmp.lt.s32.totalorder %s19, 1
        %s215 = scalar_select %p214, %s19, 1
        %s216 = smul.addr %s215, 32
        %s217 = smul.addr %s216, 8
        %s218 = scalar_lea.vmem %s2, %s217
      $region28: #{transformer_decoder_forward.22} parent=15 // pred_fallthru
        _
    $region16: #{transformer_decoder_forward.22} parent=5 // pred_fallthru
      _
    %p219 = scmp.le.s32.totalorder 1, %s11
    %p220 = scmp.lt.s32.totalorder %s11, 5
    %p221 = pnand %p219, %p220
    %p222 = pneg %p221
    // Predicated region
    $region29: #{transformer_decoder_forward.22} parent=5 // pred_check
      _
    $region30: #{transformer_decoder_forward.22} parent=5 // pred_check_branch
      %224 = sbr.rel (%p221) target = $region32
    $region31: #{transformer_decoder_forward.22} parent=5 // pred_region
      %s225 = ssub.s32 %s11, 1
      %s226 = smul.u32 2, %s23
      %p227 = scmp.lt.s32.totalorder %s21, 1
      %s228 = scalar_select %p227, %s21, 1
      %p229 = scmp.lt.s32.totalorder %s226, 1
      %s230 = scalar_select %p229, %s226, 1
      %s231 = smul.addr %s230, 2
      %s232 = smul.addr %s228, 4
      %s233 = sadd.s32 %s231, %s232
      %s234 = smul.addr %s233, 8
      %s235 = scalar_lea.vmem %s0, %s234
      %p236 = pneg %p58
      %p237 = pneg %p55
      %p238 = scmp.lt.s32.totalorder %s22, 1
      %s239 = scalar_select %p238, %s22, 1
      %s240 = smul.addr %s239, 32
      %s241 = smul.addr %s240, 8
      %s242 = scalar_lea.vmem %s1, %s241
      %p243 = pneg %p84
      %p244 = pneg %p81
      %p245 = scmp.lt.s32.totalorder %s22, 1
      %s246 = scalar_select %p245, %s22, 1
      %s247 = smul.addr %s246, 32
      %s248 = smul.addr %s247, 8
      %s249 = scalar_lea.vmem %s2, %s248
      %p250 = pneg %p110
      %p251 = pneg %p107
      %p252 = pneg %p140
      %p253 = pneg %p137
      %s254 = smul.u32 2, %s23
      %p255 = scmp.lt.s32.totalorder %s21, 1
      %s256 = scalar_select %p255, %s21, 1
      %p257 = scmp.lt.s32.totalorder %s22, 1
      %s258 = scalar_select %p257, %s22, 1
      %p259 = scmp.lt.s32.totalorder %s254, 1
      %s260 = scalar_select %p259, %s254, 1
      %s261 = smul.addr %s258, 2
      %s262 = sadd.s32 %s260, %s261
      %s263 = smul.addr %s256, 4
      %s264 = sadd.s32 %s262, %s263
      %s265 = smul.addr %s264, 8
      %s266 = scalar_lea.vmem %s3, %s265
      %p267 = pneg %p170
      %p268 = pneg %p167
      %s269 = smul.u32 2, %s23
      %p270 = scmp.lt.s32.totalorder %s21, 1
      %s271 = scalar_select %p270, %s21, 1
      %p272 = scmp.lt.s32.totalorder %s22, 1
      %s273 = scalar_select %p272, %s22, 1
      %p274 = scmp.lt.s32.totalorder %s269, 1
      %s275 = scalar_select %p274, %s269, 1
      %s276 = smul.addr %s273, 2
      %s277 = sadd.s32 %s275, %s276
      %s278 = smul.addr %s271, 4
      %s279 = sadd.s32 %s277, %s278
      %s280 = smul.addr %s279, 8
      %s281 = scalar_lea.vmem %s4, %s280
      %s282 = smul.u32 2, %s23
      %p283 = scmp.lt.s32.totalorder %s21, 1
      %s284 = scalar_select %p283, %s21, 1
      %p285 = scmp.lt.s32.totalorder %s282, 1
      %s286 = scalar_select %p285, %s282, 1
      %s287 = smul.addr %s286, 2
      %s288 = smul.addr %s284, 4
      %s289 = sadd.s32 %s287, %s288
      %s290 = smul.addr %s289, 8
      %s291 = scalar_lea.vmem %s0, %s290
      %s292 = smul.u32 2, %s23
      %p293 = scmp.lt.s32.totalorder %s22, 1
      %s294 = scalar_select %p293, %s22, 1
      %s295 = smul.addr %s294, 32
      %s296 = smul.addr %s295, 8
      %s297 = scalar_lea.vmem %s1, %s296
      %p298 = scmp.lt.s32.totalorder %s22, 1
      %s299 = scalar_select %p298, %s22, 1
      %s300 = smul.addr %s299, 32
      %s301 = smul.addr %s300, 8
      %s302 = scalar_lea.vmem %s2, %s301
      %s303 = smul.u32 2, %s23
      %p304 = scmp.lt.s32.totalorder %s21, 1
      %s305 = scalar_select %p304, %s21, 1
      %p306 = scmp.lt.s32.totalorder %s22, 1
      %s307 = scalar_select %p306, %s22, 1
      %p308 = scmp.lt.s32.totalorder %s303, 1
      %s309 = scalar_select %p308, %s303, 1
      %s310 = smul.addr %s307, 2
      %s311 = sadd.s32 %s309, %s310
      %s312 = smul.addr %s305, 4
      %s313 = sadd.s32 %s311, %s312
      %s314 = smul.addr %s313, 8
      %s315 = scalar_lea.vmem %s3, %s314
      %s316 = smul.u32 2, %s23
      %s317 = smul.u32 2, %s23
      %p318 = scmp.lt.s32.totalorder %s21, 1
      %s319 = scalar_select %p318, %s21, 1
      %p320 = scmp.lt.s32.totalorder %s22, 1
      %s321 = scalar_select %p320, %s22, 1
      %p322 = scmp.lt.s32.totalorder %s317, 1
      %s323 = scalar_select %p322, %s317, 1
      %s324 = smul.addr %s321, 2
      %s325 = sadd.s32 %s323, %s324
      %s326 = smul.addr %s319, 4
      %s327 = sadd.s32 %s325, %s326
      %s328 = smul.addr %s327, 8
      %s329 = scalar_lea.vmem %s4, %s328
      %s330 = smul.u32 2, %s23
      %v331 = vld [vmem:[%s291] sm:$0xff]
      %v332 = vld [vmem:[%s291 + $0x8] sm:$0xff]
      %v333 = vld [vmem:[%s291 + $0x10] sm:$0xff]
      %v334 = vld [vmem:[%s291 + $0x18] sm:$0xff]
      %v335 = vld [vmem:[%s297] sm:$0xff]
      %v336 = vld [vmem:[%s297 + $0x8] sm:$0xff]
      %v337 = vld [vmem:[%s297 + $0x10] sm:$0xff]
      %v338 = vld [vmem:[%s297 + $0x18] sm:$0xff]
      %v339 = vld [vmem:[%s297 + $0x20] sm:$0xff]
      %v340 = vld [vmem:[%s297 + $0x28] sm:$0xff]
      %v341 = vld [vmem:[%s297 + $0x30] sm:$0xff]
      %v342 = vld [vmem:[%s297 + $0x38] sm:$0xff]
      %v343 = vld [vmem:[%s297 + $0x40] sm:$0xff]
      %v344 = vld [vmem:[%s297 + $0x48] sm:$0xff]
      %v345 = vld [vmem:[%s297 + $0x50] sm:$0xff]
      %v346 = vld [vmem:[%s297 + $0x58] sm:$0xff]
      %v347 = vld [vmem:[%s297 + $0x60] sm:$0xff]
      %v348 = vld [vmem:[%s297 + $0x68] sm:$0xff]
      %v349 = vld [vmem:[%s297 + $0x70] sm:$0xff]
      %v350 = vld [vmem:[%s297 + $0x78] sm:$0xff]
      %v351 = vld [vmem:[%s297 + $0x80] sm:$0xff]
      %v352 = vld [vmem:[%s297 + $0x88] sm:$0xff]
      %v353 = vld [vmem:[%s297 + $0x90] sm:$0xff]
      %v354 = vld [vmem:[%s297 + $0x98] sm:$0xff]
      %v355 = vld [vmem:[%s297 + $0xa0] sm:$0xff]
      %v356 = vld [vmem:[%s297 + $0xa8] sm:$0xff]
      %v357 = vld [vmem:[%s297 + $0xb0] sm:$0xff]
      %v358 = vld [vmem:[%s297 + $0xb8] sm:$0xff]
      %v359 = vld [vmem:[%s297 + $0xc0] sm:$0xff]
      %v360 = vld [vmem:[%s297 + $0xc8] sm:$0xff]
      %v361 = vld [vmem:[%s297 + $0xd0] sm:$0xff]
      %v362 = vld [vmem:[%s297 + $0xd8] sm:$0xff]
      %v363 = vld [vmem:[%s297 + $0xe0] sm:$0xff]
      %v364 = vld [vmem:[%s297 + $0xe8] sm:$0xff]
      %v365 = vld [vmem:[%s297 + $0xf0] sm:$0xff]
      %v366 = vld [vmem:[%s297 + $0xf8] sm:$0xff]
      %367 = vmatprep.subr.mxu0 0.0
      %368 = vmatpush1.msra.mxu0 %v350
      %369 = vmatprep.subr.mxu0 0.0
      %370 = vmatpush1.msra.mxu0 %v349
      %371 = vmatprep.subr.mxu0 0.0
      %372 = vmatpush1.msra.mxu0 %v348
      %373 = vmatprep.subr.mxu0 0.0
      %374 = vmatpush1.msra.mxu0 %v347
      %375 = vmatprep.subr.mxu0 0.0
      %376 = vmatpush1.msra.mxu0 %v346
      %377 = vmatprep.subr.mxu0 0.0
      %378 = vmatpush1.msra.mxu0 %v345
      %379 = vmatprep.subr.mxu0 0.0
      %380 = vmatpush1.msra.mxu0 %v344
      %381 = vmatprep.subr.mxu0 0.0
      %382 = vmatpush1.msra.mxu0 %v343
      %383 = vmatprep.subr.mxu0 0.0
      %384 = vmatpush1.msra.mxu0 %v342
      %385 = vmatprep.subr.mxu0 0.0
      %386 = vmatpush1.msra.mxu0 %v341
      %387 = vmatprep.subr.mxu0 0.0
      %388 = vmatpush1.msra.mxu0 %v340
      %389 = vmatprep.subr.mxu0 0.0
      %390 = vmatpush1.msra.mxu0 %v339
      %391 = vmatprep.subr.mxu0 0.0
      %392 = vmatpush1.msra.mxu0 %v338
      %393 = vmatprep.subr.mxu0 0.0
      %394 = vmatpush1.msra.mxu0 %v337
      %395 = vmatprep.subr.mxu0 0.0
      %396 = vmatpush1.msra.mxu0 %v336
      %397 = vmatprep.subr.mxu0 0.0
      %398 = vmatpush1.msra.mxu0 %v335
      %399 = vmatprep.subr.mxu0 0.0
      %400 = vmatpush2.msra.mxu0 %v366
      %401 = vmatprep.subr.mxu0 0.0
      %402 = vmatpush2.msra.mxu0 %v365
      %403 = vmatprep.subr.mxu0 0.0
      %404 = vmatpush2.msra.mxu0 %v364
      %405 = vmatprep.subr.mxu0 0.0
      %406 = vmatpush2.msra.mxu0 %v363
      %407 = vmatprep.subr.mxu0 0.0
      %408 = vmatpush2.msra.mxu0 %v362
      %409 = vmatprep.subr.mxu0 0.0
      %410 = vmatpush2.msra.mxu0 %v361
      %411 = vmatprep.subr.mxu0 0.0
      %412 = vmatpush2.msra.mxu0 %v360
      %413 = vmatprep.subr.mxu0 0.0
      %414 = vmatpush2.msra.mxu0 %v359
      %415 = vmatprep.subr.mxu0 0.0
      %416 = vmatpush2.msra.mxu0 %v358
      %417 = vmatprep.subr.mxu0 0.0
      %418 = vmatpush2.msra.mxu0 %v357
      %419 = vmatprep.subr.mxu0 0.0
      %420 = vmatpush2.msra.mxu0 %v356
      %421 = vmatprep.subr.mxu0 0.0
      %422 = vmatpush2.msra.mxu0 %v355
      %423 = vmatprep.subr.mxu0 0.0
      %424 = vmatpush2.msra.mxu0 %v354
      %425 = vmatprep.subr.mxu0 0.0
      %426 = vmatpush2.msra.mxu0 %v353
      %427 = vmatprep.subr.mxu0 0.0
      %428 = vmatpush2.msra.mxu0 %v352
      %429 = vmatprep.subr.mxu0 0.0
      %430 = vmatpush2.msra.mxu0 %v351
      %431 = vmatprep.mubr.f32.mxu0 %v332
      %432 = vmatmul.mubr.f32.gmra.mxu0 %v331
      %v433 = vpop.f32.mrf.mxu0
      %v434 = vadd.f32 0.0, %v433
      %v435 = vpop.f32.mrf.mxu0
      %436 = vmatprep.mubr.f32.mxu0 %v334
      %437 = vmatmul.mubr.f32.gmra.mxu0 %v333
      %v438 = vpop.f32.mrf.mxu0
      %v439 = vadd.f32 0.0, %v438
      %v440 = vpop.f32.mrf.mxu0
      %441 = vdwg.mxu0
      %442 = vst [vmem:[%s315] sm:$0xff] %v434
      %443 = vst [vmem:[%s315 + $0x8] sm:$0xff] %v439
      %v444 = vld [vmem:[%s302] sm:$0xff]
      %v445 = vld [vmem:[%s302 + $0x8] sm:$0xff]
      %v446 = vld [vmem:[%s302 + $0x10] sm:$0xff]
      %v447 = vld [vmem:[%s302 + $0x18] sm:$0xff]
      %v448 = vld [vmem:[%s302 + $0x20] sm:$0xff]
      %v449 = vld [vmem:[%s302 + $0x28] sm:$0xff]
      %v450 = vld [vmem:[%s302 + $0x30] sm:$0xff]
      %v451 = vld [vmem:[%s302 + $0x38] sm:$0xff]
      %v452 = vld [vmem:[%s302 + $0x40] sm:$0xff]
      %v453 = vld [vmem:[%s302 + $0x48] sm:$0xff]
      %v454 = vld [vmem:[%s302 + $0x50] sm:$0xff]
      %v455 = vld [vmem:[%s302 + $0x58] sm:$0xff]
      %v456 = vld [vmem:[%s302 + $0x60] sm:$0xff]
      %v457 = vld [vmem:[%s302 + $0x68] sm:$0xff]
      %v458 = vld [vmem:[%s302 + $0x70] sm:$0xff]
      %v459 = vld [vmem:[%s302 + $0x78] sm:$0xff]
      %v460 = vld [vmem:[%s302 + $0x80] sm:$0xff]
      %v461 = vld [vmem:[%s302 + $0x88] sm:$0xff]
      %v462 = vld [vmem:[%s302 + $0x90] sm:$0xff]
      %v463 = vld [vmem:[%s302 + $0x98] sm:$0xff]
      %v464 = vld [vmem:[%s302 + $0xa0] sm:$0xff]
      %v465 = vld [vmem:[%s302 + $0xa8] sm:$0xff]
      %v466 = vld [vmem:[%s302 + $0xb0] sm:$0xff]
      %v467 = vld [vmem:[%s302 + $0xb8] sm:$0xff]
      %v468 = vld [vmem:[%s302 + $0xc0] sm:$0xff]
      %v469 = vld [vmem:[%s302 + $0xc8] sm:$0xff]
      %v470 = vld [vmem:[%s302 + $0xd0] sm:$0xff]
      %v471 = vld [vmem:[%s302 + $0xd8] sm:$0xff]
      %v472 = vld [vmem:[%s302 + $0xe0] sm:$0xff]
      %v473 = vld [vmem:[%s302 + $0xe8] sm:$0xff]
      %v474 = vld [vmem:[%s302 + $0xf0] sm:$0xff]
      %v475 = vld [vmem:[%s302 + $0xf8] sm:$0xff]
      %476 = vmatprep.subr.mxu0 0.0
      %477 = vmatpush1.msra.mxu0 %v459
      %478 = vmatprep.subr.mxu0 0.0
      %479 = vmatpush1.msra.mxu0 %v458
      %480 = vmatprep.subr.mxu0 0.0
      %481 = vmatpush1.msra.mxu0 %v457
      %482 = vmatprep.subr.mxu0 0.0
      %483 = vmatpush1.msra.mxu0 %v456
      %484 = vmatprep.subr.mxu0 0.0
      %485 = vmatpush1.msra.mxu0 %v455
      %486 = vmatprep.subr.mxu0 0.0
      %487 = vmatpush1.msra.mxu0 %v454
      %488 = vmatprep.subr.mxu0 0.0
      %489 = vmatpush1.msra.mxu0 %v453
      %490 = vmatprep.subr.mxu0 0.0
      %491 = vmatpush1.msra.mxu0 %v452
      %492 = vmatprep.subr.mxu0 0.0
      %493 = vmatpush1.msra.mxu0 %v451
      %494 = vmatprep.subr.mxu0 0.0
      %495 = vmatpush1.msra.mxu0 %v450
      %496 = vmatprep.subr.mxu0 0.0
      %497 = vmatpush1.msra.mxu0 %v449
      %498 = vmatprep.subr.mxu0 0.0
      %499 = vmatpush1.msra.mxu0 %v448
      %500 = vmatprep.subr.mxu0 0.0
      %501 = vmatpush1.msra.mxu0 %v447
      %502 = vmatprep.subr.mxu0 0.0
      %503 = vmatpush1.msra.mxu0 %v446
      %504 = vmatprep.subr.mxu0 0.0
      %505 = vmatpush1.msra.mxu0 %v445
      %506 = vmatprep.subr.mxu0 0.0
      %507 = vmatpush1.msra.mxu0 %v444
      %508 = vmatprep.subr.mxu0 0.0
      %509 = vmatpush2.msra.mxu0 %v475
      %510 = vmatprep.subr.mxu0 0.0
      %511 = vmatpush2.msra.mxu0 %v474
      %512 = vmatprep.subr.mxu0 0.0
      %513 = vmatpush2.msra.mxu0 %v473
      %514 = vmatprep.subr.mxu0 0.0
      %515 = vmatpush2.msra.mxu0 %v472
      %516 = vmatprep.subr.mxu0 0.0
      %517 = vmatpush2.msra.mxu0 %v471
      %518 = vmatprep.subr.mxu0 0.0
      %519 = vmatpush2.msra.mxu0 %v470
      %520 = vmatprep.subr.mxu0 0.0
      %521 = vmatpush2.msra.mxu0 %v469
      %522 = vmatprep.subr.mxu0 0.0
      %523 = vmatpush2.msra.mxu0 %v468
      %524 = vmatprep.subr.mxu0 0.0
      %525 = vmatpush2.msra.mxu0 %v467
      %526 = vmatprep.subr.mxu0 0.0
      %527 = vmatpush2.msra.mxu0 %v466
      %528 = vmatprep.subr.mxu0 0.0
      %529 = vmatpush2.msra.mxu0 %v465
      %530 = vmatprep.subr.mxu0 0.0
      %531 = vmatpush2.msra.mxu0 %v464
      %532 = vmatprep.subr.mxu0 0.0
      %533 = vmatpush2.msra.mxu0 %v463
      %534 = vmatprep.subr.mxu0 0.0
      %535 = vmatpush2.msra.mxu0 %v462
      %536 = vmatprep.subr.mxu0 0.0
      %537 = vmatpush2.msra.mxu0 %v461
      %538 = vmatprep.subr.mxu0 0.0
      %539 = vmatpush2.msra.mxu0 %v460
      %540 = vmatprep.mubr.f32.mxu0 %v332
      %541 = vmatmul.mubr.f32.gmra.mxu0 %v331
      %v542 = vpop.f32.mrf.mxu0
      %v543 = vadd.f32 0.0, %v542
      %v544 = vpop.f32.mrf.mxu0
      %545 = vmatprep.mubr.f32.mxu0 %v334
      %546 = vmatmul.mubr.f32.gmra.mxu0 %v333
      %v547 = vpop.f32.mrf.mxu0
      %v548 = vadd.f32 0.0, %v547
      %v549 = vpop.f32.mrf.mxu0
      %550 = vdwg.mxu0
      %551 = vst [vmem:[%s329] sm:$0xff] %v543
      %552 = vst [vmem:[%s329 + $0x8] sm:$0xff] %v548
      %s553 = smul.u32 2, %s23
      %p554 = scmp.lt.s32.totalorder %s21, 1
      %s555 = scalar_select %p554, %s21, 1
      %p556 = scmp.lt.s32.totalorder %s22, 1
      %s557 = scalar_select %p556, %s22, 1
      %p558 = scmp.lt.s32.totalorder %s553, 1
      %s559 = scalar_select %p558, %s553, 1
      %s560 = smul.addr %s557, 2
      %s561 = sadd.s32 %s559, %s560
      %s562 = smul.addr %s555, 4
      %s563 = sadd.s32 %s561, %s562
      %s564 = smul.addr %s563, 8
      %s565 = scalar_lea.vmem %s3, %s564
      %s566 = smul.u32 2, %s23
      %p567 = scmp.lt.s32.totalorder %s21, 1
      %s568 = scalar_select %p567, %s21, 1
      %p569 = scmp.lt.s32.totalorder %s22, 1
      %s570 = scalar_select %p569, %s22, 1
      %p571 = scmp.lt.s32.totalorder %s566, 1
      %s572 = scalar_select %p571, %s566, 1
      %s573 = smul.addr %s570, 2
      %s574 = sadd.s32 %s572, %s573
      %s575 = smul.addr %s568, 4
      %s576 = sadd.s32 %s574, %s575
      %s577 = smul.addr %s576, 8
      %s578 = scalar_lea.vmem %s4, %s577
      // Predicated region
      $region33: #{transformer_decoder_forward.22} parent=31 // pred_check
        %p579 = pneg %p137
      $region34: #{transformer_decoder_forward.22} parent=31 // pred_check_branch
        %581 = sbr.rel (%p579) target = $region36
      $region35: #{transformer_decoder_forward.22} parent=31 // pred_region
        %s582 = smul.u32 2, %s23
      $region36: #{transformer_decoder_forward.22} parent=31 // pred_fallthru
        _
      // Predicated region
      $region37: #{transformer_decoder_forward.22} parent=31 // pred_check
        %p583 = pneg %p167
      $region38: #{transformer_decoder_forward.22} parent=31 // pred_check_branch
        %585 = sbr.rel (%p583) target = $region40
      $region39: #{transformer_decoder_forward.22} parent=31 // pred_region
        %s586 = smul.u32 2, %s23
      $region40: #{transformer_decoder_forward.22} parent=31 // pred_fallthru
        _
    $region32: #{transformer_decoder_forward.22} parent=5 // pred_fallthru
      _
    %p587 = scmp.le.s32.totalorder 2, %s11
    // Predicated region
    $region41: #{transformer_decoder_forward.22} parent=5 // pred_check
      %p588 = pneg %p587
    $region42: #{transformer_decoder_forward.22} parent=5 // pred_check_branch
      %590 = sbr.rel (%p588) target = $region44
    $region43: #{transformer_decoder_forward.22} parent=5 // pred_region
      %s591 = ssub.s32 %s11, 2
      // Predicated region
      $region45: #{transformer_decoder_forward.22} parent=43 // pred_check
        %p592 = pneg %p143
      $region46: #{transformer_decoder_forward.22} parent=43 // pred_check_branch
        %594 = sbr.rel (%p592) target = $region48
      $region47: #{transformer_decoder_forward.22} parent=43 // pred_region
        %s595 = smul.u32 2, %s26
        %p596 = scmp.lt.s32.totalorder %s24, 1
        %s597 = scalar_select %p596, %s24, 1
        %p598 = scmp.lt.s32.totalorder %s25, 1
        %s599 = scalar_select %p598, %s25, 1
        %p600 = scmp.lt.s32.totalorder %s595, 1
        %s601 = scalar_select %p600, %s595, 1
        %s602 = smul.addr %s599, 2
        %s603 = sadd.s32 %s601, %s602
        %s604 = smul.addr %s597, 4
        %s605 = sadd.s32 %s603, %s604
        %s606 = smul.addr %s605, 8
        %s607 = scalar_lea.vmem %s3, %s606
      $region48: #{transformer_decoder_forward.22} parent=43 // pred_fallthru
        _
      // Predicated region
      $region49: #{transformer_decoder_forward.22} parent=43 // pred_check
        %p608 = pneg %p173
      $region50: #{transformer_decoder_forward.22} parent=43 // pred_check_branch
        %610 = sbr.rel (%p608) target = $region52
      $region51: #{transformer_decoder_forward.22} parent=43 // pred_region
        %s611 = smul.u32 2, %s26
        %p612 = scmp.lt.s32.totalorder %s24, 1
        %s613 = scalar_select %p612, %s24, 1
        %p614 = scmp.lt.s32.totalorder %s25, 1
        %s615 = scalar_select %p614, %s25, 1
        %p616 = scmp.lt.s32.totalorder %s611, 1
        %s617 = scalar_select %p616, %s611, 1
        %s618 = smul.addr %s615, 2
        %s619 = sadd.s32 %s617, %s618
        %s620 = smul.addr %s613, 4
        %s621 = sadd.s32 %s619, %s620
        %s622 = smul.addr %s621, 8
        %s623 = scalar_lea.vmem %s4, %s622
      $region52: #{transformer_decoder_forward.22} parent=43 // pred_fallthru
        _
    $region44: #{transformer_decoder_forward.22} parent=5 // pred_fallthru
      _
  $region6: #{transformer_decoder_forward.22} parent=0 // loop_footer
    %s15 = sadd.s32 1, %s11
  $region7: #{transformer_decoder_forward.22} parent=0 // loop_footer_branch
    %10 = sbr.rel target = $region3
  $region8: #{transformer_decoder_forward.22} parent=0 // loop_exit
    _

// kernel: transformer_decoder_forward.23
$region0: #{transformer_decoder_forward.23}
  #allocation0 [shape = 'u32[]', space=smem, size = 0x4, offset = 0x4, fixed_abs, tag = 'smem constant byte address 0x4 - core index']
  #allocation1 [shape = 'u32[144,128]{1,0:T(1,128)}', space=vmem, size = 0x12000, scoped, tag = 'internal scratch']
  #allocation2 [shape = 'f32[2,8,1]{2,1,0:T(8,128)}', space=vmem, size = 0x2000, scoped, tag = 'scratch operand']
  #allocation3 [shape = 'f32[2,8,1]{2,1,0:T(8,128)}', space=vmem, size = 0x2000, scoped, tag = 'scratch operand']
  #allocation4 [shape = 'f32[2,8,128]{2,1,0:T(8,128)}', space=vmem, size = 0x2000, scoped, tag = 'scratch operand']
  %s0 = inlined_call_operand.vmem [shape: f32[2,2,8,128], index: 0, kind: input, shape index: {}]
  %s1 = inlined_call_operand.vmem [shape: f32[2,2,16,128], index: 1, kind: input, shape index: {}]
  %s2 = inlined_call_operand.vmem [shape: f32[2,2,16,128], index: 2, kind: input, shape index: {}]
  %s3 = inlined_call_operand.vmem [shape: f32[2,1,16], index: 3, kind: input, shape index: {}]
  %s4 = inlined_call_operand.vmem [shape: f32[2,2,8,128], index: 4, kind: output, shape index: {}]
  %s5 = sld [smem:[#allocation0]]
  $region57: #{transformer_decoder_forward.23} parent=0
    _
  %s7 = ssub.s32 1, %s5
  %s8 = scalar_select 0, %s7, %s5
  loop: start=0, step=1, limit=4
  $region2: #{transformer_decoder_forward.23} parent=0 // loop_pre_header
    _
  $region3: #{transformer_decoder_forward.23} parent=0 // loop_header
    %s10 = sphi 0, %s14
    %p11 = scmp.ge.s32.totalorder %s10, 4
    %s17 = sphi 0, %s36
    %s18 = sphi 0, %s32
    %s19 = sphi 0, %s28
    %s20 = sphi 0, %s17
    %s21 = sphi 0, %s18
    %s22 = sphi 0, %s19
    %s23 = sphi 0, %s20
    %s24 = sphi 0, %s21
    %s25 = sphi 0, %s22
    %s41 = sphi 0, %s43
    %s44 = sphi 0, %s41
    %s45 = sphi 0, %s44
    %s61 = sphi 0, %s45
    %s69 = sphi 0, %s71
    %s72 = sphi 0, %s69
    %s73 = sphi 0, %s72
    %s89 = sphi 0, %s73
    %s97 = sphi 0, %s99
    %s100 = sphi 0, %s97
    %s101 = sphi 0, %s100
    %s117 = sphi 0, %s101
    %s125 = sphi 0, %s127
    %s128 = sphi 0, %s125
    %s129 = sphi 0, %s128
    %s145 = sphi 0, %s129
    %s153 = sphi 0, %s155
    %s156 = sphi 0, %s153
    %s157 = sphi 0, %s156
    %s173 = sphi 0, %s157
  $region4: #{transformer_decoder_forward.23} parent=0 // loop_header_branch
    %13 = sbr.rel (%p11) target = $region8
  $region5: #{transformer_decoder_forward.23} parent=0 // loop_body
    %s15 = ssub.s32 %s10, 1
    %s16 = ssub.s32 %s10, 2
    %s26 = sadd.s32 1, %s19
    %p27 = scmp.ge.s32.totalorder %s26, 1
    %s28 = scalar_select %p27, 0, %s26
    %s29 = sadd.s32 1, %s18
    %s30 = scalar_select %p27, %s29, %s18
    %p31 = scmp.ge.s32.totalorder %s30, 1
    %s32 = scalar_select %p31, 0, %s30
    %s33 = sadd.s32 1, %s17
    %s34 = scalar_select %p31, %s33, %s17
    %p35 = scmp.ge.s32.totalorder %s34, 2
    %s36 = scalar_select %p35, 0, %s34
    %s37 = ssub.s32 %s17, %s36
    %s38 = ssub.s32 %s18, %s32
    %s39 = sor.u32 %s37, %s38
    %p40 = scmp.eq.s32.totalorder %s39, 0
    %s42 = sadd.s32 %s41, 1
    %s43 = scalar_select %p40, %s41, %s42
    %p46 = pneg %p40
    %p47 = scmp.eq.s32.totalorder %s10, 1
    %p48 = por %p46, %p47
    %p49 = scmp.ne.s32.totalorder %s41, %s44
    %p50 = scmp.eq.s32.totalorder %s10, 0
    %p51 = por %p49, %p50
    %p52 = scmp.ne.s32.totalorder %s41, %s44
    %p53 = scmp.eq.s32.totalorder %s15, 1
    %p54 = por %p52, %p53
    %p55 = scmp.ne.s32.totalorder %s44, %s45
    %p56 = scmp.eq.s32.totalorder %s15, 0
    %p57 = por %p55, %p56
    %p58 = scmp.ne.s32.totalorder %s44, %s45
    %p59 = scmp.eq.s32.totalorder %s16, 1
    %p60 = por %p58, %p59
    %p62 = scmp.ne.s32.totalorder %s45, %s61
    %p63 = scmp.eq.s32.totalorder %s16, 0
    %p64 = por %p62, %p63
    %s65 = ssub.s32 %s17, %s36
    %s66 = ssub.s32 %s19, %s28
    %s67 = sor.u32 %s65, %s66
    %p68 = scmp.eq.s32.totalorder %s67, 0
    %s70 = sadd.s32 %s69, 1
    %s71 = scalar_select %p68, %s69, %s70
    %p74 = pneg %p68
    %p75 = scmp.eq.s32.totalorder %s10, 1
    %p76 = por %p74, %p75
    %p77 = scmp.ne.s32.totalorder %s69, %s72
    %p78 = scmp.eq.s32.totalorder %s10, 0
    %p79 = por %p77, %p78
    %p80 = scmp.ne.s32.totalorder %s69, %s72
    %p81 = scmp.eq.s32.totalorder %s15, 1
    %p82 = por %p80, %p81
    %p83 = scmp.ne.s32.totalorder %s72, %s73
    %p84 = scmp.eq.s32.totalorder %s15, 0
    %p85 = por %p83, %p84
    %p86 = scmp.ne.s32.totalorder %s72, %s73
    %p87 = scmp.eq.s32.totalorder %s16, 1
    %p88 = por %p86, %p87
    %p90 = scmp.ne.s32.totalorder %s73, %s89
    %p91 = scmp.eq.s32.totalorder %s16, 0
    %p92 = por %p90, %p91
    %s93 = ssub.s32 %s17, %s36
    %s94 = ssub.s32 %s19, %s28
    %s95 = sor.u32 %s93, %s94
    %p96 = scmp.eq.s32.totalorder %s95, 0
    %s98 = sadd.s32 %s97, 1
    %s99 = scalar_select %p96, %s97, %s98
    %p102 = pneg %p96
    %p103 = scmp.eq.s32.totalorder %s10, 1
    %p104 = por %p102, %p103
    %p105 = scmp.ne.s32.totalorder %s97, %s100
    %p106 = scmp.eq.s32.totalorder %s10, 0
    %p107 = por %p105, %p106
    %p108 = scmp.ne.s32.totalorder %s97, %s100
    %p109 = scmp.eq.s32.totalorder %s15, 1
    %p110 = por %p108, %p109
    %p111 = scmp.ne.s32.totalorder %s100, %s101
    %p112 = scmp.eq.s32.totalorder %s15, 0
    %p113 = por %p111, %p112
    %p114 = scmp.ne.s32.totalorder %s100, %s101
    %p115 = scmp.eq.s32.totalorder %s16, 1
    %p116 = por %p114, %p115
    %p118 = scmp.ne.s32.totalorder %s101, %s117
    %p119 = scmp.eq.s32.totalorder %s16, 0
    %p120 = por %p118, %p119
    %s121 = ssub.s32 %s17, %s36
    %s122 = ssub.s32 %s19, %s28
    %s123 = sor.u32 %s121, %s122
    %p124 = scmp.eq.s32.totalorder %s123, 0
    %s126 = sadd.s32 %s125, 1
    %s127 = scalar_select %p124, %s125, %s126
    %p130 = pneg %p124
    %p131 = scmp.eq.s32.totalorder %s10, 1
    %p132 = por %p130, %p131
    %p133 = scmp.ne.s32.totalorder %s125, %s128
    %p134 = scmp.eq.s32.totalorder %s10, 0
    %p135 = por %p133, %p134
    %p136 = scmp.ne.s32.totalorder %s125, %s128
    %p137 = scmp.eq.s32.totalorder %s15, 1
    %p138 = por %p136, %p137
    %p139 = scmp.ne.s32.totalorder %s128, %s129
    %p140 = scmp.eq.s32.totalorder %s15, 0
    %p141 = por %p139, %p140
    %p142 = scmp.ne.s32.totalorder %s128, %s129
    %p143 = scmp.eq.s32.totalorder %s16, 1
    %p144 = por %p142, %p143
    %p146 = scmp.ne.s32.totalorder %s129, %s145
    %p147 = scmp.eq.s32.totalorder %s16, 0
    %p148 = por %p146, %p147
    %s149 = ssub.s32 %s17, %s36
    %s150 = ssub.s32 %s18, %s32
    %s151 = sor.u32 %s149, %s150
    %p152 = scmp.eq.s32.totalorder %s151, 0
    %s154 = sadd.s32 %s153, 1
    %s155 = scalar_select %p152, %s153, %s154
    %p158 = pneg %p152
    %p159 = scmp.eq.s32.totalorder %s10, 1
    %p160 = por %p158, %p159
    %p161 = scmp.ne.s32.totalorder %s153, %s156
    %p162 = scmp.eq.s32.totalorder %s10, 0
    %p163 = por %p161, %p162
    %p164 = scmp.ne.s32.totalorder %s153, %s156
    %p165 = scmp.eq.s32.totalorder %s15, 1
    %p166 = por %p164, %p165
    %p167 = scmp.ne.s32.totalorder %s156, %s157
    %p168 = scmp.eq.s32.totalorder %s15, 0
    %p169 = por %p167, %p168
    %p170 = scmp.ne.s32.totalorder %s156, %s157
    %p171 = scmp.eq.s32.totalorder %s16, 1
    %p172 = por %p170, %p171
    %p174 = scmp.ne.s32.totalorder %s157, %s173
    %p175 = scmp.eq.s32.totalorder %s16, 0
    %p176 = por %p174, %p175
    %p177 = scmp.le.s32.totalorder 1, %s10
    %p178 = scmp.lt.s32.totalorder %s10, 3
    %p179 = pnand %p177, %p178
    %p180 = pneg %p179
    // Predicated region
    $region9: #{transformer_decoder_forward.23} parent=5 // pred_check
      _
    $region10: #{transformer_decoder_forward.23} parent=5 // pred_check_branch
      %182 = sbr.rel (%p179) target = $region12
    $region11: #{transformer_decoder_forward.23} parent=5 // pred_region
      %s183 = ssub.s32 %s10, 1
    $region12: #{transformer_decoder_forward.23} parent=5 // pred_fallthru
      _
    %p184 = scmp.lt.s32.totalorder %s10, 2
    // Predicated region
    $region13: #{transformer_decoder_forward.23} parent=5 // pred_check
      %p185 = pneg %p184
    $region14: #{transformer_decoder_forward.23} parent=5 // pred_check_branch
      %187 = sbr.rel (%p185) target = $region16
    $region15: #{transformer_decoder_forward.23} parent=5 // pred_region
      // Predicated region
      $region17: #{transformer_decoder_forward.23} parent=15 // pred_check
        %p188 = pneg %p51
      $region18: #{transformer_decoder_forward.23} parent=15 // pred_check_branch
        %190 = sbr.rel (%p188) target = $region20
      $region19: #{transformer_decoder_forward.23} parent=15 // pred_region
        %p191 = scmp.lt.s32.totalorder %s17, 1
        %s192 = scalar_select %p191, %s17, 1
        %p193 = scmp.lt.s32.totalorder %s18, 0
        %s194 = scalar_select %p193, %s18, 0
        %s195 = smul.addr %s192, 2
        %s196 = sadd.s32 %s194, %s195
        %s197 = smul.addr %s196, 8
        %s198 = scalar_lea.vmem %s0, %s197
      $region20: #{transformer_decoder_forward.23} parent=15 // pred_fallthru
        _
      // Predicated region
      $region21: #{transformer_decoder_forward.23} parent=15 // pred_check
        %p199 = pneg %p79
      $region22: #{transformer_decoder_forward.23} parent=15 // pred_check_branch
        %201 = sbr.rel (%p199) target = $region24
      $region23: #{transformer_decoder_forward.23} parent=15 // pred_region
        %s202 = smul.u32 2, %s19
        %p203 = scmp.lt.s32.totalorder %s17, 1
        %s204 = scalar_select %p203, %s17, 1
        %p205 = scmp.lt.s32.totalorder %s202, 1
        %s206 = scalar_select %p205, %s202, 1
        %s207 = smul.addr %s204, 4
        %s208 = sadd.s32 %s206, %s207
        %s209 = smul.addr %s208, 8
        %s210 = scalar_lea.vmem %s1, %s209
        %s211 = smul.u32 2, %s19
      $region24: #{transformer_decoder_forward.23} parent=15 // pred_fallthru
        _
      // Predicated region
      $region25: #{transformer_decoder_forward.23} parent=15 // pred_check
        %p212 = pneg %p107
      $region26: #{transformer_decoder_forward.23} parent=15 // pred_check_branch
        %214 = sbr.rel (%p212) target = $region28
      $region27: #{transformer_decoder_forward.23} parent=15 // pred_region
        %s215 = smul.u32 2, %s19
        %p216 = scmp.lt.s32.totalorder %s17, 1
        %s217 = scalar_select %p216, %s17, 1
        %p218 = scmp.lt.s32.totalorder %s215, 1
        %s219 = scalar_select %p218, %s215, 1
        %s220 = smul.addr %s217, 4
        %s221 = sadd.s32 %s219, %s220
        %s222 = smul.addr %s221, 8
        %s223 = scalar_lea.vmem %s2, %s222
        %s224 = smul.u32 2, %s19
      $region28: #{transformer_decoder_forward.23} parent=15 // pred_fallthru
        _
      // Predicated region
      $region29: #{transformer_decoder_forward.23} parent=15 // pred_check
        %p225 = pneg %p135
      $region30: #{transformer_decoder_forward.23} parent=15 // pred_check_branch
        %227 = sbr.rel (%p225) target = $region32
      $region31: #{transformer_decoder_forward.23} parent=15 // pred_region
        %p228 = scmp.lt.s32.totalorder %s17, 1
        %s229 = scalar_select %p228, %s17, 1
        %p230 = scmp.lt.s32.totalorder %s19, 0
        %s231 = scalar_select %p230, %s19, 0
        %s232 = sadd.s32 %s231, %s229
        %s233 = scalar_lea.vmem %s3, %s232
      $region32: #{transformer_decoder_forward.23} parent=15 // pred_fallthru
        _
    $region16: #{transformer_decoder_forward.23} parent=5 // pred_fallthru
      _
    %p234 = scmp.le.s32.totalorder 1, %s10
    %p235 = scmp.lt.s32.totalorder %s10, 3
    %p236 = pnand %p234, %p235
    %p237 = pneg %p236
    // Predicated region
    $region33: #{transformer_decoder_forward.23} parent=5 // pred_check
      _
    $region34: #{transformer_decoder_forward.23} parent=5 // pred_check_branch
      %239 = sbr.rel (%p236) target = $region36
    $region35: #{transformer_decoder_forward.23} parent=5 // pred_region
      %s240 = ssub.s32 %s10, 1
      %p241 = scmp.lt.s32.totalorder %s20, 1
      %s242 = scalar_select %p241, %s20, 1
      %p243 = scmp.lt.s32.totalorder %s21, 0
      %s244 = scalar_select %p243, %s21, 0
      %s245 = smul.addr %s242, 2
      %s246 = sadd.s32 %s244, %s245
      %s247 = smul.addr %s246, 8
      %s248 = scalar_lea.vmem %s0, %s247
      %p249 = pneg %p57
      %p250 = pneg %p54
      %s251 = smul.u32 2, %s22
      %p252 = scmp.lt.s32.totalorder %s20, 1
      %s253 = scalar_select %p252, %s20, 1
      %p254 = scmp.lt.s32.totalorder %s251, 1
      %s255 = scalar_select %p254, %s251, 1
      %s256 = smul.addr %s253, 4
      %s257 = sadd.s32 %s255, %s256
      %s258 = smul.addr %s257, 8
      %s259 = scalar_lea.vmem %s1, %s258
      %p260 = pneg %p85
      %p261 = pneg %p82
      %s262 = smul.u32 2, %s22
      %p263 = scmp.lt.s32.totalorder %s20, 1
      %s264 = scalar_select %p263, %s20, 1
      %p265 = scmp.lt.s32.totalorder %s262, 1
      %s266 = scalar_select %p265, %s262, 1
      %s267 = smul.addr %s264, 4
      %s268 = sadd.s32 %s266, %s267
      %s269 = smul.addr %s268, 8
      %s270 = scalar_lea.vmem %s2, %s269
      %p271 = pneg %p113
      %p272 = pneg %p110
      %p273 = scmp.lt.s32.totalorder %s20, 1
      %s274 = scalar_select %p273, %s20, 1
      %p275 = scmp.lt.s32.totalorder %s22, 0
      %s276 = scalar_select %p275, %s22, 0
      %s277 = sadd.s32 %s276, %s274
      %s278 = scalar_lea.vmem %s3, %s277
      %p279 = pneg %p141
      %p280 = pneg %p138
      %p281 = pneg %p169
      %p282 = pneg %p166
      %p283 = scmp.lt.s32.totalorder %s20, 1
      %s284 = scalar_select %p283, %s20, 1
      %p285 = scmp.lt.s32.totalorder %s21, 0
      %s286 = scalar_select %p285, %s21, 0
      %s287 = smul.addr %s284, 2
      %s288 = sadd.s32 %s286, %s287
      %s289 = smul.addr %s288, 8
      %s290 = scalar_lea.vmem %s4, %s289
      %p291 = scmp.lt.s32.totalorder %s20, 1
      %s292 = scalar_select %p291, %s20, 1
      %p293 = scmp.lt.s32.totalorder %s21, 0
      %s294 = scalar_select %p293, %s21, 0
      %s295 = smul.addr %s292, 2
      %s296 = sadd.s32 %s294, %s295
      %s297 = smul.addr %s296, 8
      %s298 = scalar_lea.vmem %s0, %s297
      %s299 = smul.u32 2, %s22
      %p300 = scmp.lt.s32.totalorder %s20, 1
      %s301 = scalar_select %p300, %s20, 1
      %p302 = scmp.lt.s32.totalorder %s299, 1
      %s303 = scalar_select %p302, %s299, 1
      %s304 = smul.addr %s301, 4
      %s305 = sadd.s32 %s303, %s304
      %s306 = smul.addr %s305, 8
      %s307 = scalar_lea.vmem %s1, %s306
      %s308 = smul.u32 2, %s22
      %s309 = smul.u32 2, %s22
      %p310 = scmp.lt.s32.totalorder %s20, 1
      %s311 = scalar_select %p310, %s20, 1
      %p312 = scmp.lt.s32.totalorder %s309, 1
      %s313 = scalar_select %p312, %s309, 1
      %s314 = smul.addr %s311, 4
      %s315 = sadd.s32 %s313, %s314
      %s316 = smul.addr %s315, 8
      %s317 = scalar_lea.vmem %s2, %s316
      %s318 = smul.u32 2, %s22
      %p319 = scmp.lt.s32.totalorder %s20, 1
      %s320 = scalar_select %p319, %s20, 1
      %p321 = scmp.lt.s32.totalorder %s22, 0
      %s322 = scalar_select %p321, %s22, 0
      %s323 = sadd.s32 %s322, %s320
      %s324 = scalar_lea.vmem %s3, %s323
      %p325 = scmp.lt.s32.totalorder %s20, 1
      %s326 = scalar_select %p325, %s20, 1
      %p327 = scmp.lt.s32.totalorder %s21, 0
      %s328 = scalar_select %p327, %s21, 0
      %s329 = smul.addr %s326, 2
      %s330 = sadd.s32 %s328, %s329
      %s331 = smul.addr %s330, 8
      %s332 = scalar_lea.vmem %s4, %s331
      %p333 = scmp.eq.s32.totalorder %s22, 0
      // Predicated region
      $region37: #{transformer_decoder_forward.23} parent=35 // pred_check
        %p334 = pneg %p333
      $region38: #{transformer_decoder_forward.23} parent=35 // pred_check_branch
        %336 = sbr.rel (%p334) target = $region40
      $region39: #{transformer_decoder_forward.23} parent=35 // pred_region
        %vm337 = vcmask 7168
        %338 = vst.msk [vmem:[#allocation2] sm:$0xff] %vm337, -inf
        %339 = vst.msk [vmem:[#allocation2 + $0x8] sm:$0xff] %vm337, -inf
        %340 = vst.msk [vmem:[#allocation3] sm:$0xff] %vm337, 0.0
        %341 = vst.msk [vmem:[#allocation3 + $0x8] sm:$0xff] %vm337, 0.0
        %342 = vst [vmem:[#allocation4] sm:$0xff] 0.0
        %343 = vst [vmem:[#allocation4 + $0x8] sm:$0xff] 0.0
      $region40: #{transformer_decoder_forward.23} parent=35 // pred_fallthru
        _
      %v344 = vld [vmem:[%s298] sm:$0xff]
      %v345 = vld [vmem:[%s298 + $0x8] sm:$0xff]
      %v346 = vmul.f32 %v344, 0.088388346
      %v347 = vmul.f32 %v345, 0.088388346
      %v348 = vld [vmem:[%s307] sm:$0xff]
      %v349 = vld [vmem:[%s307 + $0x8] sm:$0xff]
      %v350 = vld [vmem:[%s307 + $0x10] sm:$0xff]
      %v351 = vld [vmem:[%s307 + $0x18] sm:$0xff]
      %v352 = vld [vmem:[%s317] sm:$0xff]
      %v353 = vld [vmem:[%s317 + $0x8] sm:$0xff]
      %v354 = vld [vmem:[%s317 + $0x10] sm:$0xff]
      %v355 = vld [vmem:[%s317 + $0x18] sm:$0xff]
      %v356 = vld [vmem:[%s324] sm:$0x1]
      %v358 = vlaneseq
      %v359 = vshrl.u32 %v358, 7
      %v360 = vsub.s32 0, %v359
      %v361 = vrot.slane %v356, %v360
      %363 = vmatprep.subr.mxu0 0.0
      %364 = vmatpush1.xpose.msra.mxu0 0.0
      %365 = vmatprep.subr.mxu0 0.0
      %366 = vmatpush1.xpose.msra.mxu0 0.0
      %367 = vmatprep.subr.mxu0 0.0
      %368 = vmatpush1.xpose.msra.mxu0 0.0
      %369 = vmatprep.subr.mxu0 0.0
      %370 = vmatpush1.xpose.msra.mxu0 0.0
      %371 = vmatprep.subr.mxu0 0.0
      %372 = vmatpush1.xpose.msra.mxu0 0.0
      %373 = vmatprep.subr.mxu0 0.0
      %374 = vmatpush1.xpose.msra.mxu0 0.0
      %375 = vmatprep.subr.mxu0 0.0
      %376 = vmatpush1.xpose.msra.mxu0 0.0
      %377 = vmatprep.subr.mxu0 0.0
      %378 = vmatpush1.xpose.msra.mxu0 0.0
      %379 = vmatprep.subr.mxu0 0.0
      %380 = vmatpush1.xpose.msra.mxu0 0.0
      %381 = vmatprep.subr.mxu0 0.0
      %382 = vmatpush1.xpose.msra.mxu0 0.0
      %383 = vmatprep.subr.mxu0 0.0
      %384 = vmatpush1.xpose.msra.mxu0 0.0
      %385 = vmatprep.subr.mxu0 0.0
      %386 = vmatpush1.xpose.msra.mxu0 0.0
      %387 = vmatprep.subr.mxu0 0.0
      %388 = vmatpush1.xpose.msra.mxu0 0.0
      %389 = vmatprep.subr.mxu0 0.0
      %390 = vmatpush1.xpose.msra.mxu0 0.0
      %391 = vmatprep.subr.mxu0 0.0
      %392 = vmatpush1.xpose.msra.mxu0 %v349
      %393 = vmatprep.subr.mxu0 0.0
      %394 = vmatpush1.xpose.msra.mxu0 %v348
      %395 = vmatprep.subr.mxu0 0.0
      %396 = vmatpush2.xpose.msra.mxu0 0.0
      %397 = vmatprep.subr.mxu0 0.0
      %398 = vmatpush2.xpose.msra.mxu0 0.0
      %399 = vmatprep.subr.mxu0 0.0
      %400 = vmatpush2.xpose.msra.mxu0 0.0
      %401 = vmatprep.subr.mxu0 0.0
      %402 = vmatpush2.xpose.msra.mxu0 0.0
      %403 = vmatprep.subr.mxu0 0.0
      %404 = vmatpush2.xpose.msra.mxu0 0.0
      %405 = vmatprep.subr.mxu0 0.0
      %406 = vmatpush2.xpose.msra.mxu0 0.0
      %407 = vmatprep.subr.mxu0 0.0
      %408 = vmatpush2.xpose.msra.mxu0 0.0
      %409 = vmatprep.subr.mxu0 0.0
      %410 = vmatpush2.xpose.msra.mxu0 0.0
      %411 = vmatprep.subr.mxu0 0.0
      %412 = vmatpush2.xpose.msra.mxu0 0.0
      %413 = vmatprep.subr.mxu0 0.0
      %414 = vmatpush2.xpose.msra.mxu0 0.0
      %415 = vmatprep.subr.mxu0 0.0
      %416 = vmatpush2.xpose.msra.mxu0 0.0
      %417 = vmatprep.subr.mxu0 0.0
      %418 = vmatpush2.xpose.msra.mxu0 0.0
      %419 = vmatprep.subr.mxu0 0.0
      %420 = vmatpush2.xpose.msra.mxu0 0.0
      %421 = vmatprep.subr.mxu0 0.0
      %422 = vmatpush2.xpose.msra.mxu0 0.0
      %423 = vmatprep.subr.mxu0 0.0
      %424 = vmatpush2.xpose.msra.mxu0 0.0
      %425 = vmatprep.subr.mxu0 0.0
      %426 = vmatpush2.xpose.msra.mxu0 0.0
      %427 = vmatprep.mubr.f32.mxu0 0.0
      %428 = vmatmul.mubr.f32.gmra.mxu0 %v346
      %v429 = vpop.f32.mrf.mxu0
      %v430 = vadd.f32 %v361, %v429
      %v431 = vpop.f32.mrf.mxu0
      %432 = vdwg.mxu0
      %433 = vmatprep.subr.mxu0 0.0
      %434 = vmatpush1.xpose.msra.mxu0 0.0
      %435 = vmatprep.subr.mxu0 0.0
      %436 = vmatpush1.xpose.msra.mxu0 0.0
      %437 = vmatprep.subr.mxu0 0.0
      %438 = vmatpush1.xpose.msra.mxu0 0.0
      %439 = vmatprep.subr.mxu0 0.0
      %440 = vmatpush1.xpose.msra.mxu0 0.0
      %441 = vmatprep.subr.mxu0 0.0
      %442 = vmatpush1.xpose.msra.mxu0 0.0
      %443 = vmatprep.subr.mxu0 0.0
      %444 = vmatpush1.xpose.msra.mxu0 0.0
      %445 = vmatprep.subr.mxu0 0.0
      %446 = vmatpush1.xpose.msra.mxu0 0.0
      %447 = vmatprep.subr.mxu0 0.0
      %448 = vmatpush1.xpose.msra.mxu0 0.0
      %449 = vmatprep.subr.mxu0 0.0
      %450 = vmatpush1.xpose.msra.mxu0 0.0
      %451 = vmatprep.subr.mxu0 0.0
      %452 = vmatpush1.xpose.msra.mxu0 0.0
      %453 = vmatprep.subr.mxu0 0.0
      %454 = vmatpush1.xpose.msra.mxu0 0.0
      %455 = vmatprep.subr.mxu0 0.0
      %456 = vmatpush1.xpose.msra.mxu0 0.0
      %457 = vmatprep.subr.mxu0 0.0
      %458 = vmatpush1.xpose.msra.mxu0 0.0
      %459 = vmatprep.subr.mxu0 0.0
      %460 = vmatpush1.xpose.msra.mxu0 0.0
      %461 = vmatprep.subr.mxu0 0.0
      %462 = vmatpush1.xpose.msra.mxu0 %v351
      %463 = vmatprep.subr.mxu0 0.0
      %464 = vmatpush1.xpose.msra.mxu0 %v350
      %465 = vmatprep.subr.mxu0 0.0
      %466 = vmatpush2.xpose.msra.mxu0 0.0
      %467 = vmatprep.subr.mxu0 0.0
      %468 = vmatpush2.xpose.msra.mxu0 0.0
      %469 = vmatprep.subr.mxu0 0.0
      %470 = vmatpush2.xpose.msra.mxu0 0.0
      %471 = vmatprep.subr.mxu0 0.0
      %472 = vmatpush2.xpose.msra.mxu0 0.0
      %473 = vmatprep.subr.mxu0 0.0
      %474 = vmatpush2.xpose.msra.mxu0 0.0
      %475 = vmatprep.subr.mxu0 0.0
      %476 = vmatpush2.xpose.msra.mxu0 0.0
      %477 = vmatprep.subr.mxu0 0.0
      %478 = vmatpush2.xpose.msra.mxu0 0.0
      %479 = vmatprep.subr.mxu0 0.0
      %480 = vmatpush2.xpose.msra.mxu0 0.0
      %481 = vmatprep.subr.mxu0 0.0
      %482 = vmatpush2.xpose.msra.mxu0 0.0
      %483 = vmatprep.subr.mxu0 0.0
      %484 = vmatpush2.xpose.msra.mxu0 0.0
      %485 = vmatprep.subr.mxu0 0.0
      %486 = vmatpush2.xpose.msra.mxu0 0.0
      %487 = vmatprep.subr.mxu0 0.0
      %488 = vmatpush2.xpose.msra.mxu0 0.0
      %489 = vmatprep.subr.mxu0 0.0
      %490 = vmatpush2.xpose.msra.mxu0 0.0
      %491 = vmatprep.subr.mxu0 0.0
      %492 = vmatpush2.xpose.msra.mxu0 0.0
      %493 = vmatprep.subr.mxu0 0.0
      %494 = vmatpush2.xpose.msra.mxu0 0.0
      %495 = vmatprep.subr.mxu0 0.0
      %496 = vmatpush2.xpose.msra.mxu0 0.0
      %497 = vmatprep.mubr.f32.mxu0 0.0
      %498 = vmatmul.mubr.f32.gmra.mxu0 %v347
      %v499 = vpop.f32.mrf.mxu0
      %v500 = vadd.f32 %v361, %v499
      %v501 = vpop.f32.mrf.mxu0
      %502 = vdwg.mxu0
      %v503 = vld [vmem:[#allocation2] sm:$0xff]
      %v504 = vld [vmem:[#allocation2 + $0x8] sm:$0xff]
      %vm505 = vcmask 130048
      %v506 = vsel %vm505, %v430, -inf
      %507 = vmax.xlane.f32.xlu0 %v506
      %v508 = vpop.xlane.xlu0 %507
      %v509 = vsel %vm505, %v500, -inf
      %510 = vmax.xlane.f32.xlu0 %v509
      %v511 = vpop.xlane.xlu0 %510
      %v512 = vmax.f32 %v503, %v508
      %v513 = vmax.f32 %v504, %v511
      %v514 = vsub.f32 %v503, %v512
      %v515 = vsub.f32 %v504, %v513
      %v516 = vmul.f32 %v514, 1.442695
      %v517 = vpow.pop %v516
      %v518 = vmul.f32 %v515, 1.442695
      %v519 = vpow.pop %v518
      %521 = vset.pattern.permute.xlu0 0
      %522 = vperm.xlu0 %521, %v512
      %v523 = vpop.permute.xlu0 %522
      %526 = vset.pattern.permute.xlu0 0
      %527 = vperm.xlu0 %526, %v513
      %v528 = vpop.permute.xlu0 %527
      %v530 = vsub.f32 %v430, %v523
      %v531 = vsub.f32 %v500, %v528
      %v532 = vmul.f32 %v530, 1.442695
      %v533 = vpow.pop %v532
      %v534 = vmul.f32 %v531, 1.442695
      %v535 = vpow.pop %v534
      %v536 = vld [vmem:[#allocation3] sm:$0xff]
      %v537 = vld [vmem:[#allocation3 + $0x8] sm:$0xff]
      %v538 = vmul.f32 %v517, %v536
      %v539 = vmul.f32 %v519, %v537
      %v540 = vsel %vm505, %v533, 0.0
      %541 = vadd.xlane.f32.xlu0 %v540
      %v542 = vpop.xlane.xlu0 %541
      %v543 = vsel %vm505, %v535, 0.0
      %544 = vadd.xlane.f32.xlu0 %v543
      %v545 = vpop.xlane.xlu0 %544
      %v546 = vadd.f32 %v538, %v542
      %v547 = vadd.f32 %v539, %v545
      %vm548 = vcmask 7168
      %549 = vst.msk [vmem:[#allocation3] sm:$0xff] %vm548, %v546
      %550 = vst.msk [vmem:[#allocation3 + $0x8] sm:$0xff] %vm548, %v547
      %v551 = vld [vmem:[#allocation4] sm:$0xff]
      %v552 = vld [vmem:[#allocation4 + $0x8] sm:$0xff]
      %554 = vset.pattern.permute.xlu0 0
      %555 = vperm.xlu0 %554, %v517
      %v556 = vpop.permute.xlu0 %555
      %559 = vset.pattern.permute.xlu0 0
      %560 = vperm.xlu0 %559, %v519
      %v561 = vpop.permute.xlu0 %560
      %v563 = vmul.f32 %v556, %v551
      %v564 = vmul.f32 %v561, %v552
      %v566 = vsel %vm505, %v533, 0
      %568 = vmatprep.subr.mxu0 0.0
      %569 = vmatpush1.msra.mxu0 0.0
      %570 = vmatprep.subr.mxu0 0.0
      %571 = vmatpush1.msra.mxu0 0.0
      %572 = vmatprep.subr.mxu0 0.0
      %573 = vmatpush1.msra.mxu0 0.0
      %574 = vmatprep.subr.mxu0 0.0
      %575 = vmatpush1.msra.mxu0 0.0
      %576 = vmatprep.subr.mxu0 0.0
      %577 = vmatpush1.msra.mxu0 0.0
      %578 = vmatprep.subr.mxu0 0.0
      %579 = vmatpush1.msra.mxu0 0.0
      %580 = vmatprep.subr.mxu0 0.0
      %581 = vmatpush1.msra.mxu0 0.0
      %582 = vmatprep.subr.mxu0 0.0
      %583 = vmatpush1.msra.mxu0 0.0
      %584 = vmatprep.subr.mxu0 0.0
      %585 = vmatpush1.msra.mxu0 0.0
      %586 = vmatprep.subr.mxu0 0.0
      %587 = vmatpush1.msra.mxu0 0.0
      %588 = vmatprep.subr.mxu0 0.0
      %589 = vmatpush1.msra.mxu0 0.0
      %590 = vmatprep.subr.mxu0 0.0
      %591 = vmatpush1.msra.mxu0 0.0
      %592 = vmatprep.subr.mxu0 0.0
      %593 = vmatpush1.msra.mxu0 0.0
      %594 = vmatprep.subr.mxu0 0.0
      %595 = vmatpush1.msra.mxu0 0.0
      %596 = vmatprep.subr.mxu0 0.0
      %597 = vmatpush1.msra.mxu0 %v353
      %598 = vmatprep.subr.mxu0 0.0
      %599 = vmatpush1.msra.mxu0 %v352
      %600 = vmatprep.subr.mxu0 0.0
      %601 = vmatpush2.msra.mxu0 0.0
      %602 = vmatprep.subr.mxu0 0.0
      %603 = vmatpush2.msra.mxu0 0.0
      %604 = vmatprep.subr.mxu0 0.0
      %605 = vmatpush2.msra.mxu0 0.0
      %606 = vmatprep.subr.mxu0 0.0
      %607 = vmatpush2.msra.mxu0 0.0
      %608 = vmatprep.subr.mxu0 0.0
      %609 = vmatpush2.msra.mxu0 0.0
      %610 = vmatprep.subr.mxu0 0.0
      %611 = vmatpush2.msra.mxu0 0.0
      %612 = vmatprep.subr.mxu0 0.0
      %613 = vmatpush2.msra.mxu0 0.0
      %614 = vmatprep.subr.mxu0 0.0
      %615 = vmatpush2.msra.mxu0 0.0
      %616 = vmatprep.subr.mxu0 0.0
      %617 = vmatpush2.msra.mxu0 0.0
      %618 = vmatprep.subr.mxu0 0.0
      %619 = vmatpush2.msra.mxu0 0.0
      %620 = vmatprep.subr.mxu0 0.0
      %621 = vmatpush2.msra.mxu0 0.0
      %622 = vmatprep.subr.mxu0 0.0
      %623 = vmatpush2.msra.mxu0 0.0
      %624 = vmatprep.subr.mxu0 0.0
      %625 = vmatpush2.msra.mxu0 0.0
      %626 = vmatprep.subr.mxu0 0.0
      %627 = vmatpush2.msra.mxu0 0.0
      %628 = vmatprep.subr.mxu0 0.0
      %629 = vmatpush2.msra.mxu0 0.0
      %630 = vmatprep.subr.mxu0 0.0
      %631 = vmatpush2.msra.mxu0 0.0
      %632 = vmatprep.mubr.f32.mxu0 0.0
      %633 = vmatmul.mubr.f32.gmra.mxu0 %v566
      %v634 = vpop.f32.mrf.mxu0
      %v635 = vadd.f32 0.0, %v634
      %v636 = vpop.f32.mrf.mxu0
      %637 = vdwg.mxu0
      %v639 = vsel %vm505, %v535, 0
      %641 = vmatprep.subr.mxu0 0.0
      %642 = vmatpush1.msra.mxu0 0.0
      %643 = vmatprep.subr.mxu0 0.0
      %644 = vmatpush1.msra.mxu0 0.0
      %645 = vmatprep.subr.mxu0 0.0
      %646 = vmatpush1.msra.mxu0 0.0
      %647 = vmatprep.subr.mxu0 0.0
      %648 = vmatpush1.msra.mxu0 0.0
      %649 = vmatprep.subr.mxu0 0.0
      %650 = vmatpush1.msra.mxu0 0.0
      %651 = vmatprep.subr.mxu0 0.0
      %652 = vmatpush1.msra.mxu0 0.0
      %653 = vmatprep.subr.mxu0 0.0
      %654 = vmatpush1.msra.mxu0 0.0
      %655 = vmatprep.subr.mxu0 0.0
      %656 = vmatpush1.msra.mxu0 0.0
      %657 = vmatprep.subr.mxu0 0.0
      %658 = vmatpush1.msra.mxu0 0.0
      %659 = vmatprep.subr.mxu0 0.0
      %660 = vmatpush1.msra.mxu0 0.0
      %661 = vmatprep.subr.mxu0 0.0
      %662 = vmatpush1.msra.mxu0 0.0
      %663 = vmatprep.subr.mxu0 0.0
      %664 = vmatpush1.msra.mxu0 0.0
      %665 = vmatprep.subr.mxu0 0.0
      %666 = vmatpush1.msra.mxu0 0.0
      %667 = vmatprep.subr.mxu0 0.0
      %668 = vmatpush1.msra.mxu0 0.0
      %669 = vmatprep.subr.mxu0 0.0
      %670 = vmatpush1.msra.mxu0 %v355
      %671 = vmatprep.subr.mxu0 0.0
      %672 = vmatpush1.msra.mxu0 %v354
      %673 = vmatprep.subr.mxu0 0.0
      %674 = vmatpush2.msra.mxu0 0.0
      %675 = vmatprep.subr.mxu0 0.0
      %676 = vmatpush2.msra.mxu0 0.0
      %677 = vmatprep.subr.mxu0 0.0
      %678 = vmatpush2.msra.mxu0 0.0
      %679 = vmatprep.subr.mxu0 0.0
      %680 = vmatpush2.msra.mxu0 0.0
      %681 = vmatprep.subr.mxu0 0.0
      %682 = vmatpush2.msra.mxu0 0.0
      %683 = vmatprep.subr.mxu0 0.0
      %684 = vmatpush2.msra.mxu0 0.0
      %685 = vmatprep.subr.mxu0 0.0
      %686 = vmatpush2.msra.mxu0 0.0
      %687 = vmatprep.subr.mxu0 0.0
      %688 = vmatpush2.msra.mxu0 0.0
      %689 = vmatprep.subr.mxu0 0.0
      %690 = vmatpush2.msra.mxu0 0.0
      %691 = vmatprep.subr.mxu0 0.0
      %692 = vmatpush2.msra.mxu0 0.0
      %693 = vmatprep.subr.mxu0 0.0
      %694 = vmatpush2.msra.mxu0 0.0
      %695 = vmatprep.subr.mxu0 0.0
      %696 = vmatpush2.msra.mxu0 0.0
      %697 = vmatprep.subr.mxu0 0.0
      %698 = vmatpush2.msra.mxu0 0.0
      %699 = vmatprep.subr.mxu0 0.0
      %700 = vmatpush2.msra.mxu0 0.0
      %701 = vmatprep.subr.mxu0 0.0
      %702 = vmatpush2.msra.mxu0 0.0
      %703 = vmatprep.subr.mxu0 0.0
      %704 = vmatpush2.msra.mxu0 0.0
      %705 = vmatprep.mubr.f32.mxu0 0.0
      %706 = vmatmul.mubr.f32.gmra.mxu0 %v639
      %v707 = vpop.f32.mrf.mxu0
      %v708 = vadd.f32 0.0, %v707
      %v709 = vpop.f32.mrf.mxu0
      %710 = vdwg.mxu0
      %v711 = vadd.f32 %v563, %v635
      %v712 = vadd.f32 %v564, %v708
      %713 = vst [vmem:[#allocation4] sm:$0xff] %v711
      %714 = vst [vmem:[#allocation4 + $0x8] sm:$0xff] %v712
      %715 = vst.msk [vmem:[#allocation2] sm:$0xff] %vm548, %v512
      %716 = vst.msk [vmem:[#allocation2 + $0x8] sm:$0xff] %vm548, %v513
      // Predicated region
      $region41: #{transformer_decoder_forward.23} parent=35 // pred_check
        %p717 = pneg %p333
      $region42: #{transformer_decoder_forward.23} parent=35 // pred_check_branch
        %719 = sbr.rel (%p717) target = $region44
      $region43: #{transformer_decoder_forward.23} parent=35 // pred_region
        %v720 = vld [vmem:[#allocation3] sm:$0xff]
        %v721 = vld [vmem:[#allocation3 + $0x8] sm:$0xff]
        %v722 = vrcp.pop %v720
        %v723 = vrcp.pop %v721
        %v724 = vld [vmem:[#allocation4] sm:$0xff]
        %v725 = vld [vmem:[#allocation4 + $0x8] sm:$0xff]
        %727 = vset.pattern.permute.xlu0 0
        %728 = vperm.xlu0 %727, %v722
        %v729 = vpop.permute.xlu0 %728
        %732 = vset.pattern.permute.xlu0 0
        %733 = vperm.xlu0 %732, %v723
        %v734 = vpop.permute.xlu0 %733
        %v736 = vmul.f32 %v724, %v729
        %v737 = vmul.f32 %v725, %v734
        %738 = vst [vmem:[%s332] sm:$0xff] %v736
        %739 = vst [vmem:[%s332 + $0x8] sm:$0xff] %v737
      $region44: #{transformer_decoder_forward.23} parent=35 // pred_fallthru
        _
      %p740 = scmp.lt.s32.totalorder %s20, 1
      %s741 = scalar_select %p740, %s20, 1
      %p742 = scmp.lt.s32.totalorder %s21, 0
      %s743 = scalar_select %p742, %s21, 0
      %s744 = smul.addr %s741, 2
      %s745 = sadd.s32 %s743, %s744
      %s746 = smul.addr %s745, 8
      %s747 = scalar_lea.vmem %s4, %s746
      // Predicated region
      $region45: #{transformer_decoder_forward.23} parent=35 // pred_check
        %p748 = pneg %p166
      $region46: #{transformer_decoder_forward.23} parent=35 // pred_check_branch
        %750 = sbr.rel (%p748) target = $region48
      $region47: #{transformer_decoder_forward.23} parent=35 // pred_region
        _
      $region48: #{transformer_decoder_forward.23} parent=35 // pred_fallthru
        _
    $region36: #{transformer_decoder_forward.23} parent=5 // pred_fallthru
      _
    %p751 = scmp.le.s32.totalorder 2, %s10
    // Predicated region
    $region49: #{transformer_decoder_forward.23} parent=5 // pred_check
      %p752 = pneg %p751
    $region50: #{transformer_decoder_forward.23} parent=5 // pred_check_branch
      %754 = sbr.rel (%p752) target = $region52
    $region51: #{transformer_decoder_forward.23} parent=5 // pred_region
      %s755 = ssub.s32 %s10, 2
      // Predicated region
      $region53: #{transformer_decoder_forward.23} parent=51 // pred_check
        %p756 = pneg %p172
      $region54: #{transformer_decoder_forward.23} parent=51 // pred_check_branch
        %758 = sbr.rel (%p756) target = $region56
      $region55: #{transformer_decoder_forward.23} parent=51 // pred_region
        %p759 = scmp.lt.s32.totalorder %s23, 1
        %s760 = scalar_select %p759, %s23, 1
        %p761 = scmp.lt.s32.totalorder %s24, 0
        %s762 = scalar_select %p761, %s24, 0
        %s763 = smul.addr %s760, 2
        %s764 = sadd.s32 %s762, %s763
        %s765 = smul.addr %s764, 8
        %s766 = scalar_lea.vmem %s4, %s765
      $region56: #{transformer_decoder_forward.23} parent=51 // pred_fallthru
        _
    $region52: #{transformer_decoder_forward.23} parent=5 // pred_fallthru
      _
  $region6: #{transformer_decoder_forward.23} parent=0 // loop_footer
    %s14 = sadd.s32 1, %s10
  $region7: #{transformer_decoder_forward.23} parent=0 // loop_footer_branch
    %9 = sbr.rel target = $region3
  $region8: #{transformer_decoder_forward.23} parent=0 // loop_exit
    _

// kernel: transformer_decoder_forward.25
$region0: #{transformer_decoder_forward.25}
  #allocation0 [shape = 'u32[]', space=smem, size = 0x4, offset = 0x4, fixed_abs, tag = 'smem constant byte address 0x4 - core index']
  #allocation1 [shape = 'u32[144,128]{1,0:T(1,128)}', space=vmem, size = 0x12000, scoped, tag = 'internal scratch']
  #allocation2 [shape = 'f32[8,256]{1,0:T(8,128)}', space=vmem, size = 0x2000, scoped, tag = 'scratch operand']
  %s0 = inlined_call_operand.vmem [shape: f32[16,256], index: 0, kind: input, shape index: {}]
  %s1 = inlined_call_operand.vmem [shape: f32[256,512], index: 1, kind: input, shape index: {}]
  %s2 = inlined_call_operand.vmem [shape: f32[1,512], index: 2, kind: input, shape index: {}]
  %s3 = inlined_call_operand.vmem [shape: f32[512,256], index: 3, kind: input, shape index: {}]
  %s4 = inlined_call_operand.vmem [shape: f32[1,256], index: 4, kind: input, shape index: {}]
  %s5 = inlined_call_operand.vmem [shape: f32[1,256], index: 5, kind: input, shape index: {}]
  %s6 = inlined_call_operand.vmem [shape: f32[1,256], index: 6, kind: input, shape index: {}]
  %s7 = inlined_call_operand.vmem [shape: f32[16,256], index: 7, kind: output, shape index: {}]
  %s8 = sld [smem:[#allocation0]]
  $region92: #{transformer_decoder_forward.25} parent=0
    _
  %s10 = ssub.s32 1, %s8
  %s11 = scalar_select 0, %s10, %s8
  $region1: #{transformer_decoder_forward.25} parent=0
    #allocation3 [shape = 'u8[524288]{0}', space=vmem, size = 0x80000, scoped, tag = 'input window, operand 1']
    loop: start=0, step=1, limit=6
    $region2: #{transformer_decoder_forward.25} parent=1 // loop_pre_header
      _
    $region3: #{transformer_decoder_forward.25} parent=1 // loop_header
      %s13 = sphi 0, %s17
      %p14 = scmp.ge.s32.totalorder %s13, 6
      %s20 = sphi 0, %s32
      %s21 = sphi 0, %s28
      %s22 = sphi 0, %s20
      %s23 = sphi 0, %s21
      %s24 = sphi 0, %s22
      %s25 = sphi 0, %s23
      %s35 = sphi 0, %s37
      %s38 = sphi 0, %s35
      %s39 = sphi 0, %s38
      %s55 = sphi 0, %s39
      %s61 = sphi 0, %s63
      %s64 = sphi 0, %s61
      %s65 = sphi 0, %s64
      %s81 = sphi 0, %s65
      %s87 = sphi 0, %s89
      %s90 = sphi 0, %s87
      %s91 = sphi 0, %s90
      %s107 = sphi 0, %s91
      %s113 = sphi 0, %s115
      %s116 = sphi 0, %s113
      %s117 = sphi 0, %s116
      %s133 = sphi 0, %s117
      %s137 = sphi 0, %s137
      %s139 = sphi 0, %s137
      %s140 = sphi 0, %s139
      %s154 = sphi 0, %s140
      %s158 = sphi 0, %s158
      %s160 = sphi 0, %s158
      %s161 = sphi 0, %s160
      %s175 = sphi 0, %s161
      %s179 = sphi 0, %s179
      %s181 = sphi 0, %s179
      %s182 = sphi 0, %s181
      %s196 = sphi 0, %s182
      %s202 = sphi 0, %s204
      %s205 = sphi 0, %s202
      %s206 = sphi 0, %s205
      %s222 = sphi 0, %s206
    $region4: #{transformer_decoder_forward.25} parent=1 // loop_header_branch
      %16 = sbr.rel (%p14) target = $region8
    $region5: #{transformer_decoder_forward.25} parent=1 // loop_body
      %s18 = ssub.s32 %s13, 1
      %s19 = ssub.s32 %s13, 2
      %s26 = sadd.s32 1, %s21
      %p27 = scmp.ge.s32.totalorder %s26, 2
      %s28 = scalar_select %p27, 0, %s26
      %s29 = sadd.s32 1, %s20
      %s30 = scalar_select %p27, %s29, %s20
      %p31 = scmp.ge.s32.totalorder %s30, 2
      %s32 = scalar_select %p31, 0, %s30
      %s33 = ssub.s32 %s20, %s32
      %p34 = scmp.eq.s32.totalorder %s33, 0
      %s36 = sadd.s32 %s35, 1
      %s37 = scalar_select %p34, %s35, %s36
      %p40 = pneg %p34
      %p41 = scmp.eq.s32.totalorder %s13, 3
      %p42 = por %p40, %p41
      %p43 = scmp.ne.s32.totalorder %s35, %s38
      %p44 = scmp.eq.s32.totalorder %s13, 0
      %p45 = por %p43, %p44
      %p46 = scmp.ne.s32.totalorder %s35, %s38
      %p47 = scmp.eq.s32.totalorder %s18, 3
      %p48 = por %p46, %p47
      %p49 = scmp.ne.s32.totalorder %s38, %s39
      %p50 = scmp.eq.s32.totalorder %s18, 0
      %p51 = por %p49, %p50
      %p52 = scmp.ne.s32.totalorder %s38, %s39
      %p53 = scmp.eq.s32.totalorder %s19, 3
      %p54 = por %p52, %p53
      %p56 = scmp.ne.s32.totalorder %s39, %s55
      %p57 = scmp.eq.s32.totalorder %s19, 0
      %p58 = por %p56, %p57
      %s59 = ssub.s32 %s21, %s28
      %p60 = scmp.eq.s32.totalorder %s59, 0
      %s62 = sadd.s32 %s61, 1
      %s63 = scalar_select %p60, %s61, %s62
      %p66 = pneg %p60
      %p67 = scmp.eq.s32.totalorder %s13, 3
      %p68 = por %p66, %p67
      %p69 = scmp.ne.s32.totalorder %s61, %s64
      %p70 = scmp.eq.s32.totalorder %s13, 0
      %p71 = por %p69, %p70
      %p72 = scmp.ne.s32.totalorder %s61, %s64
      %p73 = scmp.eq.s32.totalorder %s18, 3
      %p74 = por %p72, %p73
      %p75 = scmp.ne.s32.totalorder %s64, %s65
      %p76 = scmp.eq.s32.totalorder %s18, 0
      %p77 = por %p75, %p76
      %p78 = scmp.ne.s32.totalorder %s64, %s65
      %p79 = scmp.eq.s32.totalorder %s19, 3
      %p80 = por %p78, %p79
      %p82 = scmp.ne.s32.totalorder %s65, %s81
      %p83 = scmp.eq.s32.totalorder %s19, 0
      %p84 = por %p82, %p83
      %s85 = ssub.s32 %s21, %s28
      %p86 = scmp.eq.s32.totalorder %s85, 0
      %s88 = sadd.s32 %s87, 1
      %s89 = scalar_select %p86, %s87, %s88
      %p92 = pneg %p86
      %p93 = scmp.eq.s32.totalorder %s13, 3
      %p94 = por %p92, %p93
      %p95 = scmp.ne.s32.totalorder %s87, %s90
      %p96 = scmp.eq.s32.totalorder %s13, 0
      %p97 = por %p95, %p96
      %p98 = scmp.ne.s32.totalorder %s87, %s90
      %p99 = scmp.eq.s32.totalorder %s18, 3
      %p100 = por %p98, %p99
      %p101 = scmp.ne.s32.totalorder %s90, %s91
      %p102 = scmp.eq.s32.totalorder %s18, 0
      %p103 = por %p101, %p102
      %p104 = scmp.ne.s32.totalorder %s90, %s91
      %p105 = scmp.eq.s32.totalorder %s19, 3
      %p106 = por %p104, %p105
      %p108 = scmp.ne.s32.totalorder %s91, %s107
      %p109 = scmp.eq.s32.totalorder %s19, 0
      %p110 = por %p108, %p109
      %s111 = ssub.s32 %s21, %s28
      %p112 = scmp.eq.s32.totalorder %s111, 0
      %s114 = sadd.s32 %s113, 1
      %s115 = scalar_select %p112, %s113, %s114
      %p118 = pneg %p112
      %p119 = scmp.eq.s32.totalorder %s13, 3
      %p120 = por %p118, %p119
      %p121 = scmp.ne.s32.totalorder %s113, %s116
      %p122 = scmp.eq.s32.totalorder %s13, 0
      %p123 = por %p121, %p122
      %p124 = scmp.ne.s32.totalorder %s113, %s116
      %p125 = scmp.eq.s32.totalorder %s18, 3
      %p126 = por %p124, %p125
      %p127 = scmp.ne.s32.totalorder %s116, %s117
      %p128 = scmp.eq.s32.totalorder %s18, 0
      %p129 = por %p127, %p128
      %p130 = scmp.ne.s32.totalorder %s116, %s117
      %p131 = scmp.eq.s32.totalorder %s19, 3
      %p132 = por %p130, %p131
      %p134 = scmp.ne.s32.totalorder %s117, %s133
      %p135 = scmp.eq.s32.totalorder %s19, 0
      %p136 = por %p134, %p135
      %s138 = sadd.s32 %s137, 1
      %p141 = scmp.eq.s32.totalorder %s13, 3
      %p142 = scmp.ne.s32.totalorder %s137, %s139
      %p143 = scmp.eq.s32.totalorder %s13, 0
      %p144 = por %p142, %p143
      %p145 = scmp.ne.s32.totalorder %s137, %s139
      %p146 = scmp.eq.s32.totalorder %s18, 3
      %p147 = por %p145, %p146
      %p148 = scmp.ne.s32.totalorder %s139, %s140
      %p149 = scmp.eq.s32.totalorder %s18, 0
      %p150 = por %p148, %p149
      %p151 = scmp.ne.s32.totalorder %s139, %s140
      %p152 = scmp.eq.s32.totalorder %s19, 3
      %p153 = por %p151, %p152
      %p155 = scmp.ne.s32.totalorder %s140, %s154
      %p156 = scmp.eq.s32.totalorder %s19, 0
      %p157 = por %p155, %p156
      %s159 = sadd.s32 %s158, 1
      %p162 = scmp.eq.s32.totalorder %s13, 3
      %p163 = scmp.ne.s32.totalorder %s158, %s160
      %p164 = scmp.eq.s32.totalorder %s13, 0
      %p165 = por %p163, %p164
      %p166 = scmp.ne.s32.totalorder %s158, %s160
      %p167 = scmp.eq.s32.totalorder %s18, 3
      %p168 = por %p166, %p167
      %p169 = scmp.ne.s32.totalorder %s160, %s161
      %p170 = scmp.eq.s32.totalorder %s18, 0
      %p171 = por %p169, %p170
      %p172 = scmp.ne.s32.totalorder %s160, %s161
      %p173 = scmp.eq.s32.totalorder %s19, 3
      %p174 = por %p172, %p173
      %p176 = scmp.ne.s32.totalorder %s161, %s175
      %p177 = scmp.eq.s32.totalorder %s19, 0
      %p178 = por %p176, %p177
      %s180 = sadd.s32 %s179, 1
      %p183 = scmp.eq.s32.totalorder %s13, 3
      %p184 = scmp.ne.s32.totalorder %s179, %s181
      %p185 = scmp.eq.s32.totalorder %s13, 0
      %p186 = por %p184, %p185
      %p187 = scmp.ne.s32.totalorder %s179, %s181
      %p188 = scmp.eq.s32.totalorder %s18, 3
      %p189 = por %p187, %p188
      %p190 = scmp.ne.s32.totalorder %s181, %s182
      %p191 = scmp.eq.s32.totalorder %s18, 0
      %p192 = por %p190, %p191
      %p193 = scmp.ne.s32.totalorder %s181, %s182
      %p194 = scmp.eq.s32.totalorder %s19, 3
      %p195 = por %p193, %p194
      %p197 = scmp.ne.s32.totalorder %s182, %s196
      %p198 = scmp.eq.s32.totalorder %s19, 0
      %p199 = por %p197, %p198
      %s200 = ssub.s32 %s20, %s32
      %p201 = scmp.eq.s32.totalorder %s200, 0
      %s203 = sadd.s32 %s202, 1
      %s204 = scalar_select %p201, %s202, %s203
      %p207 = pneg %p201
      %p208 = scmp.eq.s32.totalorder %s13, 3
      %p209 = por %p207, %p208
      %p210 = scmp.ne.s32.totalorder %s202, %s205
      %p211 = scmp.eq.s32.totalorder %s13, 0
      %p212 = por %p210, %p211
      %p213 = scmp.ne.s32.totalorder %s202, %s205
      %p214 = scmp.eq.s32.totalorder %s18, 3
      %p215 = por %p213, %p214
      %p216 = scmp.ne.s32.totalorder %s205, %s206
      %p217 = scmp.eq.s32.totalorder %s18, 0
      %p218 = por %p216, %p217
      %p219 = scmp.ne.s32.totalorder %s205, %s206
      %p220 = scmp.eq.s32.totalorder %s19, 3
      %p221 = por %p219, %p220
      %p223 = scmp.ne.s32.totalorder %s206, %s222
      %p224 = scmp.eq.s32.totalorder %s19, 0
      %p225 = por %p223, %p224
      %p226 = scmp.le.s32.totalorder 1, %s13
      %p227 = scmp.lt.s32.totalorder %s13, 5
      %p228 = pnand %p226, %p227
      %p229 = pneg %p228
      // Predicated region
      $region9: #{transformer_decoder_forward.25} parent=5 // pred_check
        _
      $region10: #{transformer_decoder_forward.25} parent=5 // pred_check_branch
        %231 = sbr.rel (%p228) target = $region12
      $region11: #{transformer_decoder_forward.25} parent=5 // pred_region
        %s232 = ssub.s32 %s13, 1
        // Predicated region
        $region13: #{transformer_decoder_forward.25} parent=11 // pred_check
          %p233 = pneg %p150
        $region14: #{transformer_decoder_forward.25} parent=11 // pred_check_branch
          %235 = sbr.rel (%p233) target = $region16
        $region15: #{transformer_decoder_forward.25} parent=11 // pred_region
          _
        $region16: #{transformer_decoder_forward.25} parent=11 // pred_fallthru
          _
        // Predicated region
        $region17: #{transformer_decoder_forward.25} parent=11 // pred_check
          %p236 = pneg %p171
        $region18: #{transformer_decoder_forward.25} parent=11 // pred_check_branch
          %238 = sbr.rel (%p236) target = $region20
        $region19: #{transformer_decoder_forward.25} parent=11 // pred_region
          _
        $region20: #{transformer_decoder_forward.25} parent=11 // pred_fallthru
          _
        // Predicated region
        $region21: #{transformer_decoder_forward.25} parent=11 // pred_check
          %p239 = pneg %p192
        $region22: #{transformer_decoder_forward.25} parent=11 // pred_check_branch
          %241 = sbr.rel (%p239) target = $region24
        $region23: #{transformer_decoder_forward.25} parent=11 // pred_region
          _
        $region24: #{transformer_decoder_forward.25} parent=11 // pred_fallthru
          _
      $region12: #{transformer_decoder_forward.25} parent=5 // pred_fallthru
        _
      %p242 = scmp.lt.s32.totalorder %s13, 4
      // Predicated region
      $region25: #{transformer_decoder_forward.25} parent=5 // pred_check
        %p243 = pneg %p242
      $region26: #{transformer_decoder_forward.25} parent=5 // pred_check_branch
        %245 = sbr.rel (%p243) target = $region28
      $region27: #{transformer_decoder_forward.25} parent=5 // pred_region
        // Predicated region
        $region29: #{transformer_decoder_forward.25} parent=27 // pred_check
          %p246 = pneg %p45
        $region30: #{transformer_decoder_forward.25} parent=27 // pred_check_branch
          %248 = sbr.rel (%p246) target = $region32
        $region31: #{transformer_decoder_forward.25} parent=27 // pred_region
          %p249 = scmp.lt.s32.totalorder %s20, 1
          %s250 = scalar_select %p249, %s20, 1
          %s251 = smul.addr %s250, 2
          %s252 = smul.addr %s251, 8
          %s253 = scalar_lea.vmem %s0, %s252
        $region32: #{transformer_decoder_forward.25} parent=27 // pred_fallthru
          _
        // Predicated region
        $region33: #{transformer_decoder_forward.25} parent=27 // pred_check
          %p254 = pneg %p71
        $region34: #{transformer_decoder_forward.25} parent=27 // pred_check_branch
          %256 = sbr.rel (%p254) target = $region36
        $region35: #{transformer_decoder_forward.25} parent=27 // pred_region
          %s257 = sand.u32 %s61, 1
          %s258 = sand.u32 %s61, 1
          %s259 = smul.addr %s258, 512
          %s260 = scalar_lea.vmem [#allocation3], %s259
          %s261 = smul.u32 2, %s21
          %s262 = smul.addr %s261, 8
          %s263 = scalar_lea.vmem %s1, %s262
          // Predicated region
          $region37: #{transformer_decoder_forward.25} parent=35 // pred_check
            _
          $region38: #{transformer_decoder_forward.25} parent=35 // pred_check_branch
            %265 = sbr.rel (0) target = $region40
          $region39: #{transformer_decoder_forward.25} parent=35 // pred_region
            // Predicated region
            $region41: #{transformer_decoder_forward.25} parent=39 // pred_check
              _
            $region42: #{transformer_decoder_forward.25} parent=39 // pred_check_branch
              %267 = sbr.rel (0) target = $region44
            $region43: #{transformer_decoder_forward.25} parent=39 // pred_region
              loop: start=0, step=1, limit=1
              $region45: #{transformer_decoder_forward.25} parent=43 // loop_pre_header
                _
              $region46: #{transformer_decoder_forward.25} parent=43 // loop_header
                %s269 = sphi 0, %s273
                %p270 = scmp.ge.s32.totalorder %s269, 1
                %s274 = sphi %s263, %s263
                %s275 = sphi %s260, %s260
              $region47: #{transformer_decoder_forward.25} parent=43 // loop_header_branch
                %272 = sbr.rel (%p270) target = $region51
              $region48: #{transformer_decoder_forward.25} parent=43 // loop_body
                %v276 = vld [vmem:[%s274] sm:$0xff]
                %277 = vst [vmem:[%s275] sm:$0xff] %v276
                %v278 = vld [vmem:[%s274 + $0x8] sm:$0xff]
                %279 = vst [vmem:[%s275 + $0x8] sm:$0xff] %v278
                %v280 = vld [vmem:[%s274 + $0x20] sm:$0xff]
                %281 = vst [vmem:[%s275 + $0x10] sm:$0xff] %v280
                %v282 = vld [vmem:[%s274 + $0x28] sm:$0xff]
                %283 = vst [vmem:[%s275 + $0x18] sm:$0xff] %v282
                %v284 = vld [vmem:[%s274 + $0x40] sm:$0xff]
                %285 = vst [vmem:[%s275 + $0x20] sm:$0xff] %v284
                %v286 = vld [vmem:[%s274 + $0x48] sm:$0xff]
                %287 = vst [vmem:[%s275 + $0x28] sm:$0xff] %v286
                %v288 = vld [vmem:[%s274 + $0x60] sm:$0xff]
                %289 = vst [vmem:[%s275 + $0x30] sm:$0xff] %v288
                %v290 = vld [vmem:[%s274 + $0x68] sm:$0xff]
                %291 = vst [vmem:[%s275 + $0x38] sm:$0xff] %v290
                %v292 = vld [vmem:[%s274 + $0x80] sm:$0xff]
                %293 = vst [vmem:[%s275 + $0x40] sm:$0xff] %v292
                %v294 = vld [vmem:[%s274 + $0x88] sm:$0xff]
                %295 = vst [vmem:[%s275 + $0x48] sm:$0xff] %v294
                %v296 = vld [vmem:[%s274 + $0xa0] sm:$0xff]
                %297 = vst [vmem:[%s275 + $0x50] sm:$0xff] %v296
                %v298 = vld [vmem:[%s274 + $0xa8] sm:$0xff]
                %299 = vst [vmem:[%s275 + $0x58] sm:$0xff] %v298
                %v300 = vld [vmem:[%s274 + $0xc0] sm:$0xff]
                %301 = vst [vmem:[%s275 + $0x60] sm:$0xff] %v300
                %v302 = vld [vmem:[%s274 + $0xc8] sm:$0xff]
                %303 = vst [vmem:[%s275 + $0x68] sm:$0xff] %v302
                %v304 = vld [vmem:[%s274 + $0xe0] sm:$0xff]
                %305 = vst [vmem:[%s275 + $0x70] sm:$0xff] %v304
                %v306 = vld [vmem:[%s274 + $0xe8] sm:$0xff]
                %307 = vst [vmem:[%s275 + $0x78] sm:$0xff] %v306
                %v308 = vld [vmem:[%s274 + $0x100] sm:$0xff]
                %309 = vst [vmem:[%s275 + $0x80] sm:$0xff] %v308
                %v310 = vld [vmem:[%s274 + $0x108] sm:$0xff]
                %311 = vst [vmem:[%s275 + $0x88] sm:$0xff] %v310
                %v312 = vld [vmem:[%s274 + $0x120] sm:$0xff]
                %313 = vst [vmem:[%s275 + $0x90] sm:$0xff] %v312
                %v314 = vld [vmem:[%s274 + $0x128] sm:$0xff]
                %315 = vst [vmem:[%s275 + $0x98] sm:$0xff] %v314
                %v316 = vld [vmem:[%s274 + $0x140] sm:$0xff]
                %317 = vst [vmem:[%s275 + $0xa0] sm:$0xff] %v316
                %v318 = vld [vmem:[%s274 + $0x148] sm:$0xff]
                %319 = vst [vmem:[%s275 + $0xa8] sm:$0xff] %v318
                %v320 = vld [vmem:[%s274 + $0x160] sm:$0xff]
                %321 = vst [vmem:[%s275 + $0xb0] sm:$0xff] %v320
                %v322 = vld [vmem:[%s274 + $0x168] sm:$0xff]
                %323 = vst [vmem:[%s275 + $0xb8] sm:$0xff] %v322
                %v324 = vld [vmem:[%s274 + $0x180] sm:$0xff]
                %325 = vst [vmem:[%s275 + $0xc0] sm:$0xff] %v324
                %v326 = vld [vmem:[%s274 + $0x188] sm:$0xff]
                %327 = vst [vmem:[%s275 + $0xc8] sm:$0xff] %v326
                %v328 = vld [vmem:[%s274 + $0x1a0] sm:$0xff]
                %329 = vst [vmem:[%s275 + $0xd0] sm:$0xff] %v328
                %v330 = vld [vmem:[%s274 + $0x1a8] sm:$0xff]
                %331 = vst [vmem:[%s275 + $0xd8] sm:$0xff] %v330
                %v332 = vld [vmem:[%s274 + $0x1c0] sm:$0xff]
                %333 = vst [vmem:[%s275 + $0xe0] sm:$0xff] %v332
                %v334 = vld [vmem:[%s274 + $0x1c8] sm:$0xff]
                %335 = vst [vmem:[%s275 + $0xe8] sm:$0xff] %v334
                %v336 = vld [vmem:[%s274 + $0x1e0] sm:$0xff]
                %337 = vst [vmem:[%s275 + $0xf0] sm:$0xff] %v336
                %v338 = vld [vmem:[%s274 + $0x1e8] sm:$0xff]
                %339 = vst [vmem:[%s275 + $0xf8] sm:$0xff] %v338
                %v340 = vld [vmem:[%s274 + $0x200] sm:$0xff]
                %341 = vst [vmem:[%s275 + $0x100] sm:$0xff] %v340
                %v342 = vld [vmem:[%s274 + $0x208] sm:$0xff]
                %343 = vst [vmem:[%s275 + $0x108] sm:$0xff] %v342
                %v344 = vld [vmem:[%s274 + $0x220] sm:$0xff]
                %345 = vst [vmem:[%s275 + $0x110] sm:$0xff] %v344
                %v346 = vld [vmem:[%s274 + $0x228] sm:$0xff]
                %347 = vst [vmem:[%s275 + $0x118] sm:$0xff] %v346
                %v348 = vld [vmem:[%s274 + $0x240] sm:$0xff]
                %349 = vst [vmem:[%s275 + $0x120] sm:$0xff] %v348
                %v350 = vld [vmem:[%s274 + $0x248] sm:$0xff]
                %351 = vst [vmem:[%s275 + $0x128] sm:$0xff] %v350
                %v352 = vld [vmem:[%s274 + $0x260] sm:$0xff]
                %353 = vst [vmem:[%s275 + $0x130] sm:$0xff] %v352
                %v354 = vld [vmem:[%s274 + $0x268] sm:$0xff]
                %355 = vst [vmem:[%s275 + $0x138] sm:$0xff] %v354
                %v356 = vld [vmem:[%s274 + $0x280] sm:$0xff]
                %357 = vst [vmem:[%s275 + $0x140] sm:$0xff] %v356
                %v358 = vld [vmem:[%s274 + $0x288] sm:$0xff]
                %359 = vst [vmem:[%s275 + $0x148] sm:$0xff] %v358
                %v360 = vld [vmem:[%s274 + $0x2a0] sm:$0xff]
                %361 = vst [vmem:[%s275 + $0x150] sm:$0xff] %v360
                %v362 = vld [vmem:[%s274 + $0x2a8] sm:$0xff]
                %363 = vst [vmem:[%s275 + $0x158] sm:$0xff] %v362
                %v364 = vld [vmem:[%s274 + $0x2c0] sm:$0xff]
                %365 = vst [vmem:[%s275 + $0x160] sm:$0xff] %v364
                %v366 = vld [vmem:[%s274 + $0x2c8] sm:$0xff]
                %367 = vst [vmem:[%s275 + $0x168] sm:$0xff] %v366
                %v368 = vld [vmem:[%s274 + $0x2e0] sm:$0xff]
                %369 = vst [vmem:[%s275 + $0x170] sm:$0xff] %v368
                %v370 = vld [vmem:[%s274 + $0x2e8] sm:$0xff]
                %371 = vst [vmem:[%s275 + $0x178] sm:$0xff] %v370
                %v372 = vld [vmem:[%s274 + $0x300] sm:$0xff]
                %373 = vst [vmem:[%s275 + $0x180] sm:$0xff] %v372
                %v374 = vld [vmem:[%s274 + $0x308] sm:$0xff]
                %375 = vst [vmem:[%s275 + $0x188] sm:$0xff] %v374
                %v376 = vld [vmem:[%s274 + $0x320] sm:$0xff]
                %377 = vst [vmem:[%s275 + $0x190] sm:$0xff] %v376
                %v378 = vld [vmem:[%s274 + $0x328] sm:$0xff]
                %379 = vst [vmem:[%s275 + $0x198] sm:$0xff] %v378
                %v380 = vld [vmem:[%s274 + $0x340] sm:$0xff]
                %381 = vst [vmem:[%s275 + $0x1a0] sm:$0xff] %v380
                %v382 = vld [vmem:[%s274 + $0x348] sm:$0xff]
                %383 = vst [vmem:[%s275 + $0x1a8] sm:$0xff] %v382
                %v384 = vld [vmem:[%s274 + $0x360] sm:$0xff]
                %385 = vst [vmem:[%s275 + $0x1b0] sm:$0xff] %v384
                %v386 = vld [vmem:[%s274 + $0x368] sm:$0xff]
                %387 = vst [vmem:[%s275 + $0x1b8] sm:$0xff] %v386
                %v388 = vld [vmem:[%s274 + $0x380] sm:$0xff]
                %389 = vst [vmem:[%s275 + $0x1c0] sm:$0xff] %v388
                %v390 = vld [vmem:[%s274 + $0x388] sm:$0xff]
                %391 = vst [vmem:[%s275 + $0x1c8] sm:$0xff] %v390
                %v392 = vld [vmem:[%s274 + $0x3a0] sm:$0xff]
                %393 = vst [vmem:[%s275 + $0x1d0] sm:$0xff] %v392
                %v394 = vld [vmem:[%s274 + $0x3a8] sm:$0xff]
                %395 = vst [vmem:[%s275 + $0x1d8] sm:$0xff] %v394
                %v396 = vld [vmem:[%s274 + $0x3c0] sm:$0xff]
                %397 = vst [vmem:[%s275 + $0x1e0] sm:$0xff] %v396
                %v398 = vld [vmem:[%s274 + $0x3c8] sm:$0xff]
                %399 = vst [vmem:[%s275 + $0x1e8] sm:$0xff] %v398
                %v400 = vld [vmem:[%s274 + $0x3e0] sm:$0xff]
                %401 = vst [vmem:[%s275 + $0x1f0] sm:$0xff] %v400
                %v402 = vld [vmem:[%s274 + $0x3e8] sm:$0xff]
                %403 = vst [vmem:[%s275 + $0x1f8] sm:$0xff] %v402
              $region49: #{transformer_decoder_forward.25} parent=43 // loop_footer
                %s273 = sadd.s32 1, %s269
              $region50: #{transformer_decoder_forward.25} parent=43 // loop_footer_branch
                %268 = sbr.rel target = $region46
              $region51: #{transformer_decoder_forward.25} parent=43 // loop_exit
                _
            $region44: #{transformer_decoder_forward.25} parent=39 // pred_fallthru
              _
            // Predicated region
            $region52: #{transformer_decoder_forward.25} parent=39 // pred_check
              _
            $region53: #{transformer_decoder_forward.25} parent=39 // pred_check_branch
              %405 = sbr.rel target = $region55
            $region54: #{transformer_decoder_forward.25} parent=39 // pred_region
              _
            $region55: #{transformer_decoder_forward.25} parent=39 // pred_fallthru
              _
          $region40: #{transformer_decoder_forward.25} parent=35 // pred_fallthru
            _
          %406 = vnop
        $region36: #{transformer_decoder_forward.25} parent=27 // pred_fallthru
          _
        // Predicated region
        $region56: #{transformer_decoder_forward.25} parent=27 // pred_check
          %p407 = pneg %p97
        $region57: #{transformer_decoder_forward.25} parent=27 // pred_check_branch
          %409 = sbr.rel (%p407) target = $region59
        $region58: #{transformer_decoder_forward.25} parent=27 // pred_region
          %s410 = smul.u32 2, %s21
          %p411 = scmp.lt.s32.totalorder %s410, 3
          %s412 = scalar_select %p411, %s410, 3
          %s413 = scalar_lea.vmem %s2, %s412
          %s414 = smul.u32 2, %s21
        $region59: #{transformer_decoder_forward.25} parent=27 // pred_fallthru
          _
        // Predicated region
        $region60: #{transformer_decoder_forward.25} parent=27 // pred_check
          %p415 = pneg %p123
        $region61: #{transformer_decoder_forward.25} parent=27 // pred_check_branch
          %417 = sbr.rel (%p415) target = $region63
        $region62: #{transformer_decoder_forward.25} parent=27 // pred_region
          %s418 = smul.u32 32, %s21
          %p419 = scmp.lt.s32.totalorder %s418, 63
          %s420 = scalar_select %p419, %s418, 63
          %s421 = smul.addr %s420, 2
          %s422 = smul.addr %s421, 8
          %s423 = scalar_lea.vmem %s3, %s422
          %s424 = smul.u32 32, %s21
        $region63: #{transformer_decoder_forward.25} parent=27 // pred_fallthru
          _
      $region28: #{transformer_decoder_forward.25} parent=5 // pred_fallthru
        _
      %p425 = scmp.le.s32.totalorder 1, %s13
      %p426 = scmp.lt.s32.totalorder %s13, 5
      %p427 = pnand %p425, %p426
      %p428 = pneg %p427
      // Predicated region
      $region64: #{transformer_decoder_forward.25} parent=5 // pred_check
        _
      $region65: #{transformer_decoder_forward.25} parent=5 // pred_check_branch
        %430 = sbr.rel (%p427) target = $region67
      $region66: #{transformer_decoder_forward.25} parent=5 // pred_region
        %s431 = ssub.s32 %s13, 1
        %s432 = sand.u32 %s64, 1
        %s433 = sand.u32 %s64, 1
        %s434 = smul.addr %s433, 512
        %s435 = scalar_lea.vmem [#allocation3], %s434
        // Predicated region
        $region68: #{transformer_decoder_forward.25} parent=66 // pred_check
          %p436 = pneg %p77
        $region69: #{transformer_decoder_forward.25} parent=66 // pred_check_branch
          %438 = sbr.rel (%p436) target = $region71
        $region70: #{transformer_decoder_forward.25} parent=66 // pred_region
          _
        $region71: #{transformer_decoder_forward.25} parent=66 // pred_fallthru
          _
        %p439 = scmp.lt.s32.totalorder %s22, 1
        %s440 = scalar_select %p439, %s22, 1
        %s441 = smul.addr %s440, 2
        %s442 = smul.addr %s441, 8
        %s443 = scalar_lea.vmem %s0, %s442
        %p444 = pneg %p51
        %p445 = pneg %p48
        %s446 = sand.u32 %s64, 1
        %s447 = sand.u32 %s64, 1
        %s448 = smul.addr %s447, 512
        %s449 = scalar_lea.vmem [#allocation3], %s448
        %p450 = pneg %p77
        %p451 = pneg %p74
        %s452 = smul.u32 2, %s23
        %p453 = scmp.lt.s32.totalorder %s452, 3
        %s454 = scalar_select %p453, %s452, 3
        %s455 = scalar_lea.vmem %s2, %s454
        %p456 = pneg %p103
        %p457 = pneg %p100
        %s458 = smul.u32 32, %s23
        %p459 = scmp.lt.s32.totalorder %s458, 63
        %s460 = scalar_select %p459, %s458, 63
        %s461 = smul.addr %s460, 2
        %s462 = smul.addr %s461, 8
        %s463 = scalar_lea.vmem %s3, %s462
        %p464 = pneg %p129
        %p465 = pneg %p126
        %p466 = pneg %p150
        %p467 = pneg %p147
        %p468 = pneg %p171
        %p469 = pneg %p168
        %p470 = pneg %p192
        %p471 = pneg %p189
        %p472 = pneg %p218
        %p473 = pneg %p215
        %p474 = scmp.lt.s32.totalorder %s22, 1
        %s475 = scalar_select %p474, %s22, 1
        %s476 = smul.addr %s475, 2
        %s477 = smul.addr %s476, 8
        %s478 = scalar_lea.vmem %s7, %s477
        %p479 = scmp.lt.s32.totalorder %s22, 1
        %s480 = scalar_select %p479, %s22, 1
        %s481 = smul.addr %s480, 2
        %s482 = smul.addr %s481, 8
        %s483 = scalar_lea.vmem %s0, %s482
        %s484 = smul.u32 2, %s23
        %s485 = smul.u32 2, %s23
        %p486 = scmp.lt.s32.totalorder %s485, 3
        %s487 = scalar_select %p486, %s485, 3
        %s488 = scalar_lea.vmem %s2, %s487
        %s489 = smul.u32 2, %s23
        %s490 = smul.u32 32, %s23
        %p491 = scmp.lt.s32.totalorder %s490, 63
        %s492 = scalar_select %p491, %s490, 63
        %s493 = smul.addr %s492, 2
        %s494 = smul.addr %s493, 8
        %s495 = scalar_lea.vmem %s3, %s494
        %s496 = smul.u32 32, %s23
        %p497 = scmp.lt.s32.totalorder %s22, 1
        %s498 = scalar_select %p497, %s22, 1
        %s499 = smul.addr %s498, 2
        %s500 = smul.addr %s499, 8
        %s501 = scalar_lea.vmem %s7, %s500
        %v502 = vld [vmem:[%s483] sm:$0xff]
        %v503 = vld [vmem:[%s483 + $0x8] sm:$0xff]
        %p504 = scmp.eq.s32.totalorder %s23, 0
        // Predicated region
        $region72: #{transformer_decoder_forward.25} parent=66 // pred_check
          %p505 = pneg %p504
        $region73: #{transformer_decoder_forward.25} parent=66 // pred_check_branch
          %507 = sbr.rel (%p505) target = $region75
        $region74: #{transformer_decoder_forward.25} parent=66 // pred_region
          %v508 = vld [vmem:[%s4] sm:$0x3]
          %v510 = vlaneseq
          %v511 = vshrl.u32 %v510, 7
          %v512 = vsub.s32 0, %v511
          %v513 = vrot.slane %v508, %v512
          %v514 = vlaneseq
          %v515 = vshrl.u32 %v514, 7
          %v516 = vsub.s32 1, %v515
          %v517 = vrot.slane %v508, %v516
          %v520 = vadd.f32 %v502, %v513
          %v521 = vadd.f32 %v503, %v517
          %522 = vst [vmem:[#allocation2] sm:$0xff] %v520
          %523 = vst [vmem:[#allocation2 + $0x8] sm:$0xff] %v521
        $region75: #{transformer_decoder_forward.25} parent=66 // pred_fallthru
          _
        %v524 = vld [vmem:[%s435] sm:$0xff]
        %v525 = vld [vmem:[%s435 + $0x8] sm:$0xff]
        %v526 = vld [vmem:[%s435 + $0x10] sm:$0xff]
        %v527 = vld [vmem:[%s435 + $0x18] sm:$0xff]
        %v528 = vld [vmem:[%s435 + $0x20] sm:$0xff]
        %v529 = vld [vmem:[%s435 + $0x28] sm:$0xff]
        %v530 = vld [vmem:[%s435 + $0x30] sm:$0xff]
        %v531 = vld [vmem:[%s435 + $0x38] sm:$0xff]
        %v532 = vld [vmem:[%s435 + $0x40] sm:$0xff]
        %v533 = vld [vmem:[%s435 + $0x48] sm:$0xff]
        %v534 = vld [vmem:[%s435 + $0x50] sm:$0xff]
        %v535 = vld [vmem:[%s435 + $0x58] sm:$0xff]
        %v536 = vld [vmem:[%s435 + $0x60] sm:$0xff]
        %v537 = vld [vmem:[%s435 + $0x68] sm:$0xff]
        %v538 = vld [vmem:[%s435 + $0x70] sm:$0xff]
        %v539 = vld [vmem:[%s435 + $0x78] sm:$0xff]
        %v540 = vld [vmem:[%s435 + $0x80] sm:$0xff]
        %v541 = vld [vmem:[%s435 + $0x88] sm:$0xff]
        %v542 = vld [vmem:[%s435 + $0x90] sm:$0xff]
        %v543 = vld [vmem:[%s435 + $0x98] sm:$0xff]
        %v544 = vld [vmem:[%s435 + $0xa0] sm:$0xff]
        %v545 = vld [vmem:[%s435 + $0xa8] sm:$0xff]
        %v546 = vld [vmem:[%s435 + $0xb0] sm:$0xff]
        %v547 = vld [vmem:[%s435 + $0xb8] sm:$0xff]
        %v548 = vld [vmem:[%s435 + $0xc0] sm:$0xff]
        %v549 = vld [vmem:[%s435 + $0xc8] sm:$0xff]
        %v550 = vld [vmem:[%s435 + $0xd0] sm:$0xff]
        %v551 = vld [vmem:[%s435 + $0xd8] sm:$0xff]
        %v552 = vld [vmem:[%s435 + $0xe0] sm:$0xff]
        %v553 = vld [vmem:[%s435 + $0xe8] sm:$0xff]
        %v554 = vld [vmem:[%s435 + $0xf0] sm:$0xff]
        %v555 = vld [vmem:[%s435 + $0xf8] sm:$0xff]
        %v556 = vld [vmem:[%s435 + $0x100] sm:$0xff]
        %v557 = vld [vmem:[%s435 + $0x108] sm:$0xff]
        %v558 = vld [vmem:[%s435 + $0x110] sm:$0xff]
        %v559 = vld [vmem:[%s435 + $0x118] sm:$0xff]
        %v560 = vld [vmem:[%s435 + $0x120] sm:$0xff]
        %v561 = vld [vmem:[%s435 + $0x128] sm:$0xff]
        %v562 = vld [vmem:[%s435 + $0x130] sm:$0xff]
        %v563 = vld [vmem:[%s435 + $0x138] sm:$0xff]
        %v564 = vld [vmem:[%s435 + $0x140] sm:$0xff]
        %v565 = vld [vmem:[%s435 + $0x148] sm:$0xff]
        %v566 = vld [vmem:[%s435 + $0x150] sm:$0xff]
        %v567 = vld [vmem:[%s435 + $0x158] sm:$0xff]
        %v568 = vld [vmem:[%s435 + $0x160] sm:$0xff]
        %v569 = vld [vmem:[%s435 + $0x168] sm:$0xff]
        %v570 = vld [vmem:[%s435 + $0x170] sm:$0xff]
        %v571 = vld [vmem:[%s435 + $0x178] sm:$0xff]
        %v572 = vld [vmem:[%s435 + $0x180] sm:$0xff]
        %v573 = vld [vmem:[%s435 + $0x188] sm:$0xff]
        %v574 = vld [vmem:[%s435 + $0x190] sm:$0xff]
        %v575 = vld [vmem:[%s435 + $0x198] sm:$0xff]
        %v576 = vld [vmem:[%s435 + $0x1a0] sm:$0xff]
        %v577 = vld [vmem:[%s435 + $0x1a8] sm:$0xff]
        %v578 = vld [vmem:[%s435 + $0x1b0] sm:$0xff]
        %v579 = vld [vmem:[%s435 + $0x1b8] sm:$0xff]
        %v580 = vld [vmem:[%s435 + $0x1c0] sm:$0xff]
        %v581 = vld [vmem:[%s435 + $0x1c8] sm:$0xff]
        %v582 = vld [vmem:[%s435 + $0x1d0] sm:$0xff]
        %v583 = vld [vmem:[%s435 + $0x1d8] sm:$0xff]
        %v584 = vld [vmem:[%s435 + $0x1e0] sm:$0xff]
        %v585 = vld [vmem:[%s435 + $0x1e8] sm:$0xff]
        %v586 = vld [vmem:[%s435 + $0x1f0] sm:$0xff]
        %v587 = vld [vmem:[%s435 + $0x1f8] sm:$0xff]
        %v588 = vld [vmem:[%s488] sm:$0x3]
        %v590 = vlaneseq
        %v591 = vshrl.u32 %v590, 7
        %v592 = vsub.s32 0, %v591
        %v593 = vrot.slane %v588, %v592
        %v594 = vlaneseq
        %v595 = vshrl.u32 %v594, 7
        %v596 = vsub.s32 1, %v595
        %v597 = vrot.slane %v588, %v596
        %600 = vmatprep.subr.mxu0 %v555
        %601 = vmatpush1.msra.mxu0 %v554
        %602 = vmatprep.subr.mxu0 %v553
        %603 = vmatpush1.msra.mxu0 %v552
        %604 = vmatprep.subr.mxu0 %v551
        %605 = vmatpush1.msra.mxu0 %v550
        %606 = vmatprep.subr.mxu0 %v549
        %607 = vmatpush1.msra.mxu0 %v548
        %608 = vmatprep.subr.mxu0 %v547
        %609 = vmatpush1.msra.mxu0 %v546
        %610 = vmatprep.subr.mxu0 %v545
        %611 = vmatpush1.msra.mxu0 %v544
        %612 = vmatprep.subr.mxu0 %v543
        %613 = vmatpush1.msra.mxu0 %v542
        %614 = vmatprep.subr.mxu0 %v541
        %615 = vmatpush1.msra.mxu0 %v540
        %616 = vmatprep.subr.mxu0 %v539
        %617 = vmatpush1.msra.mxu0 %v538
        %618 = vmatprep.subr.mxu0 %v537
        %619 = vmatpush1.msra.mxu0 %v536
        %620 = vmatprep.subr.mxu0 %v535
        %621 = vmatpush1.msra.mxu0 %v534
        %622 = vmatprep.subr.mxu0 %v533
        %623 = vmatpush1.msra.mxu0 %v532
        %624 = vmatprep.subr.mxu0 %v531
        %625 = vmatpush1.msra.mxu0 %v530
        %626 = vmatprep.subr.mxu0 %v529
        %627 = vmatpush1.msra.mxu0 %v528
        %628 = vmatprep.subr.mxu0 %v527
        %629 = vmatpush1.msra.mxu0 %v526
        %630 = vmatprep.subr.mxu0 %v525
        %631 = vmatpush1.msra.mxu0 %v524
        %632 = vmatprep.subr.mxu0 %v587
        %633 = vmatpush2.msra.mxu0 %v586
        %634 = vmatprep.subr.mxu0 %v585
        %635 = vmatpush2.msra.mxu0 %v584
        %636 = vmatprep.subr.mxu0 %v583
        %637 = vmatpush2.msra.mxu0 %v582
        %638 = vmatprep.subr.mxu0 %v581
        %639 = vmatpush2.msra.mxu0 %v580
        %640 = vmatprep.subr.mxu0 %v579
        %641 = vmatpush2.msra.mxu0 %v578
        %642 = vmatprep.subr.mxu0 %v577
        %643 = vmatpush2.msra.mxu0 %v576
        %644 = vmatprep.subr.mxu0 %v575
        %645 = vmatpush2.msra.mxu0 %v574
        %646 = vmatprep.subr.mxu0 %v573
        %647 = vmatpush2.msra.mxu0 %v572
        %648 = vmatprep.subr.mxu0 %v571
        %649 = vmatpush2.msra.mxu0 %v570
        %650 = vmatprep.subr.mxu0 %v569
        %651 = vmatpush2.msra.mxu0 %v568
        %652 = vmatprep.subr.mxu0 %v567
        %653 = vmatpush2.msra.mxu0 %v566
        %654 = vmatprep.subr.mxu0 %v565
        %655 = vmatpush2.msra.mxu0 %v564
        %656 = vmatprep.subr.mxu0 %v563
        %657 = vmatpush2.msra.mxu0 %v562
        %658 = vmatprep.subr.mxu0 %v561
        %659 = vmatpush2.msra.mxu0 %v560
        %660 = vmatprep.subr.mxu0 %v559
        %661 = vmatpush2.msra.mxu0 %v558
        %662 = vmatprep.subr.mxu0 %v557
        %663 = vmatpush2.msra.mxu0 %v556
        %664 = vmatprep.mubr.f32.mxu0 %v503
        %665 = vmatmul.mubr.f32.gmra.mxu0 %v502
        %v666 = vpop.f32.mrf.mxu0
        %v667 = vadd.f32 %v593, %v666
        %v668 = vpop.f32.mrf.mxu0
        %v669 = vadd.f32 %v597, %v668
        %670 = vdwg.mxu0
        %v671 = vmax.f32 %v667, 0.0
        %v672 = vmax.f32 %v669, 0.0
        %v673 = vld [vmem:[#allocation2] sm:$0xff]
        %v674 = vld [vmem:[#allocation2 + $0x8] sm:$0xff]
        %v675 = vld [vmem:[%s495] sm:$0xff]
        %v676 = vld [vmem:[%s495 + $0x8] sm:$0xff]
        %v677 = vld [vmem:[%s495 + $0x10] sm:$0xff]
        %v678 = vld [vmem:[%s495 + $0x18] sm:$0xff]
        %v679 = vld [vmem:[%s495 + $0x20] sm:$0xff]
        %v680 = vld [vmem:[%s495 + $0x28] sm:$0xff]
        %v681 = vld [vmem:[%s495 + $0x30] sm:$0xff]
        %v682 = vld [vmem:[%s495 + $0x38] sm:$0xff]
        %v683 = vld [vmem:[%s495 + $0x40] sm:$0xff]
        %v684 = vld [vmem:[%s495 + $0x48] sm:$0xff]
        %v685 = vld [vmem:[%s495 + $0x50] sm:$0xff]
        %v686 = vld [vmem:[%s495 + $0x58] sm:$0xff]
        %v687 = vld [vmem:[%s495 + $0x60] sm:$0xff]
        %v688 = vld [vmem:[%s495 + $0x68] sm:$0xff]
        %v689 = vld [vmem:[%s495 + $0x70] sm:$0xff]
        %v690 = vld [vmem:[%s495 + $0x78] sm:$0xff]
        %v691 = vld [vmem:[%s495 + $0x80] sm:$0xff]
        %v692 = vld [vmem:[%s495 + $0x88] sm:$0xff]
        %v693 = vld [vmem:[%s495 + $0x90] sm:$0xff]
        %v694 = vld [vmem:[%s495 + $0x98] sm:$0xff]
        %v695 = vld [vmem:[%s495 + $0xa0] sm:$0xff]
        %v696 = vld [vmem:[%s495 + $0xa8] sm:$0xff]
        %v697 = vld [vmem:[%s495 + $0xb0] sm:$0xff]
        %v698 = vld [vmem:[%s495 + $0xb8] sm:$0xff]
        %v699 = vld [vmem:[%s495 + $0xc0] sm:$0xff]
        %v700 = vld [vmem:[%s495 + $0xc8] sm:$0xff]
        %v701 = vld [vmem:[%s495 + $0xd0] sm:$0xff]
        %v702 = vld [vmem:[%s495 + $0xd8] sm:$0xff]
        %v703 = vld [vmem:[%s495 + $0xe0] sm:$0xff]
        %v704 = vld [vmem:[%s495 + $0xe8] sm:$0xff]
        %v705 = vld [vmem:[%s495 + $0xf0] sm:$0xff]
        %v706 = vld [vmem:[%s495 + $0xf8] sm:$0xff]
        %v707 = vld [vmem:[%s495 + $0x100] sm:$0xff]
        %v708 = vld [vmem:[%s495 + $0x108] sm:$0xff]
        %v709 = vld [vmem:[%s495 + $0x110] sm:$0xff]
        %v710 = vld [vmem:[%s495 + $0x118] sm:$0xff]
        %v711 = vld [vmem:[%s495 + $0x120] sm:$0xff]
        %v712 = vld [vmem:[%s495 + $0x128] sm:$0xff]
        %v713 = vld [vmem:[%s495 + $0x130] sm:$0xff]
        %v714 = vld [vmem:[%s495 + $0x138] sm:$0xff]
        %v715 = vld [vmem:[%s495 + $0x140] sm:$0xff]
        %v716 = vld [vmem:[%s495 + $0x148] sm:$0xff]
        %v717 = vld [vmem:[%s495 + $0x150] sm:$0xff]
        %v718 = vld [vmem:[%s495 + $0x158] sm:$0xff]
        %v719 = vld [vmem:[%s495 + $0x160] sm:$0xff]
        %v720 = vld [vmem:[%s495 + $0x168] sm:$0xff]
        %v721 = vld [vmem:[%s495 + $0x170] sm:$0xff]
        %v722 = vld [vmem:[%s495 + $0x178] sm:$0xff]
        %v723 = vld [vmem:[%s495 + $0x180] sm:$0xff]
        %v724 = vld [vmem:[%s495 + $0x188] sm:$0xff]
        %v725 = vld [vmem:[%s495 + $0x190] sm:$0xff]
        %v726 = vld [vmem:[%s495 + $0x198] sm:$0xff]
        %v727 = vld [vmem:[%s495 + $0x1a0] sm:$0xff]
        %v728 = vld [vmem:[%s495 + $0x1a8] sm:$0xff]
        %v729 = vld [vmem:[%s495 + $0x1b0] sm:$0xff]
        %v730 = vld [vmem:[%s495 + $0x1b8] sm:$0xff]
        %v731 = vld [vmem:[%s495 + $0x1c0] sm:$0xff]
        %v732 = vld [vmem:[%s495 + $0x1c8] sm:$0xff]
        %v733 = vld [vmem:[%s495 + $0x1d0] sm:$0xff]
        %v734 = vld [vmem:[%s495 + $0x1d8] sm:$0xff]
        %v735 = vld [vmem:[%s495 + $0x1e0] sm:$0xff]
        %v736 = vld [vmem:[%s495 + $0x1e8] sm:$0xff]
        %v737 = vld [vmem:[%s495 + $0x1f0] sm:$0xff]
        %v738 = vld [vmem:[%s495 + $0x1f8] sm:$0xff]
        %739 = vmatprep.subr.mxu0 %v706
        %740 = vmatpush1.msra.mxu0 %v705
        %741 = vmatprep.subr.mxu0 %v704
        %742 = vmatpush1.msra.mxu0 %v703
        %743 = vmatprep.subr.mxu0 %v702
        %744 = vmatpush1.msra.mxu0 %v701
        %745 = vmatprep.subr.mxu0 %v700
        %746 = vmatpush1.msra.mxu0 %v699
        %747 = vmatprep.subr.mxu0 %v698
        %748 = vmatpush1.msra.mxu0 %v697
        %749 = vmatprep.subr.mxu0 %v696
        %750 = vmatpush1.msra.mxu0 %v695
        %751 = vmatprep.subr.mxu0 %v694
        %752 = vmatpush1.msra.mxu0 %v693
        %753 = vmatprep.subr.mxu0 %v692
        %754 = vmatpush1.msra.mxu0 %v691
        %755 = vmatprep.subr.mxu0 %v690
        %756 = vmatpush1.msra.mxu0 %v689
        %757 = vmatprep.subr.mxu0 %v688
        %758 = vmatpush1.msra.mxu0 %v687
        %759 = vmatprep.subr.mxu0 %v686
        %760 = vmatpush1.msra.mxu0 %v685
        %761 = vmatprep.subr.mxu0 %v684
        %762 = vmatpush1.msra.mxu0 %v683
        %763 = vmatprep.subr.mxu0 %v682
        %764 = vmatpush1.msra.mxu0 %v681
        %765 = vmatprep.subr.mxu0 %v680
        %766 = vmatpush1.msra.mxu0 %v679
        %767 = vmatprep.subr.mxu0 %v678
        %768 = vmatpush1.msra.mxu0 %v677
        %769 = vmatprep.subr.mxu0 %v676
        %770 = vmatpush1.msra.mxu0 %v675
        %771 = vmatprep.subr.mxu0 %v738
        %772 = vmatpush2.msra.mxu0 %v737
        %773 = vmatprep.subr.mxu0 %v736
        %774 = vmatpush2.msra.mxu0 %v735
        %775 = vmatprep.subr.mxu0 %v734
        %776 = vmatpush2.msra.mxu0 %v733
        %777 = vmatprep.subr.mxu0 %v732
        %778 = vmatpush2.msra.mxu0 %v731
        %779 = vmatprep.subr.mxu0 %v730
        %780 = vmatpush2.msra.mxu0 %v729
        %781 = vmatprep.subr.mxu0 %v728
        %782 = vmatpush2.msra.mxu0 %v727
        %783 = vmatprep.subr.mxu0 %v726
        %784 = vmatpush2.msra.mxu0 %v725
        %785 = vmatprep.subr.mxu0 %v724
        %786 = vmatpush2.msra.mxu0 %v723
        %787 = vmatprep.subr.mxu0 %v722
        %788 = vmatpush2.msra.mxu0 %v721
        %789 = vmatprep.subr.mxu0 %v720
        %790 = vmatpush2.msra.mxu0 %v719
        %791 = vmatprep.subr.mxu0 %v718
        %792 = vmatpush2.msra.mxu0 %v717
        %793 = vmatprep.subr.mxu0 %v716
        %794 = vmatpush2.msra.mxu0 %v715
        %795 = vmatprep.subr.mxu0 %v714
        %796 = vmatpush2.msra.mxu0 %v713
        %797 = vmatprep.subr.mxu0 %v712
        %798 = vmatpush2.msra.mxu0 %v711
        %799 = vmatprep.subr.mxu0 %v710
        %800 = vmatpush2.msra.mxu0 %v709
        %801 = vmatprep.subr.mxu0 %v708
        %802 = vmatpush2.msra.mxu0 %v707
        %803 = vmatprep.mubr.f32.mxu0 %v672
        %804 = vmatmul.mubr.f32.gmra.mxu0 %v671
        %v805 = vpop.f32.mrf.mxu0
        %v806 = vadd.f32 0.0, %v805
        %v807 = vpop.f32.mrf.mxu0
        %v808 = vadd.f32 0.0, %v807
        %809 = vdwg.mxu0
        %v810 = vadd.f32 %v673, %v806
        %v811 = vadd.f32 %v674, %v808
        %812 = vst [vmem:[#allocation2] sm:$0xff] %v810
        %813 = vst [vmem:[#allocation2 + $0x8] sm:$0xff] %v811
        %p814 = scmp.eq.s32.totalorder %s23, 1
        // Predicated region
        $region76: #{transformer_decoder_forward.25} parent=66 // pred_check
          %p815 = pneg %p814
        $region77: #{transformer_decoder_forward.25} parent=66 // pred_check_branch
          %817 = sbr.rel (%p815) target = $region79
        $region78: #{transformer_decoder_forward.25} parent=66 // pred_region
          %v818 = vld [vmem:[#allocation2] sm:$0xff]
          %v819 = vld [vmem:[#allocation2 + $0x8] sm:$0xff]
          %v820 = vadd.f32 %v818, %v819
          %821 = vadd.xlane.f32.xlu0 %v820
          %v822 = vpop.xlane.xlu0 %821
          %v823 = vrcp.pop 256.0
          %v824 = vmul.f32 %v822, %v823
          %v825 = vsub.f32 %v818, %v824
          %v826 = vsub.f32 %v819, %v824
          %v827 = vmul.f32 %v825, %v825
          %v828 = vmul.f32 %v826, %v826
          %v829 = vadd.f32 %v827, %v828
          %830 = vadd.xlane.f32.xlu0 %v829
          %v831 = vpop.xlane.xlu0 %830
          %v832 = vmul.f32 %v831, %v823
          %v833 = vadd.f32 %v832, 1e-06
          %v834 = vrsqrt.pop %v833
          %v835 = vmul.f32 %v825, %v834
          %v836 = vmul.f32 %v826, %v834
          %v837 = vld [vmem:[%s5] sm:$0x3]
          %v839 = vlaneseq
          %v840 = vshrl.u32 %v839, 7
          %v841 = vsub.s32 0, %v840
          %v842 = vrot.slane %v837, %v841
          %v843 = vlaneseq
          %v844 = vshrl.u32 %v843, 7
          %v845 = vsub.s32 1, %v844
          %v846 = vrot.slane %v837, %v845
          %v849 = vmul.f32 %v835, %v842
          %v850 = vmul.f32 %v836, %v846
          %v851 = vld [vmem:[%s6] sm:$0x3]
          %v853 = vlaneseq
          %v854 = vshrl.u32 %v853, 7
          %v855 = vsub.s32 0, %v854
          %v856 = vrot.slane %v851, %v855
          %v857 = vlaneseq
          %v858 = vshrl.u32 %v857, 7
          %v859 = vsub.s32 1, %v858
          %v860 = vrot.slane %v851, %v859
          %v863 = vadd.f32 %v849, %v856
          %v864 = vadd.f32 %v850, %v860
          %865 = vst [vmem:[%s501] sm:$0xff] %v863
          %866 = vst [vmem:[%s501 + $0x8] sm:$0xff] %v864
        $region79: #{transformer_decoder_forward.25} parent=66 // pred_fallthru
          _
        %p867 = scmp.lt.s32.totalorder %s22, 1
        %s868 = scalar_select %p867, %s22, 1
        %s869 = smul.addr %s868, 2
        %s870 = smul.addr %s869, 8
        %s871 = scalar_lea.vmem %s7, %s870
        // Predicated region
        $region80: #{transformer_decoder_forward.25} parent=66 // pred_check
          %p872 = pneg %p215
        $region81: #{transformer_decoder_forward.25} parent=66 // pred_check_branch
          %874 = sbr.rel (%p872) target = $region83
        $region82: #{transformer_decoder_forward.25} parent=66 // pred_region
          _
        $region83: #{transformer_decoder_forward.25} parent=66 // pred_fallthru
          _
      $region67: #{transformer_decoder_forward.25} parent=5 // pred_fallthru
        _
      %p875 = scmp.le.s32.totalorder 2, %s13
      // Predicated region
      $region84: #{transformer_decoder_forward.25} parent=5 // pred_check
        %p876 = pneg %p875
      $region85: #{transformer_decoder_forward.25} parent=5 // pred_check_branch
        %878 = sbr.rel (%p876) target = $region87
      $region86: #{transformer_decoder_forward.25} parent=5 // pred_region
        %s879 = ssub.s32 %s13, 2
        // Predicated region
        $region88: #{transformer_decoder_forward.25} parent=86 // pred_check
          %p880 = pneg %p221
        $region89: #{transformer_decoder_forward.25} parent=86 // pred_check_branch
          %882 = sbr.rel (%p880) target = $region91
        $region90: #{transformer_decoder_forward.25} parent=86 // pred_region
          %p883 = scmp.lt.s32.totalorder %s24, 1
          %s884 = scalar_select %p883, %s24, 1
          %s885 = smul.addr %s884, 2
          %s886 = smul.addr %s885, 8
          %s887 = scalar_lea.vmem %s7, %s886
        $region91: #{transformer_decoder_forward.25} parent=86 // pred_fallthru
          _
      $region87: #{transformer_decoder_forward.25} parent=5 // pred_fallthru
        _
    $region6: #{transformer_decoder_forward.25} parent=1 // loop_footer
      %s17 = sadd.s32 1, %s13
    $region7: #{transformer_decoder_forward.25} parent=1 // loop_footer_branch
      %12 = sbr.rel target = $region3
    $region8: #{transformer_decoder_forward.25} parent=1 // loop_exit
      _

// kernel: transformer_decoder_forward.26
$region0: #{transformer_decoder_forward.26}
  #allocation0 [shape = 'u32[]', space=smem, size = 0x4, offset = 0x4, fixed_abs, tag = 'smem constant byte address 0x4 - core index']
  #allocation1 [shape = 'u32[144,128]{1,0:T(1,128)}', space=vmem, size = 0x12000, scoped, tag = 'internal scratch']
  %s0 = inlined_call_operand.vmem [shape: f32[2,8,256], index: 0, kind: input, shape index: {}]
  %s1 = inlined_call_operand.vmem [shape: f32[2,256,128], index: 1, kind: input, shape index: {}]
  %s2 = inlined_call_operand.vmem [shape: f32[2,256,128], index: 2, kind: input, shape index: {}]
  %s3 = inlined_call_operand.vmem [shape: f32[2,256,128], index: 3, kind: input, shape index: {}]
  %s4 = inlined_call_operand.vmem [shape: f32[2,2,8,128], index: 4, kind: output, shape index: {0}]
  %s5 = inlined_call_operand.vmem [shape: f32[2,2,8,128], index: 5, kind: output, shape index: {1}]
  %s6 = inlined_call_operand.vmem [shape: f32[2,2,8,128], index: 6, kind: output, shape index: {2}]
  %7 = xla_tuple %s4, %s5, %s6
  %s8 = sld [smem:[#allocation0]]
  $region65: #{transformer_decoder_forward.26} parent=0
    _
  %s10 = ssub.s32 1, %s8
  %s11 = scalar_select 0, %s10, %s8
  loop: start=0, step=1, limit=6
  $region2: #{transformer_decoder_forward.26} parent=0 // loop_pre_header
    _
  $region3: #{transformer_decoder_forward.26} parent=0 // loop_header
    %s13 = sphi 0, %s17
    %p14 = scmp.ge.s32.totalorder %s13, 6
    %s20 = sphi 0, %s39
    %s21 = sphi 0, %s35
    %s22 = sphi 0, %s31
    %s23 = sphi 0, %s20
    %s24 = sphi 0, %s21
    %s25 = sphi 0, %s22
    %s26 = sphi 0, %s23
    %s27 = sphi 0, %s24
    %s28 = sphi 0, %s25
    %s44 = sphi 0, %s46
    %s47 = sphi 0, %s44
    %s48 = sphi 0, %s47
    %s64 = sphi 0, %s48
    %s70 = sphi 0, %s72
    %s73 = sphi 0, %s70
    %s74 = sphi 0, %s73
    %s90 = sphi 0, %s74
    %s96 = sphi 0, %s98
    %s99 = sphi 0, %s96
    %s100 = sphi 0, %s99
    %s116 = sphi 0, %s100
    %s122 = sphi 0, %s124
    %s125 = sphi 0, %s122
    %s126 = sphi 0, %s125
    %s142 = sphi 0, %s126
    %s152 = sphi 0, %s154
    %s155 = sphi 0, %s152
    %s156 = sphi 0, %s155
    %s172 = sphi 0, %s156
    %s182 = sphi 0, %s184
    %s185 = sphi 0, %s182
    %s186 = sphi 0, %s185
    %s202 = sphi 0, %s186
    %s212 = sphi 0, %s214
    %s215 = sphi 0, %s212
    %s216 = sphi 0, %s215
    %s232 = sphi 0, %s216
  $region4: #{transformer_decoder_forward.26} parent=0 // loop_header_branch
    %16 = sbr.rel (%p14) target = $region8
  $region5: #{transformer_decoder_forward.26} parent=0 // loop_body
    %s18 = ssub.s32 %s13, 1
    %s19 = ssub.s32 %s13, 2
    %s29 = sadd.s32 1, %s22
    %p30 = scmp.ge.s32.totalorder %s29, 1
    %s31 = scalar_select %p30, 0, %s29
    %s32 = sadd.s32 1, %s21
    %s33 = scalar_select %p30, %s32, %s21
    %p34 = scmp.ge.s32.totalorder %s33, 2
    %s35 = scalar_select %p34, 0, %s33
    %s36 = sadd.s32 1, %s20
    %s37 = scalar_select %p34, %s36, %s20
    %p38 = scmp.ge.s32.totalorder %s37, 2
    %s39 = scalar_select %p38, 0, %s37
    %s40 = ssub.s32 %s20, %s39
    %s41 = ssub.s32 %s22, %s31
    %s42 = sor.u32 %s40, %s41
    %p43 = scmp.eq.s32.totalorder %s42, 0
    %s45 = sadd.s32 %s44, 1
    %s46 = scalar_select %p43, %s44, %s45
    %p49 = pneg %p43
    %p50 = scmp.eq.s32.totalorder %s13, 3
    %p51 = por %p49, %p50
    %p52 = scmp.ne.s32.totalorder %s44, %s47
    %p53 = scmp.eq.s32.totalorder %s13, 0
    %p54 = por %p52, %p53
    %p55 = scmp.ne.s32.totalorder %s44, %s47
    %p56 = scmp.eq.s32.totalorder %s18, 3
    %p57 = por %p55, %p56
    %p58 = scmp.ne.s32.totalorder %s47, %s48
    %p59 = scmp.eq.s32.totalorder %s18, 0
    %p60 = por %p58, %p59
    %p61 = scmp.ne.s32.totalorder %s47, %s48
    %p62 = scmp.eq.s32.totalorder %s19, 3
    %p63 = por %p61, %p62
    %p65 = scmp.ne.s32.totalorder %s48, %s64
    %p66 = scmp.eq.s32.totalorder %s19, 0
    %p67 = por %p65, %p66
    %s68 = ssub.s32 %s21, %s35
    %p69 = scmp.eq.s32.totalorder %s68, 0
    %s71 = sadd.s32 %s70, 1
    %s72 = scalar_select %p69, %s70, %s71
    %p75 = pneg %p69
    %p76 = scmp.eq.s32.totalorder %s13, 3
    %p77 = por %p75, %p76
    %p78 = scmp.ne.s32.totalorder %s70, %s73
    %p79 = scmp.eq.s32.totalorder %s13, 0
    %p80 = por %p78, %p79
    %p81 = scmp.ne.s32.totalorder %s70, %s73
    %p82 = scmp.eq.s32.totalorder %s18, 3
    %p83 = por %p81, %p82
    %p84 = scmp.ne.s32.totalorder %s73, %s74
    %p85 = scmp.eq.s32.totalorder %s18, 0
    %p86 = por %p84, %p85
    %p87 = scmp.ne.s32.totalorder %s73, %s74
    %p88 = scmp.eq.s32.totalorder %s19, 3
    %p89 = por %p87, %p88
    %p91 = scmp.ne.s32.totalorder %s74, %s90
    %p92 = scmp.eq.s32.totalorder %s19, 0
    %p93 = por %p91, %p92
    %s94 = ssub.s32 %s21, %s35
    %p95 = scmp.eq.s32.totalorder %s94, 0
    %s97 = sadd.s32 %s96, 1
    %s98 = scalar_select %p95, %s96, %s97
    %p101 = pneg %p95
    %p102 = scmp.eq.s32.totalorder %s13, 3
    %p103 = por %p101, %p102
    %p104 = scmp.ne.s32.totalorder %s96, %s99
    %p105 = scmp.eq.s32.totalorder %s13, 0
    %p106 = por %p104, %p105
    %p107 = scmp.ne.s32.totalorder %s96, %s99
    %p108 = scmp.eq.s32.totalorder %s18, 3
    %p109 = por %p107, %p108
    %p110 = scmp.ne.s32.totalorder %s99, %s100
    %p111 = scmp.eq.s32.totalorder %s18, 0
    %p112 = por %p110, %p111
    %p113 = scmp.ne.s32.totalorder %s99, %s100
    %p114 = scmp.eq.s32.totalorder %s19, 3
    %p115 = por %p113, %p114
    %p117 = scmp.ne.s32.totalorder %s100, %s116
    %p118 = scmp.eq.s32.totalorder %s19, 0
    %p119 = por %p117, %p118
    %s120 = ssub.s32 %s21, %s35
    %p121 = scmp.eq.s32.totalorder %s120, 0
    %s123 = sadd.s32 %s122, 1
    %s124 = scalar_select %p121, %s122, %s123
    %p127 = pneg %p121
    %p128 = scmp.eq.s32.totalorder %s13, 3
    %p129 = por %p127, %p128
    %p130 = scmp.ne.s32.totalorder %s122, %s125
    %p131 = scmp.eq.s32.totalorder %s13, 0
    %p132 = por %p130, %p131
    %p133 = scmp.ne.s32.totalorder %s122, %s125
    %p134 = scmp.eq.s32.totalorder %s18, 3
    %p135 = por %p133, %p134
    %p136 = scmp.ne.s32.totalorder %s125, %s126
    %p137 = scmp.eq.s32.totalorder %s18, 0
    %p138 = por %p136, %p137
    %p139 = scmp.ne.s32.totalorder %s125, %s126
    %p140 = scmp.eq.s32.totalorder %s19, 3
    %p141 = por %p139, %p140
    %p143 = scmp.ne.s32.totalorder %s126, %s142
    %p144 = scmp.eq.s32.totalorder %s19, 0
    %p145 = por %p143, %p144
    %s146 = ssub.s32 %s20, %s39
    %s147 = ssub.s32 %s21, %s35
    %s148 = sor.u32 %s146, %s147
    %s149 = ssub.s32 %s22, %s31
    %s150 = sor.u32 %s148, %s149
    %p151 = scmp.eq.s32.totalorder %s150, 0
    %s153 = sadd.s32 %s152, 1
    %s154 = scalar_select %p151, %s152, %s153
    %p157 = pneg %p151
    %p158 = scmp.eq.s32.totalorder %s13, 3
    %p159 = por %p157, %p158
    %p160 = scmp.ne.s32.totalorder %s152, %s155
    %p161 = scmp.eq.s32.totalorder %s13, 0
    %p162 = por %p160, %p161
    %p163 = scmp.ne.s32.totalorder %s152, %s155
    %p164 = scmp.eq.s32.totalorder %s18, 3
    %p165 = por %p163, %p164
    %p166 = scmp.ne.s32.totalorder %s155, %s156
    %p167 = scmp.eq.s32.totalorder %s18, 0
    %p168 = por %p166, %p167
    %p169 = scmp.ne.s32.totalorder %s155, %s156
    %p170 = scmp.eq.s32.totalorder %s19, 3
    %p171 = por %p169, %p170
    %p173 = scmp.ne.s32.totalorder %s156, %s172
    %p174 = scmp.eq.s32.totalorder %s19, 0
    %p175 = por %p173, %p174
    %s176 = ssub.s32 %s20, %s39
    %s177 = ssub.s32 %s21, %s35
    %s178 = sor.u32 %s176, %s177
    %s179 = ssub.s32 %s22, %s31
    %s180 = sor.u32 %s178, %s179
    %p181 = scmp.eq.s32.totalorder %s180, 0
    %s183 = sadd.s32 %s182, 1
    %s184 = scalar_select %p181, %s182, %s183
    %p187 = pneg %p181
    %p188 = scmp.eq.s32.totalorder %s13, 3
    %p189 = por %p187, %p188
    %p190 = scmp.ne.s32.totalorder %s182, %s185
    %p191 = scmp.eq.s32.totalorder %s13, 0
    %p192 = por %p190, %p191
    %p193 = scmp.ne.s32.totalorder %s182, %s185
    %p194 = scmp.eq.s32.totalorder %s18, 3
    %p195 = por %p193, %p194
    %p196 = scmp.ne.s32.totalorder %s185, %s186
    %p197 = scmp.eq.s32.totalorder %s18, 0
    %p198 = por %p196, %p197
    %p199 = scmp.ne.s32.totalorder %s185, %s186
    %p200 = scmp.eq.s32.totalorder %s19, 3
    %p201 = por %p199, %p200
    %p203 = scmp.ne.s32.totalorder %s186, %s202
    %p204 = scmp.eq.s32.totalorder %s19, 0
    %p205 = por %p203, %p204
    %s206 = ssub.s32 %s20, %s39
    %s207 = ssub.s32 %s21, %s35
    %s208 = sor.u32 %s206, %s207
    %s209 = ssub.s32 %s22, %s31
    %s210 = sor.u32 %s208, %s209
    %p211 = scmp.eq.s32.totalorder %s210, 0
    %s213 = sadd.s32 %s212, 1
    %s214 = scalar_select %p211, %s212, %s213
    %p217 = pneg %p211
    %p218 = scmp.eq.s32.totalorder %s13, 3
    %p219 = por %p217, %p218
    %p220 = scmp.ne.s32.totalorder %s212, %s215
    %p221 = scmp.eq.s32.totalorder %s13, 0
    %p222 = por %p220, %p221
    %p223 = scmp.ne.s32.totalorder %s212, %s215
    %p224 = scmp.eq.s32.totalorder %s18, 3
    %p225 = por %p223, %p224
    %p226 = scmp.ne.s32.totalorder %s215, %s216
    %p227 = scmp.eq.s32.totalorder %s18, 0
    %p228 = por %p226, %p227
    %p229 = scmp.ne.s32.totalorder %s215, %s216
    %p230 = scmp.eq.s32.totalorder %s19, 3
    %p231 = por %p229, %p230
    %p233 = scmp.ne.s32.totalorder %s216, %s232
    %p234 = scmp.eq.s32.totalorder %s19, 0
    %p235 = por %p233, %p234
    %p236 = scmp.le.s32.totalorder 1, %s13
    %p237 = scmp.lt.s32.totalorder %s13, 5
    %p238 = pnand %p236, %p237
    %p239 = pneg %p238
    // Predicated region
    $region9: #{transformer_decoder_forward.26} parent=5 // pred_check
      _
    $region10: #{transformer_decoder_forward.26} parent=5 // pred_check_branch
      %241 = sbr.rel (%p238) target = $region12
    $region11: #{transformer_decoder_forward.26} parent=5 // pred_region
      %s242 = ssub.s32 %s13, 1
    $region12: #{transformer_decoder_forward.26} parent=5 // pred_fallthru
      _
    %p243 = scmp.lt.s32.totalorder %s13, 4
    // Predicated region
    $region13: #{transformer_decoder_forward.26} parent=5 // pred_check
      %p244 = pneg %p243
    $region14: #{transformer_decoder_forward.26} parent=5 // pred_check_branch
      %246 = sbr.rel (%p244) target = $region16
    $region15: #{transformer_decoder_forward.26} parent=5 // pred_region
      // Predicated region
      $region17: #{transformer_decoder_forward.26} parent=15 // pred_check
        %p247 = pneg %p54
      $region18: #{transformer_decoder_forward.26} parent=15 // pred_check_branch
        %249 = sbr.rel (%p247) target = $region20
      $region19: #{transformer_decoder_forward.26} parent=15 // pred_region
        %p250 = scmp.lt.s32.totalorder %s20, 1
        %s251 = scalar_select %p250, %s20, 1
        %p252 = scmp.lt.s32.totalorder %s22, 0
        %s253 = scalar_select %p252, %s22, 0
        %s254 = smul.addr %s253, 2
        %s255 = smul.addr %s251, 2
        %s256 = sadd.s32 %s254, %s255
        %s257 = smul.addr %s256, 8
        %s258 = scalar_lea.vmem %s0, %s257
      $region20: #{transformer_decoder_forward.26} parent=15 // pred_fallthru
        _
      // Predicated region
      $region21: #{transformer_decoder_forward.26} parent=15 // pred_check
        %p259 = pneg %p80
      $region22: #{transformer_decoder_forward.26} parent=15 // pred_check_branch
        %261 = sbr.rel (%p259) target = $region24
      $region23: #{transformer_decoder_forward.26} parent=15 // pred_region
        %p262 = scmp.lt.s32.totalorder %s21, 1
        %s263 = scalar_select %p262, %s21, 1
        %s264 = smul.addr %s263, 32
        %s265 = smul.addr %s264, 8
        %s266 = scalar_lea.vmem %s1, %s265
      $region24: #{transformer_decoder_forward.26} parent=15 // pred_fallthru
        _
      // Predicated region
      $region25: #{transformer_decoder_forward.26} parent=15 // pred_check
        %p267 = pneg %p106
      $region26: #{transformer_decoder_forward.26} parent=15 // pred_check_branch
        %269 = sbr.rel (%p267) target = $region28
      $region27: #{transformer_decoder_forward.26} parent=15 // pred_region
        %p270 = scmp.lt.s32.totalorder %s21, 1
        %s271 = scalar_select %p270, %s21, 1
        %s272 = smul.addr %s271, 32
        %s273 = smul.addr %s272, 8
        %s274 = scalar_lea.vmem %s2, %s273
      $region28: #{transformer_decoder_forward.26} parent=15 // pred_fallthru
        _
      // Predicated region
      $region29: #{transformer_decoder_forward.26} parent=15 // pred_check
        %p275 = pneg %p132
      $region30: #{transformer_decoder_forward.26} parent=15 // pred_check_branch
        %277 = sbr.rel (%p275) target = $region32
      $region31: #{transformer_decoder_forward.26} parent=15 // pred_region
        %p278 = scmp.lt.s32.totalorder %s21, 1
        %s279 = scalar_select %p278, %s21, 1
        %s280 = smul.addr %s279, 32
        %s281 = smul.addr %s280, 8
        %s282 = scalar_lea.vmem %s3, %s281
      $region32: #{transformer_decoder_forward.26} parent=15 // pred_fallthru
        _
    $region16: #{transformer_decoder_forward.26} parent=5 // pred_fallthru
      _
    %p283 = scmp.le.s32.totalorder 1, %s13
    %p284 = scmp.lt.s32.totalorder %s13, 5
    %p285 = pnand %p283, %p284
    %p286 = pneg %p285
    // Predicated region
    $region33: #{transformer_decoder_forward.26} parent=5 // pred_check
      _
    $region34: #{transformer_decoder_forward.26} parent=5 // pred_check_branch
      %288 = sbr.rel (%p285) target = $region36
    $region35: #{transformer_decoder_forward.26} parent=5 // pred_region
      %s289 = ssub.s32 %s13, 1
      %p290 = scmp.lt.s32.totalorder %s23, 1
      %s291 = scalar_select %p290, %s23, 1
      %p292 = scmp.lt.s32.totalorder %s25, 0
      %s293 = scalar_select %p292, %s25, 0
      %s294 = smul.addr %s293, 2
      %s295 = smul.addr %s291, 2
      %s296 = sadd.s32 %s294, %s295
      %s297 = smul.addr %s296, 8
      %s298 = scalar_lea.vmem %s0, %s297
      %p299 = pneg %p60
      %p300 = pneg %p57
      %p301 = scmp.lt.s32.totalorder %s24, 1
      %s302 = scalar_select %p301, %s24, 1
      %s303 = smul.addr %s302, 32
      %s304 = smul.addr %s303, 8
      %s305 = scalar_lea.vmem %s1, %s304
      %p306 = pneg %p86
      %p307 = pneg %p83
      %p308 = scmp.lt.s32.totalorder %s24, 1
      %s309 = scalar_select %p308, %s24, 1
      %s310 = smul.addr %s309, 32
      %s311 = smul.addr %s310, 8
      %s312 = scalar_lea.vmem %s2, %s311
      %p313 = pneg %p112
      %p314 = pneg %p109
      %p315 = scmp.lt.s32.totalorder %s24, 1
      %s316 = scalar_select %p315, %s24, 1
      %s317 = smul.addr %s316, 32
      %s318 = smul.addr %s317, 8
      %s319 = scalar_lea.vmem %s3, %s318
      %p320 = pneg %p138
      %p321 = pneg %p135
      %p322 = pneg %p168
      %p323 = pneg %p165
      %p324 = scmp.lt.s32.totalorder %s23, 1
      %s325 = scalar_select %p324, %s23, 1
      %p326 = scmp.lt.s32.totalorder %s24, 1
      %s327 = scalar_select %p326, %s24, 1
      %p328 = scmp.lt.s32.totalorder %s25, 0
      %s329 = scalar_select %p328, %s25, 0
      %s330 = sadd.s32 %s329, %s327
      %s331 = smul.addr %s325, 2
      %s332 = sadd.s32 %s330, %s331
      %s333 = smul.addr %s332, 8
      %s334 = scalar_lea.vmem %s4, %s333
      %p335 = pneg %p198
      %p336 = pneg %p195
      %p337 = scmp.lt.s32.totalorder %s23, 1
      %s338 = scalar_select %p337, %s23, 1
      %p339 = scmp.lt.s32.totalorder %s24, 1
      %s340 = scalar_select %p339, %s24, 1
      %p341 = scmp.lt.s32.totalorder %s25, 0
      %s342 = scalar_select %p341, %s25, 0
      %s343 = sadd.s32 %s342, %s340
      %s344 = smul.addr %s338, 2
      %s345 = sadd.s32 %s343, %s344
      %s346 = smul.addr %s345, 8
      %s347 = scalar_lea.vmem %s5, %s346
      %p348 = pneg %p228
      %p349 = pneg %p225
      %p350 = scmp.lt.s32.totalorder %s23, 1
      %s351 = scalar_select %p350, %s23, 1
      %p352 = scmp.lt.s32.totalorder %s24, 1
      %s353 = scalar_select %p352, %s24, 1
      %p354 = scmp.lt.s32.totalorder %s25, 0
      %s355 = scalar_select %p354, %s25, 0
      %s356 = sadd.s32 %s355, %s353
      %s357 = smul.addr %s351, 2
      %s358 = sadd.s32 %s356, %s357
      %s359 = smul.addr %s358, 8
      %s360 = scalar_lea.vmem %s6, %s359
      %p361 = scmp.lt.s32.totalorder %s23, 1
      %s362 = scalar_select %p361, %s23, 1
      %p363 = scmp.lt.s32.totalorder %s25, 0
      %s364 = scalar_select %p363, %s25, 0
      %s365 = smul.addr %s364, 2
      %s366 = smul.addr %s362, 2
      %s367 = sadd.s32 %s365, %s366
      %s368 = smul.addr %s367, 8
      %s369 = scalar_lea.vmem %s0, %s368
      %p370 = scmp.lt.s32.totalorder %s24, 1
      %s371 = scalar_select %p370, %s24, 1
      %s372 = smul.addr %s371, 32
      %s373 = smul.addr %s372, 8
      %s374 = scalar_lea.vmem %s1, %s373
      %p375 = scmp.lt.s32.totalorder %s24, 1
      %s376 = scalar_select %p375, %s24, 1
      %s377 = smul.addr %s376, 32
      %s378 = smul.addr %s377, 8
      %s379 = scalar_lea.vmem %s2, %s378
      %p380 = scmp.lt.s32.totalorder %s24, 1
      %s381 = scalar_select %p380, %s24, 1
      %s382 = smul.addr %s381, 32
      %s383 = smul.addr %s382, 8
      %s384 = scalar_lea.vmem %s3, %s383
      %p385 = scmp.lt.s32.totalorder %s23, 1
      %s386 = scalar_select %p385, %s23, 1
      %p387 = scmp.lt.s32.totalorder %s24, 1
      %s388 = scalar_select %p387, %s24, 1
      %p389 = scmp.lt.s32.totalorder %s25, 0
      %s390 = scalar_select %p389, %s25, 0
      %s391 = sadd.s32 %s390, %s388
      %s392 = smul.addr %s386, 2
      %s393 = sadd.s32 %s391, %s392
      %s394 = smul.addr %s393, 8
      %s395 = scalar_lea.vmem %s4, %s394
      %p396 = scmp.lt.s32.totalorder %s23, 1
      %s397 = scalar_select %p396, %s23, 1
      %p398 = scmp.lt.s32.totalorder %s24, 1
      %s399 = scalar_select %p398, %s24, 1
      %p400 = scmp.lt.s32.totalorder %s25, 0
      %s401 = scalar_select %p400, %s25, 0
      %s402 = sadd.s32 %s401, %s399
      %s403 = smul.addr %s397, 2
      %s404 = sadd.s32 %s402, %s403
      %s405 = smul.addr %s404, 8
      %s406 = scalar_lea.vmem %s5, %s405
      %p407 = scmp.lt.s32.totalorder %s23, 1
      %s408 = scalar_select %p407, %s23, 1
      %p409 = scmp.lt.s32.totalorder %s24, 1
      %s410 = scalar_select %p409, %s24, 1
      %p411 = scmp.lt.s32.totalorder %s25, 0
      %s412 = scalar_select %p411, %s25, 0
      %s413 = sadd.s32 %s412, %s410
      %s414 = smul.addr %s408, 2
      %s415 = sadd.s32 %s413, %s414
      %s416 = smul.addr %s415, 8
      %s417 = scalar_lea.vmem %s6, %s416
      %v418 = vld [vmem:[%s369] sm:$0xff]
      %v419 = vld [vmem:[%s369 + $0x8] sm:$0xff]
      %v420 = vld [vmem:[%s374] sm:$0xff]
      %v421 = vld [vmem:[%s374 + $0x8] sm:$0xff]
      %v422 = vld [vmem:[%s374 + $0x10] sm:$0xff]
      %v423 = vld [vmem:[%s374 + $0x18] sm:$0xff]
      %v424 = vld [vmem:[%s374 + $0x20] sm:$0xff]
      %v425 = vld [vmem:[%s374 + $0x28] sm:$0xff]
      %v426 = vld [vmem:[%s374 + $0x30] sm:$0xff]
      %v427 = vld [vmem:[%s374 + $0x38] sm:$0xff]
      %v428 = vld [vmem:[%s374 + $0x40] sm:$0xff]
      %v429 = vld [vmem:[%s374 + $0x48] sm:$0xff]
      %v430 = vld [vmem:[%s374 + $0x50] sm:$0xff]
      %v431 = vld [vmem:[%s374 + $0x58] sm:$0xff]
      %v432 = vld [vmem:[%s374 + $0x60] sm:$0xff]
      %v433 = vld [vmem:[%s374 + $0x68] sm:$0xff]
      %v434 = vld [vmem:[%s374 + $0x70] sm:$0xff]
      %v435 = vld [vmem:[%s374 + $0x78] sm:$0xff]
      %v436 = vld [vmem:[%s374 + $0x80] sm:$0xff]
      %v437 = vld [vmem:[%s374 + $0x88] sm:$0xff]
      %v438 = vld [vmem:[%s374 + $0x90] sm:$0xff]
      %v439 = vld [vmem:[%s374 + $0x98] sm:$0xff]
      %v440 = vld [vmem:[%s374 + $0xa0] sm:$0xff]
      %v441 = vld [vmem:[%s374 + $0xa8] sm:$0xff]
      %v442 = vld [vmem:[%s374 + $0xb0] sm:$0xff]
      %v443 = vld [vmem:[%s374 + $0xb8] sm:$0xff]
      %v444 = vld [vmem:[%s374 + $0xc0] sm:$0xff]
      %v445 = vld [vmem:[%s374 + $0xc8] sm:$0xff]
      %v446 = vld [vmem:[%s374 + $0xd0] sm:$0xff]
      %v447 = vld [vmem:[%s374 + $0xd8] sm:$0xff]
      %v448 = vld [vmem:[%s374 + $0xe0] sm:$0xff]
      %v449 = vld [vmem:[%s374 + $0xe8] sm:$0xff]
      %v450 = vld [vmem:[%s374 + $0xf0] sm:$0xff]
      %v451 = vld [vmem:[%s374 + $0xf8] sm:$0xff]
      %452 = vmatprep.subr.mxu0 0.0
      %453 = vmatpush1.msra.mxu0 %v435
      %454 = vmatprep.subr.mxu0 0.0
      %455 = vmatpush1.msra.mxu0 %v434
      %456 = vmatprep.subr.mxu0 0.0
      %457 = vmatpush1.msra.mxu0 %v433
      %458 = vmatprep.subr.mxu0 0.0
      %459 = vmatpush1.msra.mxu0 %v432
      %460 = vmatprep.subr.mxu0 0.0
      %461 = vmatpush1.msra.mxu0 %v431
      %462 = vmatprep.subr.mxu0 0.0
      %463 = vmatpush1.msra.mxu0 %v430
      %464 = vmatprep.subr.mxu0 0.0
      %465 = vmatpush1.msra.mxu0 %v429
      %466 = vmatprep.subr.mxu0 0.0
      %467 = vmatpush1.msra.mxu0 %v428
      %468 = vmatprep.subr.mxu0 0.0
      %469 = vmatpush1.msra.mxu0 %v427
      %470 = vmatprep.subr.mxu0 0.0
      %471 = vmatpush1.msra.mxu0 %v426
      %472 = vmatprep.subr.mxu0 0.0
      %473 = vmatpush1.msra.mxu0 %v425
      %474 = vmatprep.subr.mxu0 0.0
      %475 = vmatpush1.msra.mxu0 %v424
      %476 = vmatprep.subr.mxu0 0.0
      %477 = vmatpush1.msra.mxu0 %v423
      %478 = vmatprep.subr.mxu0 0.0
      %479 = vmatpush1.msra.mxu0 %v422
      %480 = vmatprep.subr.mxu0 0.0
      %481 = vmatpush1.msra.mxu0 %v421
      %482 = vmatprep.subr.mxu0 0.0
      %483 = vmatpush1.msra.mxu0 %v420
      %484 = vmatprep.subr.mxu0 0.0
      %485 = vmatpush2.msra.mxu0 %v451
      %486 = vmatprep.subr.mxu0 0.0
      %487 = vmatpush2.msra.mxu0 %v450
      %488 = vmatprep.subr.mxu0 0.0
      %489 = vmatpush2.msra.mxu0 %v449
      %490 = vmatprep.subr.mxu0 0.0
      %491 = vmatpush2.msra.mxu0 %v448
      %492 = vmatprep.subr.mxu0 0.0
      %493 = vmatpush2.msra.mxu0 %v447
      %494 = vmatprep.subr.mxu0 0.0
      %495 = vmatpush2.msra.mxu0 %v446
      %496 = vmatprep.subr.mxu0 0.0
      %497 = vmatpush2.msra.mxu0 %v445
      %498 = vmatprep.subr.mxu0 0.0
      %499 = vmatpush2.msra.mxu0 %v444
      %500 = vmatprep.subr.mxu0 0.0
      %501 = vmatpush2.msra.mxu0 %v443
      %502 = vmatprep.subr.mxu0 0.0
      %503 = vmatpush2.msra.mxu0 %v442
      %504 = vmatprep.subr.mxu0 0.0
      %505 = vmatpush2.msra.mxu0 %v441
      %506 = vmatprep.subr.mxu0 0.0
      %507 = vmatpush2.msra.mxu0 %v440
      %508 = vmatprep.subr.mxu0 0.0
      %509 = vmatpush2.msra.mxu0 %v439
      %510 = vmatprep.subr.mxu0 0.0
      %511 = vmatpush2.msra.mxu0 %v438
      %512 = vmatprep.subr.mxu0 0.0
      %513 = vmatpush2.msra.mxu0 %v437
      %514 = vmatprep.subr.mxu0 0.0
      %515 = vmatpush2.msra.mxu0 %v436
      %516 = vmatprep.mubr.f32.mxu0 %v419
      %517 = vmatmul.mubr.f32.gmra.mxu0 %v418
      %v518 = vpop.f32.mrf.mxu0
      %v519 = vadd.f32 0.0, %v518
      %v520 = vpop.f32.mrf.mxu0
      %521 = vdwg.mxu0
      %522 = vst [vmem:[%s395] sm:$0xff] %v519
      %v523 = vld [vmem:[%s379] sm:$0xff]
      %v524 = vld [vmem:[%s379 + $0x8] sm:$0xff]
      %v525 = vld [vmem:[%s379 + $0x10] sm:$0xff]
      %v526 = vld [vmem:[%s379 + $0x18] sm:$0xff]
      %v527 = vld [vmem:[%s379 + $0x20] sm:$0xff]
      %v528 = vld [vmem:[%s379 + $0x28] sm:$0xff]
      %v529 = vld [vmem:[%s379 + $0x30] sm:$0xff]
      %v530 = vld [vmem:[%s379 + $0x38] sm:$0xff]
      %v531 = vld [vmem:[%s379 + $0x40] sm:$0xff]
      %v532 = vld [vmem:[%s379 + $0x48] sm:$0xff]
      %v533 = vld [vmem:[%s379 + $0x50] sm:$0xff]
      %v534 = vld [vmem:[%s379 + $0x58] sm:$0xff]
      %v535 = vld [vmem:[%s379 + $0x60] sm:$0xff]
      %v536 = vld [vmem:[%s379 + $0x68] sm:$0xff]
      %v537 = vld [vmem:[%s379 + $0x70] sm:$0xff]
      %v538 = vld [vmem:[%s379 + $0x78] sm:$0xff]
      %v539 = vld [vmem:[%s379 + $0x80] sm:$0xff]
      %v540 = vld [vmem:[%s379 + $0x88] sm:$0xff]
      %v541 = vld [vmem:[%s379 + $0x90] sm:$0xff]
      %v542 = vld [vmem:[%s379 + $0x98] sm:$0xff]
      %v543 = vld [vmem:[%s379 + $0xa0] sm:$0xff]
      %v544 = vld [vmem:[%s379 + $0xa8] sm:$0xff]
      %v545 = vld [vmem:[%s379 + $0xb0] sm:$0xff]
      %v546 = vld [vmem:[%s379 + $0xb8] sm:$0xff]
      %v547 = vld [vmem:[%s379 + $0xc0] sm:$0xff]
      %v548 = vld [vmem:[%s379 + $0xc8] sm:$0xff]
      %v549 = vld [vmem:[%s379 + $0xd0] sm:$0xff]
      %v550 = vld [vmem:[%s379 + $0xd8] sm:$0xff]
      %v551 = vld [vmem:[%s379 + $0xe0] sm:$0xff]
      %v552 = vld [vmem:[%s379 + $0xe8] sm:$0xff]
      %v553 = vld [vmem:[%s379 + $0xf0] sm:$0xff]
      %v554 = vld [vmem:[%s379 + $0xf8] sm:$0xff]
      %555 = vmatprep.subr.mxu0 0.0
      %556 = vmatpush1.msra.mxu0 %v538
      %557 = vmatprep.subr.mxu0 0.0
      %558 = vmatpush1.msra.mxu0 %v537
      %559 = vmatprep.subr.mxu0 0.0
      %560 = vmatpush1.msra.mxu0 %v536
      %561 = vmatprep.subr.mxu0 0.0
      %562 = vmatpush1.msra.mxu0 %v535
      %563 = vmatprep.subr.mxu0 0.0
      %564 = vmatpush1.msra.mxu0 %v534
      %565 = vmatprep.subr.mxu0 0.0
      %566 = vmatpush1.msra.mxu0 %v533
      %567 = vmatprep.subr.mxu0 0.0
      %568 = vmatpush1.msra.mxu0 %v532
      %569 = vmatprep.subr.mxu0 0.0
      %570 = vmatpush1.msra.mxu0 %v531
      %571 = vmatprep.subr.mxu0 0.0
      %572 = vmatpush1.msra.mxu0 %v530
      %573 = vmatprep.subr.mxu0 0.0
      %574 = vmatpush1.msra.mxu0 %v529
      %575 = vmatprep.subr.mxu0 0.0
      %576 = vmatpush1.msra.mxu0 %v528
      %577 = vmatprep.subr.mxu0 0.0
      %578 = vmatpush1.msra.mxu0 %v527
      %579 = vmatprep.subr.mxu0 0.0
      %580 = vmatpush1.msra.mxu0 %v526
      %581 = vmatprep.subr.mxu0 0.0
      %582 = vmatpush1.msra.mxu0 %v525
      %583 = vmatprep.subr.mxu0 0.0
      %584 = vmatpush1.msra.mxu0 %v524
      %585 = vmatprep.subr.mxu0 0.0
      %586 = vmatpush1.msra.mxu0 %v523
      %587 = vmatprep.subr.mxu0 0.0
      %588 = vmatpush2.msra.mxu0 %v554
      %589 = vmatprep.subr.mxu0 0.0
      %590 = vmatpush2.msra.mxu0 %v553
      %591 = vmatprep.subr.mxu0 0.0
      %592 = vmatpush2.msra.mxu0 %v552
      %593 = vmatprep.subr.mxu0 0.0
      %594 = vmatpush2.msra.mxu0 %v551
      %595 = vmatprep.subr.mxu0 0.0
      %596 = vmatpush2.msra.mxu0 %v550
      %597 = vmatprep.subr.mxu0 0.0
      %598 = vmatpush2.msra.mxu0 %v549
      %599 = vmatprep.subr.mxu0 0.0
      %600 = vmatpush2.msra.mxu0 %v548
      %601 = vmatprep.subr.mxu0 0.0
      %602 = vmatpush2.msra.mxu0 %v547
      %603 = vmatprep.subr.mxu0 0.0
      %604 = vmatpush2.msra.mxu0 %v546
      %605 = vmatprep.subr.mxu0 0.0
      %606 = vmatpush2.msra.mxu0 %v545
      %607 = vmatprep.subr.mxu0 0.0
      %608 = vmatpush2.msra.mxu0 %v544
      %609 = vmatprep.subr.mxu0 0.0
      %610 = vmatpush2.msra.mxu0 %v543
      %611 = vmatprep.subr.mxu0 0.0
      %612 = vmatpush2.msra.mxu0 %v542
      %613 = vmatprep.subr.mxu0 0.0
      %614 = vmatpush2.msra.mxu0 %v541
      %615 = vmatprep.subr.mxu0 0.0
      %616 = vmatpush2.msra.mxu0 %v540
      %617 = vmatprep.subr.mxu0 0.0
      %618 = vmatpush2.msra.mxu0 %v539
      %619 = vmatprep.mubr.f32.mxu0 %v419
      %620 = vmatmul.mubr.f32.gmra.mxu0 %v418
      %v621 = vpop.f32.mrf.mxu0
      %v622 = vadd.f32 0.0, %v621
      %v623 = vpop.f32.mrf.mxu0
      %624 = vdwg.mxu0
      %625 = vst [vmem:[%s406] sm:$0xff] %v622
      %v626 = vld [vmem:[%s384] sm:$0xff]
      %v627 = vld [vmem:[%s384 + $0x8] sm:$0xff]
      %v628 = vld [vmem:[%s384 + $0x10] sm:$0xff]
      %v629 = vld [vmem:[%s384 + $0x18] sm:$0xff]
      %v630 = vld [vmem:[%s384 + $0x20] sm:$0xff]
      %v631 = vld [vmem:[%s384 + $0x28] sm:$0xff]
      %v632 = vld [vmem:[%s384 + $0x30] sm:$0xff]
      %v633 = vld [vmem:[%s384 + $0x38] sm:$0xff]
      %v634 = vld [vmem:[%s384 + $0x40] sm:$0xff]
      %v635 = vld [vmem:[%s384 + $0x48] sm:$0xff]
      %v636 = vld [vmem:[%s384 + $0x50] sm:$0xff]
      %v637 = vld [vmem:[%s384 + $0x58] sm:$0xff]
      %v638 = vld [vmem:[%s384 + $0x60] sm:$0xff]
      %v639 = vld [vmem:[%s384 + $0x68] sm:$0xff]
      %v640 = vld [vmem:[%s384 + $0x70] sm:$0xff]
      %v641 = vld [vmem:[%s384 + $0x78] sm:$0xff]
      %v642 = vld [vmem:[%s384 + $0x80] sm:$0xff]
      %v643 = vld [vmem:[%s384 + $0x88] sm:$0xff]
      %v644 = vld [vmem:[%s384 + $0x90] sm:$0xff]
      %v645 = vld [vmem:[%s384 + $0x98] sm:$0xff]
      %v646 = vld [vmem:[%s384 + $0xa0] sm:$0xff]
      %v647 = vld [vmem:[%s384 + $0xa8] sm:$0xff]
      %v648 = vld [vmem:[%s384 + $0xb0] sm:$0xff]
      %v649 = vld [vmem:[%s384 + $0xb8] sm:$0xff]
      %v650 = vld [vmem:[%s384 + $0xc0] sm:$0xff]
      %v651 = vld [vmem:[%s384 + $0xc8] sm:$0xff]
      %v652 = vld [vmem:[%s384 + $0xd0] sm:$0xff]
      %v653 = vld [vmem:[%s384 + $0xd8] sm:$0xff]
      %v654 = vld [vmem:[%s384 + $0xe0] sm:$0xff]
      %v655 = vld [vmem:[%s384 + $0xe8] sm:$0xff]
      %v656 = vld [vmem:[%s384 + $0xf0] sm:$0xff]
      %v657 = vld [vmem:[%s384 + $0xf8] sm:$0xff]
      %658 = vmatprep.subr.mxu0 0.0
      %659 = vmatpush1.msra.mxu0 %v641
      %660 = vmatprep.subr.mxu0 0.0
      %661 = vmatpush1.msra.mxu0 %v640
      %662 = vmatprep.subr.mxu0 0.0
      %663 = vmatpush1.msra.mxu0 %v639
      %664 = vmatprep.subr.mxu0 0.0
      %665 = vmatpush1.msra.mxu0 %v638
      %666 = vmatprep.subr.mxu0 0.0
      %667 = vmatpush1.msra.mxu0 %v637
      %668 = vmatprep.subr.mxu0 0.0
      %669 = vmatpush1.msra.mxu0 %v636
      %670 = vmatprep.subr.mxu0 0.0
      %671 = vmatpush1.msra.mxu0 %v635
      %672 = vmatprep.subr.mxu0 0.0
      %673 = vmatpush1.msra.mxu0 %v634
      %674 = vmatprep.subr.mxu0 0.0
      %675 = vmatpush1.msra.mxu0 %v633
      %676 = vmatprep.subr.mxu0 0.0
      %677 = vmatpush1.msra.mxu0 %v632
      %678 = vmatprep.subr.mxu0 0.0
      %679 = vmatpush1.msra.mxu0 %v631
      %680 = vmatprep.subr.mxu0 0.0
      %681 = vmatpush1.msra.mxu0 %v630
      %682 = vmatprep.subr.mxu0 0.0
      %683 = vmatpush1.msra.mxu0 %v629
      %684 = vmatprep.subr.mxu0 0.0
      %685 = vmatpush1.msra.mxu0 %v628
      %686 = vmatprep.subr.mxu0 0.0
      %687 = vmatpush1.msra.mxu0 %v627
      %688 = vmatprep.subr.mxu0 0.0
      %689 = vmatpush1.msra.mxu0 %v626
      %690 = vmatprep.subr.mxu0 0.0
      %691 = vmatpush2.msra.mxu0 %v657
      %692 = vmatprep.subr.mxu0 0.0
      %693 = vmatpush2.msra.mxu0 %v656
      %694 = vmatprep.subr.mxu0 0.0
      %695 = vmatpush2.msra.mxu0 %v655
      %696 = vmatprep.subr.mxu0 0.0
      %697 = vmatpush2.msra.mxu0 %v654
      %698 = vmatprep.subr.mxu0 0.0
      %699 = vmatpush2.msra.mxu0 %v653
      %700 = vmatprep.subr.mxu0 0.0
      %701 = vmatpush2.msra.mxu0 %v652
      %702 = vmatprep.subr.mxu0 0.0
      %703 = vmatpush2.msra.mxu0 %v651
      %704 = vmatprep.subr.mxu0 0.0
      %705 = vmatpush2.msra.mxu0 %v650
      %706 = vmatprep.subr.mxu0 0.0
      %707 = vmatpush2.msra.mxu0 %v649
      %708 = vmatprep.subr.mxu0 0.0
      %709 = vmatpush2.msra.mxu0 %v648
      %710 = vmatprep.subr.mxu0 0.0
      %711 = vmatpush2.msra.mxu0 %v647
      %712 = vmatprep.subr.mxu0 0.0
      %713 = vmatpush2.msra.mxu0 %v646
      %714 = vmatprep.subr.mxu0 0.0
      %715 = vmatpush2.msra.mxu0 %v645
      %716 = vmatprep.subr.mxu0 0.0
      %717 = vmatpush2.msra.mxu0 %v644
      %718 = vmatprep.subr.mxu0 0.0
      %719 = vmatpush2.msra.mxu0 %v643
      %720 = vmatprep.subr.mxu0 0.0
      %721 = vmatpush2.msra.mxu0 %v642
      %722 = vmatprep.mubr.f32.mxu0 %v419
      %723 = vmatmul.mubr.f32.gmra.mxu0 %v418
      %v724 = vpop.f32.mrf.mxu0
      %v725 = vadd.f32 0.0, %v724
      %v726 = vpop.f32.mrf.mxu0
      %727 = vdwg.mxu0
      %728 = vst [vmem:[%s417] sm:$0xff] %v725
      %p729 = scmp.lt.s32.totalorder %s23, 1
      %s730 = scalar_select %p729, %s23, 1
      %p731 = scmp.lt.s32.totalorder %s24, 1
      %s732 = scalar_select %p731, %s24, 1
      %p733 = scmp.lt.s32.totalorder %s25, 0
      %s734 = scalar_select %p733, %s25, 0
      %s735 = sadd.s32 %s734, %s732
      %s736 = smul.addr %s730, 2
      %s737 = sadd.s32 %s735, %s736
      %s738 = smul.addr %s737, 8
      %s739 = scalar_lea.vmem %s4, %s738
      %p740 = scmp.lt.s32.totalorder %s23, 1
      %s741 = scalar_select %p740, %s23, 1
      %p742 = scmp.lt.s32.totalorder %s24, 1
      %s743 = scalar_select %p742, %s24, 1
      %p744 = scmp.lt.s32.totalorder %s25, 0
      %s745 = scalar_select %p744, %s25, 0
      %s746 = sadd.s32 %s745, %s743
      %s747 = smul.addr %s741, 2
      %s748 = sadd.s32 %s746, %s747
      %s749 = smul.addr %s748, 8
      %s750 = scalar_lea.vmem %s5, %s749
      %p751 = scmp.lt.s32.totalorder %s23, 1
      %s752 = scalar_select %p751, %s23, 1
      %p753 = scmp.lt.s32.totalorder %s24, 1
      %s754 = scalar_select %p753, %s24, 1
      %p755 = scmp.lt.s32.totalorder %s25, 0
      %s756 = scalar_select %p755, %s25, 0
      %s757 = sadd.s32 %s756, %s754
      %s758 = smul.addr %s752, 2
      %s759 = sadd.s32 %s757, %s758
      %s760 = smul.addr %s759, 8
      %s761 = scalar_lea.vmem %s6, %s760
      // Predicated region
      $region37: #{transformer_decoder_forward.26} parent=35 // pred_check
        %p762 = pneg %p165
      $region38: #{transformer_decoder_forward.26} parent=35 // pred_check_branch
        %764 = sbr.rel (%p762) target = $region40
      $region39: #{transformer_decoder_forward.26} parent=35 // pred_region
        _
      $region40: #{transformer_decoder_forward.26} parent=35 // pred_fallthru
        _
      // Predicated region
      $region41: #{transformer_decoder_forward.26} parent=35 // pred_check
        %p765 = pneg %p195
      $region42: #{transformer_decoder_forward.26} parent=35 // pred_check_branch
        %767 = sbr.rel (%p765) target = $region44
      $region43: #{transformer_decoder_forward.26} parent=35 // pred_region
        _
      $region44: #{transformer_decoder_forward.26} parent=35 // pred_fallthru
        _
      // Predicated region
      $region45: #{transformer_decoder_forward.26} parent=35 // pred_check
        %p768 = pneg %p225
      $region46: #{transformer_decoder_forward.26} parent=35 // pred_check_branch
        %770 = sbr.rel (%p768) target = $region48
      $region47: #{transformer_decoder_forward.26} parent=35 // pred_region
        _
      $region48: #{transformer_decoder_forward.26} parent=35 // pred_fallthru
        _
    $region36: #{transformer_decoder_forward.26} parent=5 // pred_fallthru
      _
    %p771 = scmp.le.s32.totalorder 2, %s13
    // Predicated region
    $region49: #{transformer_decoder_forward.26} parent=5 // pred_check
      %p772 = pneg %p771
    $region50: #{transformer_decoder_forward.26} parent=5 // pred_check_branch
      %774 = sbr.rel (%p772) target = $region52
    $region51: #{transformer_decoder_forward.26} parent=5 // pred_region
      %s775 = ssub.s32 %s13, 2
      // Predicated region
      $region53: #{transformer_decoder_forward.26} parent=51 // pred_check
        %p776 = pneg %p171
      $region54: #{transformer_decoder_forward.26} parent=51 // pred_check_branch
        %778 = sbr.rel (%p776) target = $region56
      $region55: #{transformer_decoder_forward.26} parent=51 // pred_region
        %p779 = scmp.lt.s32.totalorder %s26, 1
        %s780 = scalar_select %p779, %s26, 1
        %p781 = scmp.lt.s32.totalorder %s27, 1
        %s782 = scalar_select %p781, %s27, 1
        %p783 = scmp.lt.s32.totalorder %s28, 0
        %s784 = scalar_select %p783, %s28, 0
        %s785 = sadd.s32 %s784, %s782
        %s786 = smul.addr %s780, 2
        %s787 = sadd.s32 %s785, %s786
        %s788 = smul.addr %s787, 8
        %s789 = scalar_lea.vmem %s4, %s788
      $region56: #{transformer_decoder_forward.26} parent=51 // pred_fallthru
        _
      // Predicated region
      $region57: #{transformer_decoder_forward.26} parent=51 // pred_check
        %p790 = pneg %p201
      $region58: #{transformer_decoder_forward.26} parent=51 // pred_check_branch
        %792 = sbr.rel (%p790) target = $region60
      $region59: #{transformer_decoder_forward.26} parent=51 // pred_region
        %p793 = scmp.lt.s32.totalorder %s26, 1
        %s794 = scalar_select %p793, %s26, 1
        %p795 = scmp.lt.s32.totalorder %s27, 1
        %s796 = scalar_select %p795, %s27, 1
        %p797 = scmp.lt.s32.totalorder %s28, 0
        %s798 = scalar_select %p797, %s28, 0
        %s799 = sadd.s32 %s798, %s796
        %s800 = smul.addr %s794, 2
        %s801 = sadd.s32 %s799, %s800
        %s802 = smul.addr %s801, 8
        %s803 = scalar_lea.vmem %s5, %s802
      $region60: #{transformer_decoder_forward.26} parent=51 // pred_fallthru
        _
      // Predicated region
      $region61: #{transformer_decoder_forward.26} parent=51 // pred_check
        %p804 = pneg %p231
      $region62: #{transformer_decoder_forward.26} parent=51 // pred_check_branch
        %806 = sbr.rel (%p804) target = $region64
      $region63: #{transformer_decoder_forward.26} parent=51 // pred_region
        %p807 = scmp.lt.s32.totalorder %s26, 1
        %s808 = scalar_select %p807, %s26, 1
        %p809 = scmp.lt.s32.totalorder %s27, 1
        %s810 = scalar_select %p809, %s27, 1
        %p811 = scmp.lt.s32.totalorder %s28, 0
        %s812 = scalar_select %p811, %s28, 0
        %s813 = sadd.s32 %s812, %s810
        %s814 = smul.addr %s808, 2
        %s815 = sadd.s32 %s813, %s814
        %s816 = smul.addr %s815, 8
        %s817 = scalar_lea.vmem %s6, %s816
      $region64: #{transformer_decoder_forward.26} parent=51 // pred_fallthru
        _
    $region52: #{transformer_decoder_forward.26} parent=5 // pred_fallthru
      _
  $region6: #{transformer_decoder_forward.26} parent=0 // loop_footer
    %s17 = sadd.s32 1, %s13
  $region7: #{transformer_decoder_forward.26} parent=0 // loop_footer_branch
    %12 = sbr.rel target = $region3
  $region8: #{transformer_decoder_forward.26} parent=0 // loop_exit
    _

// kernel: transformer_decoder_forward.33
$region0: #{transformer_decoder_forward.33}
  #allocation0 [shape = 'u32[]', space=smem, size = 0x4, offset = 0x4, fixed_abs, tag = 'smem constant byte address 0x4 - core index']
  #allocation1 [shape = 'u32[144,128]{1,0:T(1,128)}', space=vmem, size = 0x12000, scoped, tag = 'internal scratch']
  #allocation2 [shape = 'f32[8,256]{1,0:T(8,128)}', space=vmem, size = 0x2000, scoped, tag = 'scratch operand']
  %s0 = inlined_call_operand.vmem [shape: f32[16,256], index: 0, kind: input, shape index: {}]
  %s1 = inlined_call_operand.vmem [shape: f32[256,512], index: 1, kind: input, shape index: {}]
  %s2 = inlined_call_operand.vmem [shape: f32[1,512], index: 2, kind: input, shape index: {}]
  %s3 = inlined_call_operand.vmem [shape: f32[512,256], index: 3, kind: input, shape index: {}]
  %s4 = inlined_call_operand.vmem [shape: f32[1,256], index: 4, kind: input, shape index: {}]
  %s5 = inlined_call_operand.vmem [shape: f32[1,256], index: 5, kind: input, shape index: {}]
  %s6 = inlined_call_operand.vmem [shape: f32[1,256], index: 6, kind: input, shape index: {}]
  %s7 = inlined_call_operand.hbm [shape: f32[16,256], index: 7, kind: output, shape index: {}]
  %s8 = sld [smem:[#allocation0]]
  $region92: #{transformer_decoder_forward.33} parent=0
    _
  %s10 = ssub.s32 1, %s8
  %s11 = scalar_select 0, %s10, %s8
  $region1: #{transformer_decoder_forward.33} parent=0
    #allocation3 [shape = 'u8[524288]{0}', space=vmem, size = 0x80000, scoped, tag = 'input window, operand 1']
    #allocation4 [shape = 'u8[16384]{0}', space=vmem, size = 0x4000, scoped, tag = 'output window, operand 0']
    #allocation5 [shape = 's32[2]{0}', space=sflag, size = 0x8, scoped, tag = 'scoped memory for transformer_decoder_forward.33']
    %12 = vsyncpa [#allocation5], 0
    %s13 = scalar_lea.sflag [#allocation5], 1
    %14 = vsyncpa %s13, 0
    loop: start=0, step=1, limit=6
    $region2: #{transformer_decoder_forward.33} parent=1 // loop_pre_header
      _
    $region3: #{transformer_decoder_forward.33} parent=1 // loop_header
      %s16 = sphi 0, %s20
      %p17 = scmp.ge.s32.totalorder %s16, 6
      %s23 = sphi 0, %s35
      %s24 = sphi 0, %s31
      %s25 = sphi 0, %s23
      %s26 = sphi 0, %s24
      %s27 = sphi 0, %s25
      %s28 = sphi 0, %s26
      %s38 = sphi 0, %s40
      %s41 = sphi 0, %s38
      %s42 = sphi 0, %s41
      %s58 = sphi 0, %s42
      %s64 = sphi 0, %s66
      %s67 = sphi 0, %s64
      %s68 = sphi 0, %s67
      %s84 = sphi 0, %s68
      %s90 = sphi 0, %s92
      %s93 = sphi 0, %s90
      %s94 = sphi 0, %s93
      %s110 = sphi 0, %s94
      %s116 = sphi 0, %s118
      %s119 = sphi 0, %s116
      %s120 = sphi 0, %s119
      %s136 = sphi 0, %s120
      %s140 = sphi 0, %s140
      %s142 = sphi 0, %s140
      %s143 = sphi 0, %s142
      %s157 = sphi 0, %s143
      %s161 = sphi 0, %s161
      %s163 = sphi 0, %s161
      %s164 = sphi 0, %s163
      %s178 = sphi 0, %s164
      %s182 = sphi 0, %s182
      %s184 = sphi 0, %s182
      %s185 = sphi 0, %s184
      %s199 = sphi 0, %s185
      %s205 = sphi 0, %s207
      %s208 = sphi 0, %s205
      %s209 = sphi 0, %s208
      %s225 = sphi 0, %s209
    $region4: #{transformer_decoder_forward.33} parent=1 // loop_header_branch
      %19 = sbr.rel (%p17) target = $region8
    $region5: #{transformer_decoder_forward.33} parent=1 // loop_body
      %s21 = ssub.s32 %s16, 1
      %s22 = ssub.s32 %s16, 2
      %s29 = sadd.s32 1, %s24
      %p30 = scmp.ge.s32.totalorder %s29, 2
      %s31 = scalar_select %p30, 0, %s29
      %s32 = sadd.s32 1, %s23
      %s33 = scalar_select %p30, %s32, %s23
      %p34 = scmp.ge.s32.totalorder %s33, 2
      %s35 = scalar_select %p34, 0, %s33
      %s36 = ssub.s32 %s23, %s35
      %p37 = scmp.eq.s32.totalorder %s36, 0
      %s39 = sadd.s32 %s38, 1
      %s40 = scalar_select %p37, %s38, %s39
      %p43 = pneg %p37
      %p44 = scmp.eq.s32.totalorder %s16, 3
      %p45 = por %p43, %p44
      %p46 = scmp.ne.s32.totalorder %s38, %s41
      %p47 = scmp.eq.s32.totalorder %s16, 0
      %p48 = por %p46, %p47
      %p49 = scmp.ne.s32.totalorder %s38, %s41
      %p50 = scmp.eq.s32.totalorder %s21, 3
      %p51 = por %p49, %p50
      %p52 = scmp.ne.s32.totalorder %s41, %s42
      %p53 = scmp.eq.s32.totalorder %s21, 0
      %p54 = por %p52, %p53
      %p55 = scmp.ne.s32.totalorder %s41, %s42
      %p56 = scmp.eq.s32.totalorder %s22, 3
      %p57 = por %p55, %p56
      %p59 = scmp.ne.s32.totalorder %s42, %s58
      %p60 = scmp.eq.s32.totalorder %s22, 0
      %p61 = por %p59, %p60
      %s62 = ssub.s32 %s24, %s31
      %p63 = scmp.eq.s32.totalorder %s62, 0
      %s65 = sadd.s32 %s64, 1
      %s66 = scalar_select %p63, %s64, %s65
      %p69 = pneg %p63
      %p70 = scmp.eq.s32.totalorder %s16, 3
      %p71 = por %p69, %p70
      %p72 = scmp.ne.s32.totalorder %s64, %s67
      %p73 = scmp.eq.s32.totalorder %s16, 0
      %p74 = por %p72, %p73
      %p75 = scmp.ne.s32.totalorder %s64, %s67
      %p76 = scmp.eq.s32.totalorder %s21, 3
      %p77 = por %p75, %p76
      %p78 = scmp.ne.s32.totalorder %s67, %s68
      %p79 = scmp.eq.s32.totalorder %s21, 0
      %p80 = por %p78, %p79
      %p81 = scmp.ne.s32.totalorder %s67, %s68
      %p82 = scmp.eq.s32.totalorder %s22, 3
      %p83 = por %p81, %p82
      %p85 = scmp.ne.s32.totalorder %s68, %s84
      %p86 = scmp.eq.s32.totalorder %s22, 0
      %p87 = por %p85, %p86
      %s88 = ssub.s32 %s24, %s31
      %p89 = scmp.eq.s32.totalorder %s88, 0
      %s91 = sadd.s32 %s90, 1
      %s92 = scalar_select %p89, %s90, %s91
      %p95 = pneg %p89
      %p96 = scmp.eq.s32.totalorder %s16, 3
      %p97 = por %p95, %p96
      %p98 = scmp.ne.s32.totalorder %s90, %s93
      %p99 = scmp.eq.s32.totalorder %s16, 0
      %p100 = por %p98, %p99
      %p101 = scmp.ne.s32.totalorder %s90, %s93
      %p102 = scmp.eq.s32.totalorder %s21, 3
      %p103 = por %p101, %p102
      %p104 = scmp.ne.s32.totalorder %s93, %s94
      %p105 = scmp.eq.s32.totalorder %s21, 0
      %p106 = por %p104, %p105
      %p107 = scmp.ne.s32.totalorder %s93, %s94
      %p108 = scmp.eq.s32.totalorder %s22, 3
      %p109 = por %p107, %p108
      %p111 = scmp.ne.s32.totalorder %s94, %s110
      %p112 = scmp.eq.s32.totalorder %s22, 0
      %p113 = por %p111, %p112
      %s114 = ssub.s32 %s24, %s31
      %p115 = scmp.eq.s32.totalorder %s114, 0
      %s117 = sadd.s32 %s116, 1
      %s118 = scalar_select %p115, %s116, %s117
      %p121 = pneg %p115
      %p122 = scmp.eq.s32.totalorder %s16, 3
      %p123 = por %p121, %p122
      %p124 = scmp.ne.s32.totalorder %s116, %s119
      %p125 = scmp.eq.s32.totalorder %s16, 0
      %p126 = por %p124, %p125
      %p127 = scmp.ne.s32.totalorder %s116, %s119
      %p128 = scmp.eq.s32.totalorder %s21, 3
      %p129 = por %p127, %p128
      %p130 = scmp.ne.s32.totalorder %s119, %s120
      %p131 = scmp.eq.s32.totalorder %s21, 0
      %p132 = por %p130, %p131
      %p133 = scmp.ne.s32.totalorder %s119, %s120
      %p134 = scmp.eq.s32.totalorder %s22, 3
      %p135 = por %p133, %p134
      %p137 = scmp.ne.s32.totalorder %s120, %s136
      %p138 = scmp.eq.s32.totalorder %s22, 0
      %p139 = por %p137, %p138
      %s141 = sadd.s32 %s140, 1
      %p144 = scmp.eq.s32.totalorder %s16, 3
      %p145 = scmp.ne.s32.totalorder %s140, %s142
      %p146 = scmp.eq.s32.totalorder %s16, 0
      %p147 = por %p145, %p146
      %p148 = scmp.ne.s32.totalorder %s140, %s142
      %p149 = scmp.eq.s32.totalorder %s21, 3
      %p150 = por %p148, %p149
      %p151 = scmp.ne.s32.totalorder %s142, %s143
      %p152 = scmp.eq.s32.totalorder %s21, 0
      %p153 = por %p151, %p152
      %p154 = scmp.ne.s32.totalorder %s142, %s143
      %p155 = scmp.eq.s32.totalorder %s22, 3
      %p156 = por %p154, %p155
      %p158 = scmp.ne.s32.totalorder %s143, %s157
      %p159 = scmp.eq.s32.totalorder %s22, 0
      %p160 = por %p158, %p159
      %s162 = sadd.s32 %s161, 1
      %p165 = scmp.eq.s32.totalorder %s16, 3
      %p166 = scmp.ne.s32.totalorder %s161, %s163
      %p167 = scmp.eq.s32.totalorder %s16, 0
      %p168 = por %p166, %p167
      %p169 = scmp.ne.s32.totalorder %s161, %s163
      %p170 = scmp.eq.s32.totalorder %s21, 3
      %p171 = por %p169, %p170
      %p172 = scmp.ne.s32.totalorder %s163, %s164
      %p173 = scmp.eq.s32.totalorder %s21, 0
      %p174 = por %p172, %p173
      %p175 = scmp.ne.s32.totalorder %s163, %s164
      %p176 = scmp.eq.s32.totalorder %s22, 3
      %p177 = por %p175, %p176
      %p179 = scmp.ne.s32.totalorder %s164, %s178
      %p180 = scmp.eq.s32.totalorder %s22, 0
      %p181 = por %p179, %p180
      %s183 = sadd.s32 %s182, 1
      %p186 = scmp.eq.s32.totalorder %s16, 3
      %p187 = scmp.ne.s32.totalorder %s182, %s184
      %p188 = scmp.eq.s32.totalorder %s16, 0
      %p189 = por %p187, %p188
      %p190 = scmp.ne.s32.totalorder %s182, %s184
      %p191 = scmp.eq.s32.totalorder %s21, 3
      %p192 = por %p190, %p191
      %p193 = scmp.ne.s32.totalorder %s184, %s185
      %p194 = scmp.eq.s32.totalorder %s21, 0
      %p195 = por %p193, %p194
      %p196 = scmp.ne.s32.totalorder %s184, %s185
      %p197 = scmp.eq.s32.totalorder %s22, 3
      %p198 = por %p196, %p197
      %p200 = scmp.ne.s32.totalorder %s185, %s199
      %p201 = scmp.eq.s32.totalorder %s22, 0
      %p202 = por %p200, %p201
      %s203 = ssub.s32 %s23, %s35
      %p204 = scmp.eq.s32.totalorder %s203, 0
      %s206 = sadd.s32 %s205, 1
      %s207 = scalar_select %p204, %s205, %s206
      %p210 = pneg %p204
      %p211 = scmp.eq.s32.totalorder %s16, 3
      %p212 = por %p210, %p211
      %p213 = scmp.ne.s32.totalorder %s205, %s208
      %p214 = scmp.eq.s32.totalorder %s16, 0
      %p215 = por %p213, %p214
      %p216 = scmp.ne.s32.totalorder %s205, %s208
      %p217 = scmp.eq.s32.totalorder %s21, 3
      %p218 = por %p216, %p217
      %p219 = scmp.ne.s32.totalorder %s208, %s209
      %p220 = scmp.eq.s32.totalorder %s21, 0
      %p221 = por %p219, %p220
      %p222 = scmp.ne.s32.totalorder %s208, %s209
      %p223 = scmp.eq.s32.totalorder %s22, 3
      %p224 = por %p222, %p223
      %p226 = scmp.ne.s32.totalorder %s209, %s225
      %p227 = scmp.eq.s32.totalorder %s22, 0
      %p228 = por %p226, %p227
      %p229 = scmp.le.s32.totalorder 1, %s16
      %p230 = scmp.lt.s32.totalorder %s16, 5
      %p231 = pnand %p229, %p230
      %p232 = pneg %p231
      // Predicated region
      $region9: #{transformer_decoder_forward.33} parent=5 // pred_check
        _
      $region10: #{transformer_decoder_forward.33} parent=5 // pred_check_branch
        %234 = sbr.rel (%p231) target = $region12
      $region11: #{transformer_decoder_forward.33} parent=5 // pred_region
        %s235 = ssub.s32 %s16, 1
        // Predicated region
        $region13: #{transformer_decoder_forward.33} parent=11 // pred_check
          %p236 = pneg %p153
        $region14: #{transformer_decoder_forward.33} parent=11 // pred_check_branch
          %238 = sbr.rel (%p236) target = $region16
        $region15: #{transformer_decoder_forward.33} parent=11 // pred_region
          _
        $region16: #{transformer_decoder_forward.33} parent=11 // pred_fallthru
          _
        // Predicated region
        $region17: #{transformer_decoder_forward.33} parent=11 // pred_check
          %p239 = pneg %p174
        $region18: #{transformer_decoder_forward.33} parent=11 // pred_check_branch
          %241 = sbr.rel (%p239) target = $region20
        $region19: #{transformer_decoder_forward.33} parent=11 // pred_region
          _
        $region20: #{transformer_decoder_forward.33} parent=11 // pred_fallthru
          _
        // Predicated region
        $region21: #{transformer_decoder_forward.33} parent=11 // pred_check
          %p242 = pneg %p195
        $region22: #{transformer_decoder_forward.33} parent=11 // pred_check_branch
          %244 = sbr.rel (%p242) target = $region24
        $region23: #{transformer_decoder_forward.33} parent=11 // pred_region
          _
        $region24: #{transformer_decoder_forward.33} parent=11 // pred_fallthru
          _
      $region12: #{transformer_decoder_forward.33} parent=5 // pred_fallthru
        _
      %p245 = scmp.lt.s32.totalorder %s16, 4
      // Predicated region
      $region25: #{transformer_decoder_forward.33} parent=5 // pred_check
        %p246 = pneg %p245
      $region26: #{transformer_decoder_forward.33} parent=5 // pred_check_branch
        %248 = sbr.rel (%p246) target = $region28
      $region27: #{transformer_decoder_forward.33} parent=5 // pred_region
        // Predicated region
        $region29: #{transformer_decoder_forward.33} parent=27 // pred_check
          %p249 = pneg %p48
        $region30: #{transformer_decoder_forward.33} parent=27 // pred_check_branch
          %251 = sbr.rel (%p249) target = $region32
        $region31: #{transformer_decoder_forward.33} parent=27 // pred_region
          %p252 = scmp.lt.s32.totalorder %s23, 1
          %s253 = scalar_select %p252, %s23, 1
          %s254 = smul.addr %s253, 2
          %s255 = smul.addr %s254, 8
          %s256 = scalar_lea.vmem %s0, %s255
        $region32: #{transformer_decoder_forward.33} parent=27 // pred_fallthru
          _
        // Predicated region
        $region33: #{transformer_decoder_forward.33} parent=27 // pred_check
          %p257 = pneg %p74
        $region34: #{transformer_decoder_forward.33} parent=27 // pred_check_branch
          %259 = sbr.rel (%p257) target = $region36
        $region35: #{transformer_decoder_forward.33} parent=27 // pred_region
          %s260 = sand.u32 %s64, 1
          %s261 = sand.u32 %s64, 1
          %s262 = smul.addr %s261, 512
          %s263 = scalar_lea.vmem [#allocation3], %s262
          %s264 = smul.u32 2, %s24
          %s265 = smul.addr %s264, 8
          %s266 = scalar_lea.vmem %s1, %s265
          // Predicated region
          $region37: #{transformer_decoder_forward.33} parent=35 // pred_check
            _
          $region38: #{transformer_decoder_forward.33} parent=35 // pred_check_branch
            %268 = sbr.rel (0) target = $region40
          $region39: #{transformer_decoder_forward.33} parent=35 // pred_region
            // Predicated region
            $region41: #{transformer_decoder_forward.33} parent=39 // pred_check
              _
            $region42: #{transformer_decoder_forward.33} parent=39 // pred_check_branch
              %270 = sbr.rel (0) target = $region44
            $region43: #{transformer_decoder_forward.33} parent=39 // pred_region
              loop: start=0, step=1, limit=1
              $region45: #{transformer_decoder_forward.33} parent=43 // loop_pre_header
                _
              $region46: #{transformer_decoder_forward.33} parent=43 // loop_header
                %s272 = sphi 0, %s276
                %p273 = scmp.ge.s32.totalorder %s272, 1
                %s277 = sphi %s266, %s266
                %s278 = sphi %s263, %s263
              $region47: #{transformer_decoder_forward.33} parent=43 // loop_header_branch
                %275 = sbr.rel (%p273) target = $region51
              $region48: #{transformer_decoder_forward.33} parent=43 // loop_body
                %v279 = vld [vmem:[%s277] sm:$0xff]
                %280 = vst [vmem:[%s278] sm:$0xff] %v279
                %v281 = vld [vmem:[%s277 + $0x8] sm:$0xff]
                %282 = vst [vmem:[%s278 + $0x8] sm:$0xff] %v281
                %v283 = vld [vmem:[%s277 + $0x20] sm:$0xff]
                %284 = vst [vmem:[%s278 + $0x10] sm:$0xff] %v283
                %v285 = vld [vmem:[%s277 + $0x28] sm:$0xff]
                %286 = vst [vmem:[%s278 + $0x18] sm:$0xff] %v285
                %v287 = vld [vmem:[%s277 + $0x40] sm:$0xff]
                %288 = vst [vmem:[%s278 + $0x20] sm:$0xff] %v287
                %v289 = vld [vmem:[%s277 + $0x48] sm:$0xff]
                %290 = vst [vmem:[%s278 + $0x28] sm:$0xff] %v289
                %v291 = vld [vmem:[%s277 + $0x60] sm:$0xff]
                %292 = vst [vmem:[%s278 + $0x30] sm:$0xff] %v291
                %v293 = vld [vmem:[%s277 + $0x68] sm:$0xff]
                %294 = vst [vmem:[%s278 + $0x38] sm:$0xff] %v293
                %v295 = vld [vmem:[%s277 + $0x80] sm:$0xff]
                %296 = vst [vmem:[%s278 + $0x40] sm:$0xff] %v295
                %v297 = vld [vmem:[%s277 + $0x88] sm:$0xff]
                %298 = vst [vmem:[%s278 + $0x48] sm:$0xff] %v297
                %v299 = vld [vmem:[%s277 + $0xa0] sm:$0xff]
                %300 = vst [vmem:[%s278 + $0x50] sm:$0xff] %v299
                %v301 = vld [vmem:[%s277 + $0xa8] sm:$0xff]
                %302 = vst [vmem:[%s278 + $0x58] sm:$0xff] %v301
                %v303 = vld [vmem:[%s277 + $0xc0] sm:$0xff]
                %304 = vst [vmem:[%s278 + $0x60] sm:$0xff] %v303
                %v305 = vld [vmem:[%s277 + $0xc8] sm:$0xff]
                %306 = vst [vmem:[%s278 + $0x68] sm:$0xff] %v305
                %v307 = vld [vmem:[%s277 + $0xe0] sm:$0xff]
                %308 = vst [vmem:[%s278 + $0x70] sm:$0xff] %v307
                %v309 = vld [vmem:[%s277 + $0xe8] sm:$0xff]
                %310 = vst [vmem:[%s278 + $0x78] sm:$0xff] %v309
                %v311 = vld [vmem:[%s277 + $0x100] sm:$0xff]
                %312 = vst [vmem:[%s278 + $0x80] sm:$0xff] %v311
                %v313 = vld [vmem:[%s277 + $0x108] sm:$0xff]
                %314 = vst [vmem:[%s278 + $0x88] sm:$0xff] %v313
                %v315 = vld [vmem:[%s277 + $0x120] sm:$0xff]
                %316 = vst [vmem:[%s278 + $0x90] sm:$0xff] %v315
                %v317 = vld [vmem:[%s277 + $0x128] sm:$0xff]
                %318 = vst [vmem:[%s278 + $0x98] sm:$0xff] %v317
                %v319 = vld [vmem:[%s277 + $0x140] sm:$0xff]
                %320 = vst [vmem:[%s278 + $0xa0] sm:$0xff] %v319
                %v321 = vld [vmem:[%s277 + $0x148] sm:$0xff]
                %322 = vst [vmem:[%s278 + $0xa8] sm:$0xff] %v321
                %v323 = vld [vmem:[%s277 + $0x160] sm:$0xff]
                %324 = vst [vmem:[%s278 + $0xb0] sm:$0xff] %v323
                %v325 = vld [vmem:[%s277 + $0x168] sm:$0xff]
                %326 = vst [vmem:[%s278 + $0xb8] sm:$0xff] %v325
                %v327 = vld [vmem:[%s277 + $0x180] sm:$0xff]
                %328 = vst [vmem:[%s278 + $0xc0] sm:$0xff] %v327
                %v329 = vld [vmem:[%s277 + $0x188] sm:$0xff]
                %330 = vst [vmem:[%s278 + $0xc8] sm:$0xff] %v329
                %v331 = vld [vmem:[%s277 + $0x1a0] sm:$0xff]
                %332 = vst [vmem:[%s278 + $0xd0] sm:$0xff] %v331
                %v333 = vld [vmem:[%s277 + $0x1a8] sm:$0xff]
                %334 = vst [vmem:[%s278 + $0xd8] sm:$0xff] %v333
                %v335 = vld [vmem:[%s277 + $0x1c0] sm:$0xff]
                %336 = vst [vmem:[%s278 + $0xe0] sm:$0xff] %v335
                %v337 = vld [vmem:[%s277 + $0x1c8] sm:$0xff]
                %338 = vst [vmem:[%s278 + $0xe8] sm:$0xff] %v337
                %v339 = vld [vmem:[%s277 + $0x1e0] sm:$0xff]
                %340 = vst [vmem:[%s278 + $0xf0] sm:$0xff] %v339
                %v341 = vld [vmem:[%s277 + $0x1e8] sm:$0xff]
                %342 = vst [vmem:[%s278 + $0xf8] sm:$0xff] %v341
                %v343 = vld [vmem:[%s277 + $0x200] sm:$0xff]
                %344 = vst [vmem:[%s278 + $0x100] sm:$0xff] %v343
                %v345 = vld [vmem:[%s277 + $0x208] sm:$0xff]
                %346 = vst [vmem:[%s278 + $0x108] sm:$0xff] %v345
                %v347 = vld [vmem:[%s277 + $0x220] sm:$0xff]
                %348 = vst [vmem:[%s278 + $0x110] sm:$0xff] %v347
                %v349 = vld [vmem:[%s277 + $0x228] sm:$0xff]
                %350 = vst [vmem:[%s278 + $0x118] sm:$0xff] %v349
                %v351 = vld [vmem:[%s277 + $0x240] sm:$0xff]
                %352 = vst [vmem:[%s278 + $0x120] sm:$0xff] %v351
                %v353 = vld [vmem:[%s277 + $0x248] sm:$0xff]
                %354 = vst [vmem:[%s278 + $0x128] sm:$0xff] %v353
                %v355 = vld [vmem:[%s277 + $0x260] sm:$0xff]
                %356 = vst [vmem:[%s278 + $0x130] sm:$0xff] %v355
                %v357 = vld [vmem:[%s277 + $0x268] sm:$0xff]
                %358 = vst [vmem:[%s278 + $0x138] sm:$0xff] %v357
                %v359 = vld [vmem:[%s277 + $0x280] sm:$0xff]
                %360 = vst [vmem:[%s278 + $0x140] sm:$0xff] %v359
                %v361 = vld [vmem:[%s277 + $0x288] sm:$0xff]
                %362 = vst [vmem:[%s278 + $0x148] sm:$0xff] %v361
                %v363 = vld [vmem:[%s277 + $0x2a0] sm:$0xff]
                %364 = vst [vmem:[%s278 + $0x150] sm:$0xff] %v363
                %v365 = vld [vmem:[%s277 + $0x2a8] sm:$0xff]
                %366 = vst [vmem:[%s278 + $0x158] sm:$0xff] %v365
                %v367 = vld [vmem:[%s277 + $0x2c0] sm:$0xff]
                %368 = vst [vmem:[%s278 + $0x160] sm:$0xff] %v367
                %v369 = vld [vmem:[%s277 + $0x2c8] sm:$0xff]
                %370 = vst [vmem:[%s278 + $0x168] sm:$0xff] %v369
                %v371 = vld [vmem:[%s277 + $0x2e0] sm:$0xff]
                %372 = vst [vmem:[%s278 + $0x170] sm:$0xff] %v371
                %v373 = vld [vmem:[%s277 + $0x2e8] sm:$0xff]
                %374 = vst [vmem:[%s278 + $0x178] sm:$0xff] %v373
                %v375 = vld [vmem:[%s277 + $0x300] sm:$0xff]
                %376 = vst [vmem:[%s278 + $0x180] sm:$0xff] %v375
                %v377 = vld [vmem:[%s277 + $0x308] sm:$0xff]
                %378 = vst [vmem:[%s278 + $0x188] sm:$0xff] %v377
                %v379 = vld [vmem:[%s277 + $0x320] sm:$0xff]
                %380 = vst [vmem:[%s278 + $0x190] sm:$0xff] %v379
                %v381 = vld [vmem:[%s277 + $0x328] sm:$0xff]
                %382 = vst [vmem:[%s278 + $0x198] sm:$0xff] %v381
                %v383 = vld [vmem:[%s277 + $0x340] sm:$0xff]
                %384 = vst [vmem:[%s278 + $0x1a0] sm:$0xff] %v383
                %v385 = vld [vmem:[%s277 + $0x348] sm:$0xff]
                %386 = vst [vmem:[%s278 + $0x1a8] sm:$0xff] %v385
                %v387 = vld [vmem:[%s277 + $0x360] sm:$0xff]
                %388 = vst [vmem:[%s278 + $0x1b0] sm:$0xff] %v387
                %v389 = vld [vmem:[%s277 + $0x368] sm:$0xff]
                %390 = vst [vmem:[%s278 + $0x1b8] sm:$0xff] %v389
                %v391 = vld [vmem:[%s277 + $0x380] sm:$0xff]
                %392 = vst [vmem:[%s278 + $0x1c0] sm:$0xff] %v391
                %v393 = vld [vmem:[%s277 + $0x388] sm:$0xff]
                %394 = vst [vmem:[%s278 + $0x1c8] sm:$0xff] %v393
                %v395 = vld [vmem:[%s277 + $0x3a0] sm:$0xff]
                %396 = vst [vmem:[%s278 + $0x1d0] sm:$0xff] %v395
                %v397 = vld [vmem:[%s277 + $0x3a8] sm:$0xff]
                %398 = vst [vmem:[%s278 + $0x1d8] sm:$0xff] %v397
                %v399 = vld [vmem:[%s277 + $0x3c0] sm:$0xff]
                %400 = vst [vmem:[%s278 + $0x1e0] sm:$0xff] %v399
                %v401 = vld [vmem:[%s277 + $0x3c8] sm:$0xff]
                %402 = vst [vmem:[%s278 + $0x1e8] sm:$0xff] %v401
                %v403 = vld [vmem:[%s277 + $0x3e0] sm:$0xff]
                %404 = vst [vmem:[%s278 + $0x1f0] sm:$0xff] %v403
                %v405 = vld [vmem:[%s277 + $0x3e8] sm:$0xff]
                %406 = vst [vmem:[%s278 + $0x1f8] sm:$0xff] %v405
              $region49: #{transformer_decoder_forward.33} parent=43 // loop_footer
                %s276 = sadd.s32 1, %s272
              $region50: #{transformer_decoder_forward.33} parent=43 // loop_footer_branch
                %271 = sbr.rel target = $region46
              $region51: #{transformer_decoder_forward.33} parent=43 // loop_exit
                _
            $region44: #{transformer_decoder_forward.33} parent=39 // pred_fallthru
              _
            // Predicated region
            $region52: #{transformer_decoder_forward.33} parent=39 // pred_check
              _
            $region53: #{transformer_decoder_forward.33} parent=39 // pred_check_branch
              %408 = sbr.rel target = $region55
            $region54: #{transformer_decoder_forward.33} parent=39 // pred_region
              _
            $region55: #{transformer_decoder_forward.33} parent=39 // pred_fallthru
              _
          $region40: #{transformer_decoder_forward.33} parent=35 // pred_fallthru
            _
          %409 = vnop
        $region36: #{transformer_decoder_forward.33} parent=27 // pred_fallthru
          _
        // Predicated region
        $region56: #{transformer_decoder_forward.33} parent=27 // pred_check
          %p410 = pneg %p100
        $region57: #{transformer_decoder_forward.33} parent=27 // pred_check_branch
          %412 = sbr.rel (%p410) target = $region59
        $region58: #{transformer_decoder_forward.33} parent=27 // pred_region
          %s413 = smul.u32 2, %s24
          %p414 = scmp.lt.s32.totalorder %s413, 3
          %s415 = scalar_select %p414, %s413, 3
          %s416 = scalar_lea.vmem %s2, %s415
          %s417 = smul.u32 2, %s24
        $region59: #{transformer_decoder_forward.33} parent=27 // pred_fallthru
          _
        // Predicated region
        $region60: #{transformer_decoder_forward.33} parent=27 // pred_check
          %p418 = pneg %p126
        $region61: #{transformer_decoder_forward.33} parent=27 // pred_check_branch
          %420 = sbr.rel (%p418) target = $region63
        $region62: #{transformer_decoder_forward.33} parent=27 // pred_region
          %s421 = smul.u32 32, %s24
          %p422 = scmp.lt.s32.totalorder %s421, 63
          %s423 = scalar_select %p422, %s421, 63
          %s424 = smul.addr %s423, 2
          %s425 = smul.addr %s424, 8
          %s426 = scalar_lea.vmem %s3, %s425
          %s427 = smul.u32 32, %s24
        $region63: #{transformer_decoder_forward.33} parent=27 // pred_fallthru
          _
      $region28: #{transformer_decoder_forward.33} parent=5 // pred_fallthru
        _
      %p428 = scmp.le.s32.totalorder 1, %s16
      %p429 = scmp.lt.s32.totalorder %s16, 5
      %p430 = pnand %p428, %p429
      %p431 = pneg %p430
      // Predicated region
      $region64: #{transformer_decoder_forward.33} parent=5 // pred_check
        _
      $region65: #{transformer_decoder_forward.33} parent=5 // pred_check_branch
        %433 = sbr.rel (%p430) target = $region67
      $region66: #{transformer_decoder_forward.33} parent=5 // pred_region
        %s434 = ssub.s32 %s16, 1
        %s435 = sand.u32 %s67, 1
        %s436 = sand.u32 %s67, 1
        %s437 = smul.addr %s436, 512
        %s438 = scalar_lea.vmem [#allocation3], %s437
        // Predicated region
        $region68: #{transformer_decoder_forward.33} parent=66 // pred_check
          %p439 = pneg %p80
        $region69: #{transformer_decoder_forward.33} parent=66 // pred_check_branch
          %441 = sbr.rel (%p439) target = $region71
        $region70: #{transformer_decoder_forward.33} parent=66 // pred_region
          _
        $region71: #{transformer_decoder_forward.33} parent=66 // pred_fallthru
          _
        %p442 = scmp.lt.s32.totalorder %s25, 1
        %s443 = scalar_select %p442, %s25, 1
        %s444 = smul.addr %s443, 2
        %s445 = smul.addr %s444, 8
        %s446 = scalar_lea.vmem %s0, %s445
        %p447 = pneg %p54
        %p448 = pneg %p51
        %s449 = sand.u32 %s67, 1
        %s450 = sand.u32 %s67, 1
        %s451 = smul.addr %s450, 512
        %s452 = scalar_lea.vmem [#allocation3], %s451
        %p453 = pneg %p80
        %p454 = pneg %p77
        %s455 = smul.u32 2, %s26
        %p456 = scmp.lt.s32.totalorder %s455, 3
        %s457 = scalar_select %p456, %s455, 3
        %s458 = scalar_lea.vmem %s2, %s457
        %p459 = pneg %p106
        %p460 = pneg %p103
        %s461 = smul.u32 32, %s26
        %p462 = scmp.lt.s32.totalorder %s461, 63
        %s463 = scalar_select %p462, %s461, 63
        %s464 = smul.addr %s463, 2
        %s465 = smul.addr %s464, 8
        %s466 = scalar_lea.vmem %s3, %s465
        %p467 = pneg %p132
        %p468 = pneg %p129
        %p469 = pneg %p153
        %p470 = pneg %p150
        %p471 = pneg %p174
        %p472 = pneg %p171
        %p473 = pneg %p195
        %p474 = pneg %p192
        %p475 = pneg %p221
        %p476 = pneg %p218
        %s477 = sand.u32 %s208, 1
        %s478 = scalar_lea.sflag [#allocation5], %s477
        %s479 = sand.u32 %s208, 1
        %s480 = smul.addr %s479, 16
        %s481 = scalar_lea.vmem [#allocation4], %s480
        %p482 = scmp.lt.s32.totalorder %s25, 1
        %s483 = scalar_select %p482, %s25, 1
        %s484 = smul.addr %s483, 2
        %s485 = smul.addr %s484, 8
        %s486 = scalar_lea.vmem %s0, %s485
        %s487 = smul.u32 2, %s26
        %s488 = smul.u32 2, %s26
        %p489 = scmp.lt.s32.totalorder %s488, 3
        %s490 = scalar_select %p489, %s488, 3
        %s491 = scalar_lea.vmem %s2, %s490
        %s492 = smul.u32 2, %s26
        %s493 = smul.u32 32, %s26
        %p494 = scmp.lt.s32.totalorder %s493, 63
        %s495 = scalar_select %p494, %s493, 63
        %s496 = smul.addr %s495, 2
        %s497 = smul.addr %s496, 8
        %s498 = scalar_lea.vmem %s3, %s497
        %s499 = smul.u32 32, %s26
        %v500 = vld [vmem:[%s486] sm:$0xff]
        %v501 = vld [vmem:[%s486 + $0x8] sm:$0xff]
        %p502 = scmp.eq.s32.totalorder %s26, 0
        // Predicated region
        $region72: #{transformer_decoder_forward.33} parent=66 // pred_check
          %p503 = pneg %p502
        $region73: #{transformer_decoder_forward.33} parent=66 // pred_check_branch
          %505 = sbr.rel (%p503) target = $region75
        $region74: #{transformer_decoder_forward.33} parent=66 // pred_region
          %v506 = vld [vmem:[%s4] sm:$0x3]
          %v508 = vlaneseq
          %v509 = vshrl.u32 %v508, 7
          %v510 = vsub.s32 0, %v509
          %v511 = vrot.slane %v506, %v510
          %v512 = vlaneseq
          %v513 = vshrl.u32 %v512, 7
          %v514 = vsub.s32 1, %v513
          %v515 = vrot.slane %v506, %v514
          %v518 = vadd.f32 %v500, %v511
          %v519 = vadd.f32 %v501, %v515
          %520 = vst [vmem:[#allocation2] sm:$0xff] %v518
          %521 = vst [vmem:[#allocation2 + $0x8] sm:$0xff] %v519
        $region75: #{transformer_decoder_forward.33} parent=66 // pred_fallthru
          _
        %v522 = vld [vmem:[%s438] sm:$0xff]
        %v523 = vld [vmem:[%s438 + $0x8] sm:$0xff]
        %v524 = vld [vmem:[%s438 + $0x10] sm:$0xff]
        %v525 = vld [vmem:[%s438 + $0x18] sm:$0xff]
        %v526 = vld [vmem:[%s438 + $0x20] sm:$0xff]
        %v527 = vld [vmem:[%s438 + $0x28] sm:$0xff]
        %v528 = vld [vmem:[%s438 + $0x30] sm:$0xff]
        %v529 = vld [vmem:[%s438 + $0x38] sm:$0xff]
        %v530 = vld [vmem:[%s438 + $0x40] sm:$0xff]
        %v531 = vld [vmem:[%s438 + $0x48] sm:$0xff]
        %v532 = vld [vmem:[%s438 + $0x50] sm:$0xff]
        %v533 = vld [vmem:[%s438 + $0x58] sm:$0xff]
        %v534 = vld [vmem:[%s438 + $0x60] sm:$0xff]
        %v535 = vld [vmem:[%s438 + $0x68] sm:$0xff]
        %v536 = vld [vmem:[%s438 + $0x70] sm:$0xff]
        %v537 = vld [vmem:[%s438 + $0x78] sm:$0xff]
        %v538 = vld [vmem:[%s438 + $0x80] sm:$0xff]
        %v539 = vld [vmem:[%s438 + $0x88] sm:$0xff]
        %v540 = vld [vmem:[%s438 + $0x90] sm:$0xff]
        %v541 = vld [vmem:[%s438 + $0x98] sm:$0xff]
        %v542 = vld [vmem:[%s438 + $0xa0] sm:$0xff]
        %v543 = vld [vmem:[%s438 + $0xa8] sm:$0xff]
        %v544 = vld [vmem:[%s438 + $0xb0] sm:$0xff]
        %v545 = vld [vmem:[%s438 + $0xb8] sm:$0xff]
        %v546 = vld [vmem:[%s438 + $0xc0] sm:$0xff]
        %v547 = vld [vmem:[%s438 + $0xc8] sm:$0xff]
        %v548 = vld [vmem:[%s438 + $0xd0] sm:$0xff]
        %v549 = vld [vmem:[%s438 + $0xd8] sm:$0xff]
        %v550 = vld [vmem:[%s438 + $0xe0] sm:$0xff]
        %v551 = vld [vmem:[%s438 + $0xe8] sm:$0xff]
        %v552 = vld [vmem:[%s438 + $0xf0] sm:$0xff]
        %v553 = vld [vmem:[%s438 + $0xf8] sm:$0xff]
        %v554 = vld [vmem:[%s438 + $0x100] sm:$0xff]
        %v555 = vld [vmem:[%s438 + $0x108] sm:$0xff]
        %v556 = vld [vmem:[%s438 + $0x110] sm:$0xff]
        %v557 = vld [vmem:[%s438 + $0x118] sm:$0xff]
        %v558 = vld [vmem:[%s438 + $0x120] sm:$0xff]
        %v559 = vld [vmem:[%s438 + $0x128] sm:$0xff]
        %v560 = vld [vmem:[%s438 + $0x130] sm:$0xff]
        %v561 = vld [vmem:[%s438 + $0x138] sm:$0xff]
        %v562 = vld [vmem:[%s438 + $0x140] sm:$0xff]
        %v563 = vld [vmem:[%s438 + $0x148] sm:$0xff]
        %v564 = vld [vmem:[%s438 + $0x150] sm:$0xff]
        %v565 = vld [vmem:[%s438 + $0x158] sm:$0xff]
        %v566 = vld [vmem:[%s438 + $0x160] sm:$0xff]
        %v567 = vld [vmem:[%s438 + $0x168] sm:$0xff]
        %v568 = vld [vmem:[%s438 + $0x170] sm:$0xff]
        %v569 = vld [vmem:[%s438 + $0x178] sm:$0xff]
        %v570 = vld [vmem:[%s438 + $0x180] sm:$0xff]
        %v571 = vld [vmem:[%s438 + $0x188] sm:$0xff]
        %v572 = vld [vmem:[%s438 + $0x190] sm:$0xff]
        %v573 = vld [vmem:[%s438 + $0x198] sm:$0xff]
        %v574 = vld [vmem:[%s438 + $0x1a0] sm:$0xff]
        %v575 = vld [vmem:[%s438 + $0x1a8] sm:$0xff]
        %v576 = vld [vmem:[%s438 + $0x1b0] sm:$0xff]
        %v577 = vld [vmem:[%s438 + $0x1b8] sm:$0xff]
        %v578 = vld [vmem:[%s438 + $0x1c0] sm:$0xff]
        %v579 = vld [vmem:[%s438 + $0x1c8] sm:$0xff]
        %v580 = vld [vmem:[%s438 + $0x1d0] sm:$0xff]
        %v581 = vld [vmem:[%s438 + $0x1d8] sm:$0xff]
        %v582 = vld [vmem:[%s438 + $0x1e0] sm:$0xff]
        %v583 = vld [vmem:[%s438 + $0x1e8] sm:$0xff]
        %v584 = vld [vmem:[%s438 + $0x1f0] sm:$0xff]
        %v585 = vld [vmem:[%s438 + $0x1f8] sm:$0xff]
        %v586 = vld [vmem:[%s491] sm:$0x3]
        %v588 = vlaneseq
        %v589 = vshrl.u32 %v588, 7
        %v590 = vsub.s32 0, %v589
        %v591 = vrot.slane %v586, %v590
        %v592 = vlaneseq
        %v593 = vshrl.u32 %v592, 7
        %v594 = vsub.s32 1, %v593
        %v595 = vrot.slane %v586, %v594
        %598 = vmatprep.subr.mxu0 %v553
        %599 = vmatpush1.msra.mxu0 %v552
        %600 = vmatprep.subr.mxu0 %v551
        %601 = vmatpush1.msra.mxu0 %v550
        %602 = vmatprep.subr.mxu0 %v549
        %603 = vmatpush1.msra.mxu0 %v548
        %604 = vmatprep.subr.mxu0 %v547
        %605 = vmatpush1.msra.mxu0 %v546
        %606 = vmatprep.subr.mxu0 %v545
        %607 = vmatpush1.msra.mxu0 %v544
        %608 = vmatprep.subr.mxu0 %v543
        %609 = vmatpush1.msra.mxu0 %v542
        %610 = vmatprep.subr.mxu0 %v541
        %611 = vmatpush1.msra.mxu0 %v540
        %612 = vmatprep.subr.mxu0 %v539
        %613 = vmatpush1.msra.mxu0 %v538
        %614 = vmatprep.subr.mxu0 %v537
        %615 = vmatpush1.msra.mxu0 %v536
        %616 = vmatprep.subr.mxu0 %v535
        %617 = vmatpush1.msra.mxu0 %v534
        %618 = vmatprep.subr.mxu0 %v533
        %619 = vmatpush1.msra.mxu0 %v532
        %620 = vmatprep.subr.mxu0 %v531
        %621 = vmatpush1.msra.mxu0 %v530
        %622 = vmatprep.subr.mxu0 %v529
        %623 = vmatpush1.msra.mxu0 %v528
        %624 = vmatprep.subr.mxu0 %v527
        %625 = vmatpush1.msra.mxu0 %v526
        %626 = vmatprep.subr.mxu0 %v525
        %627 = vmatpush1.msra.mxu0 %v524
        %628 = vmatprep.subr.mxu0 %v523
        %629 = vmatpush1.msra.mxu0 %v522
        %630 = vmatprep.subr.mxu0 %v585
        %631 = vmatpush2.msra.mxu0 %v584
        %632 = vmatprep.subr.mxu0 %v583
        %633 = vmatpush2.msra.mxu0 %v582
        %634 = vmatprep.subr.mxu0 %v581
        %635 = vmatpush2.msra.mxu0 %v580
        %636 = vmatprep.subr.mxu0 %v579
        %637 = vmatpush2.msra.mxu0 %v578
        %638 = vmatprep.subr.mxu0 %v577
        %639 = vmatpush2.msra.mxu0 %v576
        %640 = vmatprep.subr.mxu0 %v575
        %641 = vmatpush2.msra.mxu0 %v574
        %642 = vmatprep.subr.mxu0 %v573
        %643 = vmatpush2.msra.mxu0 %v572
        %644 = vmatprep.subr.mxu0 %v571
        %645 = vmatpush2.msra.mxu0 %v570
        %646 = vmatprep.subr.mxu0 %v569
        %647 = vmatpush2.msra.mxu0 %v568
        %648 = vmatprep.subr.mxu0 %v567
        %649 = vmatpush2.msra.mxu0 %v566
        %650 = vmatprep.subr.mxu0 %v565
        %651 = vmatpush2.msra.mxu0 %v564
        %652 = vmatprep.subr.mxu0 %v563
        %653 = vmatpush2.msra.mxu0 %v562
        %654 = vmatprep.subr.mxu0 %v561
        %655 = vmatpush2.msra.mxu0 %v560
        %656 = vmatprep.subr.mxu0 %v559
        %657 = vmatpush2.msra.mxu0 %v558
        %658 = vmatprep.subr.mxu0 %v557
        %659 = vmatpush2.msra.mxu0 %v556
        %660 = vmatprep.subr.mxu0 %v555
        %661 = vmatpush2.msra.mxu0 %v554
        %662 = vmatprep.mubr.f32.mxu0 %v501
        %663 = vmatmul.mubr.f32.gmra.mxu0 %v500
        %v664 = vpop.f32.mrf.mxu0
        %v665 = vadd.f32 %v591, %v664
        %v666 = vpop.f32.mrf.mxu0
        %v667 = vadd.f32 %v595, %v666
        %668 = vdwg.mxu0
        %v669 = vmax.f32 %v665, 0.0
        %v670 = vmax.f32 %v667, 0.0
        %v671 = vld [vmem:[#allocation2] sm:$0xff]
        %v672 = vld [vmem:[#allocation2 + $0x8] sm:$0xff]
        %v673 = vld [vmem:[%s498] sm:$0xff]
        %v674 = vld [vmem:[%s498 + $0x8] sm:$0xff]
        %v675 = vld [vmem:[%s498 + $0x10] sm:$0xff]
        %v676 = vld [vmem:[%s498 + $0x18] sm:$0xff]
        %v677 = vld [vmem:[%s498 + $0x20] sm:$0xff]
        %v678 = vld [vmem:[%s498 + $0x28] sm:$0xff]
        %v679 = vld [vmem:[%s498 + $0x30] sm:$0xff]
        %v680 = vld [vmem:[%s498 + $0x38] sm:$0xff]
        %v681 = vld [vmem:[%s498 + $0x40] sm:$0xff]
        %v682 = vld [vmem:[%s498 + $0x48] sm:$0xff]
        %v683 = vld [vmem:[%s498 + $0x50] sm:$0xff]
        %v684 = vld [vmem:[%s498 + $0x58] sm:$0xff]
        %v685 = vld [vmem:[%s498 + $0x60] sm:$0xff]
        %v686 = vld [vmem:[%s498 + $0x68] sm:$0xff]
        %v687 = vld [vmem:[%s498 + $0x70] sm:$0xff]
        %v688 = vld [vmem:[%s498 + $0x78] sm:$0xff]
        %v689 = vld [vmem:[%s498 + $0x80] sm:$0xff]
        %v690 = vld [vmem:[%s498 + $0x88] sm:$0xff]
        %v691 = vld [vmem:[%s498 + $0x90] sm:$0xff]
        %v692 = vld [vmem:[%s498 + $0x98] sm:$0xff]
        %v693 = vld [vmem:[%s498 + $0xa0] sm:$0xff]
        %v694 = vld [vmem:[%s498 + $0xa8] sm:$0xff]
        %v695 = vld [vmem:[%s498 + $0xb0] sm:$0xff]
        %v696 = vld [vmem:[%s498 + $0xb8] sm:$0xff]
        %v697 = vld [vmem:[%s498 + $0xc0] sm:$0xff]
        %v698 = vld [vmem:[%s498 + $0xc8] sm:$0xff]
        %v699 = vld [vmem:[%s498 + $0xd0] sm:$0xff]
        %v700 = vld [vmem:[%s498 + $0xd8] sm:$0xff]
        %v701 = vld [vmem:[%s498 + $0xe0] sm:$0xff]
        %v702 = vld [vmem:[%s498 + $0xe8] sm:$0xff]
        %v703 = vld [vmem:[%s498 + $0xf0] sm:$0xff]
        %v704 = vld [vmem:[%s498 + $0xf8] sm:$0xff]
        %v705 = vld [vmem:[%s498 + $0x100] sm:$0xff]
        %v706 = vld [vmem:[%s498 + $0x108] sm:$0xff]
        %v707 = vld [vmem:[%s498 + $0x110] sm:$0xff]
        %v708 = vld [vmem:[%s498 + $0x118] sm:$0xff]
        %v709 = vld [vmem:[%s498 + $0x120] sm:$0xff]
        %v710 = vld [vmem:[%s498 + $0x128] sm:$0xff]
        %v711 = vld [vmem:[%s498 + $0x130] sm:$0xff]
        %v712 = vld [vmem:[%s498 + $0x138] sm:$0xff]
        %v713 = vld [vmem:[%s498 + $0x140] sm:$0xff]
        %v714 = vld [vmem:[%s498 + $0x148] sm:$0xff]
        %v715 = vld [vmem:[%s498 + $0x150] sm:$0xff]
        %v716 = vld [vmem:[%s498 + $0x158] sm:$0xff]
        %v717 = vld [vmem:[%s498 + $0x160] sm:$0xff]
        %v718 = vld [vmem:[%s498 + $0x168] sm:$0xff]
        %v719 = vld [vmem:[%s498 + $0x170] sm:$0xff]
        %v720 = vld [vmem:[%s498 + $0x178] sm:$0xff]
        %v721 = vld [vmem:[%s498 + $0x180] sm:$0xff]
        %v722 = vld [vmem:[%s498 + $0x188] sm:$0xff]
        %v723 = vld [vmem:[%s498 + $0x190] sm:$0xff]
        %v724 = vld [vmem:[%s498 + $0x198] sm:$0xff]
        %v725 = vld [vmem:[%s498 + $0x1a0] sm:$0xff]
        %v726 = vld [vmem:[%s498 + $0x1a8] sm:$0xff]
        %v727 = vld [vmem:[%s498 + $0x1b0] sm:$0xff]
        %v728 = vld [vmem:[%s498 + $0x1b8] sm:$0xff]
        %v729 = vld [vmem:[%s498 + $0x1c0] sm:$0xff]
        %v730 = vld [vmem:[%s498 + $0x1c8] sm:$0xff]
        %v731 = vld [vmem:[%s498 + $0x1d0] sm:$0xff]
        %v732 = vld [vmem:[%s498 + $0x1d8] sm:$0xff]
        %v733 = vld [vmem:[%s498 + $0x1e0] sm:$0xff]
        %v734 = vld [vmem:[%s498 + $0x1e8] sm:$0xff]
        %v735 = vld [vmem:[%s498 + $0x1f0] sm:$0xff]
        %v736 = vld [vmem:[%s498 + $0x1f8] sm:$0xff]
        %737 = vmatprep.subr.mxu0 %v704
        %738 = vmatpush1.msra.mxu0 %v703
        %739 = vmatprep.subr.mxu0 %v702
        %740 = vmatpush1.msra.mxu0 %v701
        %741 = vmatprep.subr.mxu0 %v700
        %742 = vmatpush1.msra.mxu0 %v699
        %743 = vmatprep.subr.mxu0 %v698
        %744 = vmatpush1.msra.mxu0 %v697
        %745 = vmatprep.subr.mxu0 %v696
        %746 = vmatpush1.msra.mxu0 %v695
        %747 = vmatprep.subr.mxu0 %v694
        %748 = vmatpush1.msra.mxu0 %v693
        %749 = vmatprep.subr.mxu0 %v692
        %750 = vmatpush1.msra.mxu0 %v691
        %751 = vmatprep.subr.mxu0 %v690
        %752 = vmatpush1.msra.mxu0 %v689
        %753 = vmatprep.subr.mxu0 %v688
        %754 = vmatpush1.msra.mxu0 %v687
        %755 = vmatprep.subr.mxu0 %v686
        %756 = vmatpush1.msra.mxu0 %v685
        %757 = vmatprep.subr.mxu0 %v684
        %758 = vmatpush1.msra.mxu0 %v683
        %759 = vmatprep.subr.mxu0 %v682
        %760 = vmatpush1.msra.mxu0 %v681
        %761 = vmatprep.subr.mxu0 %v680
        %762 = vmatpush1.msra.mxu0 %v679
        %763 = vmatprep.subr.mxu0 %v678
        %764 = vmatpush1.msra.mxu0 %v677
        %765 = vmatprep.subr.mxu0 %v676
        %766 = vmatpush1.msra.mxu0 %v675
        %767 = vmatprep.subr.mxu0 %v674
        %768 = vmatpush1.msra.mxu0 %v673
        %769 = vmatprep.subr.mxu0 %v736
        %770 = vmatpush2.msra.mxu0 %v735
        %771 = vmatprep.subr.mxu0 %v734
        %772 = vmatpush2.msra.mxu0 %v733
        %773 = vmatprep.subr.mxu0 %v732
        %774 = vmatpush2.msra.mxu0 %v731
        %775 = vmatprep.subr.mxu0 %v730
        %776 = vmatpush2.msra.mxu0 %v729
        %777 = vmatprep.subr.mxu0 %v728
        %778 = vmatpush2.msra.mxu0 %v727
        %779 = vmatprep.subr.mxu0 %v726
        %780 = vmatpush2.msra.mxu0 %v725
        %781 = vmatprep.subr.mxu0 %v724
        %782 = vmatpush2.msra.mxu0 %v723
        %783 = vmatprep.subr.mxu0 %v722
        %784 = vmatpush2.msra.mxu0 %v721
        %785 = vmatprep.subr.mxu0 %v720
        %786 = vmatpush2.msra.mxu0 %v719
        %787 = vmatprep.subr.mxu0 %v718
        %788 = vmatpush2.msra.mxu0 %v717
        %789 = vmatprep.subr.mxu0 %v716
        %790 = vmatpush2.msra.mxu0 %v715
        %791 = vmatprep.subr.mxu0 %v714
        %792 = vmatpush2.msra.mxu0 %v713
        %793 = vmatprep.subr.mxu0 %v712
        %794 = vmatpush2.msra.mxu0 %v711
        %795 = vmatprep.subr.mxu0 %v710
        %796 = vmatpush2.msra.mxu0 %v709
        %797 = vmatprep.subr.mxu0 %v708
        %798 = vmatpush2.msra.mxu0 %v707
        %799 = vmatprep.subr.mxu0 %v706
        %800 = vmatpush2.msra.mxu0 %v705
        %801 = vmatprep.mubr.f32.mxu0 %v670
        %802 = vmatmul.mubr.f32.gmra.mxu0 %v669
        %v803 = vpop.f32.mrf.mxu0
        %v804 = vadd.f32 0.0, %v803
        %v805 = vpop.f32.mrf.mxu0
        %v806 = vadd.f32 0.0, %v805
        %807 = vdwg.mxu0
        %v808 = vadd.f32 %v671, %v804
        %v809 = vadd.f32 %v672, %v806
        %810 = vst [vmem:[#allocation2] sm:$0xff] %v808
        %811 = vst [vmem:[#allocation2 + $0x8] sm:$0xff] %v809
        %p812 = scmp.eq.s32.totalorder %s26, 1
        // Predicated region
        $region76: #{transformer_decoder_forward.33} parent=66 // pred_check
          %p813 = pneg %p812
        $region77: #{transformer_decoder_forward.33} parent=66 // pred_check_branch
          %815 = sbr.rel (%p813) target = $region79
        $region78: #{transformer_decoder_forward.33} parent=66 // pred_region
          %v816 = vld [vmem:[#allocation2] sm:$0xff]
          %v817 = vld [vmem:[#allocation2 + $0x8] sm:$0xff]
          %v818 = vadd.f32 %v816, %v817
          %819 = vadd.xlane.f32.xlu0 %v818
          %v820 = vpop.xlane.xlu0 %819
          %v821 = vrcp.pop 256.0
          %v822 = vmul.f32 %v820, %v821
          %v823 = vsub.f32 %v816, %v822
          %v824 = vsub.f32 %v817, %v822
          %v825 = vmul.f32 %v823, %v823
          %v826 = vmul.f32 %v824, %v824
          %v827 = vadd.f32 %v825, %v826
          %828 = vadd.xlane.f32.xlu0 %v827
          %v829 = vpop.xlane.xlu0 %828
          %v830 = vmul.f32 %v829, %v821
          %v831 = vadd.f32 %v830, 1e-06
          %v832 = vrsqrt.pop %v831
          %v833 = vmul.f32 %v823, %v832
          %v834 = vmul.f32 %v824, %v832
          %v835 = vld [vmem:[%s5] sm:$0x3]
          %v837 = vlaneseq
          %v838 = vshrl.u32 %v837, 7
          %v839 = vsub.s32 0, %v838
          %v840 = vrot.slane %v835, %v839
          %v841 = vlaneseq
          %v842 = vshrl.u32 %v841, 7
          %v843 = vsub.s32 1, %v842
          %v844 = vrot.slane %v835, %v843
          %v847 = vmul.f32 %v833, %v840
          %v848 = vmul.f32 %v834, %v844
          %v849 = vld [vmem:[%s6] sm:$0x3]
          %v851 = vlaneseq
          %v852 = vshrl.u32 %v851, 7
          %v853 = vsub.s32 0, %v852
          %v854 = vrot.slane %v849, %v853
          %v855 = vlaneseq
          %v856 = vshrl.u32 %v855, 7
          %v857 = vsub.s32 1, %v856
          %v858 = vrot.slane %v849, %v857
          %v861 = vadd.f32 %v847, %v854
          %v862 = vadd.f32 %v848, %v858
          %863 = vst [vmem:[%s481] sm:$0xff] %v861
          %864 = vst [vmem:[%s481 + $0x8] sm:$0xff] %v862
        $region79: #{transformer_decoder_forward.33} parent=66 // pred_fallthru
          _
        %s865 = sand.u32 %s208, 1
        %s866 = scalar_lea.sflag [#allocation5], %s865
        %s867 = sand.u32 %s208, 1
        %s868 = smul.addr %s867, 16
        %s869 = scalar_lea.vmem [#allocation4], %s868
        // Predicated region
        $region80: #{transformer_decoder_forward.33} parent=66 // pred_check
          %p870 = pneg %p218
        $region81: #{transformer_decoder_forward.33} parent=66 // pred_check_branch
          %872 = sbr.rel (%p870) target = $region83
        $region82: #{transformer_decoder_forward.33} parent=66 // pred_region
          %s874 = ssub.s32 256, 256
          %875 = vsyncadd %s866, %s874
          %s876 = smul.addr %s25, 2
          %s877 = smul.addr %s876, 128
          %s878 = scalar_lea.hbm %s7, %s877
          %s880 = sshll.u32 %s869, 4
          %s881 = int_to_ptr.vmem [resolvable:$true] %s880
          %883 = dma.vmem_to_hbm [thread:$0]  %s881, 256, %s878, %s866
        $region83: #{transformer_decoder_forward.33} parent=66 // pred_fallthru
          _
      $region67: #{transformer_decoder_forward.33} parent=5 // pred_fallthru
        _
      %p884 = scmp.le.s32.totalorder 2, %s16
      // Predicated region
      $region84: #{transformer_decoder_forward.33} parent=5 // pred_check
        %p885 = pneg %p884
      $region85: #{transformer_decoder_forward.33} parent=5 // pred_check_branch
        %887 = sbr.rel (%p885) target = $region87
      $region86: #{transformer_decoder_forward.33} parent=5 // pred_region
        %s888 = ssub.s32 %s16, 2
        // Predicated region
        $region88: #{transformer_decoder_forward.33} parent=86 // pred_check
          %p889 = pneg %p224
        $region89: #{transformer_decoder_forward.33} parent=86 // pred_check_branch
          %891 = sbr.rel (%p889) target = $region91
        $region90: #{transformer_decoder_forward.33} parent=86 // pred_region
          %s892 = sand.u32 %s209, 1
          %s893 = scalar_lea.sflag [#allocation5], %s892
          %s894 = sand.u32 %s209, 1
          %s895 = smul.addr %s894, 16
          %s896 = scalar_lea.vmem [#allocation4], %s895
          %897 = dma.done %s893, 256
        $region91: #{transformer_decoder_forward.33} parent=86 // pred_fallthru
          _
      $region87: #{transformer_decoder_forward.33} parent=5 // pred_fallthru
        _
    $region6: #{transformer_decoder_forward.33} parent=1 // loop_footer
      %s20 = sadd.s32 1, %s16
    $region7: #{transformer_decoder_forward.33} parent=1 // loop_footer_branch
      %15 = sbr.rel target = $region3
    $region8: #{transformer_decoder_forward.33} parent=1 // loop_exit
      _
    %898 = vsyncpa [#allocation5], 1
    %s899 = scalar_lea.sflag [#allocation5], 1
    %900 = vsyncpa %s899, 1

</llo_original>
